<compile_context>
chip_gen: v5e
topology: v5e:2x2
jax: 0.10.0
libtpu: 0.0.40
codegen_flags: <defaults>
</compile_context>

<pallas_src>
import functools

import jax
import jax.numpy as jnp
from jax.experimental import pallas as pl
from jax.experimental.pallas import tpu as pltpu

# ----------------------------- model config ---------------------------------
NODE_DIM_IN = 128      # C_s
SC_DIM_HIDDEN = 128    # H
NUM_BLOCKS = 4
OUT_DIM = 14           # 7 * 2
EPS_IN = 1e-5          # InstanceNorm1d eps
EPS_NORM = 1e-12       # F.normalize eps

_ROW_BYTES = 18 * 1024  # rough per-M-row VMEM working set (unrolled body + I/O)


# ------------------------------ Pallas kernel --------------------------------
def _sidechain_kernel(s_cur_ref, s_init_ref, w_in_ref, b_in_ref,
                      conv_w_ref, w_out_ref, b_out_ref, pair_ref,
                      a_unnorm_ref, a_norm_ref):
    bt, n, c = s_cur_ref.shape
    m = bt * n
    h_dim = w_in_ref.shape[1]

    # ---- fused input linears: [M, 2C] @ [2C, H] (bf16 operands, f32 acc) ---
    s_cur = jnp.maximum(s_cur_ref[...].reshape(m, c), 0.0)
    s_init = jnp.maximum(s_init_ref[...].reshape(m, c), 0.0)
    s_cat = jnp.concatenate([s_cur, s_init], axis=-1).astype(jnp.bfloat16)
    x = jnp.dot(s_cat, w_in_ref[...],
                preferred_element_type=jnp.float32) + b_in_ref[...]   # [M, H]

    # ---- sequence-boundary masks, (M, 1): lane-broadcast in where is free --
    seq_pos = jax.lax.broadcasted_iota(jnp.int32, (bt, n, 1), 1).reshape(m, 1)
    is_first = seq_pos == 0          # first residue of each sequence
    is_last = seq_pos == n - 1       # last residue of each sequence

    def conv3(hf, w_cat):
        # 3-tap Conv1d (padding=1, bias=False): P = x @ [w0|w1|w2]  (H, 3H),
        # then out[t] = P0[t-1] + P1[t] + P2[t+1] via two masked rolls.
        p = jnp.dot(hf.astype(jnp.bfloat16), w_cat,
                    preferred_element_type=jnp.float32)               # [M, 3H]
        p_m1 = p[:, :h_dim]              # tap applied to x[t-1]
        p_00 = p[:, h_dim:2 * h_dim]     # tap applied to x[t]
        p_p1 = p[:, 2 * h_dim:]          # tap applied to x[t+1]
        left = jnp.where(is_first, 0.0, pltpu.roll(p_m1, shift=1, axis=0))
        right = jnp.where(is_last, 0.0, pltpu.roll(p_p1, shift=m - 1, axis=0))
        return p_00 + left + right

    def inorm(hf):
        # InstanceNorm1d (affine=False, biased variance), per (batch, channel)
        # over the sequence axis; single reduction pass (sum + sum-of-squares).
        hb = hf.reshape(bt, n, h_dim)
        s1 = jnp.sum(hb, axis=1, keepdims=True)
        s2 = jnp.sum(hb * hb, axis=1, keepdims=True)
        mu = s1 * (1.0 / n)
        var = jnp.maximum(s2 * (1.0 / n) - mu * mu, 0.0)
        return ((hb - mu) * jax.lax.rsqrt(var + EPS_IN)).reshape(m, h_dim)

    for i in range(NUM_BLOCKS):           # statically unrolled residual stack
        res = x
        y = jnp.maximum(inorm(conv3(x, conv_w_ref[2 * i])), 0.0)
        # dropout: identity in eval mode
        z = inorm(conv3(y, conv_w_ref[2 * i + 1]))
        x = jnp.maximum(z + res, 0.0)

    # ---- out_layer = ReLU -> Linear(H, 14), fused F.normalize over (7,2) ---
    x = jnp.maximum(x, 0.0)
    a = jnp.dot(x.astype(jnp.bfloat16), w_out_ref[...],
                preferred_element_type=jnp.float32) + b_out_ref[...]   # [M, 14]
    # pair-wise sum of squares via tiny matmul with the 2x2-block pair matrix
    nrm_sq = jnp.dot(a * a, pair_ref[...],
                     preferred_element_type=jnp.float32)               # [M, 14]
    a_nrm = a / jnp.maximum(jnp.sqrt(nrm_sq), EPS_NORM)

    a_unnorm_ref[...] = a.reshape(bt, n, OUT_DIM).astype(a_unnorm_ref.dtype)
    a_norm_ref[...] = a_nrm.reshape(bt, n, OUT_DIM).astype(a_norm_ref.dtype)


# ------------------------------- tiling --------------------------------------
def _tpu_vmem_bytes():
    try:
        return int(pltpu.get_tpu_info().vmem_capacity_bytes)
    except Exception:
        return 64 * 1024 * 1024   # conservative default (v7x-sized)


def _choose_tiling(batch, seq):
    """Batch-tile size Bt (fold batch into matmul-M) + scoped-VMEM limit.

    Generation-aware: budget scales with physical VMEM (v5e/v6e 128 MiB ->
    limit 96 MiB, v7x 64 MiB -> limit 48 MiB).  Prefer >= 2 grid steps so the
    'parallel' axis shards across v7x's two TensorCores and input DMA has
    something to overlap with.
    """
    vmem = _tpu_vmem_bytes()
    vmem_limit = min((vmem * 3) // 4, 96 * 1024 * 1024)
    max_m = max(8, min(2048, (vmem_limit // 2) // _ROW_BYTES))
    divisors = [d for d in range(1, batch + 1) if batch % d == 0]
    fitting = [d for d in divisors if d * seq <= max_m]
    if not fitting:
        # N alone exceeds the tile budget: fall back to Bt=1 (may thrash VMEM).
        # TODO(synk): tile N via a streamed two-pass InstanceNorm for very long sequences.
        fitting = [1]
    bt = fitting[-1]
    if bt == batch and batch > 1 and len(fitting) > 1:
        bt = fitting[-2]          # force >= 2 grid steps when batch allows
    return bt, int(vmem_limit)


# ------------------------------- wrapper --------------------------------------
def prepare_params(params):
    """Pre-fuse / pre-cast weights ONCE (hoisted out of the per-call path)."""
    C, H = NODE_DIM_IN, SC_DIM_HIDDEN
    w_in = jnp.concatenate([params["w_cur"], params["w_init"]],
                           axis=0).astype(jnp.bfloat16)               # [2C, H]
    b_in = (params["b_cur"] + params["b_init"]).astype(jnp.float32)   # [1, H]
    # Conv1d taps concatenated on the OUTPUT axis: (nb*2, H_in, 3*H_out)
    conv_w = jnp.transpose(params["conv_w"], (0, 1, 3, 2, 4)).reshape(
        NUM_BLOCKS * 2, H, 3 * H).astype(jnp.bfloat16)
    w_out = params["w_out"].astype(jnp.bfloat16)                      # [H, 14]
    b_out = params["b_out"].astype(jnp.float32)                       # [1, 14]
    # 2x2-block pair matrix: (a*a) @ pair -> per-pair sum of squares
    idx = jnp.arange(OUT_DIM)
    pair = (idx[:, None] // 2 == idx[None, :] // 2).astype(jnp.float32)
    return {"w_in": w_in, "b_in": b_in, "conv_w": conv_w,
            "w_out": w_out, "b_out": b_out, "pair": pair}


def _sidechain_pallas(s_cur, s_init, prep, buffered_weights):
    B, N, C = s_cur.shape
    H = SC_DIM_HIDDEN
    if N % 8 != 0:
        # TODO(synk): pad N to a multiple of 8 and mask conv / InstanceNorm tails.
        raise NotImplementedError("SideChain1D Pallas kernel requires N % 8 == 0")
    Bt, vmem_limit = _choose_tiling(B, N)
    grid = (B // Bt,)

    def w_spec(shape):
        nd = len(shape)
        def idx_map(g):
            return (0,) * nd
        if buffered_weights:
            # constant index_map -> single VMEM buffer is enough
            return pl.BlockSpec(shape, idx_map, pipeline_mode=pl.Buffered(1))
        return pl.BlockSpec(shape, idx_map)

    def io_spec(last):
        return pl.BlockSpec((Bt, N, last), lambda g: (g, 0, 0))

    a_unnorm, a_norm = pl.pallas_call(
        _sidechain_kernel,
        out_shape=(jax.ShapeDtypeStruct((B, N, OUT_DIM), jnp.float32),
                   jax.ShapeDtypeStruct((B, N, OUT_DIM), jnp.float32)),
        grid_spec=pltpu.PrefetchScalarGridSpec(
            num_scalar_prefetch=0,
            grid=grid,
            in_specs=[
                io_spec(C),                           # s_cur
                io_spec(C),                           # s_init
                w_spec((2 * C, H)),                   # fused input linear weight
                w_spec((1, H)),                       # fused input linear bias
                w_spec((NUM_BLOCKS * 2, H, 3 * H)),   # conv weights (taps on out-axis)
                w_spec((H, OUT_DIM)),                 # out linear weight
                w_spec((1, OUT_DIM)),                 # out linear bias
                w_spec((OUT_DIM, OUT_DIM)),           # pair matrix
            ],
            out_specs=(io_spec(OUT_DIM), io_spec(OUT_DIM)),
        ),
        compiler_params=pltpu.CompilerParams(
            dimension_semantics=("parallel",),
            vmem_limit_bytes=vmem_limit),
    )(s_cur, s_init, prep["w_in"], prep["b_in"], prep["conv_w"],
      prep["w_out"], prep["b_out"], prep["pair"])

    # cheap view reshapes only — no padded-output re-read
    return a_norm.reshape(B, N, 7, 2), a_unnorm.reshape(B, N, 7, 2)


@functools.partial(jax.jit, static_argnames=("buffered_weights",))
def sidechain1d_forward(s_cur, s_init, prep, buffered_weights=True):
    return _sidechain_pallas(s_cur, s_init, prep, buffered_weights)


# -------------------------- params / reference -------------------------------
def init_params(key):
    C, H = NODE_DIM_IN, SC_DIM_HIDDEN
    ks = jax.random.split(key, 7)
    scale = 0.05
    return {
        # nn.Linear weights stored pre-transposed: [in, out]
        "w_cur": scale * jax.random.normal(ks[0], (C, H), jnp.float32),
        "b_cur": scale * jax.random.normal(ks[1], (1, H), jnp.float32),
        "w_init": scale * jax.random.normal(ks[2], (C, H), jnp.float32),
        "b_init": scale * jax.random.normal(ks[3], (1, H), jnp.float32),
        # Conv1d weight [C_out, C_in, k] pre-transposed to
        # [block, conv_in_block, k, C_in, C_out]
        "conv_w": scale * jax.random.normal(
            ks[4], (NUM_BLOCKS, 2, 3, H, H), jnp.float32),
        "w_out": scale * jax.random.normal(ks[5], (H, OUT_DIM), jnp.float32),
        "b_out": scale * jax.random.normal(ks[6], (1, OUT_DIM), jnp.float32),
    }


def _reference_forward(s_cur, s_init, params):
    """Pure-JAX f32 reference (same assumed ResNet1DBlock semantics)."""
    x = (jnp.maximum(s_cur, 0.0) @ params["w_cur"] + params["b_cur"]
         + jnp.maximum(s_init, 0.0) @ params["w_init"] + params["b_init"])
    B, N, _ = x.shape

    def conv3(h, w):                       # w: [3, H_in, H_out]
        h_prev = jnp.pad(h, ((0, 0), (1, 0), (0, 0)))[:, :N]
        h_next = jnp.pad(h, ((0, 0), (0, 1), (0, 0)))[:, 1:]
        return h_prev @ w[0] + h @ w[1] + h_next @ w[2]

    def inorm(h):
        mu = jnp.mean(h, axis=1, keepdims=True)
        var = jnp.mean((h - mu) ** 2, axis=1, keepdims=True)
        return (h - mu) * jax.lax.rsqrt(var + EPS_IN)

    for i in range(NUM_BLOCKS):
        res = x
        y = jnp.maximum(inorm(conv3(x, params["conv_w"][i, 0])), 0.0)
        z = inorm(conv3(y, params["conv_w"][i, 1]))
        x = jnp.maximum(z + res, 0.0)

    a = jnp.maximum(x, 0.0) @ params["w_out"] + params["b_out"]
    return a.reshape(B, N, 7, 2)


if __name__ == "__main__":
    key = jax.random.PRNGKey(0)
    k_p, k_c, k_i = jax.random.split(key, 3)

    B, N = 2, 16
    s_cur = jax.random.normal(k_c, (B, N, NODE_DIM_IN), jnp.float32)
    s_init = jax.random.normal(k_i, (B, N, NODE_DIM_IN), jnp.float32)
    params = init_params(k_p)
    prep = prepare_params(params)            # weight fusion hoisted, done once

    try:
        a_norm, a_unnorm = sidechain1d_forward(s_cur, s_init, prep,
                                               buffered_weights=True)
        jax.block_until_ready((a_norm, a_unnorm))
    except Exception:
        # Fallback if this JAX build rejects pipeline_mode=pl.Buffered(1).
        a_norm, a_unnorm = sidechain1d_forward(s_cur, s_init, prep,
                                               buffered_weights=False)
        jax.block_until_ready((a_norm, a_unnorm))

    assert a_norm.shape == (B, N, 7, 2) and a_unnorm.shape == (B, N, 7, 2)

    # loose sanity check vs pure-JAX f32 reference (kernel matmuls run in bf16)
    ref = _reference_forward(s_cur, s_init, params)
    err_u = float(jnp.max(jnp.abs(a_unnorm - ref)))
    assert err_u < 0.1, f"a_unnorm max |err| = {err_u}"

    # fused F.normalize self-consistency (validates the pair-matrix trick)
    nrm = jnp.sqrt(jnp.sum(a_unnorm * a_unnorm, axis=-1, keepdims=True))
    ref_norm = a_unnorm / jnp.maximum(nrm, EPS_NORM)
    err_n = float(jnp.max(jnp.abs(a_norm - ref_norm)))
    assert err_n < 1e-2, f"a_norm max |err| = {err_n}"

    print("KERNEL_OK")
</pallas_src>

<mosaic_0001>
module attributes {stable_mosaic.version = 11 : i64} {
  func.func @_sidechain_kernel(%arg0: i32, %arg1: memref<1x16x128xf32, #tpu.memory_space<vmem>>, %arg2: memref<1x16x128xf32, #tpu.memory_space<vmem>>, %arg3: memref<256x128xbf16, #tpu.memory_space<vmem>>, %arg4: memref<1x128xf32, #tpu.memory_space<vmem>>, %arg5: memref<8x128x384xbf16, #tpu.memory_space<vmem>>, %arg6: memref<128x14xbf16, #tpu.memory_space<vmem>>, %arg7: memref<1x14xf32, #tpu.memory_space<vmem>>, %arg8: memref<14x14xf32, #tpu.memory_space<vmem>>, %arg9: memref<1x16x14xf32, #tpu.memory_space<vmem>>, %arg10: memref<1x16x14xf32, #tpu.memory_space<vmem>>) attributes {dimension_semantics = [#tpu.dimension_semantics<parallel>], iteration_bounds = array<i64: 2>, scalar_prefetch = 0 : i64, scratch_operands = 0 : i64, tpu.core_type = #tpu.core_type<tc>, window_params = [{transform_indices = @transform_0, window_bounds = array<i64: 1, 16, 128>}, {transform_indices = @transform_1, window_bounds = array<i64: 1, 16, 128>}, {pipeline_mode = #tpu.pipeline_mode<synchronous>, transform_indices = @transform_2, window_bounds = array<i64: 256, 128>}, {pipeline_mode = #tpu.pipeline_mode<synchronous>, transform_indices = @transform_3, window_bounds = array<i64: 1, 128>}, {pipeline_mode = #tpu.pipeline_mode<synchronous>, transform_indices = @transform_4, window_bounds = array<i64: 8, 128, 384>}, {pipeline_mode = #tpu.pipeline_mode<synchronous>, transform_indices = @transform_5, window_bounds = array<i64: 128, 14>}, {pipeline_mode = #tpu.pipeline_mode<synchronous>, transform_indices = @transform_6, window_bounds = array<i64: 1, 14>}, {pipeline_mode = #tpu.pipeline_mode<synchronous>, transform_indices = @transform_7, window_bounds = array<i64: 14, 14>}, {transform_indices = @transform_8, window_bounds = array<i64: 1, 16, 14>}, {transform_indices = @transform_9, window_bounds = array<i64: 1, 16, 14>}]} {
    %c0 = arith.constant 0 : index
    %c0_0 = arith.constant 0 : index
    %c0_1 = arith.constant 0 : index
    %0 = vector.load %arg1[%c0, %c0_0, %c0_1] : memref<1x16x128xf32, #tpu.memory_space<vmem>>, vector<1x16x128xf32>
    %1 = vector.shape_cast %0 : vector<1x16x128xf32> to vector<16x128xf32>
    %cst = arith.constant 0.000000e+00 : f32
    %2 = vector.broadcast %cst : f32 to vector<16x128xf32>
    %3 = arith.maximumf %1, %2 : vector<16x128xf32>
    %c0_2 = arith.constant 0 : index
    %c0_3 = arith.constant 0 : index
    %c0_4 = arith.constant 0 : index
    %4 = vector.load %arg2[%c0_2, %c0_3, %c0_4] : memref<1x16x128xf32, #tpu.memory_space<vmem>>, vector<1x16x128xf32>
    %5 = vector.shape_cast %4 : vector<1x16x128xf32> to vector<16x128xf32>
    %cst_5 = arith.constant 0.000000e+00 : f32
    %6 = vector.broadcast %cst_5 : f32 to vector<16x128xf32>
    %7 = arith.maximumf %5, %6 : vector<16x128xf32>
    %8 = tpu.concatenate %3, %7 in 1 : vector<16x128xf32>, vector<16x128xf32> -> vector<16x256xf32>
    %9 = arith.truncf %8 : vector<16x256xf32> to vector<16x256xbf16>
    %c0_6 = arith.constant 0 : index
    %c0_7 = arith.constant 0 : index
    %10 = vector.load %arg3[%c0_6, %c0_7] : memref<256x128xbf16, #tpu.memory_space<vmem>>, vector<256x128xbf16>
    %cst_8 = arith.constant dense<0.000000e+00> : vector<16x128xf32>
    %11 = tpu.matmul %9, %10, %cst_8 {dimension_numbers = #tpu.dot_dimension_numbers<[1], [0], [0], [1], [0, 0, 1, 1], [], []>} : vector<16x256xbf16>, vector<256x128xbf16>, vector<16x128xf32> -> vector<16x128xf32>
    %c0_9 = arith.constant 0 : index
    %c0_10 = arith.constant 0 : index
    %12 = vector.load %arg4[%c0_9, %c0_10] : memref<1x128xf32, #tpu.memory_space<vmem>>, vector<1x128xf32>
    %13 = vector.broadcast %12 : vector<1x128xf32> to vector<16x128xf32>
    %14 = arith.addf %11, %13 : vector<16x128xf32>
    %15 = tpu.iota {dimensions = array<i32: 1>} : vector<1x16x1xi32>
    %16 = vector.shape_cast %15 : vector<1x16x1xi32> to vector<16x1xi32>
    %c0_i32 = arith.constant 0 : i32
    %17 = vector.broadcast %c0_i32 : i32 to vector<16x1xi32>
    %18 = arith.cmpi eq, %16, %17 : vector<16x1xi32>
    %c15_i32 = arith.constant 15 : i32
    %19 = vector.broadcast %c15_i32 : i32 to vector<16x1xi32>
    %20 = arith.cmpi eq, %16, %19 : vector<16x1xi32>
    %c0_11 = arith.constant 0 : index
    %c0_12 = arith.constant 0 : index
    %c0_13 = arith.constant 0 : index
    %21 = vector.load %arg5[%c0_11, %c0_12, %c0_13] : memref<8x128x384xbf16, #tpu.memory_space<vmem>>, vector<1x128x384xbf16>
    %22 = vector.shape_cast %21 : vector<1x128x384xbf16> to vector<128x384xbf16>
    %23 = arith.truncf %14 : vector<16x128xf32> to vector<16x128xbf16>
    %cst_14 = arith.constant dense<0.000000e+00> : vector<16x384xf32>
    %24 = tpu.matmul %23, %22, %cst_14 {dimension_numbers = #tpu.dot_dimension_numbers<[1], [0], [0], [1], [0, 0, 1, 1], [], []>} : vector<16x128xbf16>, vector<128x384xbf16>, vector<16x384xf32> -> vector<16x384xf32>
    %25 = vector.extract_strided_slice %24 {offsets = [0, 0], sizes = [16, 128], strides = [1, 1]} : vector<16x384xf32> to vector<16x128xf32>
    %26 = vector.extract_strided_slice %24 {offsets = [0, 128], sizes = [16, 128], strides = [1, 1]} : vector<16x384xf32> to vector<16x128xf32>
    %27 = vector.extract_strided_slice %24 {offsets = [0, 256], sizes = [16, 128], strides = [1, 1]} : vector<16x384xf32> to vector<16x128xf32>
    %c1_i32 = arith.constant 1 : i32
    %28 = tpu.dynamic_rotate %25 by %c1_i32 dim 0 : vector<16x128xf32>, i32 -> vector<16x128xf32>
    %cst_15 = arith.constant 0.000000e+00 : f32
    %29 = vector.shape_cast %18 : vector<16x1xi1> to vector<16x1xi1>
    %30 = vector.broadcast %29 : vector<16x1xi1> to vector<16x128xi1>
    %31 = vector.broadcast %cst_15 : f32 to vector<16x128xf32>
    %32 = arith.select %30, %31, %28 : vector<16x128xi1>, vector<16x128xf32>
    %c15_i32_16 = arith.constant 15 : i32
    %33 = tpu.dynamic_rotate %27 by %c15_i32_16 dim 0 : vector<16x128xf32>, i32 -> vector<16x128xf32>
    %cst_17 = arith.constant 0.000000e+00 : f32
    %34 = vector.shape_cast %20 : vector<16x1xi1> to vector<16x1xi1>
    %35 = vector.broadcast %34 : vector<16x1xi1> to vector<16x128xi1>
    %36 = vector.broadcast %cst_17 : f32 to vector<16x128xf32>
    %37 = arith.select %35, %36, %33 : vector<16x128xi1>, vector<16x128xf32>
    %38 = arith.addf %26, %32 : vector<16x128xf32>
    %39 = arith.addf %38, %37 : vector<16x128xf32>
    %40 = vector.shape_cast %39 : vector<16x128xf32> to vector<1x16x128xf32>
    %cst_18 = arith.constant dense<0.000000e+00> : vector<1x128xf32>
    %41 = vector.multi_reduction <add>, %40, %cst_18 [1] : vector<1x16x128xf32> to vector<1x128xf32>
    %42 = vector.shape_cast %41 : vector<1x128xf32> to vector<1x1x128xf32>
    %43 = arith.mulf %40, %40 : vector<1x16x128xf32>
    %cst_19 = arith.constant dense<0.000000e+00> : vector<1x128xf32>
    %44 = vector.multi_reduction <add>, %43, %cst_19 [1] : vector<1x16x128xf32> to vector<1x128xf32>
    %45 = vector.shape_cast %44 : vector<1x128xf32> to vector<1x1x128xf32>
    %cst_20 = arith.constant 6.250000e-02 : f32
    %46 = vector.broadcast %cst_20 : f32 to vector<1x1x128xf32>
    %47 = arith.mulf %42, %46 : vector<1x1x128xf32>
    %cst_21 = arith.constant 6.250000e-02 : f32
    %48 = vector.broadcast %cst_21 : f32 to vector<1x1x128xf32>
    %49 = arith.mulf %45, %48 : vector<1x1x128xf32>
    %50 = arith.mulf %47, %47 : vector<1x1x128xf32>
    %51 = arith.subf %49, %50 : vector<1x1x128xf32>
    %cst_22 = arith.constant 0.000000e+00 : f32
    %52 = vector.broadcast %cst_22 : f32 to vector<1x1x128xf32>
    %53 = arith.maximumf %51, %52 : vector<1x1x128xf32>
    %54 = vector.broadcast %47 : vector<1x1x128xf32> to vector<1x16x128xf32>
    %55 = arith.subf %40, %54 : vector<1x16x128xf32>
    %cst_23 = arith.constant 9.99999974E-6 : f32
    %56 = vector.broadcast %cst_23 : f32 to vector<1x1x128xf32>
    %57 = arith.addf %53, %56 : vector<1x1x128xf32>
    %58 = math.rsqrt %57 : vector<1x1x128xf32>
    %59 = vector.broadcast %58 : vector<1x1x128xf32> to vector<1x16x128xf32>
    %60 = arith.mulf %55, %59 : vector<1x16x128xf32>
    %61 = vector.shape_cast %60 : vector<1x16x128xf32> to vector<16x128xf32>
    %cst_24 = arith.constant 0.000000e+00 : f32
    %62 = vector.broadcast %cst_24 : f32 to vector<16x128xf32>
    %63 = arith.maximumf %61, %62 : vector<16x128xf32>
    %c1 = arith.constant 1 : index
    %c0_25 = arith.constant 0 : index
    %c0_26 = arith.constant 0 : index
    %64 = vector.load %arg5[%c1, %c0_25, %c0_26] : memref<8x128x384xbf16, #tpu.memory_space<vmem>>, vector<1x128x384xbf16>
    %65 = vector.shape_cast %64 : vector<1x128x384xbf16> to vector<128x384xbf16>
    %66 = arith.truncf %63 : vector<16x128xf32> to vector<16x128xbf16>
    %cst_27 = arith.constant dense<0.000000e+00> : vector<16x384xf32>
    %67 = tpu.matmul %66, %65, %cst_27 {dimension_numbers = #tpu.dot_dimension_numbers<[1], [0], [0], [1], [0, 0, 1, 1], [], []>} : vector<16x128xbf16>, vector<128x384xbf16>, vector<16x384xf32> -> vector<16x384xf32>
    %68 = vector.extract_strided_slice %67 {offsets = [0, 0], sizes = [16, 128], strides = [1, 1]} : vector<16x384xf32> to vector<16x128xf32>
    %69 = vector.extract_strided_slice %67 {offsets = [0, 128], sizes = [16, 128], strides = [1, 1]} : vector<16x384xf32> to vector<16x128xf32>
    %70 = vector.extract_strided_slice %67 {offsets = [0, 256], sizes = [16, 128], strides = [1, 1]} : vector<16x384xf32> to vector<16x128xf32>
    %c1_i32_28 = arith.constant 1 : i32
    %71 = tpu.dynamic_rotate %68 by %c1_i32_28 dim 0 : vector<16x128xf32>, i32 -> vector<16x128xf32>
    %cst_29 = arith.constant 0.000000e+00 : f32
    %72 = vector.shape_cast %18 : vector<16x1xi1> to vector<16x1xi1>
    %73 = vector.broadcast %72 : vector<16x1xi1> to vector<16x128xi1>
    %74 = vector.broadcast %cst_29 : f32 to vector<16x128xf32>
    %75 = arith.select %73, %74, %71 : vector<16x128xi1>, vector<16x128xf32>
    %c15_i32_30 = arith.constant 15 : i32
    %76 = tpu.dynamic_rotate %70 by %c15_i32_30 dim 0 : vector<16x128xf32>, i32 -> vector<16x128xf32>
    %cst_31 = arith.constant 0.000000e+00 : f32
    %77 = vector.shape_cast %20 : vector<16x1xi1> to vector<16x1xi1>
    %78 = vector.broadcast %77 : vector<16x1xi1> to vector<16x128xi1>
    %79 = vector.broadcast %cst_31 : f32 to vector<16x128xf32>
    %80 = arith.select %78, %79, %76 : vector<16x128xi1>, vector<16x128xf32>
    %81 = arith.addf %69, %75 : vector<16x128xf32>
    %82 = arith.addf %81, %80 : vector<16x128xf32>
    %83 = vector.shape_cast %82 : vector<16x128xf32> to vector<1x16x128xf32>
    %cst_32 = arith.constant dense<0.000000e+00> : vector<1x128xf32>
    %84 = vector.multi_reduction <add>, %83, %cst_32 [1] : vector<1x16x128xf32> to vector<1x128xf32>
    %85 = vector.shape_cast %84 : vector<1x128xf32> to vector<1x1x128xf32>
    %86 = arith.mulf %83, %83 : vector<1x16x128xf32>
    %cst_33 = arith.constant dense<0.000000e+00> : vector<1x128xf32>
    %87 = vector.multi_reduction <add>, %86, %cst_33 [1] : vector<1x16x128xf32> to vector<1x128xf32>
    %88 = vector.shape_cast %87 : vector<1x128xf32> to vector<1x1x128xf32>
    %cst_34 = arith.constant 6.250000e-02 : f32
    %89 = vector.broadcast %cst_34 : f32 to vector<1x1x128xf32>
    %90 = arith.mulf %85, %89 : vector<1x1x128xf32>
    %cst_35 = arith.constant 6.250000e-02 : f32
    %91 = vector.broadcast %cst_35 : f32 to vector<1x1x128xf32>
    %92 = arith.mulf %88, %91 : vector<1x1x128xf32>
    %93 = arith.mulf %90, %90 : vector<1x1x128xf32>
    %94 = arith.subf %92, %93 : vector<1x1x128xf32>
    %cst_36 = arith.constant 0.000000e+00 : f32
    %95 = vector.broadcast %cst_36 : f32 to vector<1x1x128xf32>
    %96 = arith.maximumf %94, %95 : vector<1x1x128xf32>
    %97 = vector.broadcast %90 : vector<1x1x128xf32> to vector<1x16x128xf32>
    %98 = arith.subf %83, %97 : vector<1x16x128xf32>
    %cst_37 = arith.constant 9.99999974E-6 : f32
    %99 = vector.broadcast %cst_37 : f32 to vector<1x1x128xf32>
    %100 = arith.addf %96, %99 : vector<1x1x128xf32>
    %101 = math.rsqrt %100 : vector<1x1x128xf32>
    %102 = vector.broadcast %101 : vector<1x1x128xf32> to vector<1x16x128xf32>
    %103 = arith.mulf %98, %102 : vector<1x16x128xf32>
    %104 = vector.shape_cast %103 : vector<1x16x128xf32> to vector<16x128xf32>
    %105 = arith.addf %104, %14 : vector<16x128xf32>
    %cst_38 = arith.constant 0.000000e+00 : f32
    %106 = vector.broadcast %cst_38 : f32 to vector<16x128xf32>
    %107 = arith.maximumf %105, %106 : vector<16x128xf32>
    %c2 = arith.constant 2 : index
    %c0_39 = arith.constant 0 : index
    %c0_40 = arith.constant 0 : index
    %108 = vector.load %arg5[%c2, %c0_39, %c0_40] : memref<8x128x384xbf16, #tpu.memory_space<vmem>>, vector<1x128x384xbf16>
    %109 = vector.shape_cast %108 : vector<1x128x384xbf16> to vector<128x384xbf16>
    %110 = arith.truncf %107 : vector<16x128xf32> to vector<16x128xbf16>
    %cst_41 = arith.constant dense<0.000000e+00> : vector<16x384xf32>
    %111 = tpu.matmul %110, %109, %cst_41 {dimension_numbers = #tpu.dot_dimension_numbers<[1], [0], [0], [1], [0, 0, 1, 1], [], []>} : vector<16x128xbf16>, vector<128x384xbf16>, vector<16x384xf32> -> vector<16x384xf32>
    %112 = vector.extract_strided_slice %111 {offsets = [0, 0], sizes = [16, 128], strides = [1, 1]} : vector<16x384xf32> to vector<16x128xf32>
    %113 = vector.extract_strided_slice %111 {offsets = [0, 128], sizes = [16, 128], strides = [1, 1]} : vector<16x384xf32> to vector<16x128xf32>
    %114 = vector.extract_strided_slice %111 {offsets = [0, 256], sizes = [16, 128], strides = [1, 1]} : vector<16x384xf32> to vector<16x128xf32>
    %c1_i32_42 = arith.constant 1 : i32
    %115 = tpu.dynamic_rotate %112 by %c1_i32_42 dim 0 : vector<16x128xf32>, i32 -> vector<16x128xf32>
    %cst_43 = arith.constant 0.000000e+00 : f32
    %116 = vector.shape_cast %18 : vector<16x1xi1> to vector<16x1xi1>
    %117 = vector.broadcast %116 : vector<16x1xi1> to vector<16x128xi1>
    %118 = vector.broadcast %cst_43 : f32 to vector<16x128xf32>
    %119 = arith.select %117, %118, %115 : vector<16x128xi1>, vector<16x128xf32>
    %c15_i32_44 = arith.constant 15 : i32
    %120 = tpu.dynamic_rotate %114 by %c15_i32_44 dim 0 : vector<16x128xf32>, i32 -> vector<16x128xf32>
    %cst_45 = arith.constant 0.000000e+00 : f32
    %121 = vector.shape_cast %20 : vector<16x1xi1> to vector<16x1xi1>
    %122 = vector.broadcast %121 : vector<16x1xi1> to vector<16x128xi1>
    %123 = vector.broadcast %cst_45 : f32 to vector<16x128xf32>
    %124 = arith.select %122, %123, %120 : vector<16x128xi1>, vector<16x128xf32>
    %125 = arith.addf %113, %119 : vector<16x128xf32>
    %126 = arith.addf %125, %124 : vector<16x128xf32>
    %127 = vector.shape_cast %126 : vector<16x128xf32> to vector<1x16x128xf32>
    %cst_46 = arith.constant dense<0.000000e+00> : vector<1x128xf32>
    %128 = vector.multi_reduction <add>, %127, %cst_46 [1] : vector<1x16x128xf32> to vector<1x128xf32>
    %129 = vector.shape_cast %128 : vector<1x128xf32> to vector<1x1x128xf32>
    %130 = arith.mulf %127, %127 : vector<1x16x128xf32>
    %cst_47 = arith.constant dense<0.000000e+00> : vector<1x128xf32>
    %131 = vector.multi_reduction <add>, %130, %cst_47 [1] : vector<1x16x128xf32> to vector<1x128xf32>
    %132 = vector.shape_cast %131 : vector<1x128xf32> to vector<1x1x128xf32>
    %cst_48 = arith.constant 6.250000e-02 : f32
    %133 = vector.broadcast %cst_48 : f32 to vector<1x1x128xf32>
    %134 = arith.mulf %129, %133 : vector<1x1x128xf32>
    %cst_49 = arith.constant 6.250000e-02 : f32
    %135 = vector.broadcast %cst_49 : f32 to vector<1x1x128xf32>
    %136 = arith.mulf %132, %135 : vector<1x1x128xf32>
    %137 = arith.mulf %134, %134 : vector<1x1x128xf32>
    %138 = arith.subf %136, %137 : vector<1x1x128xf32>
    %cst_50 = arith.constant 0.000000e+00 : f32
    %139 = vector.broadcast %cst_50 : f32 to vector<1x1x128xf32>
    %140 = arith.maximumf %138, %139 : vector<1x1x128xf32>
    %141 = vector.broadcast %134 : vector<1x1x128xf32> to vector<1x16x128xf32>
    %142 = arith.subf %127, %141 : vector<1x16x128xf32>
    %cst_51 = arith.constant 9.99999974E-6 : f32
    %143 = vector.broadcast %cst_51 : f32 to vector<1x1x128xf32>
    %144 = arith.addf %140, %143 : vector<1x1x128xf32>
    %145 = math.rsqrt %144 : vector<1x1x128xf32>
    %146 = vector.broadcast %145 : vector<1x1x128xf32> to vector<1x16x128xf32>
    %147 = arith.mulf %142, %146 : vector<1x16x128xf32>
    %148 = vector.shape_cast %147 : vector<1x16x128xf32> to vector<16x128xf32>
    %cst_52 = arith.constant 0.000000e+00 : f32
    %149 = vector.broadcast %cst_52 : f32 to vector<16x128xf32>
    %150 = arith.maximumf %148, %149 : vector<16x128xf32>
    %c3 = arith.constant 3 : index
    %c0_53 = arith.constant 0 : index
    %c0_54 = arith.constant 0 : index
    %151 = vector.load %arg5[%c3, %c0_53, %c0_54] : memref<8x128x384xbf16, #tpu.memory_space<vmem>>, vector<1x128x384xbf16>
    %152 = vector.shape_cast %151 : vector<1x128x384xbf16> to vector<128x384xbf16>
    %153 = arith.truncf %150 : vector<16x128xf32> to vector<16x128xbf16>
    %cst_55 = arith.constant dense<0.000000e+00> : vector<16x384xf32>
    %154 = tpu.matmul %153, %152, %cst_55 {dimension_numbers = #tpu.dot_dimension_numbers<[1], [0], [0], [1], [0, 0, 1, 1], [], []>} : vector<16x128xbf16>, vector<128x384xbf16>, vector<16x384xf32> -> vector<16x384xf32>
    %155 = vector.extract_strided_slice %154 {offsets = [0, 0], sizes = [16, 128], strides = [1, 1]} : vector<16x384xf32> to vector<16x128xf32>
    %156 = vector.extract_strided_slice %154 {offsets = [0, 128], sizes = [16, 128], strides = [1, 1]} : vector<16x384xf32> to vector<16x128xf32>
    %157 = vector.extract_strided_slice %154 {offsets = [0, 256], sizes = [16, 128], strides = [1, 1]} : vector<16x384xf32> to vector<16x128xf32>
    %c1_i32_56 = arith.constant 1 : i32
    %158 = tpu.dynamic_rotate %155 by %c1_i32_56 dim 0 : vector<16x128xf32>, i32 -> vector<16x128xf32>
    %cst_57 = arith.constant 0.000000e+00 : f32
    %159 = vector.shape_cast %18 : vector<16x1xi1> to vector<16x1xi1>
    %160 = vector.broadcast %159 : vector<16x1xi1> to vector<16x128xi1>
    %161 = vector.broadcast %cst_57 : f32 to vector<16x128xf32>
    %162 = arith.select %160, %161, %158 : vector<16x128xi1>, vector<16x128xf32>
    %c15_i32_58 = arith.constant 15 : i32
    %163 = tpu.dynamic_rotate %157 by %c15_i32_58 dim 0 : vector<16x128xf32>, i32 -> vector<16x128xf32>
    %cst_59 = arith.constant 0.000000e+00 : f32
    %164 = vector.shape_cast %20 : vector<16x1xi1> to vector<16x1xi1>
    %165 = vector.broadcast %164 : vector<16x1xi1> to vector<16x128xi1>
    %166 = vector.broadcast %cst_59 : f32 to vector<16x128xf32>
    %167 = arith.select %165, %166, %163 : vector<16x128xi1>, vector<16x128xf32>
    %168 = arith.addf %156, %162 : vector<16x128xf32>
    %169 = arith.addf %168, %167 : vector<16x128xf32>
    %170 = vector.shape_cast %169 : vector<16x128xf32> to vector<1x16x128xf32>
    %cst_60 = arith.constant dense<0.000000e+00> : vector<1x128xf32>
    %171 = vector.multi_reduction <add>, %170, %cst_60 [1] : vector<1x16x128xf32> to vector<1x128xf32>
    %172 = vector.shape_cast %171 : vector<1x128xf32> to vector<1x1x128xf32>
    %173 = arith.mulf %170, %170 : vector<1x16x128xf32>
    %cst_61 = arith.constant dense<0.000000e+00> : vector<1x128xf32>
    %174 = vector.multi_reduction <add>, %173, %cst_61 [1] : vector<1x16x128xf32> to vector<1x128xf32>
    %175 = vector.shape_cast %174 : vector<1x128xf32> to vector<1x1x128xf32>
    %cst_62 = arith.constant 6.250000e-02 : f32
    %176 = vector.broadcast %cst_62 : f32 to vector<1x1x128xf32>
    %177 = arith.mulf %172, %176 : vector<1x1x128xf32>
    %cst_63 = arith.constant 6.250000e-02 : f32
    %178 = vector.broadcast %cst_63 : f32 to vector<1x1x128xf32>
    %179 = arith.mulf %175, %178 : vector<1x1x128xf32>
    %180 = arith.mulf %177, %177 : vector<1x1x128xf32>
    %181 = arith.subf %179, %180 : vector<1x1x128xf32>
    %cst_64 = arith.constant 0.000000e+00 : f32
    %182 = vector.broadcast %cst_64 : f32 to vector<1x1x128xf32>
    %183 = arith.maximumf %181, %182 : vector<1x1x128xf32>
    %184 = vector.broadcast %177 : vector<1x1x128xf32> to vector<1x16x128xf32>
    %185 = arith.subf %170, %184 : vector<1x16x128xf32>
    %cst_65 = arith.constant 9.99999974E-6 : f32
    %186 = vector.broadcast %cst_65 : f32 to vector<1x1x128xf32>
    %187 = arith.addf %183, %186 : vector<1x1x128xf32>
    %188 = math.rsqrt %187 : vector<1x1x128xf32>
    %189 = vector.broadcast %188 : vector<1x1x128xf32> to vector<1x16x128xf32>
    %190 = arith.mulf %185, %189 : vector<1x16x128xf32>
    %191 = vector.shape_cast %190 : vector<1x16x128xf32> to vector<16x128xf32>
    %192 = arith.addf %191, %107 : vector<16x128xf32>
    %cst_66 = arith.constant 0.000000e+00 : f32
    %193 = vector.broadcast %cst_66 : f32 to vector<16x128xf32>
    %194 = arith.maximumf %192, %193 : vector<16x128xf32>
    %c4 = arith.constant 4 : index
    %c0_67 = arith.constant 0 : index
    %c0_68 = arith.constant 0 : index
    %195 = vector.load %arg5[%c4, %c0_67, %c0_68] : memref<8x128x384xbf16, #tpu.memory_space<vmem>>, vector<1x128x384xbf16>
    %196 = vector.shape_cast %195 : vector<1x128x384xbf16> to vector<128x384xbf16>
    %197 = arith.truncf %194 : vector<16x128xf32> to vector<16x128xbf16>
    %cst_69 = arith.constant dense<0.000000e+00> : vector<16x384xf32>
    %198 = tpu.matmul %197, %196, %cst_69 {dimension_numbers = #tpu.dot_dimension_numbers<[1], [0], [0], [1], [0, 0, 1, 1], [], []>} : vector<16x128xbf16>, vector<128x384xbf16>, vector<16x384xf32> -> vector<16x384xf32>
    %199 = vector.extract_strided_slice %198 {offsets = [0, 0], sizes = [16, 128], strides = [1, 1]} : vector<16x384xf32> to vector<16x128xf32>
    %200 = vector.extract_strided_slice %198 {offsets = [0, 128], sizes = [16, 128], strides = [1, 1]} : vector<16x384xf32> to vector<16x128xf32>
    %201 = vector.extract_strided_slice %198 {offsets = [0, 256], sizes = [16, 128], strides = [1, 1]} : vector<16x384xf32> to vector<16x128xf32>
    %c1_i32_70 = arith.constant 1 : i32
    %202 = tpu.dynamic_rotate %199 by %c1_i32_70 dim 0 : vector<16x128xf32>, i32 -> vector<16x128xf32>
    %cst_71 = arith.constant 0.000000e+00 : f32
    %203 = vector.shape_cast %18 : vector<16x1xi1> to vector<16x1xi1>
    %204 = vector.broadcast %203 : vector<16x1xi1> to vector<16x128xi1>
    %205 = vector.broadcast %cst_71 : f32 to vector<16x128xf32>
    %206 = arith.select %204, %205, %202 : vector<16x128xi1>, vector<16x128xf32>
    %c15_i32_72 = arith.constant 15 : i32
    %207 = tpu.dynamic_rotate %201 by %c15_i32_72 dim 0 : vector<16x128xf32>, i32 -> vector<16x128xf32>
    %cst_73 = arith.constant 0.000000e+00 : f32
    %208 = vector.shape_cast %20 : vector<16x1xi1> to vector<16x1xi1>
    %209 = vector.broadcast %208 : vector<16x1xi1> to vector<16x128xi1>
    %210 = vector.broadcast %cst_73 : f32 to vector<16x128xf32>
    %211 = arith.select %209, %210, %207 : vector<16x128xi1>, vector<16x128xf32>
    %212 = arith.addf %200, %206 : vector<16x128xf32>
    %213 = arith.addf %212, %211 : vector<16x128xf32>
    %214 = vector.shape_cast %213 : vector<16x128xf32> to vector<1x16x128xf32>
    %cst_74 = arith.constant dense<0.000000e+00> : vector<1x128xf32>
    %215 = vector.multi_reduction <add>, %214, %cst_74 [1] : vector<1x16x128xf32> to vector<1x128xf32>
    %216 = vector.shape_cast %215 : vector<1x128xf32> to vector<1x1x128xf32>
    %217 = arith.mulf %214, %214 : vector<1x16x128xf32>
    %cst_75 = arith.constant dense<0.000000e+00> : vector<1x128xf32>
    %218 = vector.multi_reduction <add>, %217, %cst_75 [1] : vector<1x16x128xf32> to vector<1x128xf32>
    %219 = vector.shape_cast %218 : vector<1x128xf32> to vector<1x1x128xf32>
    %cst_76 = arith.constant 6.250000e-02 : f32
    %220 = vector.broadcast %cst_76 : f32 to vector<1x1x128xf32>
    %221 = arith.mulf %216, %220 : vector<1x1x128xf32>
    %cst_77 = arith.constant 6.250000e-02 : f32
    %222 = vector.broadcast %cst_77 : f32 to vector<1x1x128xf32>
    %223 = arith.mulf %219, %222 : vector<1x1x128xf32>
    %224 = arith.mulf %221, %221 : vector<1x1x128xf32>
    %225 = arith.subf %223, %224 : vector<1x1x128xf32>
    %cst_78 = arith.constant 0.000000e+00 : f32
    %226 = vector.broadcast %cst_78 : f32 to vector<1x1x128xf32>
    %227 = arith.maximumf %225, %226 : vector<1x1x128xf32>
    %228 = vector.broadcast %221 : vector<1x1x128xf32> to vector<1x16x128xf32>
    %229 = arith.subf %214, %228 : vector<1x16x128xf32>
    %cst_79 = arith.constant 9.99999974E-6 : f32
    %230 = vector.broadcast %cst_79 : f32 to vector<1x1x128xf32>
    %231 = arith.addf %227, %230 : vector<1x1x128xf32>
    %232 = math.rsqrt %231 : vector<1x1x128xf32>
    %233 = vector.broadcast %232 : vector<1x1x128xf32> to vector<1x16x128xf32>
    %234 = arith.mulf %229, %233 : vector<1x16x128xf32>
    %235 = vector.shape_cast %234 : vector<1x16x128xf32> to vector<16x128xf32>
    %cst_80 = arith.constant 0.000000e+00 : f32
    %236 = vector.broadcast %cst_80 : f32 to vector<16x128xf32>
    %237 = arith.maximumf %235, %236 : vector<16x128xf32>
    %c5 = arith.constant 5 : index
    %c0_81 = arith.constant 0 : index
    %c0_82 = arith.constant 0 : index
    %238 = vector.load %arg5[%c5, %c0_81, %c0_82] : memref<8x128x384xbf16, #tpu.memory_space<vmem>>, vector<1x128x384xbf16>
    %239 = vector.shape_cast %238 : vector<1x128x384xbf16> to vector<128x384xbf16>
    %240 = arith.truncf %237 : vector<16x128xf32> to vector<16x128xbf16>
    %cst_83 = arith.constant dense<0.000000e+00> : vector<16x384xf32>
    %241 = tpu.matmul %240, %239, %cst_83 {dimension_numbers = #tpu.dot_dimension_numbers<[1], [0], [0], [1], [0, 0, 1, 1], [], []>} : vector<16x128xbf16>, vector<128x384xbf16>, vector<16x384xf32> -> vector<16x384xf32>
    %242 = vector.extract_strided_slice %241 {offsets = [0, 0], sizes = [16, 128], strides = [1, 1]} : vector<16x384xf32> to vector<16x128xf32>
    %243 = vector.extract_strided_slice %241 {offsets = [0, 128], sizes = [16, 128], strides = [1, 1]} : vector<16x384xf32> to vector<16x128xf32>
    %244 = vector.extract_strided_slice %241 {offsets = [0, 256], sizes = [16, 128], strides = [1, 1]} : vector<16x384xf32> to vector<16x128xf32>
    %c1_i32_84 = arith.constant 1 : i32
    %245 = tpu.dynamic_rotate %242 by %c1_i32_84 dim 0 : vector<16x128xf32>, i32 -> vector<16x128xf32>
    %cst_85 = arith.constant 0.000000e+00 : f32
    %246 = vector.shape_cast %18 : vector<16x1xi1> to vector<16x1xi1>
    %247 = vector.broadcast %246 : vector<16x1xi1> to vector<16x128xi1>
    %248 = vector.broadcast %cst_85 : f32 to vector<16x128xf32>
    %249 = arith.select %247, %248, %245 : vector<16x128xi1>, vector<16x128xf32>
    %c15_i32_86 = arith.constant 15 : i32
    %250 = tpu.dynamic_rotate %244 by %c15_i32_86 dim 0 : vector<16x128xf32>, i32 -> vector<16x128xf32>
    %cst_87 = arith.constant 0.000000e+00 : f32
    %251 = vector.shape_cast %20 : vector<16x1xi1> to vector<16x1xi1>
    %252 = vector.broadcast %251 : vector<16x1xi1> to vector<16x128xi1>
    %253 = vector.broadcast %cst_87 : f32 to vector<16x128xf32>
    %254 = arith.select %252, %253, %250 : vector<16x128xi1>, vector<16x128xf32>
    %255 = arith.addf %243, %249 : vector<16x128xf32>
    %256 = arith.addf %255, %254 : vector<16x128xf32>
    %257 = vector.shape_cast %256 : vector<16x128xf32> to vector<1x16x128xf32>
    %cst_88 = arith.constant dense<0.000000e+00> : vector<1x128xf32>
    %258 = vector.multi_reduction <add>, %257, %cst_88 [1] : vector<1x16x128xf32> to vector<1x128xf32>
    %259 = vector.shape_cast %258 : vector<1x128xf32> to vector<1x1x128xf32>
    %260 = arith.mulf %257, %257 : vector<1x16x128xf32>
    %cst_89 = arith.constant dense<0.000000e+00> : vector<1x128xf32>
    %261 = vector.multi_reduction <add>, %260, %cst_89 [1] : vector<1x16x128xf32> to vector<1x128xf32>
    %262 = vector.shape_cast %261 : vector<1x128xf32> to vector<1x1x128xf32>
    %cst_90 = arith.constant 6.250000e-02 : f32
    %263 = vector.broadcast %cst_90 : f32 to vector<1x1x128xf32>
    %264 = arith.mulf %259, %263 : vector<1x1x128xf32>
    %cst_91 = arith.constant 6.250000e-02 : f32
    %265 = vector.broadcast %cst_91 : f32 to vector<1x1x128xf32>
    %266 = arith.mulf %262, %265 : vector<1x1x128xf32>
    %267 = arith.mulf %264, %264 : vector<1x1x128xf32>
    %268 = arith.subf %266, %267 : vector<1x1x128xf32>
    %cst_92 = arith.constant 0.000000e+00 : f32
    %269 = vector.broadcast %cst_92 : f32 to vector<1x1x128xf32>
    %270 = arith.maximumf %268, %269 : vector<1x1x128xf32>
    %271 = vector.broadcast %264 : vector<1x1x128xf32> to vector<1x16x128xf32>
    %272 = arith.subf %257, %271 : vector<1x16x128xf32>
    %cst_93 = arith.constant 9.99999974E-6 : f32
    %273 = vector.broadcast %cst_93 : f32 to vector<1x1x128xf32>
    %274 = arith.addf %270, %273 : vector<1x1x128xf32>
    %275 = math.rsqrt %274 : vector<1x1x128xf32>
    %276 = vector.broadcast %275 : vector<1x1x128xf32> to vector<1x16x128xf32>
    %277 = arith.mulf %272, %276 : vector<1x16x128xf32>
    %278 = vector.shape_cast %277 : vector<1x16x128xf32> to vector<16x128xf32>
    %279 = arith.addf %278, %194 : vector<16x128xf32>
    %cst_94 = arith.constant 0.000000e+00 : f32
    %280 = vector.broadcast %cst_94 : f32 to vector<16x128xf32>
    %281 = arith.maximumf %279, %280 : vector<16x128xf32>
    %c6 = arith.constant 6 : index
    %c0_95 = arith.constant 0 : index
    %c0_96 = arith.constant 0 : index
    %282 = vector.load %arg5[%c6, %c0_95, %c0_96] : memref<8x128x384xbf16, #tpu.memory_space<vmem>>, vector<1x128x384xbf16>
    %283 = vector.shape_cast %282 : vector<1x128x384xbf16> to vector<128x384xbf16>
    %284 = arith.truncf %281 : vector<16x128xf32> to vector<16x128xbf16>
    %cst_97 = arith.constant dense<0.000000e+00> : vector<16x384xf32>
    %285 = tpu.matmul %284, %283, %cst_97 {dimension_numbers = #tpu.dot_dimension_numbers<[1], [0], [0], [1], [0, 0, 1, 1], [], []>} : vector<16x128xbf16>, vector<128x384xbf16>, vector<16x384xf32> -> vector<16x384xf32>
    %286 = vector.extract_strided_slice %285 {offsets = [0, 0], sizes = [16, 128], strides = [1, 1]} : vector<16x384xf32> to vector<16x128xf32>
    %287 = vector.extract_strided_slice %285 {offsets = [0, 128], sizes = [16, 128], strides = [1, 1]} : vector<16x384xf32> to vector<16x128xf32>
    %288 = vector.extract_strided_slice %285 {offsets = [0, 256], sizes = [16, 128], strides = [1, 1]} : vector<16x384xf32> to vector<16x128xf32>
    %c1_i32_98 = arith.constant 1 : i32
    %289 = tpu.dynamic_rotate %286 by %c1_i32_98 dim 0 : vector<16x128xf32>, i32 -> vector<16x128xf32>
    %cst_99 = arith.constant 0.000000e+00 : f32
    %290 = vector.shape_cast %18 : vector<16x1xi1> to vector<16x1xi1>
    %291 = vector.broadcast %290 : vector<16x1xi1> to vector<16x128xi1>
    %292 = vector.broadcast %cst_99 : f32 to vector<16x128xf32>
    %293 = arith.select %291, %292, %289 : vector<16x128xi1>, vector<16x128xf32>
    %c15_i32_100 = arith.constant 15 : i32
    %294 = tpu.dynamic_rotate %288 by %c15_i32_100 dim 0 : vector<16x128xf32>, i32 -> vector<16x128xf32>
    %cst_101 = arith.constant 0.000000e+00 : f32
    %295 = vector.shape_cast %20 : vector<16x1xi1> to vector<16x1xi1>
    %296 = vector.broadcast %295 : vector<16x1xi1> to vector<16x128xi1>
    %297 = vector.broadcast %cst_101 : f32 to vector<16x128xf32>
    %298 = arith.select %296, %297, %294 : vector<16x128xi1>, vector<16x128xf32>
    %299 = arith.addf %287, %293 : vector<16x128xf32>
    %300 = arith.addf %299, %298 : vector<16x128xf32>
    %301 = vector.shape_cast %300 : vector<16x128xf32> to vector<1x16x128xf32>
    %cst_102 = arith.constant dense<0.000000e+00> : vector<1x128xf32>
    %302 = vector.multi_reduction <add>, %301, %cst_102 [1] : vector<1x16x128xf32> to vector<1x128xf32>
    %303 = vector.shape_cast %302 : vector<1x128xf32> to vector<1x1x128xf32>
    %304 = arith.mulf %301, %301 : vector<1x16x128xf32>
    %cst_103 = arith.constant dense<0.000000e+00> : vector<1x128xf32>
    %305 = vector.multi_reduction <add>, %304, %cst_103 [1] : vector<1x16x128xf32> to vector<1x128xf32>
    %306 = vector.shape_cast %305 : vector<1x128xf32> to vector<1x1x128xf32>
    %cst_104 = arith.constant 6.250000e-02 : f32
    %307 = vector.broadcast %cst_104 : f32 to vector<1x1x128xf32>
    %308 = arith.mulf %303, %307 : vector<1x1x128xf32>
    %cst_105 = arith.constant 6.250000e-02 : f32
    %309 = vector.broadcast %cst_105 : f32 to vector<1x1x128xf32>
    %310 = arith.mulf %306, %309 : vector<1x1x128xf32>
    %311 = arith.mulf %308, %308 : vector<1x1x128xf32>
    %312 = arith.subf %310, %311 : vector<1x1x128xf32>
    %cst_106 = arith.constant 0.000000e+00 : f32
    %313 = vector.broadcast %cst_106 : f32 to vector<1x1x128xf32>
    %314 = arith.maximumf %312, %313 : vector<1x1x128xf32>
    %315 = vector.broadcast %308 : vector<1x1x128xf32> to vector<1x16x128xf32>
    %316 = arith.subf %301, %315 : vector<1x16x128xf32>
    %cst_107 = arith.constant 9.99999974E-6 : f32
    %317 = vector.broadcast %cst_107 : f32 to vector<1x1x128xf32>
    %318 = arith.addf %314, %317 : vector<1x1x128xf32>
    %319 = math.rsqrt %318 : vector<1x1x128xf32>
    %320 = vector.broadcast %319 : vector<1x1x128xf32> to vector<1x16x128xf32>
    %321 = arith.mulf %316, %320 : vector<1x16x128xf32>
    %322 = vector.shape_cast %321 : vector<1x16x128xf32> to vector<16x128xf32>
    %cst_108 = arith.constant 0.000000e+00 : f32
    %323 = vector.broadcast %cst_108 : f32 to vector<16x128xf32>
    %324 = arith.maximumf %322, %323 : vector<16x128xf32>
    %c7 = arith.constant 7 : index
    %c0_109 = arith.constant 0 : index
    %c0_110 = arith.constant 0 : index
    %325 = vector.load %arg5[%c7, %c0_109, %c0_110] : memref<8x128x384xbf16, #tpu.memory_space<vmem>>, vector<1x128x384xbf16>
    %326 = vector.shape_cast %325 : vector<1x128x384xbf16> to vector<128x384xbf16>
    %327 = arith.truncf %324 : vector<16x128xf32> to vector<16x128xbf16>
    %cst_111 = arith.constant dense<0.000000e+00> : vector<16x384xf32>
    %328 = tpu.matmul %327, %326, %cst_111 {dimension_numbers = #tpu.dot_dimension_numbers<[1], [0], [0], [1], [0, 0, 1, 1], [], []>} : vector<16x128xbf16>, vector<128x384xbf16>, vector<16x384xf32> -> vector<16x384xf32>
    %329 = vector.extract_strided_slice %328 {offsets = [0, 0], sizes = [16, 128], strides = [1, 1]} : vector<16x384xf32> to vector<16x128xf32>
    %330 = vector.extract_strided_slice %328 {offsets = [0, 128], sizes = [16, 128], strides = [1, 1]} : vector<16x384xf32> to vector<16x128xf32>
    %331 = vector.extract_strided_slice %328 {offsets = [0, 256], sizes = [16, 128], strides = [1, 1]} : vector<16x384xf32> to vector<16x128xf32>
    %c1_i32_112 = arith.constant 1 : i32
    %332 = tpu.dynamic_rotate %329 by %c1_i32_112 dim 0 : vector<16x128xf32>, i32 -> vector<16x128xf32>
    %cst_113 = arith.constant 0.000000e+00 : f32
    %333 = vector.shape_cast %18 : vector<16x1xi1> to vector<16x1xi1>
    %334 = vector.broadcast %333 : vector<16x1xi1> to vector<16x128xi1>
    %335 = vector.broadcast %cst_113 : f32 to vector<16x128xf32>
    %336 = arith.select %334, %335, %332 : vector<16x128xi1>, vector<16x128xf32>
    %c15_i32_114 = arith.constant 15 : i32
    %337 = tpu.dynamic_rotate %331 by %c15_i32_114 dim 0 : vector<16x128xf32>, i32 -> vector<16x128xf32>
    %cst_115 = arith.constant 0.000000e+00 : f32
    %338 = vector.shape_cast %20 : vector<16x1xi1> to vector<16x1xi1>
    %339 = vector.broadcast %338 : vector<16x1xi1> to vector<16x128xi1>
    %340 = vector.broadcast %cst_115 : f32 to vector<16x128xf32>
    %341 = arith.select %339, %340, %337 : vector<16x128xi1>, vector<16x128xf32>
    %342 = arith.addf %330, %336 : vector<16x128xf32>
    %343 = arith.addf %342, %341 : vector<16x128xf32>
    %344 = vector.shape_cast %343 : vector<16x128xf32> to vector<1x16x128xf32>
    %cst_116 = arith.constant dense<0.000000e+00> : vector<1x128xf32>
    %345 = vector.multi_reduction <add>, %344, %cst_116 [1] : vector<1x16x128xf32> to vector<1x128xf32>
    %346 = vector.shape_cast %345 : vector<1x128xf32> to vector<1x1x128xf32>
    %347 = arith.mulf %344, %344 : vector<1x16x128xf32>
    %cst_117 = arith.constant dense<0.000000e+00> : vector<1x128xf32>
    %348 = vector.multi_reduction <add>, %347, %cst_117 [1] : vector<1x16x128xf32> to vector<1x128xf32>
    %349 = vector.shape_cast %348 : vector<1x128xf32> to vector<1x1x128xf32>
    %cst_118 = arith.constant 6.250000e-02 : f32
    %350 = vector.broadcast %cst_118 : f32 to vector<1x1x128xf32>
    %351 = arith.mulf %346, %350 : vector<1x1x128xf32>
    %cst_119 = arith.constant 6.250000e-02 : f32
    %352 = vector.broadcast %cst_119 : f32 to vector<1x1x128xf32>
    %353 = arith.mulf %349, %352 : vector<1x1x128xf32>
    %354 = arith.mulf %351, %351 : vector<1x1x128xf32>
    %355 = arith.subf %353, %354 : vector<1x1x128xf32>
    %cst_120 = arith.constant 0.000000e+00 : f32
    %356 = vector.broadcast %cst_120 : f32 to vector<1x1x128xf32>
    %357 = arith.maximumf %355, %356 : vector<1x1x128xf32>
    %358 = vector.broadcast %351 : vector<1x1x128xf32> to vector<1x16x128xf32>
    %359 = arith.subf %344, %358 : vector<1x16x128xf32>
    %cst_121 = arith.constant 9.99999974E-6 : f32
    %360 = vector.broadcast %cst_121 : f32 to vector<1x1x128xf32>
    %361 = arith.addf %357, %360 : vector<1x1x128xf32>
    %362 = math.rsqrt %361 : vector<1x1x128xf32>
    %363 = vector.broadcast %362 : vector<1x1x128xf32> to vector<1x16x128xf32>
    %364 = arith.mulf %359, %363 : vector<1x16x128xf32>
    %365 = vector.shape_cast %364 : vector<1x16x128xf32> to vector<16x128xf32>
    %366 = arith.addf %365, %281 : vector<16x128xf32>
    %cst_122 = arith.constant 0.000000e+00 : f32
    %367 = vector.broadcast %cst_122 : f32 to vector<16x128xf32>
    %368 = arith.maximumf %366, %367 : vector<16x128xf32>
    %cst_123 = arith.constant 0.000000e+00 : f32
    %369 = vector.broadcast %cst_123 : f32 to vector<16x128xf32>
    %370 = arith.maximumf %368, %369 : vector<16x128xf32>
    %371 = arith.truncf %370 : vector<16x128xf32> to vector<16x128xbf16>
    %c0_124 = arith.constant 0 : index
    %c0_125 = arith.constant 0 : index
    %372 = vector.load %arg6[%c0_124, %c0_125] : memref<128x14xbf16, #tpu.memory_space<vmem>>, vector<128x14xbf16>
    %cst_126 = arith.constant dense<0.000000e+00> : vector<16x14xf32>
    %373 = tpu.matmul %371, %372, %cst_126 {dimension_numbers = #tpu.dot_dimension_numbers<[1], [0], [0], [1], [0, 0, 1, 1], [], []>} : vector<16x128xbf16>, vector<128x14xbf16>, vector<16x14xf32> -> vector<16x14xf32>
    %c0_127 = arith.constant 0 : index
    %c0_128 = arith.constant 0 : index
    %374 = vector.load %arg7[%c0_127, %c0_128] : memref<1x14xf32, #tpu.memory_space<vmem>>, vector<1x14xf32>
    %375 = vector.broadcast %374 : vector<1x14xf32> to vector<16x14xf32>
    %376 = arith.addf %373, %375 : vector<16x14xf32>
    %377 = arith.mulf %376, %376 : vector<16x14xf32>
    %c0_129 = arith.constant 0 : index
    %c0_130 = arith.constant 0 : index
    %378 = vector.load %arg8[%c0_129, %c0_130] : memref<14x14xf32, #tpu.memory_space<vmem>>, vector<14x14xf32>
    %cst_131 = arith.constant dense<0.000000e+00> : vector<16x14xf32>
    %379 = tpu.matmul %377, %378, %cst_131 {dimension_numbers = #tpu.dot_dimension_numbers<[1], [0], [0], [1], [0, 0, 1, 1], [], []>} : vector<16x14xf32>, vector<14x14xf32>, vector<16x14xf32> -> vector<16x14xf32>
    %380 = math.sqrt %379 : vector<16x14xf32>
    %cst_132 = arith.constant 9.99999996E-13 : f32
    %381 = vector.broadcast %cst_132 : f32 to vector<16x14xf32>
    %382 = arith.maximumf %380, %381 : vector<16x14xf32>
    %383 = arith.divf %376, %382 : vector<16x14xf32>
    %384 = vector.shape_cast %376 : vector<16x14xf32> to vector<1x16x14xf32>
    %c0_133 = arith.constant 0 : index
    %c0_134 = arith.constant 0 : index
    %c0_135 = arith.constant 0 : index
    %385 = vector.load %arg9[%c0_133, %c0_134, %c0_135] : memref<1x16x14xf32, #tpu.memory_space<vmem>>, vector<1x16x14xf32>
    tpu.vector_store %arg9[%c0_133, %c0_134, %c0_135], %384 {strides = array<i32>} : memref<1x16x14xf32, #tpu.memory_space<vmem>>, vector<1x16x14xf32>,
    %386 = vector.shape_cast %383 : vector<16x14xf32> to vector<1x16x14xf32>
    %c0_136 = arith.constant 0 : index
    %c0_137 = arith.constant 0 : index
    %c0_138 = arith.constant 0 : index
    %387 = vector.load %arg10[%c0_136, %c0_137, %c0_138] : memref<1x16x14xf32, #tpu.memory_space<vmem>>, vector<1x16x14xf32>
    tpu.vector_store %arg10[%c0_136, %c0_137, %c0_138], %386 {strides = array<i32>} : memref<1x16x14xf32, #tpu.memory_space<vmem>>, vector<1x16x14xf32>,
    return
  }
  func.func @transform_0(%arg0: i32) -> (i32, i32, i32) {
    %c0_i32 = arith.constant 0 : i32
    %c0_i32_0 = arith.constant 0 : i32
    %c0_i32_1 = arith.constant 0 : i32
    return %arg0, %c0_i32, %c0_i32_0 : i32, i32, i32
  }
  func.func @transform_1(%arg0: i32) -> (i32, i32, i32) {
    %c0_i32 = arith.constant 0 : i32
    %c0_i32_0 = arith.constant 0 : i32
    %c0_i32_1 = arith.constant 0 : i32
    return %arg0, %c0_i32, %c0_i32_0 : i32, i32, i32
  }
  func.func @transform_2(%arg0: i32) -> (i32, i32) {
    %c0_i32 = arith.constant 0 : i32
    %c0_i32_0 = arith.constant 0 : i32
    %c0_i32_1 = arith.constant 0 : i32
    return %c0_i32, %c0_i32_0 : i32, i32
  }
  func.func @transform_3(%arg0: i32) -> (i32, i32) {
    %c0_i32 = arith.constant 0 : i32
    %c0_i32_0 = arith.constant 0 : i32
    %c0_i32_1 = arith.constant 0 : i32
    return %c0_i32, %c0_i32_0 : i32, i32
  }
  func.func @transform_4(%arg0: i32) -> (i32, i32, i32) {
    %c0_i32 = arith.constant 0 : i32
    %c0_i32_0 = arith.constant 0 : i32
    %c0_i32_1 = arith.constant 0 : i32
    %c0_i32_2 = arith.constant 0 : i32
    return %c0_i32, %c0_i32_0, %c0_i32_1 : i32, i32, i32
  }
  func.func @transform_5(%arg0: i32) -> (i32, i32) {
    %c0_i32 = arith.constant 0 : i32
    %c0_i32_0 = arith.constant 0 : i32
    %c0_i32_1 = arith.constant 0 : i32
    return %c0_i32, %c0_i32_0 : i32, i32
  }
  func.func @transform_6(%arg0: i32) -> (i32, i32) {
    %c0_i32 = arith.constant 0 : i32
    %c0_i32_0 = arith.constant 0 : i32
    %c0_i32_1 = arith.constant 0 : i32
    return %c0_i32, %c0_i32_0 : i32, i32
  }
  func.func @transform_7(%arg0: i32) -> (i32, i32) {
    %c0_i32 = arith.constant 0 : i32
    %c0_i32_0 = arith.constant 0 : i32
    %c0_i32_1 = arith.constant 0 : i32
    return %c0_i32, %c0_i32_0 : i32, i32
  }
  func.func @transform_8(%arg0: i32) -> (i32, i32, i32) {
    %c0_i32 = arith.constant 0 : i32
    %c0_i32_0 = arith.constant 0 : i32
    %c0_i32_1 = arith.constant 0 : i32
    return %arg0, %c0_i32, %c0_i32_0 : i32, i32, i32
  }
  func.func @transform_9(%arg0: i32) -> (i32, i32, i32) {
    %c0_i32 = arith.constant 0 : i32
    %c0_i32_0 = arith.constant 0 : i32
    %c0_i32_1 = arith.constant 0 : i32
    return %arg0, %c0_i32, %c0_i32_0 : i32, i32, i32
  }
}

module attributes {stable_mosaic.version = 11 : i64} {
  func.func @_sidechain_kernel(%arg0: i32, %arg1: memref<1x16x128xf32, #tpu.memory_space<vmem>>, %arg2: memref<1x16x128xf32, #tpu.memory_space<vmem>>, %arg3: memref<256x128xbf16, #tpu.memory_space<vmem>>, %arg4: memref<1x128xf32, #tpu.memory_space<vmem>>, %arg5: memref<8x128x384xbf16, #tpu.memory_space<vmem>>, %arg6: memref<128x14xbf16, #tpu.memory_space<vmem>>, %arg7: memref<1x14xf32, #tpu.memory_space<vmem>>, %arg8: memref<14x14xf32, #tpu.memory_space<vmem>>, %arg9: memref<1x16x14xf32, #tpu.memory_space<vmem>>, %arg10: memref<1x16x14xf32, #tpu.memory_space<vmem>>) attributes {dimension_semantics = [#tpu.dimension_semantics<parallel>], iteration_bounds = array<i64: 2>, scalar_prefetch = 0 : i64, scratch_operands = 0 : i64, tpu.core_type = #tpu.core_type<tc>, window_params = [{transform_indices = @transform_0, window_bounds = array<i64: 1, 16, 128>}, {transform_indices = @transform_1, window_bounds = array<i64: 1, 16, 128>}, {pipeline_mode = #tpu.pipeline_mode<synchronous>, transform_indices = @transform_2, window_bounds = array<i64: 256, 128>}, {pipeline_mode = #tpu.pipeline_mode<synchronous>, transform_indices = @transform_3, window_bounds = array<i64: 1, 128>}, {pipeline_mode = #tpu.pipeline_mode<synchronous>, transform_indices = @transform_4, window_bounds = array<i64: 8, 128, 384>}, {pipeline_mode = #tpu.pipeline_mode<synchronous>, transform_indices = @transform_5, window_bounds = array<i64: 128, 14>}, {pipeline_mode = #tpu.pipeline_mode<synchronous>, transform_indices = @transform_6, window_bounds = array<i64: 1, 14>}, {pipeline_mode = #tpu.pipeline_mode<synchronous>, transform_indices = @transform_7, window_bounds = array<i64: 14, 14>}, {transform_indices = @transform_8, window_bounds = array<i64: 1, 16, 14>}, {transform_indices = @transform_9, window_bounds = array<i64: 1, 16, 14>}]} {
    %c0 = arith.constant 0 : index
    %c0_0 = arith.constant 0 : index
    %c0_1 = arith.constant 0 : index
    %0 = vector.load %arg1[%c0, %c0_0, %c0_1] : memref<1x16x128xf32, #tpu.memory_space<vmem>>, vector<1x16x128xf32>
    %1 = vector.shape_cast %0 : vector<1x16x128xf32> to vector<16x128xf32>
    %cst = arith.constant 0.000000e+00 : f32
    %2 = vector.broadcast %cst : f32 to vector<16x128xf32>
    %3 = arith.maximumf %1, %2 : vector<16x128xf32>
    %c0_2 = arith.constant 0 : index
    %c0_3 = arith.constant 0 : index
    %c0_4 = arith.constant 0 : index
    %4 = vector.load %arg2[%c0_2, %c0_3, %c0_4] : memref<1x16x128xf32, #tpu.memory_space<vmem>>, vector<1x16x128xf32>
    %5 = vector.shape_cast %4 : vector<1x16x128xf32> to vector<16x128xf32>
    %cst_5 = arith.constant 0.000000e+00 : f32
    %6 = vector.broadcast %cst_5 : f32 to vector<16x128xf32>
    %7 = arith.maximumf %5, %6 : vector<16x128xf32>
    %8 = tpu.concatenate %3, %7 in 1 : vector<16x128xf32>, vector<16x128xf32> -> vector<16x256xf32>
    %9 = arith.truncf %8 : vector<16x256xf32> to vector<16x256xbf16>
    %c0_6 = arith.constant 0 : index
    %c0_7 = arith.constant 0 : index
    %10 = vector.load %arg3[%c0_6, %c0_7] : memref<256x128xbf16, #tpu.memory_space<vmem>>, vector<256x128xbf16>
    %cst_8 = arith.constant dense<0.000000e+00> : vector<16x128xf32>
    %11 = tpu.matmul %9, %10, %cst_8 {dimension_numbers = #tpu.dot_dimension_numbers<[1], [0], [0], [1], [0, 0, 1, 1], [], []>} : vector<16x256xbf16>, vector<256x128xbf16>, vector<16x128xf32> -> vector<16x128xf32>
    %c0_9 = arith.constant 0 : index
    %c0_10 = arith.constant 0 : index
    %12 = vector.load %arg4[%c0_9, %c0_10] : memref<1x128xf32, #tpu.memory_space<vmem>>, vector<1x128xf32>
    %13 = vector.broadcast %12 : vector<1x128xf32> to vector<16x128xf32>
    %14 = arith.addf %11, %13 : vector<16x128xf32>
    %15 = tpu.iota {dimensions = array<i32: 1>} : vector<1x16x1xi32>
    %16 = vector.shape_cast %15 : vector<1x16x1xi32> to vector<16x1xi32>
    %c0_i32 = arith.constant 0 : i32
    %17 = vector.broadcast %c0_i32 : i32 to vector<16x1xi32>
    %18 = arith.cmpi eq, %16, %17 : vector<16x1xi32>
    %c15_i32 = arith.constant 15 : i32
    %19 = vector.broadcast %c15_i32 : i32 to vector<16x1xi32>
    %20 = arith.cmpi eq, %16, %19 : vector<16x1xi32>
    %c0_11 = arith.constant 0 : index
    %c0_12 = arith.constant 0 : index
    %c0_13 = arith.constant 0 : index
    %21 = vector.load %arg5[%c0_11, %c0_12, %c0_13] : memref<8x128x384xbf16, #tpu.memory_space<vmem>>, vector<1x128x384xbf16>
    %22 = vector.shape_cast %21 : vector<1x128x384xbf16> to vector<128x384xbf16>
    %23 = arith.truncf %14 : vector<16x128xf32> to vector<16x128xbf16>
    %cst_14 = arith.constant dense<0.000000e+00> : vector<16x384xf32>
    %24 = tpu.matmul %23, %22, %cst_14 {dimension_numbers = #tpu.dot_dimension_numbers<[1], [0], [0], [1], [0, 0, 1, 1], [], []>} : vector<16x128xbf16>, vector<128x384xbf16>, vector<16x384xf32> -> vector<16x384xf32>
    %25 = vector.extract_strided_slice %24 {offsets = [0, 0], sizes = [16, 128], strides = [1, 1]} : vector<16x384xf32> to vector<16x128xf32>
    %26 = vector.extract_strided_slice %24 {offsets = [0, 128], sizes = [16, 128], strides = [1, 1]} : vector<16x384xf32> to vector<16x128xf32>
    %27 = vector.extract_strided_slice %24 {offsets = [0, 256], sizes = [16, 128], strides = [1, 1]} : vector<16x384xf32> to vector<16x128xf32>
    %c1_i32 = arith.constant 1 : i32
    %28 = tpu.dynamic_rotate %25 by %c1_i32 dim 0 : vector<16x128xf32>, i32 -> vector<16x128xf32>
    %cst_15 = arith.constant 0.000000e+00 : f32
    %29 = vector.shape_cast %18 : vector<16x1xi1> to vector<16x1xi1>
    %30 = vector.broadcast %29 : vector<16x1xi1> to vector<16x128xi1>
    %31 = vector.broadcast %cst_15 : f32 to vector<16x128xf32>
    %32 = arith.select %30, %31, %28 : vector<16x128xi1>, vector<16x128xf32>
    %c15_i32_16 = arith.constant 15 : i32
    %33 = tpu.dynamic_rotate %27 by %c15_i32_16 dim 0 : vector<16x128xf32>, i32 -> vector<16x128xf32>
    %cst_17 = arith.constant 0.000000e+00 : f32
    %34 = vector.shape_cast %20 : vector<16x1xi1> to vector<16x1xi1>
    %35 = vector.broadcast %34 : vector<16x1xi1> to vector<16x128xi1>
    %36 = vector.broadcast %cst_17 : f32 to vector<16x128xf32>
    %37 = arith.select %35, %36, %33 : vector<16x128xi1>, vector<16x128xf32>
    %38 = arith.addf %26, %32 : vector<16x128xf32>
    %39 = arith.addf %38, %37 : vector<16x128xf32>
    %40 = vector.shape_cast %39 : vector<16x128xf32> to vector<1x16x128xf32>
    %cst_18 = arith.constant dense<0.000000e+00> : vector<1x128xf32>
    %41 = vector.multi_reduction <add>, %40, %cst_18 [1] : vector<1x16x128xf32> to vector<1x128xf32>
    %42 = vector.shape_cast %41 : vector<1x128xf32> to vector<1x1x128xf32>
    %43 = arith.mulf %40, %40 : vector<1x16x128xf32>
    %cst_19 = arith.constant dense<0.000000e+00> : vector<1x128xf32>
    %44 = vector.multi_reduction <add>, %43, %cst_19 [1] : vector<1x16x128xf32> to vector<1x128xf32>
    %45 = vector.shape_cast %44 : vector<1x128xf32> to vector<1x1x128xf32>
    %cst_20 = arith.constant 6.250000e-02 : f32
    %46 = vector.broadcast %cst_20 : f32 to vector<1x1x128xf32>
    %47 = arith.mulf %42, %46 : vector<1x1x128xf32>
    %cst_21 = arith.constant 6.250000e-02 : f32
    %48 = vector.broadcast %cst_21 : f32 to vector<1x1x128xf32>
    %49 = arith.mulf %45, %48 : vector<1x1x128xf32>
    %50 = arith.mulf %47, %47 : vector<1x1x128xf32>
    %51 = arith.subf %49, %50 : vector<1x1x128xf32>
    %cst_22 = arith.constant 0.000000e+00 : f32
    %52 = vector.broadcast %cst_22 : f32 to vector<1x1x128xf32>
    %53 = arith.maximumf %51, %52 : vector<1x1x128xf32>
    %54 = vector.broadcast %47 : vector<1x1x128xf32> to vector<1x16x128xf32>
    %55 = arith.subf %40, %54 : vector<1x16x128xf32>
    %cst_23 = arith.constant 9.99999974E-6 : f32
    %56 = vector.broadcast %cst_23 : f32 to vector<1x1x128xf32>
    %57 = arith.addf %53, %56 : vector<1x1x128xf32>
    %58 = math.rsqrt %57 : vector<1x1x128xf32>
    %59 = vector.broadcast %58 : vector<1x1x128xf32> to vector<1x16x128xf32>
    %60 = arith.mulf %55, %59 : vector<1x16x128xf32>
    %61 = vector.shape_cast %60 : vector<1x16x128xf32> to vector<16x128xf32>
    %cst_24 = arith.constant 0.000000e+00 : f32
    %62 = vector.broadcast %cst_24 : f32 to vector<16x128xf32>
    %63 = arith.maximumf %61, %62 : vector<16x128xf32>
    %c1 = arith.constant 1 : index
    %c0_25 = arith.constant 0 : index
    %c0_26 = arith.constant 0 : index
    %64 = vector.load %arg5[%c1, %c0_25, %c0_26] : memref<8x128x384xbf16, #tpu.memory_space<vmem>>, vector<1x128x384xbf16>
    %65 = vector.shape_cast %64 : vector<1x128x384xbf16> to vector<128x384xbf16>
    %66 = arith.truncf %63 : vector<16x128xf32> to vector<16x128xbf16>
    %cst_27 = arith.constant dense<0.000000e+00> : vector<16x384xf32>
    %67 = tpu.matmul %66, %65, %cst_27 {dimension_numbers = #tpu.dot_dimension_numbers<[1], [0], [0], [1], [0, 0, 1, 1], [], []>} : vector<16x128xbf16>, vector<128x384xbf16>, vector<16x384xf32> -> vector<16x384xf32>
    %68 = vector.extract_strided_slice %67 {offsets = [0, 0], sizes = [16, 128], strides = [1, 1]} : vector<16x384xf32> to vector<16x128xf32>
    %69 = vector.extract_strided_slice %67 {offsets = [0, 128], sizes = [16, 128], strides = [1, 1]} : vector<16x384xf32> to vector<16x128xf32>
    %70 = vector.extract_strided_slice %67 {offsets = [0, 256], sizes = [16, 128], strides = [1, 1]} : vector<16x384xf32> to vector<16x128xf32>
    %c1_i32_28 = arith.constant 1 : i32
    %71 = tpu.dynamic_rotate %68 by %c1_i32_28 dim 0 : vector<16x128xf32>, i32 -> vector<16x128xf32>
    %cst_29 = arith.constant 0.000000e+00 : f32
    %72 = vector.shape_cast %18 : vector<16x1xi1> to vector<16x1xi1>
    %73 = vector.broadcast %72 : vector<16x1xi1> to vector<16x128xi1>
    %74 = vector.broadcast %cst_29 : f32 to vector<16x128xf32>
    %75 = arith.select %73, %74, %71 : vector<16x128xi1>, vector<16x128xf32>
    %c15_i32_30 = arith.constant 15 : i32
    %76 = tpu.dynamic_rotate %70 by %c15_i32_30 dim 0 : vector<16x128xf32>, i32 -> vector<16x128xf32>
    %cst_31 = arith.constant 0.000000e+00 : f32
    %77 = vector.shape_cast %20 : vector<16x1xi1> to vector<16x1xi1>
    %78 = vector.broadcast %77 : vector<16x1xi1> to vector<16x128xi1>
    %79 = vector.broadcast %cst_31 : f32 to vector<16x128xf32>
    %80 = arith.select %78, %79, %76 : vector<16x128xi1>, vector<16x128xf32>
    %81 = arith.addf %69, %75 : vector<16x128xf32>
    %82 = arith.addf %81, %80 : vector<16x128xf32>
    %83 = vector.shape_cast %82 : vector<16x128xf32> to vector<1x16x128xf32>
    %cst_32 = arith.constant dense<0.000000e+00> : vector<1x128xf32>
    %84 = vector.multi_reduction <add>, %83, %cst_32 [1] : vector<1x16x128xf32> to vector<1x128xf32>
    %85 = vector.shape_cast %84 : vector<1x128xf32> to vector<1x1x128xf32>
    %86 = arith.mulf %83, %83 : vector<1x16x128xf32>
    %cst_33 = arith.constant dense<0.000000e+00> : vector<1x128xf32>
    %87 = vector.multi_reduction <add>, %86, %cst_33 [1] : vector<1x16x128xf32> to vector<1x128xf32>
    %88 = vector.shape_cast %87 : vector<1x128xf32> to vector<1x1x128xf32>
    %cst_34 = arith.constant 6.250000e-02 : f32
    %89 = vector.broadcast %cst_34 : f32 to vector<1x1x128xf32>
    %90 = arith.mulf %85, %89 : vector<1x1x128xf32>
    %cst_35 = arith.constant 6.250000e-02 : f32
    %91 = vector.broadcast %cst_35 : f32 to vector<1x1x128xf32>
    %92 = arith.mulf %88, %91 : vector<1x1x128xf32>
    %93 = arith.mulf %90, %90 : vector<1x1x128xf32>
    %94 = arith.subf %92, %93 : vector<1x1x128xf32>
    %cst_36 = arith.constant 0.000000e+00 : f32
    %95 = vector.broadcast %cst_36 : f32 to vector<1x1x128xf32>
    %96 = arith.maximumf %94, %95 : vector<1x1x128xf32>
    %97 = vector.broadcast %90 : vector<1x1x128xf32> to vector<1x16x128xf32>
    %98 = arith.subf %83, %97 : vector<1x16x128xf32>
    %cst_37 = arith.constant 9.99999974E-6 : f32
    %99 = vector.broadcast %cst_37 : f32 to vector<1x1x128xf32>
    %100 = arith.addf %96, %99 : vector<1x1x128xf32>
    %101 = math.rsqrt %100 : vector<1x1x128xf32>
    %102 = vector.broadcast %101 : vector<1x1x128xf32> to vector<1x16x128xf32>
    %103 = arith.mulf %98, %102 : vector<1x16x128xf32>
    %104 = vector.shape_cast %103 : vector<1x16x128xf32> to vector<16x128xf32>
    %105 = arith.addf %104, %14 : vector<16x128xf32>
    %cst_38 = arith.constant 0.000000e+00 : f32
    %106 = vector.broadcast %cst_38 : f32 to vector<16x128xf32>
    %107 = arith.maximumf %105, %106 : vector<16x128xf32>
    %c2 = arith.constant 2 : index
    %c0_39 = arith.constant 0 : index
    %c0_40 = arith.constant 0 : index
    %108 = vector.load %arg5[%c2, %c0_39, %c0_40] : memref<8x128x384xbf16, #tpu.memory_space<vmem>>, vector<1x128x384xbf16>
    %109 = vector.shape_cast %108 : vector<1x128x384xbf16> to vector<128x384xbf16>
    %110 = arith.truncf %107 : vector<16x128xf32> to vector<16x128xbf16>
    %cst_41 = arith.constant dense<0.000000e+00> : vector<16x384xf32>
    %111 = tpu.matmul %110, %109, %cst_41 {dimension_numbers = #tpu.dot_dimension_numbers<[1], [0], [0], [1], [0, 0, 1, 1], [], []>} : vector<16x128xbf16>, vector<128x384xbf16>, vector<16x384xf32> -> vector<16x384xf32>
    %112 = vector.extract_strided_slice %111 {offsets = [0, 0], sizes = [16, 128], strides = [1, 1]} : vector<16x384xf32> to vector<16x128xf32>
    %113 = vector.extract_strided_slice %111 {offsets = [0, 128], sizes = [16, 128], strides = [1, 1]} : vector<16x384xf32> to vector<16x128xf32>
    %114 = vector.extract_strided_slice %111 {offsets = [0, 256], sizes = [16, 128], strides = [1, 1]} : vector<16x384xf32> to vector<16x128xf32>
    %c1_i32_42 = arith.constant 1 : i32
    %115 = tpu.dynamic_rotate %112 by %c1_i32_42 dim 0 : vector<16x128xf32>, i32 -> vector<16x128xf32>
    %cst_43 = arith.constant 0.000000e+00 : f32
    %116 = vector.shape_cast %18 : vector<16x1xi1> to vector<16x1xi1>
    %117 = vector.broadcast %116 : vector<16x1xi1> to vector<16x128xi1>
    %118 = vector.broadcast %cst_43 : f32 to vector<16x128xf32>
    %119 = arith.select %117, %118, %115 : vector<16x128xi1>, vector<16x128xf32>
    %c15_i32_44 = arith.constant 15 : i32
    %120 = tpu.dynamic_rotate %114 by %c15_i32_44 dim 0 : vector<16x128xf32>, i32 -> vector<16x128xf32>
    %cst_45 = arith.constant 0.000000e+00 : f32
    %121 = vector.shape_cast %20 : vector<16x1xi1> to vector<16x1xi1>
    %122 = vector.broadcast %121 : vector<16x1xi1> to vector<16x128xi1>
    %123 = vector.broadcast %cst_45 : f32 to vector<16x128xf32>
    %124 = arith.select %122, %123, %120 : vector<16x128xi1>, vector<16x128xf32>
    %125 = arith.addf %113, %119 : vector<16x128xf32>
    %126 = arith.addf %125, %124 : vector<16x128xf32>
    %127 = vector.shape_cast %126 : vector<16x128xf32> to vector<1x16x128xf32>
    %cst_46 = arith.constant dense<0.000000e+00> : vector<1x128xf32>
    %128 = vector.multi_reduction <add>, %127, %cst_46 [1] : vector<1x16x128xf32> to vector<1x128xf32>
    %129 = vector.shape_cast %128 : vector<1x128xf32> to vector<1x1x128xf32>
    %130 = arith.mulf %127, %127 : vector<1x16x128xf32>
    %cst_47 = arith.constant dense<0.000000e+00> : vector<1x128xf32>
    %131 = vector.multi_reduction <add>, %130, %cst_47 [1] : vector<1x16x128xf32> to vector<1x128xf32>
    %132 = vector.shape_cast %131 : vector<1x128xf32> to vector<1x1x128xf32>
    %cst_48 = arith.constant 6.250000e-02 : f32
    %133 = vector.broadcast %cst_48 : f32 to vector<1x1x128xf32>
    %134 = arith.mulf %129, %133 : vector<1x1x128xf32>
    %cst_49 = arith.constant 6.250000e-02 : f32
    %135 = vector.broadcast %cst_49 : f32 to vector<1x1x128xf32>
    %136 = arith.mulf %132, %135 : vector<1x1x128xf32>
    %137 = arith.mulf %134, %134 : vector<1x1x128xf32>
    %138 = arith.subf %136, %137 : vector<1x1x128xf32>
    %cst_50 = arith.constant 0.000000e+00 : f32
    %139 = vector.broadcast %cst_50 : f32 to vector<1x1x128xf32>
    %140 = arith.maximumf %138, %139 : vector<1x1x128xf32>
    %141 = vector.broadcast %134 : vector<1x1x128xf32> to vector<1x16x128xf32>
    %142 = arith.subf %127, %141 : vector<1x16x128xf32>
    %cst_51 = arith.constant 9.99999974E-6 : f32
    %143 = vector.broadcast %cst_51 : f32 to vector<1x1x128xf32>
    %144 = arith.addf %140, %143 : vector<1x1x128xf32>
    %145 = math.rsqrt %144 : vector<1x1x128xf32>
    %146 = vector.broadcast %145 : vector<1x1x128xf32> to vector<1x16x128xf32>
    %147 = arith.mulf %142, %146 : vector<1x16x128xf32>
    %148 = vector.shape_cast %147 : vector<1x16x128xf32> to vector<16x128xf32>
    %cst_52 = arith.constant 0.000000e+00 : f32
    %149 = vector.broadcast %cst_52 : f32 to vector<16x128xf32>
    %150 = arith.maximumf %148, %149 : vector<16x128xf32>
    %c3 = arith.constant 3 : index
    %c0_53 = arith.constant 0 : index
    %c0_54 = arith.constant 0 : index
    %151 = vector.load %arg5[%c3, %c0_53, %c0_54] : memref<8x128x384xbf16, #tpu.memory_space<vmem>>, vector<1x128x384xbf16>
    %152 = vector.shape_cast %151 : vector<1x128x384xbf16> to vector<128x384xbf16>
    %153 = arith.truncf %150 : vector<16x128xf32> to vector<16x128xbf16>
    %cst_55 = arith.constant dense<0.000000e+00> : vector<16x384xf32>
    %154 = tpu.matmul %153, %152, %cst_55 {dimension_numbers = #tpu.dot_dimension_numbers<[1], [0], [0], [1], [0, 0, 1, 1], [], []>} : vector<16x128xbf16>, vector<128x384xbf16>, vector<16x384xf32> -> vector<16x384xf32>
    %155 = vector.extract_strided_slice %154 {offsets = [0, 0], sizes = [16, 128], strides = [1, 1]} : vector<16x384xf32> to vector<16x128xf32>
    %156 = vector.extract_strided_slice %154 {offsets = [0, 128], sizes = [16, 128], strides = [1, 1]} : vector<16x384xf32> to vector<16x128xf32>
    %157 = vector.extract_strided_slice %154 {offsets = [0, 256], sizes = [16, 128], strides = [1, 1]} : vector<16x384xf32> to vector<16x128xf32>
    %c1_i32_56 = arith.constant 1 : i32
    %158 = tpu.dynamic_rotate %155 by %c1_i32_56 dim 0 : vector<16x128xf32>, i32 -> vector<16x128xf32>
    %cst_57 = arith.constant 0.000000e+00 : f32
    %159 = vector.shape_cast %18 : vector<16x1xi1> to vector<16x1xi1>
    %160 = vector.broadcast %159 : vector<16x1xi1> to vector<16x128xi1>
    %161 = vector.broadcast %cst_57 : f32 to vector<16x128xf32>
    %162 = arith.select %160, %161, %158 : vector<16x128xi1>, vector<16x128xf32>
    %c15_i32_58 = arith.constant 15 : i32
    %163 = tpu.dynamic_rotate %157 by %c15_i32_58 dim 0 : vector<16x128xf32>, i32 -> vector<16x128xf32>
    %cst_59 = arith.constant 0.000000e+00 : f32
    %164 = vector.shape_cast %20 : vector<16x1xi1> to vector<16x1xi1>
    %165 = vector.broadcast %164 : vector<16x1xi1> to vector<16x128xi1>
    %166 = vector.broadcast %cst_59 : f32 to vector<16x128xf32>
    %167 = arith.select %165, %166, %163 : vector<16x128xi1>, vector<16x128xf32>
    %168 = arith.addf %156, %162 : vector<16x128xf32>
    %169 = arith.addf %168, %167 : vector<16x128xf32>
    %170 = vector.shape_cast %169 : vector<16x128xf32> to vector<1x16x128xf32>
    %cst_60 = arith.constant dense<0.000000e+00> : vector<1x128xf32>
    %171 = vector.multi_reduction <add>, %170, %cst_60 [1] : vector<1x16x128xf32> to vector<1x128xf32>
    %172 = vector.shape_cast %171 : vector<1x128xf32> to vector<1x1x128xf32>
    %173 = arith.mulf %170, %170 : vector<1x16x128xf32>
    %cst_61 = arith.constant dense<0.000000e+00> : vector<1x128xf32>
    %174 = vector.multi_reduction <add>, %173, %cst_61 [1] : vector<1x16x128xf32> to vector<1x128xf32>
    %175 = vector.shape_cast %174 : vector<1x128xf32> to vector<1x1x128xf32>
    %cst_62 = arith.constant 6.250000e-02 : f32
    %176 = vector.broadcast %cst_62 : f32 to vector<1x1x128xf32>
    %177 = arith.mulf %172, %176 : vector<1x1x128xf32>
    %cst_63 = arith.constant 6.250000e-02 : f32
    %178 = vector.broadcast %cst_63 : f32 to vector<1x1x128xf32>
    %179 = arith.mulf %175, %178 : vector<1x1x128xf32>
    %180 = arith.mulf %177, %177 : vector<1x1x128xf32>
    %181 = arith.subf %179, %180 : vector<1x1x128xf32>
    %cst_64 = arith.constant 0.000000e+00 : f32
    %182 = vector.broadcast %cst_64 : f32 to vector<1x1x128xf32>
    %183 = arith.maximumf %181, %182 : vector<1x1x128xf32>
    %184 = vector.broadcast %177 : vector<1x1x128xf32> to vector<1x16x128xf32>
    %185 = arith.subf %170, %184 : vector<1x16x128xf32>
    %cst_65 = arith.constant 9.99999974E-6 : f32
    %186 = vector.broadcast %cst_65 : f32 to vector<1x1x128xf32>
    %187 = arith.addf %183, %186 : vector<1x1x128xf32>
    %188 = math.rsqrt %187 : vector<1x1x128xf32>
    %189 = vector.broadcast %188 : vector<1x1x128xf32> to vector<1x16x128xf32>
    %190 = arith.mulf %185, %189 : vector<1x16x128xf32>
    %191 = vector.shape_cast %190 : vector<1x16x128xf32> to vector<16x128xf32>
    %192 = arith.addf %191, %107 : vector<16x128xf32>
    %cst_66 = arith.constant 0.000000e+00 : f32
    %193 = vector.broadcast %cst_66 : f32 to vector<16x128xf32>
    %194 = arith.maximumf %192, %193 : vector<16x128xf32>
    %c4 = arith.constant 4 : index
    %c0_67 = arith.constant 0 : index
    %c0_68 = arith.constant 0 : index
    %195 = vector.load %arg5[%c4, %c0_67, %c0_68] : memref<8x128x384xbf16, #tpu.memory_space<vmem>>, vector<1x128x384xbf16>
    %196 = vector.shape_cast %195 : vector<1x128x384xbf16> to vector<128x384xbf16>
    %197 = arith.truncf %194 : vector<16x128xf32> to vector<16x128xbf16>
    %cst_69 = arith.constant dense<0.000000e+00> : vector<16x384xf32>
    %198 = tpu.matmul %197, %196, %cst_69 {dimension_numbers = #tpu.dot_dimension_numbers<[1], [0], [0], [1], [0, 0, 1, 1], [], []>} : vector<16x128xbf16>, vector<128x384xbf16>, vector<16x384xf32> -> vector<16x384xf32>
    %199 = vector.extract_strided_slice %198 {offsets = [0, 0], sizes = [16, 128], strides = [1, 1]} : vector<16x384xf32> to vector<16x128xf32>
    %200 = vector.extract_strided_slice %198 {offsets = [0, 128], sizes = [16, 128], strides = [1, 1]} : vector<16x384xf32> to vector<16x128xf32>
    %201 = vector.extract_strided_slice %198 {offsets = [0, 256], sizes = [16, 128], strides = [1, 1]} : vector<16x384xf32> to vector<16x128xf32>
    %c1_i32_70 = arith.constant 1 : i32
    %202 = tpu.dynamic_rotate %199 by %c1_i32_70 dim 0 : vector<16x128xf32>, i32 -> vector<16x128xf32>
    %cst_71 = arith.constant 0.000000e+00 : f32
    %203 = vector.shape_cast %18 : vector<16x1xi1> to vector<16x1xi1>
    %204 = vector.broadcast %203 : vector<16x1xi1> to vector<16x128xi1>
    %205 = vector.broadcast %cst_71 : f32 to vector<16x128xf32>
    %206 = arith.select %204, %205, %202 : vector<16x128xi1>, vector<16x128xf32>
    %c15_i32_72 = arith.constant 15 : i32
    %207 = tpu.dynamic_rotate %201 by %c15_i32_72 dim 0 : vector<16x128xf32>, i32 -> vector<16x128xf32>
    %cst_73 = arith.constant 0.000000e+00 : f32
    %208 = vector.shape_cast %20 : vector<16x1xi1> to vector<16x1xi1>
    %209 = vector.broadcast %208 : vector<16x1xi1> to vector<16x128xi1>
    %210 = vector.broadcast %cst_73 : f32 to vector<16x128xf32>
    %211 = arith.select %209, %210, %207 : vector<16x128xi1>, vector<16x128xf32>
    %212 = arith.addf %200, %206 : vector<16x128xf32>
    %213 = arith.addf %212, %211 : vector<16x128xf32>
    %214 = vector.shape_cast %213 : vector<16x128xf32> to vector<1x16x128xf32>
    %cst_74 = arith.constant dense<0.000000e+00> : vector<1x128xf32>
    %215 = vector.multi_reduction <add>, %214, %cst_74 [1] : vector<1x16x128xf32> to vector<1x128xf32>
    %216 = vector.shape_cast %215 : vector<1x128xf32> to vector<1x1x128xf32>
    %217 = arith.mulf %214, %214 : vector<1x16x128xf32>
    %cst_75 = arith.constant dense<0.000000e+00> : vector<1x128xf32>
    %218 = vector.multi_reduction <add>, %217, %cst_75 [1] : vector<1x16x128xf32> to vector<1x128xf32>
    %219 = vector.shape_cast %218 : vector<1x128xf32> to vector<1x1x128xf32>
    %cst_76 = arith.constant 6.250000e-02 : f32
    %220 = vector.broadcast %cst_76 : f32 to vector<1x1x128xf32>
    %221 = arith.mulf %216, %220 : vector<1x1x128xf32>
    %cst_77 = arith.constant 6.250000e-02 : f32
    %222 = vector.broadcast %cst_77 : f32 to vector<1x1x128xf32>
    %223 = arith.mulf %219, %222 : vector<1x1x128xf32>
    %224 = arith.mulf %221, %221 : vector<1x1x128xf32>
    %225 = arith.subf %223, %224 : vector<1x1x128xf32>
    %cst_78 = arith.constant 0.000000e+00 : f32
    %226 = vector.broadcast %cst_78 : f32 to vector<1x1x128xf32>
    %227 = arith.maximumf %225, %226 : vector<1x1x128xf32>
    %228 = vector.broadcast %221 : vector<1x1x128xf32> to vector<1x16x128xf32>
    %229 = arith.subf %214, %228 : vector<1x16x128xf32>
    %cst_79 = arith.constant 9.99999974E-6 : f32
    %230 = vector.broadcast %cst_79 : f32 to vector<1x1x128xf32>
    %231 = arith.addf %227, %230 : vector<1x1x128xf32>
    %232 = math.rsqrt %231 : vector<1x1x128xf32>
    %233 = vector.broadcast %232 : vector<1x1x128xf32> to vector<1x16x128xf32>
    %234 = arith.mulf %229, %233 : vector<1x16x128xf32>
    %235 = vector.shape_cast %234 : vector<1x16x128xf32> to vector<16x128xf32>
    %cst_80 = arith.constant 0.000000e+00 : f32
    %236 = vector.broadcast %cst_80 : f32 to vector<16x128xf32>
    %237 = arith.maximumf %235, %236 : vector<16x128xf32>
    %c5 = arith.constant 5 : index
    %c0_81 = arith.constant 0 : index
    %c0_82 = arith.constant 0 : index
    %238 = vector.load %arg5[%c5, %c0_81, %c0_82] : memref<8x128x384xbf16, #tpu.memory_space<vmem>>, vector<1x128x384xbf16>
    %239 = vector.shape_cast %238 : vector<1x128x384xbf16> to vector<128x384xbf16>
    %240 = arith.truncf %237 : vector<16x128xf32> to vector<16x128xbf16>
    %cst_83 = arith.constant dense<0.000000e+00> : vector<16x384xf32>
    %241 = tpu.matmul %240, %239, %cst_83 {dimension_numbers = #tpu.dot_dimension_numbers<[1], [0], [0], [1], [0, 0, 1, 1], [], []>} : vector<16x128xbf16>, vector<128x384xbf16>, vector<16x384xf32> -> vector<16x384xf32>
    %242 = vector.extract_strided_slice %241 {offsets = [0, 0], sizes = [16, 128], strides = [1, 1]} : vector<16x384xf32> to vector<16x128xf32>
    %243 = vector.extract_strided_slice %241 {offsets = [0, 128], sizes = [16, 128], strides = [1, 1]} : vector<16x384xf32> to vector<16x128xf32>
    %244 = vector.extract_strided_slice %241 {offsets = [0, 256], sizes = [16, 128], strides = [1, 1]} : vector<16x384xf32> to vector<16x128xf32>
    %c1_i32_84 = arith.constant 1 : i32
    %245 = tpu.dynamic_rotate %242 by %c1_i32_84 dim 0 : vector<16x128xf32>, i32 -> vector<16x128xf32>
    %cst_85 = arith.constant 0.000000e+00 : f32
    %246 = vector.shape_cast %18 : vector<16x1xi1> to vector<16x1xi1>
    %247 = vector.broadcast %246 : vector<16x1xi1> to vector<16x128xi1>
    %248 = vector.broadcast %cst_85 : f32 to vector<16x128xf32>
    %249 = arith.select %247, %248, %245 : vector<16x128xi1>, vector<16x128xf32>
    %c15_i32_86 = arith.constant 15 : i32
    %250 = tpu.dynamic_rotate %244 by %c15_i32_86 dim 0 : vector<16x128xf32>, i32 -> vector<16x128xf32>
    %cst_87 = arith.constant 0.000000e+00 : f32
    %251 = vector.shape_cast %20 : vector<16x1xi1> to vector<16x1xi1>
    %252 = vector.broadcast %251 : vector<16x1xi1> to vector<16x128xi1>
    %253 = vector.broadcast %cst_87 : f32 to vector<16x128xf32>
    %254 = arith.select %252, %253, %250 : vector<16x128xi1>, vector<16x128xf32>
    %255 = arith.addf %243, %249 : vector<16x128xf32>
    %256 = arith.addf %255, %254 : vector<16x128xf32>
    %257 = vector.shape_cast %256 : vector<16x128xf32> to vector<1x16x128xf32>
    %cst_88 = arith.constant dense<0.000000e+00> : vector<1x128xf32>
    %258 = vector.multi_reduction <add>, %257, %cst_88 [1] : vector<1x16x128xf32> to vector<1x128xf32>
    %259 = vector.shape_cast %258 : vector<1x128xf32> to vector<1x1x128xf32>
    %260 = arith.mulf %257, %257 : vector<1x16x128xf32>
    %cst_89 = arith.constant dense<0.000000e+00> : vector<1x128xf32>
    %261 = vector.multi_reduction <add>, %260, %cst_89 [1] : vector<1x16x128xf32> to vector<1x128xf32>
    %262 = vector.shape_cast %261 : vector<1x128xf32> to vector<1x1x128xf32>
    %cst_90 = arith.constant 6.250000e-02 : f32
    %263 = vector.broadcast %cst_90 : f32 to vector<1x1x128xf32>
    %264 = arith.mulf %259, %263 : vector<1x1x128xf32>
    %cst_91 = arith.constant 6.250000e-02 : f32
    %265 = vector.broadcast %cst_91 : f32 to vector<1x1x128xf32>
    %266 = arith.mulf %262, %265 : vector<1x1x128xf32>
    %267 = arith.mulf %264, %264 : vector<1x1x128xf32>
    %268 = arith.subf %266, %267 : vector<1x1x128xf32>
    %cst_92 = arith.constant 0.000000e+00 : f32
    %269 = vector.broadcast %cst_92 : f32 to vector<1x1x128xf32>
    %270 = arith.maximumf %268, %269 : vector<1x1x128xf32>
    %271 = vector.broadcast %264 : vector<1x1x128xf32> to vector<1x16x128xf32>
    %272 = arith.subf %257, %271 : vector<1x16x128xf32>
    %cst_93 = arith.constant 9.99999974E-6 : f32
    %273 = vector.broadcast %cst_93 : f32 to vector<1x1x128xf32>
    %274 = arith.addf %270, %273 : vector<1x1x128xf32>
    %275 = math.rsqrt %274 : vector<1x1x128xf32>
    %276 = vector.broadcast %275 : vector<1x1x128xf32> to vector<1x16x128xf32>
    %277 = arith.mulf %272, %276 : vector<1x16x128xf32>
    %278 = vector.shape_cast %277 : vector<1x16x128xf32> to vector<16x128xf32>
    %279 = arith.addf %278, %194 : vector<16x128xf32>
    %cst_94 = arith.constant 0.000000e+00 : f32
    %280 = vector.broadcast %cst_94 : f32 to vector<16x128xf32>
    %281 = arith.maximumf %279, %280 : vector<16x128xf32>
    %c6 = arith.constant 6 : index
    %c0_95 = arith.constant 0 : index
    %c0_96 = arith.constant 0 : index
    %282 = vector.load %arg5[%c6, %c0_95, %c0_96] : memref<8x128x384xbf16, #tpu.memory_space<vmem>>, vector<1x128x384xbf16>
    %283 = vector.shape_cast %282 : vector<1x128x384xbf16> to vector<128x384xbf16>
    %284 = arith.truncf %281 : vector<16x128xf32> to vector<16x128xbf16>
    %cst_97 = arith.constant dense<0.000000e+00> : vector<16x384xf32>
    %285 = tpu.matmul %284, %283, %cst_97 {dimension_numbers = #tpu.dot_dimension_numbers<[1], [0], [0], [1], [0, 0, 1, 1], [], []>} : vector<16x128xbf16>, vector<128x384xbf16>, vector<16x384xf32> -> vector<16x384xf32>
    %286 = vector.extract_strided_slice %285 {offsets = [0, 0], sizes = [16, 128], strides = [1, 1]} : vector<16x384xf32> to vector<16x128xf32>
    %287 = vector.extract_strided_slice %285 {offsets = [0, 128], sizes = [16, 128], strides = [1, 1]} : vector<16x384xf32> to vector<16x128xf32>
    %288 = vector.extract_strided_slice %285 {offsets = [0, 256], sizes = [16, 128], strides = [1, 1]} : vector<16x384xf32> to vector<16x128xf32>
    %c1_i32_98 = arith.constant 1 : i32
    %289 = tpu.dynamic_rotate %286 by %c1_i32_98 dim 0 : vector<16x128xf32>, i32 -> vector<16x128xf32>
    %cst_99 = arith.constant 0.000000e+00 : f32
    %290 = vector.shape_cast %18 : vector<16x1xi1> to vector<16x1xi1>
    %291 = vector.broadcast %290 : vector<16x1xi1> to vector<16x128xi1>
    %292 = vector.broadcast %cst_99 : f32 to vector<16x128xf32>
    %293 = arith.select %291, %292, %289 : vector<16x128xi1>, vector<16x128xf32>
    %c15_i32_100 = arith.constant 15 : i32
    %294 = tpu.dynamic_rotate %288 by %c15_i32_100 dim 0 : vector<16x128xf32>, i32 -> vector<16x128xf32>
    %cst_101 = arith.constant 0.000000e+00 : f32
    %295 = vector.shape_cast %20 : vector<16x1xi1> to vector<16x1xi1>
    %296 = vector.broadcast %295 : vector<16x1xi1> to vector<16x128xi1>
    %297 = vector.broadcast %cst_101 : f32 to vector<16x128xf32>
    %298 = arith.select %296, %297, %294 : vector<16x128xi1>, vector<16x128xf32>
    %299 = arith.addf %287, %293 : vector<16x128xf32>
    %300 = arith.addf %299, %298 : vector<16x128xf32>
    %301 = vector.shape_cast %300 : vector<16x128xf32> to vector<1x16x128xf32>
    %cst_102 = arith.constant dense<0.000000e+00> : vector<1x128xf32>
    %302 = vector.multi_reduction <add>, %301, %cst_102 [1] : vector<1x16x128xf32> to vector<1x128xf32>
    %303 = vector.shape_cast %302 : vector<1x128xf32> to vector<1x1x128xf32>
    %304 = arith.mulf %301, %301 : vector<1x16x128xf32>
    %cst_103 = arith.constant dense<0.000000e+00> : vector<1x128xf32>
    %305 = vector.multi_reduction <add>, %304, %cst_103 [1] : vector<1x16x128xf32> to vector<1x128xf32>
    %306 = vector.shape_cast %305 : vector<1x128xf32> to vector<1x1x128xf32>
    %cst_104 = arith.constant 6.250000e-02 : f32
    %307 = vector.broadcast %cst_104 : f32 to vector<1x1x128xf32>
    %308 = arith.mulf %303, %307 : vector<1x1x128xf32>
    %cst_105 = arith.constant 6.250000e-02 : f32
    %309 = vector.broadcast %cst_105 : f32 to vector<1x1x128xf32>
    %310 = arith.mulf %306, %309 : vector<1x1x128xf32>
    %311 = arith.mulf %308, %308 : vector<1x1x128xf32>
    %312 = arith.subf %310, %311 : vector<1x1x128xf32>
    %cst_106 = arith.constant 0.000000e+00 : f32
    %313 = vector.broadcast %cst_106 : f32 to vector<1x1x128xf32>
    %314 = arith.maximumf %312, %313 : vector<1x1x128xf32>
    %315 = vector.broadcast %308 : vector<1x1x128xf32> to vector<1x16x128xf32>
    %316 = arith.subf %301, %315 : vector<1x16x128xf32>
    %cst_107 = arith.constant 9.99999974E-6 : f32
    %317 = vector.broadcast %cst_107 : f32 to vector<1x1x128xf32>
    %318 = arith.addf %314, %317 : vector<1x1x128xf32>
    %319 = math.rsqrt %318 : vector<1x1x128xf32>
    %320 = vector.broadcast %319 : vector<1x1x128xf32> to vector<1x16x128xf32>
    %321 = arith.mulf %316, %320 : vector<1x16x128xf32>
    %322 = vector.shape_cast %321 : vector<1x16x128xf32> to vector<16x128xf32>
    %cst_108 = arith.constant 0.000000e+00 : f32
    %323 = vector.broadcast %cst_108 : f32 to vector<16x128xf32>
    %324 = arith.maximumf %322, %323 : vector<16x128xf32>
    %c7 = arith.constant 7 : index
    %c0_109 = arith.constant 0 : index
    %c0_110 = arith.constant 0 : index
    %325 = vector.load %arg5[%c7, %c0_109, %c0_110] : memref<8x128x384xbf16, #tpu.memory_space<vmem>>, vector<1x128x384xbf16>
    %326 = vector.shape_cast %325 : vector<1x128x384xbf16> to vector<128x384xbf16>
    %327 = arith.truncf %324 : vector<16x128xf32> to vector<16x128xbf16>
    %cst_111 = arith.constant dense<0.000000e+00> : vector<16x384xf32>
    %328 = tpu.matmul %327, %326, %cst_111 {dimension_numbers = #tpu.dot_dimension_numbers<[1], [0], [0], [1], [0, 0, 1, 1], [], []>} : vector<16x128xbf16>, vector<128x384xbf16>, vector<16x384xf32> -> vector<16x384xf32>
    %329 = vector.extract_strided_slice %328 {offsets = [0, 0], sizes = [16, 128], strides = [1, 1]} : vector<16x384xf32> to vector<16x128xf32>
    %330 = vector.extract_strided_slice %328 {offsets = [0, 128], sizes = [16, 128], strides = [1, 1]} : vector<16x384xf32> to vector<16x128xf32>
    %331 = vector.extract_strided_slice %328 {offsets = [0, 256], sizes = [16, 128], strides = [1, 1]} : vector<16x384xf32> to vector<16x128xf32>
    %c1_i32_112 = arith.constant 1 : i32
    %332 = tpu.dynamic_rotate %329 by %c1_i32_112 dim 0 : vector<16x128xf32>, i32 -> vector<16x128xf32>
    %cst_113 = arith.constant 0.000000e+00 : f32
    %333 = vector.shape_cast %18 : vector<16x1xi1> to vector<16x1xi1>
    %334 = vector.broadcast %333 : vector<16x1xi1> to vector<16x128xi1>
    %335 = vector.broadcast %cst_113 : f32 to vector<16x128xf32>
    %336 = arith.select %334, %335, %332 : vector<16x128xi1>, vector<16x128xf32>
    %c15_i32_114 = arith.constant 15 : i32
    %337 = tpu.dynamic_rotate %331 by %c15_i32_114 dim 0 : vector<16x128xf32>, i32 -> vector<16x128xf32>
    %cst_115 = arith.constant 0.000000e+00 : f32
    %338 = vector.shape_cast %20 : vector<16x1xi1> to vector<16x1xi1>
    %339 = vector.broadcast %338 : vector<16x1xi1> to vector<16x128xi1>
    %340 = vector.broadcast %cst_115 : f32 to vector<16x128xf32>
    %341 = arith.select %339, %340, %337 : vector<16x128xi1>, vector<16x128xf32>
    %342 = arith.addf %330, %336 : vector<16x128xf32>
    %343 = arith.addf %342, %341 : vector<16x128xf32>
    %344 = vector.shape_cast %343 : vector<16x128xf32> to vector<1x16x128xf32>
    %cst_116 = arith.constant dense<0.000000e+00> : vector<1x128xf32>
    %345 = vector.multi_reduction <add>, %344, %cst_116 [1] : vector<1x16x128xf32> to vector<1x128xf32>
    %346 = vector.shape_cast %345 : vector<1x128xf32> to vector<1x1x128xf32>
    %347 = arith.mulf %344, %344 : vector<1x16x128xf32>
    %cst_117 = arith.constant dense<0.000000e+00> : vector<1x128xf32>
    %348 = vector.multi_reduction <add>, %347, %cst_117 [1] : vector<1x16x128xf32> to vector<1x128xf32>
    %349 = vector.shape_cast %348 : vector<1x128xf32> to vector<1x1x128xf32>
    %cst_118 = arith.constant 6.250000e-02 : f32
    %350 = vector.broadcast %cst_118 : f32 to vector<1x1x128xf32>
    %351 = arith.mulf %346, %350 : vector<1x1x128xf32>
    %cst_119 = arith.constant 6.250000e-02 : f32
    %352 = vector.broadcast %cst_119 : f32 to vector<1x1x128xf32>
    %353 = arith.mulf %349, %352 : vector<1x1x128xf32>
    %354 = arith.mulf %351, %351 : vector<1x1x128xf32>
    %355 = arith.subf %353, %354 : vector<1x1x128xf32>
    %cst_120 = arith.constant 0.000000e+00 : f32
    %356 = vector.broadcast %cst_120 : f32 to vector<1x1x128xf32>
    %357 = arith.maximumf %355, %356 : vector<1x1x128xf32>
    %358 = vector.broadcast %351 : vector<1x1x128xf32> to vector<1x16x128xf32>
    %359 = arith.subf %344, %358 : vector<1x16x128xf32>
    %cst_121 = arith.constant 9.99999974E-6 : f32
    %360 = vector.broadcast %cst_121 : f32 to vector<1x1x128xf32>
    %361 = arith.addf %357, %360 : vector<1x1x128xf32>
    %362 = math.rsqrt %361 : vector<1x1x128xf32>
    %363 = vector.broadcast %362 : vector<1x1x128xf32> to vector<1x16x128xf32>
    %364 = arith.mulf %359, %363 : vector<1x16x128xf32>
    %365 = vector.shape_cast %364 : vector<1x16x128xf32> to vector<16x128xf32>
    %366 = arith.addf %365, %281 : vector<16x128xf32>
    %cst_122 = arith.constant 0.000000e+00 : f32
    %367 = vector.broadcast %cst_122 : f32 to vector<16x128xf32>
    %368 = arith.maximumf %366, %367 : vector<16x128xf32>
    %cst_123 = arith.constant 0.000000e+00 : f32
    %369 = vector.broadcast %cst_123 : f32 to vector<16x128xf32>
    %370 = arith.maximumf %368, %369 : vector<16x128xf32>
    %371 = arith.truncf %370 : vector<16x128xf32> to vector<16x128xbf16>
    %c0_124 = arith.constant 0 : index
    %c0_125 = arith.constant 0 : index
    %372 = vector.load %arg6[%c0_124, %c0_125] : memref<128x14xbf16, #tpu.memory_space<vmem>>, vector<128x14xbf16>
    %cst_126 = arith.constant dense<0.000000e+00> : vector<16x14xf32>
    %373 = tpu.matmul %371, %372, %cst_126 {dimension_numbers = #tpu.dot_dimension_numbers<[1], [0], [0], [1], [0, 0, 1, 1], [], []>} : vector<16x128xbf16>, vector<128x14xbf16>, vector<16x14xf32> -> vector<16x14xf32>
    %c0_127 = arith.constant 0 : index
    %c0_128 = arith.constant 0 : index
    %374 = vector.load %arg7[%c0_127, %c0_128] : memref<1x14xf32, #tpu.memory_space<vmem>>, vector<1x14xf32>
    %375 = vector.broadcast %374 : vector<1x14xf32> to vector<16x14xf32>
    %376 = arith.addf %373, %375 : vector<16x14xf32>
    %377 = arith.mulf %376, %376 : vector<16x14xf32>
    %c0_129 = arith.constant 0 : index
    %c0_130 = arith.constant 0 : index
    %378 = vector.load %arg8[%c0_129, %c0_130] : memref<14x14xf32, #tpu.memory_space<vmem>>, vector<14x14xf32>
    %cst_131 = arith.constant dense<0.000000e+00> : vector<16x14xf32>
    %379 = tpu.matmul %377, %378, %cst_131 {dimension_numbers = #tpu.dot_dimension_numbers<[1], [0], [0], [1], [0, 0, 1, 1], [], []>} : vector<16x14xf32>, vector<14x14xf32>, vector<16x14xf32> -> vector<16x14xf32>
    %380 = math.sqrt %379 : vector<16x14xf32>
    %cst_132 = arith.constant 9.99999996E-13 : f32
    %381 = vector.broadcast %cst_132 : f32 to vector<16x14xf32>
    %382 = arith.maximumf %380, %381 : vector<16x14xf32>
    %383 = arith.divf %376, %382 : vector<16x14xf32>
    %384 = vector.shape_cast %376 : vector<16x14xf32> to vector<1x16x14xf32>
    %c0_133 = arith.constant 0 : index
    %c0_134 = arith.constant 0 : index
    %c0_135 = arith.constant 0 : index
    %385 = vector.load %arg9[%c0_133, %c0_134, %c0_135] : memref<1x16x14xf32, #tpu.memory_space<vmem>>, vector<1x16x14xf32>
    tpu.vector_store %arg9[%c0_133, %c0_134, %c0_135], %384 {strides = array<i32>} : memref<1x16x14xf32, #tpu.memory_space<vmem>>, vector<1x16x14xf32>,
    %386 = vector.shape_cast %383 : vector<16x14xf32> to vector<1x16x14xf32>
    %c0_136 = arith.constant 0 : index
    %c0_137 = arith.constant 0 : index
    %c0_138 = arith.constant 0 : index
    %387 = vector.load %arg10[%c0_136, %c0_137, %c0_138] : memref<1x16x14xf32, #tpu.memory_space<vmem>>, vector<1x16x14xf32>
    tpu.vector_store %arg10[%c0_136, %c0_137, %c0_138], %386 {strides = array<i32>} : memref<1x16x14xf32, #tpu.memory_space<vmem>>, vector<1x16x14xf32>,
    return
  }
  func.func @transform_0(%arg0: i32) -> (i32, i32, i32) {
    %c0_i32 = arith.constant 0 : i32
    %c0_i32_0 = arith.constant 0 : i32
    %c0_i32_1 = arith.constant 0 : i32
    return %arg0, %c0_i32, %c0_i32_0 : i32, i32, i32
  }
  func.func @transform_1(%arg0: i32) -> (i32, i32, i32) {
    %c0_i32 = arith.constant 0 : i32
    %c0_i32_0 = arith.constant 0 : i32
    %c0_i32_1 = arith.constant 0 : i32
    return %arg0, %c0_i32, %c0_i32_0 : i32, i32, i32
  }
  func.func @transform_2(%arg0: i32) -> (i32, i32) {
    %c0_i32 = arith.constant 0 : i32
    %c0_i32_0 = arith.constant 0 : i32
    %c0_i32_1 = arith.constant 0 : i32
    return %c0_i32, %c0_i32_0 : i32, i32
  }
  func.func @transform_3(%arg0: i32) -> (i32, i32) {
    %c0_i32 = arith.constant 0 : i32
    %c0_i32_0 = arith.constant 0 : i32
    %c0_i32_1 = arith.constant 0 : i32
    return %c0_i32, %c0_i32_0 : i32, i32
  }
  func.func @transform_4(%arg0: i32) -> (i32, i32, i32) {
    %c0_i32 = arith.constant 0 : i32
    %c0_i32_0 = arith.constant 0 : i32
    %c0_i32_1 = arith.constant 0 : i32
    %c0_i32_2 = arith.constant 0 : i32
    return %c0_i32, %c0_i32_0, %c0_i32_1 : i32, i32, i32
  }
  func.func @transform_5(%arg0: i32) -> (i32, i32) {
    %c0_i32 = arith.constant 0 : i32
    %c0_i32_0 = arith.constant 0 : i32
    %c0_i32_1 = arith.constant 0 : i32
    return %c0_i32, %c0_i32_0 : i32, i32
  }
  func.func @transform_6(%arg0: i32) -> (i32, i32) {
    %c0_i32 = arith.constant 0 : i32
    %c0_i32_0 = arith.constant 0 : i32
    %c0_i32_1 = arith.constant 0 : i32
    return %c0_i32, %c0_i32_0 : i32, i32
  }
  func.func @transform_7(%arg0: i32) -> (i32, i32) {
    %c0_i32 = arith.constant 0 : i32
    %c0_i32_0 = arith.constant 0 : i32
    %c0_i32_1 = arith.constant 0 : i32
    return %c0_i32, %c0_i32_0 : i32, i32
  }
  func.func @transform_8(%arg0: i32) -> (i32, i32, i32) {
    %c0_i32 = arith.constant 0 : i32
    %c0_i32_0 = arith.constant 0 : i32
    %c0_i32_1 = arith.constant 0 : i32
    return %arg0, %c0_i32, %c0_i32_0 : i32, i32, i32
  }
  func.func @transform_9(%arg0: i32) -> (i32, i32, i32) {
    %c0_i32 = arith.constant 0 : i32
    %c0_i32_0 = arith.constant 0 : i32
    %c0_i32_1 = arith.constant 0 : i32
    return %arg0, %c0_i32, %c0_i32_0 : i32, i32, i32
  }
}

</mosaic_0001>

<llo_original>
// kernel: sidechain1d_forward.1
$region0: #{sidechain1d_forward.1}
  #allocation0 [shape = 'u32[]', space=smem, size = 0x4, offset = 0x4, fixed_abs, tag = 'smem constant byte address 0x4 - core index']
  #allocation1 [shape = 'u32[72,128]{1,0:T(1,128)}', space=vmem, size = 0x9000, scoped, tag = 'internal scratch']
  %s0 = inlined_call_operand.vmem [shape: f32[2,16,128], index: 0, kind: input, shape index: {}]
  %s1 = inlined_call_operand.vmem [shape: f32[2,16,128], index: 1, kind: input, shape index: {}]
  %s2 = inlined_call_operand.hbm [shape: bf16[256,128], index: 2, kind: input, shape index: {}]
  %s3 = inlined_call_operand.vmem [shape: f32[1,128], index: 3, kind: input, shape index: {}]
  %s4 = inlined_call_operand.hbm [shape: bf16[8,128,384], index: 4, kind: input, shape index: {}]
  %s5 = inlined_call_operand.vmem [shape: bf16[128,14], index: 5, kind: input, shape index: {}]
  %s6 = inlined_call_operand.vmem [shape: f32[1,14], index: 6, kind: input, shape index: {}]
  %s7 = inlined_call_operand.hbm [shape: f32[14,14], index: 7, kind: input, shape index: {}]
  %s8 = inlined_call_operand.vmem [shape: f32[2,16,14], index: 8, kind: output, shape index: {0}]
  %s9 = inlined_call_operand.vmem [shape: f32[2,16,14], index: 9, kind: output, shape index: {1}]
  %10 = xla_tuple %s8, %s9
  %s11 = sld [smem:[#allocation0]]
  $region85: #{sidechain1d_forward.1} parent=0
    _
  %s13 = ssub.s32 1, %s11
  %s14 = scalar_select 0, %s13, %s11
  $region1: #{sidechain1d_forward.1} parent=0
    #allocation2 [shape = 'u8[65536]{0}', space=vmem, size = 0x10000, scoped, tag = 'input window, operand 2, single buffered']
    #allocation3 [shape = 's32[2]{0}', space=sflag, size = 0x8, scoped, tag = 'scoped memory for sidechain1d_forward.1']
    #allocation4 [shape = 'u8[786432]{0}', space=vmem, size = 0xc0000, scoped, tag = 'input window, operand 4, single buffered']
    #allocation5 [shape = 's32[1]{0}', space=sflag, size = 0x4, scoped, tag = 'scoped memory for sidechain1d_forward.1']
    #allocation6 [shape = 'u8[8192]{0}', space=vmem, size = 0x2000, scoped, tag = 'input window, operand 7, single buffered']
    %15 = vsyncpa [#allocation3], 0
    %16 = vsyncpa [#allocation5], 0
    loop: start=0, step=1, limit=4
    $region2: #{sidechain1d_forward.1} parent=1 // loop_pre_header
      _
    $region3: #{sidechain1d_forward.1} parent=1 // loop_header
      %s18 = sphi 0, %s22
      %p19 = scmp.ge.s32.totalorder %s18, 4
      %s28 = sphi 0, %s30
      %s31 = sphi 0, %s28
      %s32 = sphi 0, %s31
      %s48 = sphi 0, %s32
      %s54 = sphi 0, %s56
      %s57 = sphi 0, %s54
      %s58 = sphi 0, %s57
      %s74 = sphi 0, %s58
      %s78 = sphi 0, %s78
      %s80 = sphi 0, %s78
      %s81 = sphi 0, %s80
      %s95 = sphi 0, %s81
      %s99 = sphi 0, %s99
      %s101 = sphi 0, %s99
      %s102 = sphi 0, %s101
      %s116 = sphi 0, %s102
      %s120 = sphi 0, %s120
      %s122 = sphi 0, %s120
      %s123 = sphi 0, %s122
      %s137 = sphi 0, %s123
      %s141 = sphi 0, %s141
      %s143 = sphi 0, %s141
      %s144 = sphi 0, %s143
      %s158 = sphi 0, %s144
      %s162 = sphi 0, %s162
      %s164 = sphi 0, %s162
      %s165 = sphi 0, %s164
      %s179 = sphi 0, %s165
      %s183 = sphi 0, %s183
      %s185 = sphi 0, %s183
      %s186 = sphi 0, %s185
      %s200 = sphi 0, %s186
      %s206 = sphi 0, %s208
      %s209 = sphi 0, %s206
      %s210 = sphi 0, %s209
      %s226 = sphi 0, %s210
      %s232 = sphi 0, %s234
      %s235 = sphi 0, %s232
      %s236 = sphi 0, %s235
      %s252 = sphi 0, %s236
    $region4: #{sidechain1d_forward.1} parent=1 // loop_header_branch
      %21 = sbr.rel (%p19) target = $region8
    $region5: #{sidechain1d_forward.1} parent=1 // loop_body
      %s23 = ssub.s32 %s18, 1
      %s24 = ssub.s32 %s18, 2
      %s25 = sadd.s32 %s18, 1
      %s26 = ssub.s32 %s18, %s25
      %p27 = scmp.eq.s32.totalorder %s26, 0
      %s29 = sadd.s32 %s28, 1
      %s30 = scalar_select %p27, %s28, %s29
      %p33 = pneg %p27
      %p34 = scmp.eq.s32.totalorder %s18, 1
      %p35 = por %p33, %p34
      %p36 = scmp.ne.s32.totalorder %s28, %s31
      %p37 = scmp.eq.s32.totalorder %s18, 0
      %p38 = por %p36, %p37
      %p39 = scmp.ne.s32.totalorder %s28, %s31
      %p40 = scmp.eq.s32.totalorder %s23, 1
      %p41 = por %p39, %p40
      %p42 = scmp.ne.s32.totalorder %s31, %s32
      %p43 = scmp.eq.s32.totalorder %s23, 0
      %p44 = por %p42, %p43
      %p45 = scmp.ne.s32.totalorder %s31, %s32
      %p46 = scmp.eq.s32.totalorder %s24, 1
      %p47 = por %p45, %p46
      %p49 = scmp.ne.s32.totalorder %s32, %s48
      %p50 = scmp.eq.s32.totalorder %s24, 0
      %p51 = por %p49, %p50
      %s52 = ssub.s32 %s18, %s25
      %p53 = scmp.eq.s32.totalorder %s52, 0
      %s55 = sadd.s32 %s54, 1
      %s56 = scalar_select %p53, %s54, %s55
      %p59 = pneg %p53
      %p60 = scmp.eq.s32.totalorder %s18, 1
      %p61 = por %p59, %p60
      %p62 = scmp.ne.s32.totalorder %s54, %s57
      %p63 = scmp.eq.s32.totalorder %s18, 0
      %p64 = por %p62, %p63
      %p65 = scmp.ne.s32.totalorder %s54, %s57
      %p66 = scmp.eq.s32.totalorder %s23, 1
      %p67 = por %p65, %p66
      %p68 = scmp.ne.s32.totalorder %s57, %s58
      %p69 = scmp.eq.s32.totalorder %s23, 0
      %p70 = por %p68, %p69
      %p71 = scmp.ne.s32.totalorder %s57, %s58
      %p72 = scmp.eq.s32.totalorder %s24, 1
      %p73 = por %p71, %p72
      %p75 = scmp.ne.s32.totalorder %s58, %s74
      %p76 = scmp.eq.s32.totalorder %s24, 0
      %p77 = por %p75, %p76
      %s79 = sadd.s32 %s78, 1
      %p82 = scmp.eq.s32.totalorder %s18, 1
      %p83 = scmp.ne.s32.totalorder %s78, %s80
      %p84 = scmp.eq.s32.totalorder %s18, 0
      %p85 = por %p83, %p84
      %p86 = scmp.ne.s32.totalorder %s78, %s80
      %p87 = scmp.eq.s32.totalorder %s23, 1
      %p88 = por %p86, %p87
      %p89 = scmp.ne.s32.totalorder %s80, %s81
      %p90 = scmp.eq.s32.totalorder %s23, 0
      %p91 = por %p89, %p90
      %p92 = scmp.ne.s32.totalorder %s80, %s81
      %p93 = scmp.eq.s32.totalorder %s24, 1
      %p94 = por %p92, %p93
      %p96 = scmp.ne.s32.totalorder %s81, %s95
      %p97 = scmp.eq.s32.totalorder %s24, 0
      %p98 = por %p96, %p97
      %s100 = sadd.s32 %s99, 1
      %p103 = scmp.eq.s32.totalorder %s18, 1
      %p104 = scmp.ne.s32.totalorder %s99, %s101
      %p105 = scmp.eq.s32.totalorder %s18, 0
      %p106 = por %p104, %p105
      %p107 = scmp.ne.s32.totalorder %s99, %s101
      %p108 = scmp.eq.s32.totalorder %s23, 1
      %p109 = por %p107, %p108
      %p110 = scmp.ne.s32.totalorder %s101, %s102
      %p111 = scmp.eq.s32.totalorder %s23, 0
      %p112 = por %p110, %p111
      %p113 = scmp.ne.s32.totalorder %s101, %s102
      %p114 = scmp.eq.s32.totalorder %s24, 1
      %p115 = por %p113, %p114
      %p117 = scmp.ne.s32.totalorder %s102, %s116
      %p118 = scmp.eq.s32.totalorder %s24, 0
      %p119 = por %p117, %p118
      %s121 = sadd.s32 %s120, 1
      %p124 = scmp.eq.s32.totalorder %s18, 1
      %p125 = scmp.ne.s32.totalorder %s120, %s122
      %p126 = scmp.eq.s32.totalorder %s18, 0
      %p127 = por %p125, %p126
      %p128 = scmp.ne.s32.totalorder %s120, %s122
      %p129 = scmp.eq.s32.totalorder %s23, 1
      %p130 = por %p128, %p129
      %p131 = scmp.ne.s32.totalorder %s122, %s123
      %p132 = scmp.eq.s32.totalorder %s23, 0
      %p133 = por %p131, %p132
      %p134 = scmp.ne.s32.totalorder %s122, %s123
      %p135 = scmp.eq.s32.totalorder %s24, 1
      %p136 = por %p134, %p135
      %p138 = scmp.ne.s32.totalorder %s123, %s137
      %p139 = scmp.eq.s32.totalorder %s24, 0
      %p140 = por %p138, %p139
      %s142 = sadd.s32 %s141, 1
      %p145 = scmp.eq.s32.totalorder %s18, 1
      %p146 = scmp.ne.s32.totalorder %s141, %s143
      %p147 = scmp.eq.s32.totalorder %s18, 0
      %p148 = por %p146, %p147
      %p149 = scmp.ne.s32.totalorder %s141, %s143
      %p150 = scmp.eq.s32.totalorder %s23, 1
      %p151 = por %p149, %p150
      %p152 = scmp.ne.s32.totalorder %s143, %s144
      %p153 = scmp.eq.s32.totalorder %s23, 0
      %p154 = por %p152, %p153
      %p155 = scmp.ne.s32.totalorder %s143, %s144
      %p156 = scmp.eq.s32.totalorder %s24, 1
      %p157 = por %p155, %p156
      %p159 = scmp.ne.s32.totalorder %s144, %s158
      %p160 = scmp.eq.s32.totalorder %s24, 0
      %p161 = por %p159, %p160
      %s163 = sadd.s32 %s162, 1
      %p166 = scmp.eq.s32.totalorder %s18, 1
      %p167 = scmp.ne.s32.totalorder %s162, %s164
      %p168 = scmp.eq.s32.totalorder %s18, 0
      %p169 = por %p167, %p168
      %p170 = scmp.ne.s32.totalorder %s162, %s164
      %p171 = scmp.eq.s32.totalorder %s23, 1
      %p172 = por %p170, %p171
      %p173 = scmp.ne.s32.totalorder %s164, %s165
      %p174 = scmp.eq.s32.totalorder %s23, 0
      %p175 = por %p173, %p174
      %p176 = scmp.ne.s32.totalorder %s164, %s165
      %p177 = scmp.eq.s32.totalorder %s24, 1
      %p178 = por %p176, %p177
      %p180 = scmp.ne.s32.totalorder %s165, %s179
      %p181 = scmp.eq.s32.totalorder %s24, 0
      %p182 = por %p180, %p181
      %s184 = sadd.s32 %s183, 1
      %p187 = scmp.eq.s32.totalorder %s18, 1
      %p188 = scmp.ne.s32.totalorder %s183, %s185
      %p189 = scmp.eq.s32.totalorder %s18, 0
      %p190 = por %p188, %p189
      %p191 = scmp.ne.s32.totalorder %s183, %s185
      %p192 = scmp.eq.s32.totalorder %s23, 1
      %p193 = por %p191, %p192
      %p194 = scmp.ne.s32.totalorder %s185, %s186
      %p195 = scmp.eq.s32.totalorder %s23, 0
      %p196 = por %p194, %p195
      %p197 = scmp.ne.s32.totalorder %s185, %s186
      %p198 = scmp.eq.s32.totalorder %s24, 1
      %p199 = por %p197, %p198
      %p201 = scmp.ne.s32.totalorder %s186, %s200
      %p202 = scmp.eq.s32.totalorder %s24, 0
      %p203 = por %p201, %p202
      %s204 = ssub.s32 %s18, %s25
      %p205 = scmp.eq.s32.totalorder %s204, 0
      %s207 = sadd.s32 %s206, 1
      %s208 = scalar_select %p205, %s206, %s207
      %p211 = pneg %p205
      %p212 = scmp.eq.s32.totalorder %s18, 1
      %p213 = por %p211, %p212
      %p214 = scmp.ne.s32.totalorder %s206, %s209
      %p215 = scmp.eq.s32.totalorder %s18, 0
      %p216 = por %p214, %p215
      %p217 = scmp.ne.s32.totalorder %s206, %s209
      %p218 = scmp.eq.s32.totalorder %s23, 1
      %p219 = por %p217, %p218
      %p220 = scmp.ne.s32.totalorder %s209, %s210
      %p221 = scmp.eq.s32.totalorder %s23, 0
      %p222 = por %p220, %p221
      %p223 = scmp.ne.s32.totalorder %s209, %s210
      %p224 = scmp.eq.s32.totalorder %s24, 1
      %p225 = por %p223, %p224
      %p227 = scmp.ne.s32.totalorder %s210, %s226
      %p228 = scmp.eq.s32.totalorder %s24, 0
      %p229 = por %p227, %p228
      %s230 = ssub.s32 %s18, %s25
      %p231 = scmp.eq.s32.totalorder %s230, 0
      %s233 = sadd.s32 %s232, 1
      %s234 = scalar_select %p231, %s232, %s233
      %p237 = pneg %p231
      %p238 = scmp.eq.s32.totalorder %s18, 1
      %p239 = por %p237, %p238
      %p240 = scmp.ne.s32.totalorder %s232, %s235
      %p241 = scmp.eq.s32.totalorder %s18, 0
      %p242 = por %p240, %p241
      %p243 = scmp.ne.s32.totalorder %s232, %s235
      %p244 = scmp.eq.s32.totalorder %s23, 1
      %p245 = por %p243, %p244
      %p246 = scmp.ne.s32.totalorder %s235, %s236
      %p247 = scmp.eq.s32.totalorder %s23, 0
      %p248 = por %p246, %p247
      %p249 = scmp.ne.s32.totalorder %s235, %s236
      %p250 = scmp.eq.s32.totalorder %s24, 1
      %p251 = por %p249, %p250
      %p253 = scmp.ne.s32.totalorder %s236, %s252
      %p254 = scmp.eq.s32.totalorder %s24, 0
      %p255 = por %p253, %p254
      %p256 = scmp.le.s32.totalorder 1, %s18
      %p257 = scmp.lt.s32.totalorder %s18, 3
      %p258 = pnand %p256, %p257
      %p259 = pneg %p258
      // Predicated region
      $region9: #{sidechain1d_forward.1} parent=5 // pred_check
        _
      $region10: #{sidechain1d_forward.1} parent=5 // pred_check_branch
        %261 = sbr.rel (%p258) target = $region12
      $region11: #{sidechain1d_forward.1} parent=5 // pred_region
        %s262 = ssub.s32 %s18, 1
        // Predicated region
        $region13: #{sidechain1d_forward.1} parent=11 // pred_check
          %p263 = pneg %p91
        $region14: #{sidechain1d_forward.1} parent=11 // pred_check_branch
          %265 = sbr.rel (%p263) target = $region16
        $region15: #{sidechain1d_forward.1} parent=11 // pred_region
          %267 = vsyncadd [#allocation3], 0
          %s268 = sshll.u32 %s2, 4
          %s269 = int_to_ptr.hbm [resolvable:$true] %s268
          %s270 = sshll.u32 [#allocation2], 4
          %s271 = int_to_ptr.vmem [resolvable:$true] %s270
          %276 = dma.hbm_to_vmem [thread:$0]  %s269, 2048, %s271, [#allocation3], 64, 64, 4
        $region16: #{sidechain1d_forward.1} parent=11 // pred_fallthru
          _
        // Predicated region
        $region17: #{sidechain1d_forward.1} parent=11 // pred_check
          %p277 = pneg %p112
        $region18: #{sidechain1d_forward.1} parent=11 // pred_check_branch
          %279 = sbr.rel (%p277) target = $region20
        $region19: #{sidechain1d_forward.1} parent=11 // pred_region
          _
        $region20: #{sidechain1d_forward.1} parent=11 // pred_fallthru
          _
        // Predicated region
        $region21: #{sidechain1d_forward.1} parent=11 // pred_check
          %p280 = pneg %p133
        $region22: #{sidechain1d_forward.1} parent=11 // pred_check_branch
          %282 = sbr.rel (%p280) target = $region24
        $region23: #{sidechain1d_forward.1} parent=11 // pred_region
          %284 = vsyncadd [#allocation5], 0
          %s285 = sshll.u32 %s4, 4
          %s286 = int_to_ptr.hbm [resolvable:$true] %s285
          %s287 = sshll.u32 [#allocation4], 4
          %s288 = int_to_ptr.vmem [resolvable:$true] %s287
          %293 = dma.hbm_to_vmem [thread:$0]  %s286, 24576, %s288, [#allocation5], 192, 192, 12
        $region24: #{sidechain1d_forward.1} parent=11 // pred_fallthru
          _
        // Predicated region
        $region25: #{sidechain1d_forward.1} parent=11 // pred_check
          %p294 = pneg %p154
        $region26: #{sidechain1d_forward.1} parent=11 // pred_check_branch
          %296 = sbr.rel (%p294) target = $region28
        $region27: #{sidechain1d_forward.1} parent=11 // pred_region
          _
        $region28: #{sidechain1d_forward.1} parent=11 // pred_fallthru
          _
        // Predicated region
        $region29: #{sidechain1d_forward.1} parent=11 // pred_check
          %p297 = pneg %p175
        $region30: #{sidechain1d_forward.1} parent=11 // pred_check_branch
          %299 = sbr.rel (%p297) target = $region32
        $region31: #{sidechain1d_forward.1} parent=11 // pred_region
          _
        $region32: #{sidechain1d_forward.1} parent=11 // pred_fallthru
          _
        // Predicated region
        $region33: #{sidechain1d_forward.1} parent=11 // pred_check
          %p300 = pneg %p196
        $region34: #{sidechain1d_forward.1} parent=11 // pred_check_branch
          %302 = sbr.rel (%p300) target = $region36
        $region35: #{sidechain1d_forward.1} parent=11 // pred_region
          %304 = vsyncadd [#allocation5], 0
          %s305 = sshll.u32 %s7, 4
          %s306 = int_to_ptr.hbm [resolvable:$true] %s305
          %s307 = sshll.u32 [#allocation6], 4
          %s308 = int_to_ptr.vmem [resolvable:$true] %s307
          %313 = dma.hbm_to_vmem [thread:$0]  %s306, 256, %s308, [#allocation5], 128, 128, 8
        $region36: #{sidechain1d_forward.1} parent=11 // pred_fallthru
          _
      $region12: #{sidechain1d_forward.1} parent=5 // pred_fallthru
        _
      %p314 = scmp.lt.s32.totalorder %s18, 2
      // Predicated region
      $region37: #{sidechain1d_forward.1} parent=5 // pred_check
        %p315 = pneg %p314
      $region38: #{sidechain1d_forward.1} parent=5 // pred_check_branch
        %317 = sbr.rel (%p315) target = $region40
      $region39: #{sidechain1d_forward.1} parent=5 // pred_region
        // Predicated region
        $region41: #{sidechain1d_forward.1} parent=39 // pred_check
          %p318 = pneg %p38
        $region42: #{sidechain1d_forward.1} parent=39 // pred_check_branch
          %320 = sbr.rel (%p318) target = $region44
        $region43: #{sidechain1d_forward.1} parent=39 // pred_region
          %p321 = scmp.lt.s32.totalorder %s18, 1
          %s322 = scalar_select %p321, %s18, 1
          %s323 = smul.addr %s322, 2
          %s324 = smul.addr %s323, 8
          %s325 = scalar_lea.vmem %s0, %s324
        $region44: #{sidechain1d_forward.1} parent=39 // pred_fallthru
          _
        // Predicated region
        $region45: #{sidechain1d_forward.1} parent=39 // pred_check
          %p326 = pneg %p64
        $region46: #{sidechain1d_forward.1} parent=39 // pred_check_branch
          %328 = sbr.rel (%p326) target = $region48
        $region47: #{sidechain1d_forward.1} parent=39 // pred_region
          %p329 = scmp.lt.s32.totalorder %s18, 1
          %s330 = scalar_select %p329, %s18, 1
          %s331 = smul.addr %s330, 2
          %s332 = smul.addr %s331, 8
          %s333 = scalar_lea.vmem %s1, %s332
        $region48: #{sidechain1d_forward.1} parent=39 // pred_fallthru
          _
      $region40: #{sidechain1d_forward.1} parent=5 // pred_fallthru
        _
      %p334 = scmp.le.s32.totalorder 1, %s18
      %p335 = scmp.lt.s32.totalorder %s18, 3
      %p336 = pnand %p334, %p335
      %p337 = pneg %p336
      // Predicated region
      $region49: #{sidechain1d_forward.1} parent=5 // pred_check
        _
      $region50: #{sidechain1d_forward.1} parent=5 // pred_check_branch
        %339 = sbr.rel (%p336) target = $region52
      $region51: #{sidechain1d_forward.1} parent=5 // pred_region
        %s340 = ssub.s32 %s18, 1
        // Predicated region
        $region53: #{sidechain1d_forward.1} parent=51 // pred_check
          %p341 = pneg %p91
        $region54: #{sidechain1d_forward.1} parent=51 // pred_check_branch
          %343 = sbr.rel (%p341) target = $region56
        $region55: #{sidechain1d_forward.1} parent=51 // pred_region
          %345 = dma.done [#allocation3], 2048
        $region56: #{sidechain1d_forward.1} parent=51 // pred_fallthru
          _
        // Predicated region
        $region57: #{sidechain1d_forward.1} parent=51 // pred_check
          %p346 = pneg %p133
        $region58: #{sidechain1d_forward.1} parent=51 // pred_check_branch
          %348 = sbr.rel (%p346) target = $region60
        $region59: #{sidechain1d_forward.1} parent=51 // pred_region
          %350 = dma.done [#allocation5], 24576
        $region60: #{sidechain1d_forward.1} parent=51 // pred_fallthru
          _
        // Predicated region
        $region61: #{sidechain1d_forward.1} parent=51 // pred_check
          %p351 = pneg %p196
        $region62: #{sidechain1d_forward.1} parent=51 // pred_check_branch
          %353 = sbr.rel (%p351) target = $region64
        $region63: #{sidechain1d_forward.1} parent=51 // pred_region
          %355 = dma.done [#allocation5], 256
        $region64: #{sidechain1d_forward.1} parent=51 // pred_fallthru
          _
        %p356 = scmp.lt.s32.totalorder %s23, 1
        %s357 = scalar_select %p356, %s23, 1
        %s358 = smul.addr %s357, 2
        %s359 = smul.addr %s358, 8
        %s360 = scalar_lea.vmem %s0, %s359
        %p361 = pneg %p44
        %p362 = pneg %p41
        %p363 = scmp.lt.s32.totalorder %s23, 1
        %s364 = scalar_select %p363, %s23, 1
        %s365 = smul.addr %s364, 2
        %s366 = smul.addr %s365, 8
        %s367 = scalar_lea.vmem %s1, %s366
        %p368 = pneg %p70
        %p369 = pneg %p67
        %p370 = pneg %p91
        %p371 = pneg %p88
        %p372 = pneg %p112
        %p373 = pneg %p109
        %p374 = pneg %p133
        %p375 = pneg %p130
        %p376 = pneg %p154
        %p377 = pneg %p151
        %p378 = pneg %p175
        %p379 = pneg %p172
        %p380 = pneg %p196
        %p381 = pneg %p193
        %p382 = pneg %p222
        %p383 = pneg %p219
        %p384 = scmp.lt.s32.totalorder %s23, 1
        %s385 = scalar_select %p384, %s23, 1
        %s386 = smul.addr %s385, 2
        %s387 = smul.addr %s386, 8
        %s388 = scalar_lea.vmem %s8, %s387
        %p389 = pneg %p248
        %p390 = pneg %p245
        %p391 = scmp.lt.s32.totalorder %s23, 1
        %s392 = scalar_select %p391, %s23, 1
        %s393 = smul.addr %s392, 2
        %s394 = smul.addr %s393, 8
        %s395 = scalar_lea.vmem %s9, %s394
        %p396 = scmp.lt.s32.totalorder %s23, 1
        %s397 = scalar_select %p396, %s23, 1
        %s398 = smul.addr %s397, 2
        %s399 = smul.addr %s398, 8
        %s400 = scalar_lea.vmem %s0, %s399
        %p401 = scmp.lt.s32.totalorder %s23, 1
        %s402 = scalar_select %p401, %s23, 1
        %s403 = smul.addr %s402, 2
        %s404 = smul.addr %s403, 8
        %s405 = scalar_lea.vmem %s1, %s404
        %p406 = scmp.lt.s32.totalorder %s23, 1
        %s407 = scalar_select %p406, %s23, 1
        %s408 = smul.addr %s407, 2
        %s409 = smul.addr %s408, 8
        %s410 = scalar_lea.vmem %s8, %s409
        %p411 = scmp.lt.s32.totalorder %s23, 1
        %s412 = scalar_select %p411, %s23, 1
        %s413 = smul.addr %s412, 2
        %s414 = smul.addr %s413, 8
        %s415 = scalar_lea.vmem %s9, %s414
        %v416 = vld [vmem:[%s400] sm:$0xff]
        %v417 = vld [vmem:[%s400 + $0x8] sm:$0xff]
        %v418 = vmax.f32 %v416, 0.0
        %v419 = vmax.f32 %v417, 0.0
        %v420 = vld [vmem:[%s405] sm:$0xff]
        %v421 = vld [vmem:[%s405 + $0x8] sm:$0xff]
        %v422 = vmax.f32 %v420, 0.0
        %v423 = vmax.f32 %v421, 0.0
        %v424 = vpack.c.bf16 %v419, %v418
        %v425 = vpack.c.bf16 %v423, %v422
        %v426 = vld [vmem:[#allocation2] sm:$0xf]
        %v427 = vld [vmem:[#allocation2 + $0x4] sm:$0xf]
        %v428 = vld [vmem:[#allocation2 + $0x8] sm:$0xf]
        %v429 = vld [vmem:[#allocation2 + $0xc] sm:$0xf]
        %v430 = vld [vmem:[#allocation2 + $0x10] sm:$0xf]
        %v431 = vld [vmem:[#allocation2 + $0x14] sm:$0xf]
        %v432 = vld [vmem:[#allocation2 + $0x18] sm:$0xf]
        %v433 = vld [vmem:[#allocation2 + $0x1c] sm:$0xf]
        %v434 = vld [vmem:[#allocation2 + $0x20] sm:$0xf]
        %v435 = vld [vmem:[#allocation2 + $0x24] sm:$0xf]
        %v436 = vld [vmem:[#allocation2 + $0x28] sm:$0xf]
        %v437 = vld [vmem:[#allocation2 + $0x2c] sm:$0xf]
        %v438 = vld [vmem:[#allocation2 + $0x30] sm:$0xf]
        %v439 = vld [vmem:[#allocation2 + $0x34] sm:$0xf]
        %v440 = vld [vmem:[#allocation2 + $0x38] sm:$0xf]
        %v441 = vld [vmem:[#allocation2 + $0x3c] sm:$0xf]
        %v442 = vld [vmem:[#allocation2 + $0x40] sm:$0xf]
        %v443 = vld [vmem:[#allocation2 + $0x44] sm:$0xf]
        %v444 = vld [vmem:[#allocation2 + $0x48] sm:$0xf]
        %v445 = vld [vmem:[#allocation2 + $0x4c] sm:$0xf]
        %v446 = vld [vmem:[#allocation2 + $0x50] sm:$0xf]
        %v447 = vld [vmem:[#allocation2 + $0x54] sm:$0xf]
        %v448 = vld [vmem:[#allocation2 + $0x58] sm:$0xf]
        %v449 = vld [vmem:[#allocation2 + $0x5c] sm:$0xf]
        %v450 = vld [vmem:[#allocation2 + $0x60] sm:$0xf]
        %v451 = vld [vmem:[#allocation2 + $0x64] sm:$0xf]
        %v452 = vld [vmem:[#allocation2 + $0x68] sm:$0xf]
        %v453 = vld [vmem:[#allocation2 + $0x6c] sm:$0xf]
        %v454 = vld [vmem:[#allocation2 + $0x70] sm:$0xf]
        %v455 = vld [vmem:[#allocation2 + $0x74] sm:$0xf]
        %v456 = vld [vmem:[#allocation2 + $0x78] sm:$0xf]
        %v457 = vld [vmem:[#allocation2 + $0x7c] sm:$0xf]
        %v458 = vld [vmem:[%s3] sm:$0x1]
        %v460 = vperm.slane %v458, 0
        %v494 = vunpack.c.l.b16 %v426
        %v495 = vunpack.c.l.b16 %v427
        %v496 = vunpack.c.l.b16 %v428
        %v497 = vunpack.c.l.b16 %v429
        %v498 = vunpack.c.l.b16 %v430
        %v499 = vunpack.c.l.b16 %v431
        %v500 = vunpack.c.l.b16 %v432
        %v501 = vunpack.c.l.b16 %v433
        %v502 = vunpack.c.l.b16 %v434
        %v503 = vunpack.c.l.b16 %v435
        %v504 = vunpack.c.l.b16 %v436
        %v505 = vunpack.c.l.b16 %v437
        %v506 = vunpack.c.l.b16 %v438
        %v507 = vunpack.c.l.b16 %v439
        %v508 = vunpack.c.l.b16 %v440
        %v509 = vunpack.c.l.b16 %v441
        %v510 = vunpack.c.l.b16 %v442
        %v511 = vunpack.c.l.b16 %v443
        %v512 = vunpack.c.l.b16 %v444
        %v513 = vunpack.c.l.b16 %v445
        %v514 = vunpack.c.l.b16 %v446
        %v515 = vunpack.c.l.b16 %v447
        %v516 = vunpack.c.l.b16 %v448
        %v517 = vunpack.c.l.b16 %v449
        %v518 = vunpack.c.l.b16 %v450
        %v519 = vunpack.c.l.b16 %v451
        %v520 = vunpack.c.l.b16 %v452
        %v521 = vunpack.c.l.b16 %v453
        %v522 = vunpack.c.l.b16 %v454
        %v523 = vunpack.c.l.b16 %v455
        %v524 = vunpack.c.l.b16 %v456
        %v525 = vunpack.c.l.b16 %v457
        %v526 = vpack.c.b16 %v495, %v494
        %v527 = vpack.c.b16 %v497, %v496
        %v528 = vpack.c.b16 %v499, %v498
        %v529 = vpack.c.b16 %v501, %v500
        %v530 = vpack.c.b16 %v503, %v502
        %v531 = vpack.c.b16 %v505, %v504
        %v532 = vpack.c.b16 %v507, %v506
        %v533 = vpack.c.b16 %v509, %v508
        %v534 = vpack.c.b16 %v511, %v510
        %v535 = vpack.c.b16 %v513, %v512
        %v536 = vpack.c.b16 %v515, %v514
        %v537 = vpack.c.b16 %v517, %v516
        %v538 = vpack.c.b16 %v519, %v518
        %v539 = vpack.c.b16 %v521, %v520
        %v540 = vpack.c.b16 %v523, %v522
        %v541 = vpack.c.b16 %v525, %v524
        %558 = vmatpush.bf16.msra.mxu0 %v533
        %559 = vmatpush.bf16.msra.mxu0 %v532
        %560 = vmatpush.bf16.msra.mxu0 %v531
        %561 = vmatpush.bf16.msra.mxu0 %v530
        %562 = vmatpush.bf16.msra.mxu0 %v529
        %563 = vmatpush.bf16.msra.mxu0 %v528
        %564 = vmatpush.bf16.msra.mxu0 %v527
        %565 = vmatpush.bf16.msra.mxu0 %v526
        %566 = vmatmul.bf16.gmra.mxu0 %v424
        %v567 = vpop.f32.mrf.mxu0
        %v568 = vadd.f32 %v460, %v567
        %v569 = vpop.f32.mrf.mxu0
        %v570 = vadd.f32 %v460, %v569
        %571 = vdwg.mxu0
        %572 = vmatpush.bf16.msra.mxu0 %v541
        %573 = vmatpush.bf16.msra.mxu0 %v540
        %574 = vmatpush.bf16.msra.mxu0 %v539
        %575 = vmatpush.bf16.msra.mxu0 %v538
        %576 = vmatpush.bf16.msra.mxu0 %v537
        %577 = vmatpush.bf16.msra.mxu0 %v536
        %578 = vmatpush.bf16.msra.mxu0 %v535
        %579 = vmatpush.bf16.msra.mxu0 %v534
        %580 = vmatmul.bf16.gmra.mxu0 %v425
        %v581 = vpop.f32.mrf.mxu0
        %v582 = vadd.f32 %v568, %v581
        %v583 = vpop.f32.mrf.mxu0
        %v584 = vadd.f32 %v570, %v583
        %585 = vdwg.mxu0
        %v586 = vlaneseq
        %v587 = vshrl.u32 %v586, 7
        %v588 = vadd.s32 %v587, 8
        %vm589 = vcmp.eq.s32.totalorder %v587, 0
        %vm590 = vcmp.eq.s32.totalorder %v588, 0
        %vm591 = vcmp.eq.s32.totalorder %v587, 15
        %vm592 = vcmp.eq.s32.totalorder %v588, 15
        %v593 = vld [vmem:[#allocation4] sm:$0xff]
        %v594 = vld [vmem:[#allocation4 + $0x8] sm:$0xf]
        %v595 = vld [vmem:[#allocation4 + $0xc] sm:$0xff]
        %v596 = vld [vmem:[#allocation4 + $0x14] sm:$0xf]
        %v597 = vld [vmem:[#allocation4 + $0x18] sm:$0xff]
        %v598 = vld [vmem:[#allocation4 + $0x20] sm:$0xf]
        %v599 = vld [vmem:[#allocation4 + $0x24] sm:$0xff]
        %v600 = vld [vmem:[#allocation4 + $0x2c] sm:$0xf]
        %v601 = vld [vmem:[#allocation4 + $0x30] sm:$0xff]
        %v602 = vld [vmem:[#allocation4 + $0x38] sm:$0xf]
        %v603 = vld [vmem:[#allocation4 + $0x3c] sm:$0xff]
        %v604 = vld [vmem:[#allocation4 + $0x44] sm:$0xf]
        %v605 = vld [vmem:[#allocation4 + $0x48] sm:$0xff]
        %v606 = vld [vmem:[#allocation4 + $0x50] sm:$0xf]
        %v607 = vld [vmem:[#allocation4 + $0x54] sm:$0xff]
        %v608 = vld [vmem:[#allocation4 + $0x5c] sm:$0xf]
        %v609 = vld [vmem:[#allocation4 + $0x60] sm:$0xff]
        %v610 = vld [vmem:[#allocation4 + $0x68] sm:$0xf]
        %v611 = vld [vmem:[#allocation4 + $0x6c] sm:$0xff]
        %v612 = vld [vmem:[#allocation4 + $0x74] sm:$0xf]
        %v613 = vld [vmem:[#allocation4 + $0x78] sm:$0xff]
        %v614 = vld [vmem:[#allocation4 + $0x80] sm:$0xf]
        %v615 = vld [vmem:[#allocation4 + $0x84] sm:$0xff]
        %v616 = vld [vmem:[#allocation4 + $0x8c] sm:$0xf]
        %v617 = vld [vmem:[#allocation4 + $0x90] sm:$0xff]
        %v618 = vld [vmem:[#allocation4 + $0x98] sm:$0xf]
        %v619 = vld [vmem:[#allocation4 + $0x9c] sm:$0xff]
        %v620 = vld [vmem:[#allocation4 + $0xa4] sm:$0xf]
        %v621 = vld [vmem:[#allocation4 + $0xa8] sm:$0xff]
        %v622 = vld [vmem:[#allocation4 + $0xb0] sm:$0xf]
        %v623 = vld [vmem:[#allocation4 + $0xb4] sm:$0xff]
        %v624 = vld [vmem:[#allocation4 + $0xbc] sm:$0xf]
        %v625 = vpack.c.bf16 %v584, %v582
        %v658 = vunpack.c.l.b16 %v593
        %v659 = vunpack.c.h.b16 %v593
        %v660 = vunpack.c.l.b16 %v594
        %v661 = vunpack.c.l.b16 %v595
        %v662 = vunpack.c.h.b16 %v595
        %v663 = vunpack.c.l.b16 %v596
        %v664 = vunpack.c.l.b16 %v597
        %v665 = vunpack.c.h.b16 %v597
        %v666 = vunpack.c.l.b16 %v598
        %v667 = vunpack.c.l.b16 %v599
        %v668 = vunpack.c.h.b16 %v599
        %v669 = vunpack.c.l.b16 %v600
        %v670 = vunpack.c.l.b16 %v601
        %v671 = vunpack.c.h.b16 %v601
        %v672 = vunpack.c.l.b16 %v602
        %v673 = vunpack.c.l.b16 %v603
        %v674 = vunpack.c.h.b16 %v603
        %v675 = vunpack.c.l.b16 %v604
        %v676 = vunpack.c.l.b16 %v605
        %v677 = vunpack.c.h.b16 %v605
        %v678 = vunpack.c.l.b16 %v606
        %v679 = vunpack.c.l.b16 %v607
        %v680 = vunpack.c.h.b16 %v607
        %v681 = vunpack.c.l.b16 %v608
        %v682 = vunpack.c.l.b16 %v609
        %v683 = vunpack.c.h.b16 %v609
        %v684 = vunpack.c.l.b16 %v610
        %v685 = vunpack.c.l.b16 %v611
        %v686 = vunpack.c.h.b16 %v611
        %v687 = vunpack.c.l.b16 %v612
        %v688 = vunpack.c.l.b16 %v613
        %v689 = vunpack.c.h.b16 %v613
        %v690 = vunpack.c.l.b16 %v614
        %v691 = vunpack.c.l.b16 %v615
        %v692 = vunpack.c.h.b16 %v615
        %v693 = vunpack.c.l.b16 %v616
        %v694 = vunpack.c.l.b16 %v617
        %v695 = vunpack.c.h.b16 %v617
        %v696 = vunpack.c.l.b16 %v618
        %v697 = vunpack.c.l.b16 %v619
        %v698 = vunpack.c.h.b16 %v619
        %v699 = vunpack.c.l.b16 %v620
        %v700 = vunpack.c.l.b16 %v621
        %v701 = vunpack.c.h.b16 %v621
        %v702 = vunpack.c.l.b16 %v622
        %v703 = vunpack.c.l.b16 %v623
        %v704 = vunpack.c.h.b16 %v623
        %v705 = vunpack.c.l.b16 %v624
        %v706 = vpack.c.b16 %v661, %v658
        %v707 = vpack.c.b16 %v662, %v659
        %v708 = vpack.c.b16 %v663, %v660
        %v709 = vpack.c.b16 %v667, %v664
        %v710 = vpack.c.b16 %v668, %v665
        %v711 = vpack.c.b16 %v669, %v666
        %v712 = vpack.c.b16 %v673, %v670
        %v713 = vpack.c.b16 %v674, %v671
        %v714 = vpack.c.b16 %v675, %v672
        %v715 = vpack.c.b16 %v679, %v676
        %v716 = vpack.c.b16 %v680, %v677
        %v717 = vpack.c.b16 %v681, %v678
        %v718 = vpack.c.b16 %v685, %v682
        %v719 = vpack.c.b16 %v686, %v683
        %v720 = vpack.c.b16 %v687, %v684
        %v721 = vpack.c.b16 %v691, %v688
        %v722 = vpack.c.b16 %v692, %v689
        %v723 = vpack.c.b16 %v693, %v690
        %v724 = vpack.c.b16 %v697, %v694
        %v725 = vpack.c.b16 %v698, %v695
        %v726 = vpack.c.b16 %v699, %v696
        %v727 = vpack.c.b16 %v703, %v700
        %v728 = vpack.c.b16 %v704, %v701
        %v729 = vpack.c.b16 %v705, %v702
        %754 = vmatpush.bf16.msra.mxu0 %v727
        %755 = vmatpush.bf16.msra.mxu0 %v724
        %756 = vmatpush.bf16.msra.mxu0 %v721
        %757 = vmatpush.bf16.msra.mxu0 %v718
        %758 = vmatpush.bf16.msra.mxu0 %v715
        %759 = vmatpush.bf16.msra.mxu0 %v712
        %760 = vmatpush.bf16.msra.mxu0 %v709
        %761 = vmatpush.bf16.msra.mxu0 %v706
        %762 = vmatmul.bf16.gmra.mxu0 %v625
        %v763 = vpop.f32.mrf.mxu0
        %v764 = vadd.f32 0.0, %v763
        %v765 = vpop.f32.mrf.mxu0
        %v766 = vadd.f32 0.0, %v765
        %767 = vdwg.mxu0
        %768 = vmatpush.bf16.msra.mxu0 %v728
        %769 = vmatpush.bf16.msra.mxu0 %v725
        %770 = vmatpush.bf16.msra.mxu0 %v722
        %771 = vmatpush.bf16.msra.mxu0 %v719
        %772 = vmatpush.bf16.msra.mxu0 %v716
        %773 = vmatpush.bf16.msra.mxu0 %v713
        %774 = vmatpush.bf16.msra.mxu0 %v710
        %775 = vmatpush.bf16.msra.mxu0 %v707
        %776 = vmatmul.bf16.gmra.mxu0 %v625
        %v777 = vpop.f32.mrf.mxu0
        %v778 = vadd.f32 0.0, %v777
        %v779 = vpop.f32.mrf.mxu0
        %v780 = vadd.f32 0.0, %v779
        %781 = vdwg.mxu0
        %782 = vmatpush.bf16.msra.mxu0 %v729
        %783 = vmatpush.bf16.msra.mxu0 %v726
        %784 = vmatpush.bf16.msra.mxu0 %v723
        %785 = vmatpush.bf16.msra.mxu0 %v720
        %786 = vmatpush.bf16.msra.mxu0 %v717
        %787 = vmatpush.bf16.msra.mxu0 %v714
        %788 = vmatpush.bf16.msra.mxu0 %v711
        %789 = vmatpush.bf16.msra.mxu0 %v708
        %790 = vmatmul.bf16.gmra.mxu0 %v625
        %v791 = vpop.f32.mrf.mxu0
        %v792 = vadd.f32 0.0, %v791
        %v793 = vpop.f32.mrf.mxu0
        %v794 = vadd.f32 0.0, %v793
        %795 = vdwg.mxu0
        %v796 = vrot.slane %v764, 7
        %v797 = vrot.slane %v766, 7
        %vm798 = vcmp.lt.s32.totalorder %v587, 1
        %v799 = vsel %vm798, %v796, %v797
        %v800 = vsel %vm798, %v797, %v796
        %v801 = vsel %vm589, 1, 0
        %v802 = vsel %vm590, 1, 0
        %vm803 = vcmp.eq.s32.totalorder %v801, 1
        %vm804 = vcmp.eq.s32.totalorder %v802, 1
        %v805 = vsel %vm803, 0.0, %v800
        %v806 = vsel %vm804, 0.0, %v799
        %v807 = vrot.slane %v792, 1
        %v808 = vrot.slane %v794, 1
        %vm809 = vcmp.lt.s32.totalorder %v587, 7
        %v810 = vsel %vm809, %v807, %v808
        %v811 = vsel %vm809, %v808, %v807
        %v812 = vsel %vm591, 1, 0
        %v813 = vsel %vm592, 1, 0
        %vm814 = vcmp.eq.s32.totalorder %v812, 1
        %vm815 = vcmp.eq.s32.totalorder %v813, 1
        %v816 = vsel %vm814, 0.0, %v810
        %v817 = vsel %vm815, 0.0, %v811
        %v818 = vadd.f32 %v778, %v805
        %v819 = vadd.f32 %v780, %v806
        %v820 = vadd.f32 %v818, %v816
        %v821 = vadd.f32 %v819, %v817
        %v822 = vadd.f32 %v820, %v821
        %v823 = vrot.slane %v822, 4
        %v824 = vadd.f32 %v822, %v823
        %v825 = vrot.slane %v824, 2
        %v826 = vadd.f32 %v824, %v825
        %v827 = vrot.slane %v826, 1
        %v828 = vadd.f32 %v826, %v827
        %v829 = vmul.f32 %v820, %v820
        %v830 = vmul.f32 %v821, %v821
        %v831 = vadd.f32 %v829, %v830
        %v832 = vrot.slane %v831, 4
        %v833 = vadd.f32 %v831, %v832
        %v834 = vrot.slane %v833, 2
        %v835 = vadd.f32 %v833, %v834
        %v836 = vrot.slane %v835, 1
        %v837 = vadd.f32 %v835, %v836
        %v838 = vmul.f32 %v828, 0.0625
        %v839 = vmul.f32 %v837, 0.0625
        %v840 = vmul.f32 %v838, %v838
        %v841 = vsub.f32 %v839, %v840
        %v842 = vmax.f32 %v841, 0.0
        %v843 = vsub.f32 %v820, %v838
        %v844 = vsub.f32 %v821, %v838
        %v845 = vadd.f32 %v842, 1e-05
        %v846 = vrsqrt.pop %v845
        %v847 = vmul.f32 %v846, %v845
        %v848 = vmul.f32 %v847, %v846
        %v849 = vmul.f32 0.5, %v848
        %v850 = vsub.f32 1.5, %v849
        %v851 = vmul.f32 %v846, %v850
        %vm852 = vweird.f32 %v845
        %vm853 = vweird.f32 %v846
        %vm854 = vmor %vm852, %vm853
        %v855 = vsel %vm854, %v846, %v851
        %v856 = vmul.f32 %v843, %v855
        %v857 = vmul.f32 %v844, %v855
        %v858 = vmax.f32 %v856, 0.0
        %v859 = vmax.f32 %v857, 0.0
        %s860 = scalar_lea.vmem [#allocation4], 192
        %v861 = vld [vmem:[%s860] sm:$0xff]
        %v862 = vld [vmem:[%s860 + $0x8] sm:$0xf]
        %v863 = vld [vmem:[%s860 + $0xc] sm:$0xff]
        %v864 = vld [vmem:[%s860 + $0x14] sm:$0xf]
        %v865 = vld [vmem:[%s860 + $0x18] sm:$0xff]
        %v866 = vld [vmem:[%s860 + $0x20] sm:$0xf]
        %v867 = vld [vmem:[%s860 + $0x24] sm:$0xff]
        %v868 = vld [vmem:[%s860 + $0x2c] sm:$0xf]
        %v869 = vld [vmem:[%s860 + $0x30] sm:$0xff]
        %v870 = vld [vmem:[%s860 + $0x38] sm:$0xf]
        %v871 = vld [vmem:[%s860 + $0x3c] sm:$0xff]
        %v872 = vld [vmem:[%s860 + $0x44] sm:$0xf]
        %v873 = vld [vmem:[%s860 + $0x48] sm:$0xff]
        %v874 = vld [vmem:[%s860 + $0x50] sm:$0xf]
        %v875 = vld [vmem:[%s860 + $0x54] sm:$0xff]
        %v876 = vld [vmem:[%s860 + $0x5c] sm:$0xf]
        %v877 = vld [vmem:[%s860 + $0x60] sm:$0xff]
        %v878 = vld [vmem:[%s860 + $0x68] sm:$0xf]
        %v879 = vld [vmem:[%s860 + $0x6c] sm:$0xff]
        %v880 = vld [vmem:[%s860 + $0x74] sm:$0xf]
        %v881 = vld [vmem:[%s860 + $0x78] sm:$0xff]
        %v882 = vld [vmem:[%s860 + $0x80] sm:$0xf]
        %v883 = vld [vmem:[%s860 + $0x84] sm:$0xff]
        %v884 = vld [vmem:[%s860 + $0x8c] sm:$0xf]
        %v885 = vld [vmem:[%s860 + $0x90] sm:$0xff]
        %v886 = vld [vmem:[%s860 + $0x98] sm:$0xf]
        %v887 = vld [vmem:[%s860 + $0x9c] sm:$0xff]
        %v888 = vld [vmem:[%s860 + $0xa4] sm:$0xf]
        %v889 = vld [vmem:[%s860 + $0xa8] sm:$0xff]
        %v890 = vld [vmem:[%s860 + $0xb0] sm:$0xf]
        %v891 = vld [vmem:[%s860 + $0xb4] sm:$0xff]
        %v892 = vld [vmem:[%s860 + $0xbc] sm:$0xf]
        %v893 = vpack.c.bf16 %v859, %v858
        %v926 = vunpack.c.l.b16 %v861
        %v927 = vunpack.c.h.b16 %v861
        %v928 = vunpack.c.l.b16 %v862
        %v929 = vunpack.c.l.b16 %v863
        %v930 = vunpack.c.h.b16 %v863
        %v931 = vunpack.c.l.b16 %v864
        %v932 = vunpack.c.l.b16 %v865
        %v933 = vunpack.c.h.b16 %v865
        %v934 = vunpack.c.l.b16 %v866
        %v935 = vunpack.c.l.b16 %v867
        %v936 = vunpack.c.h.b16 %v867
        %v937 = vunpack.c.l.b16 %v868
        %v938 = vunpack.c.l.b16 %v869
        %v939 = vunpack.c.h.b16 %v869
        %v940 = vunpack.c.l.b16 %v870
        %v941 = vunpack.c.l.b16 %v871
        %v942 = vunpack.c.h.b16 %v871
        %v943 = vunpack.c.l.b16 %v872
        %v944 = vunpack.c.l.b16 %v873
        %v945 = vunpack.c.h.b16 %v873
        %v946 = vunpack.c.l.b16 %v874
        %v947 = vunpack.c.l.b16 %v875
        %v948 = vunpack.c.h.b16 %v875
        %v949 = vunpack.c.l.b16 %v876
        %v950 = vunpack.c.l.b16 %v877
        %v951 = vunpack.c.h.b16 %v877
        %v952 = vunpack.c.l.b16 %v878
        %v953 = vunpack.c.l.b16 %v879
        %v954 = vunpack.c.h.b16 %v879
        %v955 = vunpack.c.l.b16 %v880
        %v956 = vunpack.c.l.b16 %v881
        %v957 = vunpack.c.h.b16 %v881
        %v958 = vunpack.c.l.b16 %v882
        %v959 = vunpack.c.l.b16 %v883
        %v960 = vunpack.c.h.b16 %v883
        %v961 = vunpack.c.l.b16 %v884
        %v962 = vunpack.c.l.b16 %v885
        %v963 = vunpack.c.h.b16 %v885
        %v964 = vunpack.c.l.b16 %v886
        %v965 = vunpack.c.l.b16 %v887
        %v966 = vunpack.c.h.b16 %v887
        %v967 = vunpack.c.l.b16 %v888
        %v968 = vunpack.c.l.b16 %v889
        %v969 = vunpack.c.h.b16 %v889
        %v970 = vunpack.c.l.b16 %v890
        %v971 = vunpack.c.l.b16 %v891
        %v972 = vunpack.c.h.b16 %v891
        %v973 = vunpack.c.l.b16 %v892
        %v974 = vpack.c.b16 %v929, %v926
        %v975 = vpack.c.b16 %v930, %v927
        %v976 = vpack.c.b16 %v931, %v928
        %v977 = vpack.c.b16 %v935, %v932
        %v978 = vpack.c.b16 %v936, %v933
        %v979 = vpack.c.b16 %v937, %v934
        %v980 = vpack.c.b16 %v941, %v938
        %v981 = vpack.c.b16 %v942, %v939
        %v982 = vpack.c.b16 %v943, %v940
        %v983 = vpack.c.b16 %v947, %v944
        %v984 = vpack.c.b16 %v948, %v945
        %v985 = vpack.c.b16 %v949, %v946
        %v986 = vpack.c.b16 %v953, %v950
        %v987 = vpack.c.b16 %v954, %v951
        %v988 = vpack.c.b16 %v955, %v952
        %v989 = vpack.c.b16 %v959, %v956
        %v990 = vpack.c.b16 %v960, %v957
        %v991 = vpack.c.b16 %v961, %v958
        %v992 = vpack.c.b16 %v965, %v962
        %v993 = vpack.c.b16 %v966, %v963
        %v994 = vpack.c.b16 %v967, %v964
        %v995 = vpack.c.b16 %v971, %v968
        %v996 = vpack.c.b16 %v972, %v969
        %v997 = vpack.c.b16 %v973, %v970
        %1022 = vmatpush.bf16.msra.mxu0 %v995
        %1023 = vmatpush.bf16.msra.mxu0 %v992
        %1024 = vmatpush.bf16.msra.mxu0 %v989
        %1025 = vmatpush.bf16.msra.mxu0 %v986
        %1026 = vmatpush.bf16.msra.mxu0 %v983
        %1027 = vmatpush.bf16.msra.mxu0 %v980
        %1028 = vmatpush.bf16.msra.mxu0 %v977
        %1029 = vmatpush.bf16.msra.mxu0 %v974
        %1030 = vmatmul.bf16.gmra.mxu0 %v893
        %v1031 = vpop.f32.mrf.mxu0
        %v1032 = vadd.f32 0.0, %v1031
        %v1033 = vpop.f32.mrf.mxu0
        %v1034 = vadd.f32 0.0, %v1033
        %1035 = vdwg.mxu0
        %1036 = vmatpush.bf16.msra.mxu0 %v996
        %1037 = vmatpush.bf16.msra.mxu0 %v993
        %1038 = vmatpush.bf16.msra.mxu0 %v990
        %1039 = vmatpush.bf16.msra.mxu0 %v987
        %1040 = vmatpush.bf16.msra.mxu0 %v984
        %1041 = vmatpush.bf16.msra.mxu0 %v981
        %1042 = vmatpush.bf16.msra.mxu0 %v978
        %1043 = vmatpush.bf16.msra.mxu0 %v975
        %1044 = vmatmul.bf16.gmra.mxu0 %v893
        %v1045 = vpop.f32.mrf.mxu0
        %v1046 = vadd.f32 0.0, %v1045
        %v1047 = vpop.f32.mrf.mxu0
        %v1048 = vadd.f32 0.0, %v1047
        %1049 = vdwg.mxu0
        %1050 = vmatpush.bf16.msra.mxu0 %v997
        %1051 = vmatpush.bf16.msra.mxu0 %v994
        %1052 = vmatpush.bf16.msra.mxu0 %v991
        %1053 = vmatpush.bf16.msra.mxu0 %v988
        %1054 = vmatpush.bf16.msra.mxu0 %v985
        %1055 = vmatpush.bf16.msra.mxu0 %v982
        %1056 = vmatpush.bf16.msra.mxu0 %v979
        %1057 = vmatpush.bf16.msra.mxu0 %v976
        %1058 = vmatmul.bf16.gmra.mxu0 %v893
        %v1059 = vpop.f32.mrf.mxu0
        %v1060 = vadd.f32 0.0, %v1059
        %v1061 = vpop.f32.mrf.mxu0
        %v1062 = vadd.f32 0.0, %v1061
        %1063 = vdwg.mxu0
        %v1064 = vrot.slane %v1032, 7
        %v1065 = vrot.slane %v1034, 7
        %v1066 = vsel %vm798, %v1064, %v1065
        %v1067 = vsel %vm798, %v1065, %v1064
        %v1068 = vsel %vm803, 0.0, %v1067
        %v1069 = vsel %vm804, 0.0, %v1066
        %v1070 = vrot.slane %v1060, 1
        %v1071 = vrot.slane %v1062, 1
        %v1072 = vsel %vm809, %v1070, %v1071
        %v1073 = vsel %vm809, %v1071, %v1070
        %v1074 = vsel %vm814, 0.0, %v1072
        %v1075 = vsel %vm815, 0.0, %v1073
        %v1076 = vadd.f32 %v1046, %v1068
        %v1077 = vadd.f32 %v1048, %v1069
        %v1078 = vadd.f32 %v1076, %v1074
        %v1079 = vadd.f32 %v1077, %v1075
        %v1080 = vadd.f32 %v1078, %v1079
        %v1081 = vrot.slane %v1080, 4
        %v1082 = vadd.f32 %v1080, %v1081
        %v1083 = vrot.slane %v1082, 2
        %v1084 = vadd.f32 %v1082, %v1083
        %v1085 = vrot.slane %v1084, 1
        %v1086 = vadd.f32 %v1084, %v1085
        %v1087 = vmul.f32 %v1078, %v1078
        %v1088 = vmul.f32 %v1079, %v1079
        %v1089 = vadd.f32 %v1087, %v1088
        %v1090 = vrot.slane %v1089, 4
        %v1091 = vadd.f32 %v1089, %v1090
        %v1092 = vrot.slane %v1091, 2
        %v1093 = vadd.f32 %v1091, %v1092
        %v1094 = vrot.slane %v1093, 1
        %v1095 = vadd.f32 %v1093, %v1094
        %v1096 = vmul.f32 %v1086, 0.0625
        %v1097 = vmul.f32 %v1095, 0.0625
        %v1098 = vmul.f32 %v1096, %v1096
        %v1099 = vsub.f32 %v1097, %v1098
        %v1100 = vmax.f32 %v1099, 0.0
        %v1101 = vsub.f32 %v1078, %v1096
        %v1102 = vsub.f32 %v1079, %v1096
        %v1103 = vadd.f32 %v1100, 1e-05
        %v1104 = vrsqrt.pop %v1103
        %v1105 = vmul.f32 %v1104, %v1103
        %v1106 = vmul.f32 %v1105, %v1104
        %v1107 = vmul.f32 0.5, %v1106
        %v1108 = vsub.f32 1.5, %v1107
        %v1109 = vmul.f32 %v1104, %v1108
        %vm1110 = vweird.f32 %v1103
        %vm1111 = vweird.f32 %v1104
        %vm1112 = vmor %vm1110, %vm1111
        %v1113 = vsel %vm1112, %v1104, %v1109
        %v1114 = vmul.f32 %v1101, %v1113
        %v1115 = vmul.f32 %v1102, %v1113
        %v1116 = vadd.f32 %v1114, %v582
        %v1117 = vadd.f32 %v1115, %v584
        %v1118 = vmax.f32 %v1116, 0.0
        %v1119 = vmax.f32 %v1117, 0.0
        %s1120 = scalar_lea.vmem [#allocation4], 384
        %v1121 = vld [vmem:[%s1120] sm:$0xff]
        %v1122 = vld [vmem:[%s1120 + $0x8] sm:$0xf]
        %v1123 = vld [vmem:[%s1120 + $0xc] sm:$0xff]
        %v1124 = vld [vmem:[%s1120 + $0x14] sm:$0xf]
        %v1125 = vld [vmem:[%s1120 + $0x18] sm:$0xff]
        %v1126 = vld [vmem:[%s1120 + $0x20] sm:$0xf]
        %v1127 = vld [vmem:[%s1120 + $0x24] sm:$0xff]
        %v1128 = vld [vmem:[%s1120 + $0x2c] sm:$0xf]
        %v1129 = vld [vmem:[%s1120 + $0x30] sm:$0xff]
        %v1130 = vld [vmem:[%s1120 + $0x38] sm:$0xf]
        %v1131 = vld [vmem:[%s1120 + $0x3c] sm:$0xff]
        %v1132 = vld [vmem:[%s1120 + $0x44] sm:$0xf]
        %v1133 = vld [vmem:[%s1120 + $0x48] sm:$0xff]
        %v1134 = vld [vmem:[%s1120 + $0x50] sm:$0xf]
        %v1135 = vld [vmem:[%s1120 + $0x54] sm:$0xff]
        %v1136 = vld [vmem:[%s1120 + $0x5c] sm:$0xf]
        %v1137 = vld [vmem:[%s1120 + $0x60] sm:$0xff]
        %v1138 = vld [vmem:[%s1120 + $0x68] sm:$0xf]
        %v1139 = vld [vmem:[%s1120 + $0x6c] sm:$0xff]
        %v1140 = vld [vmem:[%s1120 + $0x74] sm:$0xf]
        %v1141 = vld [vmem:[%s1120 + $0x78] sm:$0xff]
        %v1142 = vld [vmem:[%s1120 + $0x80] sm:$0xf]
        %v1143 = vld [vmem:[%s1120 + $0x84] sm:$0xff]
        %v1144 = vld [vmem:[%s1120 + $0x8c] sm:$0xf]
        %v1145 = vld [vmem:[%s1120 + $0x90] sm:$0xff]
        %v1146 = vld [vmem:[%s1120 + $0x98] sm:$0xf]
        %v1147 = vld [vmem:[%s1120 + $0x9c] sm:$0xff]
        %v1148 = vld [vmem:[%s1120 + $0xa4] sm:$0xf]
        %v1149 = vld [vmem:[%s1120 + $0xa8] sm:$0xff]
        %v1150 = vld [vmem:[%s1120 + $0xb0] sm:$0xf]
        %v1151 = vld [vmem:[%s1120 + $0xb4] sm:$0xff]
        %v1152 = vld [vmem:[%s1120 + $0xbc] sm:$0xf]
        %v1153 = vpack.c.bf16 %v1119, %v1118
        %v1186 = vunpack.c.l.b16 %v1121
        %v1187 = vunpack.c.h.b16 %v1121
        %v1188 = vunpack.c.l.b16 %v1122
        %v1189 = vunpack.c.l.b16 %v1123
        %v1190 = vunpack.c.h.b16 %v1123
        %v1191 = vunpack.c.l.b16 %v1124
        %v1192 = vunpack.c.l.b16 %v1125
        %v1193 = vunpack.c.h.b16 %v1125
        %v1194 = vunpack.c.l.b16 %v1126
        %v1195 = vunpack.c.l.b16 %v1127
        %v1196 = vunpack.c.h.b16 %v1127
        %v1197 = vunpack.c.l.b16 %v1128
        %v1198 = vunpack.c.l.b16 %v1129
        %v1199 = vunpack.c.h.b16 %v1129
        %v1200 = vunpack.c.l.b16 %v1130
        %v1201 = vunpack.c.l.b16 %v1131
        %v1202 = vunpack.c.h.b16 %v1131
        %v1203 = vunpack.c.l.b16 %v1132
        %v1204 = vunpack.c.l.b16 %v1133
        %v1205 = vunpack.c.h.b16 %v1133
        %v1206 = vunpack.c.l.b16 %v1134
        %v1207 = vunpack.c.l.b16 %v1135
        %v1208 = vunpack.c.h.b16 %v1135
        %v1209 = vunpack.c.l.b16 %v1136
        %v1210 = vunpack.c.l.b16 %v1137
        %v1211 = vunpack.c.h.b16 %v1137
        %v1212 = vunpack.c.l.b16 %v1138
        %v1213 = vunpack.c.l.b16 %v1139
        %v1214 = vunpack.c.h.b16 %v1139
        %v1215 = vunpack.c.l.b16 %v1140
        %v1216 = vunpack.c.l.b16 %v1141
        %v1217 = vunpack.c.h.b16 %v1141
        %v1218 = vunpack.c.l.b16 %v1142
        %v1219 = vunpack.c.l.b16 %v1143
        %v1220 = vunpack.c.h.b16 %v1143
        %v1221 = vunpack.c.l.b16 %v1144
        %v1222 = vunpack.c.l.b16 %v1145
        %v1223 = vunpack.c.h.b16 %v1145
        %v1224 = vunpack.c.l.b16 %v1146
        %v1225 = vunpack.c.l.b16 %v1147
        %v1226 = vunpack.c.h.b16 %v1147
        %v1227 = vunpack.c.l.b16 %v1148
        %v1228 = vunpack.c.l.b16 %v1149
        %v1229 = vunpack.c.h.b16 %v1149
        %v1230 = vunpack.c.l.b16 %v1150
        %v1231 = vunpack.c.l.b16 %v1151
        %v1232 = vunpack.c.h.b16 %v1151
        %v1233 = vunpack.c.l.b16 %v1152
        %v1234 = vpack.c.b16 %v1189, %v1186
        %v1235 = vpack.c.b16 %v1190, %v1187
        %v1236 = vpack.c.b16 %v1191, %v1188
        %v1237 = vpack.c.b16 %v1195, %v1192
        %v1238 = vpack.c.b16 %v1196, %v1193
        %v1239 = vpack.c.b16 %v1197, %v1194
        %v1240 = vpack.c.b16 %v1201, %v1198
        %v1241 = vpack.c.b16 %v1202, %v1199
        %v1242 = vpack.c.b16 %v1203, %v1200
        %v1243 = vpack.c.b16 %v1207, %v1204
        %v1244 = vpack.c.b16 %v1208, %v1205
        %v1245 = vpack.c.b16 %v1209, %v1206
        %v1246 = vpack.c.b16 %v1213, %v1210
        %v1247 = vpack.c.b16 %v1214, %v1211
        %v1248 = vpack.c.b16 %v1215, %v1212
        %v1249 = vpack.c.b16 %v1219, %v1216
        %v1250 = vpack.c.b16 %v1220, %v1217
        %v1251 = vpack.c.b16 %v1221, %v1218
        %v1252 = vpack.c.b16 %v1225, %v1222
        %v1253 = vpack.c.b16 %v1226, %v1223
        %v1254 = vpack.c.b16 %v1227, %v1224
        %v1255 = vpack.c.b16 %v1231, %v1228
        %v1256 = vpack.c.b16 %v1232, %v1229
        %v1257 = vpack.c.b16 %v1233, %v1230
        %1282 = vmatpush.bf16.msra.mxu0 %v1255
        %1283 = vmatpush.bf16.msra.mxu0 %v1252
        %1284 = vmatpush.bf16.msra.mxu0 %v1249
        %1285 = vmatpush.bf16.msra.mxu0 %v1246
        %1286 = vmatpush.bf16.msra.mxu0 %v1243
        %1287 = vmatpush.bf16.msra.mxu0 %v1240
        %1288 = vmatpush.bf16.msra.mxu0 %v1237
        %1289 = vmatpush.bf16.msra.mxu0 %v1234
        %1290 = vmatmul.bf16.gmra.mxu0 %v1153
        %v1291 = vpop.f32.mrf.mxu0
        %v1292 = vadd.f32 0.0, %v1291
        %v1293 = vpop.f32.mrf.mxu0
        %v1294 = vadd.f32 0.0, %v1293
        %1295 = vdwg.mxu0
        %1296 = vmatpush.bf16.msra.mxu0 %v1256
        %1297 = vmatpush.bf16.msra.mxu0 %v1253
        %1298 = vmatpush.bf16.msra.mxu0 %v1250
        %1299 = vmatpush.bf16.msra.mxu0 %v1247
        %1300 = vmatpush.bf16.msra.mxu0 %v1244
        %1301 = vmatpush.bf16.msra.mxu0 %v1241
        %1302 = vmatpush.bf16.msra.mxu0 %v1238
        %1303 = vmatpush.bf16.msra.mxu0 %v1235
        %1304 = vmatmul.bf16.gmra.mxu0 %v1153
        %v1305 = vpop.f32.mrf.mxu0
        %v1306 = vadd.f32 0.0, %v1305
        %v1307 = vpop.f32.mrf.mxu0
        %v1308 = vadd.f32 0.0, %v1307
        %1309 = vdwg.mxu0
        %1310 = vmatpush.bf16.msra.mxu0 %v1257
        %1311 = vmatpush.bf16.msra.mxu0 %v1254
        %1312 = vmatpush.bf16.msra.mxu0 %v1251
        %1313 = vmatpush.bf16.msra.mxu0 %v1248
        %1314 = vmatpush.bf16.msra.mxu0 %v1245
        %1315 = vmatpush.bf16.msra.mxu0 %v1242
        %1316 = vmatpush.bf16.msra.mxu0 %v1239
        %1317 = vmatpush.bf16.msra.mxu0 %v1236
        %1318 = vmatmul.bf16.gmra.mxu0 %v1153
        %v1319 = vpop.f32.mrf.mxu0
        %v1320 = vadd.f32 0.0, %v1319
        %v1321 = vpop.f32.mrf.mxu0
        %v1322 = vadd.f32 0.0, %v1321
        %1323 = vdwg.mxu0
        %v1324 = vrot.slane %v1292, 7
        %v1325 = vrot.slane %v1294, 7
        %v1326 = vsel %vm798, %v1324, %v1325
        %v1327 = vsel %vm798, %v1325, %v1324
        %v1328 = vsel %vm803, 0.0, %v1327
        %v1329 = vsel %vm804, 0.0, %v1326
        %v1330 = vrot.slane %v1320, 1
        %v1331 = vrot.slane %v1322, 1
        %v1332 = vsel %vm809, %v1330, %v1331
        %v1333 = vsel %vm809, %v1331, %v1330
        %v1334 = vsel %vm814, 0.0, %v1332
        %v1335 = vsel %vm815, 0.0, %v1333
        %v1336 = vadd.f32 %v1306, %v1328
        %v1337 = vadd.f32 %v1308, %v1329
        %v1338 = vadd.f32 %v1336, %v1334
        %v1339 = vadd.f32 %v1337, %v1335
        %v1340 = vadd.f32 %v1338, %v1339
        %v1341 = vrot.slane %v1340, 4
        %v1342 = vadd.f32 %v1340, %v1341
        %v1343 = vrot.slane %v1342, 2
        %v1344 = vadd.f32 %v1342, %v1343
        %v1345 = vrot.slane %v1344, 1
        %v1346 = vadd.f32 %v1344, %v1345
        %v1347 = vmul.f32 %v1338, %v1338
        %v1348 = vmul.f32 %v1339, %v1339
        %v1349 = vadd.f32 %v1347, %v1348
        %v1350 = vrot.slane %v1349, 4
        %v1351 = vadd.f32 %v1349, %v1350
        %v1352 = vrot.slane %v1351, 2
        %v1353 = vadd.f32 %v1351, %v1352
        %v1354 = vrot.slane %v1353, 1
        %v1355 = vadd.f32 %v1353, %v1354
        %v1356 = vmul.f32 %v1346, 0.0625
        %v1357 = vmul.f32 %v1355, 0.0625
        %v1358 = vmul.f32 %v1356, %v1356
        %v1359 = vsub.f32 %v1357, %v1358
        %v1360 = vmax.f32 %v1359, 0.0
        %v1361 = vsub.f32 %v1338, %v1356
        %v1362 = vsub.f32 %v1339, %v1356
        %v1363 = vadd.f32 %v1360, 1e-05
        %v1364 = vrsqrt.pop %v1363
        %v1365 = vmul.f32 %v1364, %v1363
        %v1366 = vmul.f32 %v1365, %v1364
        %v1367 = vmul.f32 0.5, %v1366
        %v1368 = vsub.f32 1.5, %v1367
        %v1369 = vmul.f32 %v1364, %v1368
        %vm1370 = vweird.f32 %v1363
        %vm1371 = vweird.f32 %v1364
        %vm1372 = vmor %vm1370, %vm1371
        %v1373 = vsel %vm1372, %v1364, %v1369
        %v1374 = vmul.f32 %v1361, %v1373
        %v1375 = vmul.f32 %v1362, %v1373
        %v1376 = vmax.f32 %v1374, 0.0
        %v1377 = vmax.f32 %v1375, 0.0
        %s1378 = scalar_lea.vmem [#allocation4], 576
        %v1379 = vld [vmem:[%s1378] sm:$0xff]
        %v1380 = vld [vmem:[%s1378 + $0x8] sm:$0xf]
        %v1381 = vld [vmem:[%s1378 + $0xc] sm:$0xff]
        %v1382 = vld [vmem:[%s1378 + $0x14] sm:$0xf]
        %v1383 = vld [vmem:[%s1378 + $0x18] sm:$0xff]
        %v1384 = vld [vmem:[%s1378 + $0x20] sm:$0xf]
        %v1385 = vld [vmem:[%s1378 + $0x24] sm:$0xff]
        %v1386 = vld [vmem:[%s1378 + $0x2c] sm:$0xf]
        %v1387 = vld [vmem:[%s1378 + $0x30] sm:$0xff]
        %v1388 = vld [vmem:[%s1378 + $0x38] sm:$0xf]
        %v1389 = vld [vmem:[%s1378 + $0x3c] sm:$0xff]
        %v1390 = vld [vmem:[%s1378 + $0x44] sm:$0xf]
        %v1391 = vld [vmem:[%s1378 + $0x48] sm:$0xff]
        %v1392 = vld [vmem:[%s1378 + $0x50] sm:$0xf]
        %v1393 = vld [vmem:[%s1378 + $0x54] sm:$0xff]
        %v1394 = vld [vmem:[%s1378 + $0x5c] sm:$0xf]
        %v1395 = vld [vmem:[%s1378 + $0x60] sm:$0xff]
        %v1396 = vld [vmem:[%s1378 + $0x68] sm:$0xf]
        %v1397 = vld [vmem:[%s1378 + $0x6c] sm:$0xff]
        %v1398 = vld [vmem:[%s1378 + $0x74] sm:$0xf]
        %v1399 = vld [vmem:[%s1378 + $0x78] sm:$0xff]
        %v1400 = vld [vmem:[%s1378 + $0x80] sm:$0xf]
        %v1401 = vld [vmem:[%s1378 + $0x84] sm:$0xff]
        %v1402 = vld [vmem:[%s1378 + $0x8c] sm:$0xf]
        %v1403 = vld [vmem:[%s1378 + $0x90] sm:$0xff]
        %v1404 = vld [vmem:[%s1378 + $0x98] sm:$0xf]
        %v1405 = vld [vmem:[%s1378 + $0x9c] sm:$0xff]
        %v1406 = vld [vmem:[%s1378 + $0xa4] sm:$0xf]
        %v1407 = vld [vmem:[%s1378 + $0xa8] sm:$0xff]
        %v1408 = vld [vmem:[%s1378 + $0xb0] sm:$0xf]
        %v1409 = vld [vmem:[%s1378 + $0xb4] sm:$0xff]
        %v1410 = vld [vmem:[%s1378 + $0xbc] sm:$0xf]
        %v1411 = vpack.c.bf16 %v1377, %v1376
        %v1444 = vunpack.c.l.b16 %v1379
        %v1445 = vunpack.c.h.b16 %v1379
        %v1446 = vunpack.c.l.b16 %v1380
        %v1447 = vunpack.c.l.b16 %v1381
        %v1448 = vunpack.c.h.b16 %v1381
        %v1449 = vunpack.c.l.b16 %v1382
        %v1450 = vunpack.c.l.b16 %v1383
        %v1451 = vunpack.c.h.b16 %v1383
        %v1452 = vunpack.c.l.b16 %v1384
        %v1453 = vunpack.c.l.b16 %v1385
        %v1454 = vunpack.c.h.b16 %v1385
        %v1455 = vunpack.c.l.b16 %v1386
        %v1456 = vunpack.c.l.b16 %v1387
        %v1457 = vunpack.c.h.b16 %v1387
        %v1458 = vunpack.c.l.b16 %v1388
        %v1459 = vunpack.c.l.b16 %v1389
        %v1460 = vunpack.c.h.b16 %v1389
        %v1461 = vunpack.c.l.b16 %v1390
        %v1462 = vunpack.c.l.b16 %v1391
        %v1463 = vunpack.c.h.b16 %v1391
        %v1464 = vunpack.c.l.b16 %v1392
        %v1465 = vunpack.c.l.b16 %v1393
        %v1466 = vunpack.c.h.b16 %v1393
        %v1467 = vunpack.c.l.b16 %v1394
        %v1468 = vunpack.c.l.b16 %v1395
        %v1469 = vunpack.c.h.b16 %v1395
        %v1470 = vunpack.c.l.b16 %v1396
        %v1471 = vunpack.c.l.b16 %v1397
        %v1472 = vunpack.c.h.b16 %v1397
        %v1473 = vunpack.c.l.b16 %v1398
        %v1474 = vunpack.c.l.b16 %v1399
        %v1475 = vunpack.c.h.b16 %v1399
        %v1476 = vunpack.c.l.b16 %v1400
        %v1477 = vunpack.c.l.b16 %v1401
        %v1478 = vunpack.c.h.b16 %v1401
        %v1479 = vunpack.c.l.b16 %v1402
        %v1480 = vunpack.c.l.b16 %v1403
        %v1481 = vunpack.c.h.b16 %v1403
        %v1482 = vunpack.c.l.b16 %v1404
        %v1483 = vunpack.c.l.b16 %v1405
        %v1484 = vunpack.c.h.b16 %v1405
        %v1485 = vunpack.c.l.b16 %v1406
        %v1486 = vunpack.c.l.b16 %v1407
        %v1487 = vunpack.c.h.b16 %v1407
        %v1488 = vunpack.c.l.b16 %v1408
        %v1489 = vunpack.c.l.b16 %v1409
        %v1490 = vunpack.c.h.b16 %v1409
        %v1491 = vunpack.c.l.b16 %v1410
        %v1492 = vpack.c.b16 %v1447, %v1444
        %v1493 = vpack.c.b16 %v1448, %v1445
        %v1494 = vpack.c.b16 %v1449, %v1446
        %v1495 = vpack.c.b16 %v1453, %v1450
        %v1496 = vpack.c.b16 %v1454, %v1451
        %v1497 = vpack.c.b16 %v1455, %v1452
        %v1498 = vpack.c.b16 %v1459, %v1456
        %v1499 = vpack.c.b16 %v1460, %v1457
        %v1500 = vpack.c.b16 %v1461, %v1458
        %v1501 = vpack.c.b16 %v1465, %v1462
        %v1502 = vpack.c.b16 %v1466, %v1463
        %v1503 = vpack.c.b16 %v1467, %v1464
        %v1504 = vpack.c.b16 %v1471, %v1468
        %v1505 = vpack.c.b16 %v1472, %v1469
        %v1506 = vpack.c.b16 %v1473, %v1470
        %v1507 = vpack.c.b16 %v1477, %v1474
        %v1508 = vpack.c.b16 %v1478, %v1475
        %v1509 = vpack.c.b16 %v1479, %v1476
        %v1510 = vpack.c.b16 %v1483, %v1480
        %v1511 = vpack.c.b16 %v1484, %v1481
        %v1512 = vpack.c.b16 %v1485, %v1482
        %v1513 = vpack.c.b16 %v1489, %v1486
        %v1514 = vpack.c.b16 %v1490, %v1487
        %v1515 = vpack.c.b16 %v1491, %v1488
        %1540 = vmatpush.bf16.msra.mxu0 %v1513
        %1541 = vmatpush.bf16.msra.mxu0 %v1510
        %1542 = vmatpush.bf16.msra.mxu0 %v1507
        %1543 = vmatpush.bf16.msra.mxu0 %v1504
        %1544 = vmatpush.bf16.msra.mxu0 %v1501
        %1545 = vmatpush.bf16.msra.mxu0 %v1498
        %1546 = vmatpush.bf16.msra.mxu0 %v1495
        %1547 = vmatpush.bf16.msra.mxu0 %v1492
        %1548 = vmatmul.bf16.gmra.mxu0 %v1411
        %v1549 = vpop.f32.mrf.mxu0
        %v1550 = vadd.f32 0.0, %v1549
        %v1551 = vpop.f32.mrf.mxu0
        %v1552 = vadd.f32 0.0, %v1551
        %1553 = vdwg.mxu0
        %1554 = vmatpush.bf16.msra.mxu0 %v1514
        %1555 = vmatpush.bf16.msra.mxu0 %v1511
        %1556 = vmatpush.bf16.msra.mxu0 %v1508
        %1557 = vmatpush.bf16.msra.mxu0 %v1505
        %1558 = vmatpush.bf16.msra.mxu0 %v1502
        %1559 = vmatpush.bf16.msra.mxu0 %v1499
        %1560 = vmatpush.bf16.msra.mxu0 %v1496
        %1561 = vmatpush.bf16.msra.mxu0 %v1493
        %1562 = vmatmul.bf16.gmra.mxu0 %v1411
        %v1563 = vpop.f32.mrf.mxu0
        %v1564 = vadd.f32 0.0, %v1563
        %v1565 = vpop.f32.mrf.mxu0
        %v1566 = vadd.f32 0.0, %v1565
        %1567 = vdwg.mxu0
        %1568 = vmatpush.bf16.msra.mxu0 %v1515
        %1569 = vmatpush.bf16.msra.mxu0 %v1512
        %1570 = vmatpush.bf16.msra.mxu0 %v1509
        %1571 = vmatpush.bf16.msra.mxu0 %v1506
        %1572 = vmatpush.bf16.msra.mxu0 %v1503
        %1573 = vmatpush.bf16.msra.mxu0 %v1500
        %1574 = vmatpush.bf16.msra.mxu0 %v1497
        %1575 = vmatpush.bf16.msra.mxu0 %v1494
        %1576 = vmatmul.bf16.gmra.mxu0 %v1411
        %v1577 = vpop.f32.mrf.mxu0
        %v1578 = vadd.f32 0.0, %v1577
        %v1579 = vpop.f32.mrf.mxu0
        %v1580 = vadd.f32 0.0, %v1579
        %1581 = vdwg.mxu0
        %v1582 = vrot.slane %v1550, 7
        %v1583 = vrot.slane %v1552, 7
        %v1584 = vsel %vm798, %v1582, %v1583
        %v1585 = vsel %vm798, %v1583, %v1582
        %v1586 = vsel %vm803, 0.0, %v1585
        %v1587 = vsel %vm804, 0.0, %v1584
        %v1588 = vrot.slane %v1578, 1
        %v1589 = vrot.slane %v1580, 1
        %v1590 = vsel %vm809, %v1588, %v1589
        %v1591 = vsel %vm809, %v1589, %v1588
        %v1592 = vsel %vm814, 0.0, %v1590
        %v1593 = vsel %vm815, 0.0, %v1591
        %v1594 = vadd.f32 %v1564, %v1586
        %v1595 = vadd.f32 %v1566, %v1587
        %v1596 = vadd.f32 %v1594, %v1592
        %v1597 = vadd.f32 %v1595, %v1593
        %v1598 = vadd.f32 %v1596, %v1597
        %v1599 = vrot.slane %v1598, 4
        %v1600 = vadd.f32 %v1598, %v1599
        %v1601 = vrot.slane %v1600, 2
        %v1602 = vadd.f32 %v1600, %v1601
        %v1603 = vrot.slane %v1602, 1
        %v1604 = vadd.f32 %v1602, %v1603
        %v1605 = vmul.f32 %v1596, %v1596
        %v1606 = vmul.f32 %v1597, %v1597
        %v1607 = vadd.f32 %v1605, %v1606
        %v1608 = vrot.slane %v1607, 4
        %v1609 = vadd.f32 %v1607, %v1608
        %v1610 = vrot.slane %v1609, 2
        %v1611 = vadd.f32 %v1609, %v1610
        %v1612 = vrot.slane %v1611, 1
        %v1613 = vadd.f32 %v1611, %v1612
        %v1614 = vmul.f32 %v1604, 0.0625
        %v1615 = vmul.f32 %v1613, 0.0625
        %v1616 = vmul.f32 %v1614, %v1614
        %v1617 = vsub.f32 %v1615, %v1616
        %v1618 = vmax.f32 %v1617, 0.0
        %v1619 = vsub.f32 %v1596, %v1614
        %v1620 = vsub.f32 %v1597, %v1614
        %v1621 = vadd.f32 %v1618, 1e-05
        %v1622 = vrsqrt.pop %v1621
        %v1623 = vmul.f32 %v1622, %v1621
        %v1624 = vmul.f32 %v1623, %v1622
        %v1625 = vmul.f32 0.5, %v1624
        %v1626 = vsub.f32 1.5, %v1625
        %v1627 = vmul.f32 %v1622, %v1626
        %vm1628 = vweird.f32 %v1621
        %vm1629 = vweird.f32 %v1622
        %vm1630 = vmor %vm1628, %vm1629
        %v1631 = vsel %vm1630, %v1622, %v1627
        %v1632 = vmul.f32 %v1619, %v1631
        %v1633 = vmul.f32 %v1620, %v1631
        %v1634 = vadd.f32 %v1632, %v1118
        %v1635 = vadd.f32 %v1633, %v1119
        %v1636 = vmax.f32 %v1634, 0.0
        %v1637 = vmax.f32 %v1635, 0.0
        %s1638 = scalar_lea.vmem [#allocation4], 768
        %v1639 = vld [vmem:[%s1638] sm:$0xff]
        %v1640 = vld [vmem:[%s1638 + $0x8] sm:$0xf]
        %v1641 = vld [vmem:[%s1638 + $0xc] sm:$0xff]
        %v1642 = vld [vmem:[%s1638 + $0x14] sm:$0xf]
        %v1643 = vld [vmem:[%s1638 + $0x18] sm:$0xff]
        %v1644 = vld [vmem:[%s1638 + $0x20] sm:$0xf]
        %v1645 = vld [vmem:[%s1638 + $0x24] sm:$0xff]
        %v1646 = vld [vmem:[%s1638 + $0x2c] sm:$0xf]
        %v1647 = vld [vmem:[%s1638 + $0x30] sm:$0xff]
        %v1648 = vld [vmem:[%s1638 + $0x38] sm:$0xf]
        %v1649 = vld [vmem:[%s1638 + $0x3c] sm:$0xff]
        %v1650 = vld [vmem:[%s1638 + $0x44] sm:$0xf]
        %v1651 = vld [vmem:[%s1638 + $0x48] sm:$0xff]
        %v1652 = vld [vmem:[%s1638 + $0x50] sm:$0xf]
        %v1653 = vld [vmem:[%s1638 + $0x54] sm:$0xff]
        %v1654 = vld [vmem:[%s1638 + $0x5c] sm:$0xf]
        %v1655 = vld [vmem:[%s1638 + $0x60] sm:$0xff]
        %v1656 = vld [vmem:[%s1638 + $0x68] sm:$0xf]
        %v1657 = vld [vmem:[%s1638 + $0x6c] sm:$0xff]
        %v1658 = vld [vmem:[%s1638 + $0x74] sm:$0xf]
        %v1659 = vld [vmem:[%s1638 + $0x78] sm:$0xff]
        %v1660 = vld [vmem:[%s1638 + $0x80] sm:$0xf]
        %v1661 = vld [vmem:[%s1638 + $0x84] sm:$0xff]
        %v1662 = vld [vmem:[%s1638 + $0x8c] sm:$0xf]
        %v1663 = vld [vmem:[%s1638 + $0x90] sm:$0xff]
        %v1664 = vld [vmem:[%s1638 + $0x98] sm:$0xf]
        %v1665 = vld [vmem:[%s1638 + $0x9c] sm:$0xff]
        %v1666 = vld [vmem:[%s1638 + $0xa4] sm:$0xf]
        %v1667 = vld [vmem:[%s1638 + $0xa8] sm:$0xff]
        %v1668 = vld [vmem:[%s1638 + $0xb0] sm:$0xf]
        %v1669 = vld [vmem:[%s1638 + $0xb4] sm:$0xff]
        %v1670 = vld [vmem:[%s1638 + $0xbc] sm:$0xf]
        %v1671 = vpack.c.bf16 %v1637, %v1636
        %v1704 = vunpack.c.l.b16 %v1639
        %v1705 = vunpack.c.h.b16 %v1639
        %v1706 = vunpack.c.l.b16 %v1640
        %v1707 = vunpack.c.l.b16 %v1641
        %v1708 = vunpack.c.h.b16 %v1641
        %v1709 = vunpack.c.l.b16 %v1642
        %v1710 = vunpack.c.l.b16 %v1643
        %v1711 = vunpack.c.h.b16 %v1643
        %v1712 = vunpack.c.l.b16 %v1644
        %v1713 = vunpack.c.l.b16 %v1645
        %v1714 = vunpack.c.h.b16 %v1645
        %v1715 = vunpack.c.l.b16 %v1646
        %v1716 = vunpack.c.l.b16 %v1647
        %v1717 = vunpack.c.h.b16 %v1647
        %v1718 = vunpack.c.l.b16 %v1648
        %v1719 = vunpack.c.l.b16 %v1649
        %v1720 = vunpack.c.h.b16 %v1649
        %v1721 = vunpack.c.l.b16 %v1650
        %v1722 = vunpack.c.l.b16 %v1651
        %v1723 = vunpack.c.h.b16 %v1651
        %v1724 = vunpack.c.l.b16 %v1652
        %v1725 = vunpack.c.l.b16 %v1653
        %v1726 = vunpack.c.h.b16 %v1653
        %v1727 = vunpack.c.l.b16 %v1654
        %v1728 = vunpack.c.l.b16 %v1655
        %v1729 = vunpack.c.h.b16 %v1655
        %v1730 = vunpack.c.l.b16 %v1656
        %v1731 = vunpack.c.l.b16 %v1657
        %v1732 = vunpack.c.h.b16 %v1657
        %v1733 = vunpack.c.l.b16 %v1658
        %v1734 = vunpack.c.l.b16 %v1659
        %v1735 = vunpack.c.h.b16 %v1659
        %v1736 = vunpack.c.l.b16 %v1660
        %v1737 = vunpack.c.l.b16 %v1661
        %v1738 = vunpack.c.h.b16 %v1661
        %v1739 = vunpack.c.l.b16 %v1662
        %v1740 = vunpack.c.l.b16 %v1663
        %v1741 = vunpack.c.h.b16 %v1663
        %v1742 = vunpack.c.l.b16 %v1664
        %v1743 = vunpack.c.l.b16 %v1665
        %v1744 = vunpack.c.h.b16 %v1665
        %v1745 = vunpack.c.l.b16 %v1666
        %v1746 = vunpack.c.l.b16 %v1667
        %v1747 = vunpack.c.h.b16 %v1667
        %v1748 = vunpack.c.l.b16 %v1668
        %v1749 = vunpack.c.l.b16 %v1669
        %v1750 = vunpack.c.h.b16 %v1669
        %v1751 = vunpack.c.l.b16 %v1670
        %v1752 = vpack.c.b16 %v1707, %v1704
        %v1753 = vpack.c.b16 %v1708, %v1705
        %v1754 = vpack.c.b16 %v1709, %v1706
        %v1755 = vpack.c.b16 %v1713, %v1710
        %v1756 = vpack.c.b16 %v1714, %v1711
        %v1757 = vpack.c.b16 %v1715, %v1712
        %v1758 = vpack.c.b16 %v1719, %v1716
        %v1759 = vpack.c.b16 %v1720, %v1717
        %v1760 = vpack.c.b16 %v1721, %v1718
        %v1761 = vpack.c.b16 %v1725, %v1722
        %v1762 = vpack.c.b16 %v1726, %v1723
        %v1763 = vpack.c.b16 %v1727, %v1724
        %v1764 = vpack.c.b16 %v1731, %v1728
        %v1765 = vpack.c.b16 %v1732, %v1729
        %v1766 = vpack.c.b16 %v1733, %v1730
        %v1767 = vpack.c.b16 %v1737, %v1734
        %v1768 = vpack.c.b16 %v1738, %v1735
        %v1769 = vpack.c.b16 %v1739, %v1736
        %v1770 = vpack.c.b16 %v1743, %v1740
        %v1771 = vpack.c.b16 %v1744, %v1741
        %v1772 = vpack.c.b16 %v1745, %v1742
        %v1773 = vpack.c.b16 %v1749, %v1746
        %v1774 = vpack.c.b16 %v1750, %v1747
        %v1775 = vpack.c.b16 %v1751, %v1748
        %1800 = vmatpush.bf16.msra.mxu0 %v1773
        %1801 = vmatpush.bf16.msra.mxu0 %v1770
        %1802 = vmatpush.bf16.msra.mxu0 %v1767
        %1803 = vmatpush.bf16.msra.mxu0 %v1764
        %1804 = vmatpush.bf16.msra.mxu0 %v1761
        %1805 = vmatpush.bf16.msra.mxu0 %v1758
        %1806 = vmatpush.bf16.msra.mxu0 %v1755
        %1807 = vmatpush.bf16.msra.mxu0 %v1752
        %1808 = vmatmul.bf16.gmra.mxu0 %v1671
        %v1809 = vpop.f32.mrf.mxu0
        %v1810 = vadd.f32 0.0, %v1809
        %v1811 = vpop.f32.mrf.mxu0
        %v1812 = vadd.f32 0.0, %v1811
        %1813 = vdwg.mxu0
        %1814 = vmatpush.bf16.msra.mxu0 %v1774
        %1815 = vmatpush.bf16.msra.mxu0 %v1771
        %1816 = vmatpush.bf16.msra.mxu0 %v1768
        %1817 = vmatpush.bf16.msra.mxu0 %v1765
        %1818 = vmatpush.bf16.msra.mxu0 %v1762
        %1819 = vmatpush.bf16.msra.mxu0 %v1759
        %1820 = vmatpush.bf16.msra.mxu0 %v1756
        %1821 = vmatpush.bf16.msra.mxu0 %v1753
        %1822 = vmatmul.bf16.gmra.mxu0 %v1671
        %v1823 = vpop.f32.mrf.mxu0
        %v1824 = vadd.f32 0.0, %v1823
        %v1825 = vpop.f32.mrf.mxu0
        %v1826 = vadd.f32 0.0, %v1825
        %1827 = vdwg.mxu0
        %1828 = vmatpush.bf16.msra.mxu0 %v1775
        %1829 = vmatpush.bf16.msra.mxu0 %v1772
        %1830 = vmatpush.bf16.msra.mxu0 %v1769
        %1831 = vmatpush.bf16.msra.mxu0 %v1766
        %1832 = vmatpush.bf16.msra.mxu0 %v1763
        %1833 = vmatpush.bf16.msra.mxu0 %v1760
        %1834 = vmatpush.bf16.msra.mxu0 %v1757
        %1835 = vmatpush.bf16.msra.mxu0 %v1754
        %1836 = vmatmul.bf16.gmra.mxu0 %v1671
        %v1837 = vpop.f32.mrf.mxu0
        %v1838 = vadd.f32 0.0, %v1837
        %v1839 = vpop.f32.mrf.mxu0
        %v1840 = vadd.f32 0.0, %v1839
        %1841 = vdwg.mxu0
        %v1842 = vrot.slane %v1810, 7
        %v1843 = vrot.slane %v1812, 7
        %v1844 = vsel %vm798, %v1842, %v1843
        %v1845 = vsel %vm798, %v1843, %v1842
        %v1846 = vsel %vm803, 0.0, %v1845
        %v1847 = vsel %vm804, 0.0, %v1844
        %v1848 = vrot.slane %v1838, 1
        %v1849 = vrot.slane %v1840, 1
        %v1850 = vsel %vm809, %v1848, %v1849
        %v1851 = vsel %vm809, %v1849, %v1848
        %v1852 = vsel %vm814, 0.0, %v1850
        %v1853 = vsel %vm815, 0.0, %v1851
        %v1854 = vadd.f32 %v1824, %v1846
        %v1855 = vadd.f32 %v1826, %v1847
        %v1856 = vadd.f32 %v1854, %v1852
        %v1857 = vadd.f32 %v1855, %v1853
        %v1858 = vadd.f32 %v1856, %v1857
        %v1859 = vrot.slane %v1858, 4
        %v1860 = vadd.f32 %v1858, %v1859
        %v1861 = vrot.slane %v1860, 2
        %v1862 = vadd.f32 %v1860, %v1861
        %v1863 = vrot.slane %v1862, 1
        %v1864 = vadd.f32 %v1862, %v1863
        %v1865 = vmul.f32 %v1856, %v1856
        %v1866 = vmul.f32 %v1857, %v1857
        %v1867 = vadd.f32 %v1865, %v1866
        %v1868 = vrot.slane %v1867, 4
        %v1869 = vadd.f32 %v1867, %v1868
        %v1870 = vrot.slane %v1869, 2
        %v1871 = vadd.f32 %v1869, %v1870
        %v1872 = vrot.slane %v1871, 1
        %v1873 = vadd.f32 %v1871, %v1872
        %v1874 = vmul.f32 %v1864, 0.0625
        %v1875 = vmul.f32 %v1873, 0.0625
        %v1876 = vmul.f32 %v1874, %v1874
        %v1877 = vsub.f32 %v1875, %v1876
        %v1878 = vmax.f32 %v1877, 0.0
        %v1879 = vsub.f32 %v1856, %v1874
        %v1880 = vsub.f32 %v1857, %v1874
        %v1881 = vadd.f32 %v1878, 1e-05
        %v1882 = vrsqrt.pop %v1881
        %v1883 = vmul.f32 %v1882, %v1881
        %v1884 = vmul.f32 %v1883, %v1882
        %v1885 = vmul.f32 0.5, %v1884
        %v1886 = vsub.f32 1.5, %v1885
        %v1887 = vmul.f32 %v1882, %v1886
        %vm1888 = vweird.f32 %v1881
        %vm1889 = vweird.f32 %v1882
        %vm1890 = vmor %vm1888, %vm1889
        %v1891 = vsel %vm1890, %v1882, %v1887
        %v1892 = vmul.f32 %v1879, %v1891
        %v1893 = vmul.f32 %v1880, %v1891
        %v1894 = vmax.f32 %v1892, 0.0
        %v1895 = vmax.f32 %v1893, 0.0
        %s1896 = scalar_lea.vmem [#allocation4], 960
        %v1897 = vld [vmem:[%s1896] sm:$0xff]
        %v1898 = vld [vmem:[%s1896 + $0x8] sm:$0xf]
        %v1899 = vld [vmem:[%s1896 + $0xc] sm:$0xff]
        %v1900 = vld [vmem:[%s1896 + $0x14] sm:$0xf]
        %v1901 = vld [vmem:[%s1896 + $0x18] sm:$0xff]
        %v1902 = vld [vmem:[%s1896 + $0x20] sm:$0xf]
        %v1903 = vld [vmem:[%s1896 + $0x24] sm:$0xff]
        %v1904 = vld [vmem:[%s1896 + $0x2c] sm:$0xf]
        %v1905 = vld [vmem:[%s1896 + $0x30] sm:$0xff]
        %v1906 = vld [vmem:[%s1896 + $0x38] sm:$0xf]
        %v1907 = vld [vmem:[%s1896 + $0x3c] sm:$0xff]
        %v1908 = vld [vmem:[%s1896 + $0x44] sm:$0xf]
        %v1909 = vld [vmem:[%s1896 + $0x48] sm:$0xff]
        %v1910 = vld [vmem:[%s1896 + $0x50] sm:$0xf]
        %v1911 = vld [vmem:[%s1896 + $0x54] sm:$0xff]
        %v1912 = vld [vmem:[%s1896 + $0x5c] sm:$0xf]
        %v1913 = vld [vmem:[%s1896 + $0x60] sm:$0xff]
        %v1914 = vld [vmem:[%s1896 + $0x68] sm:$0xf]
        %v1915 = vld [vmem:[%s1896 + $0x6c] sm:$0xff]
        %v1916 = vld [vmem:[%s1896 + $0x74] sm:$0xf]
        %v1917 = vld [vmem:[%s1896 + $0x78] sm:$0xff]
        %v1918 = vld [vmem:[%s1896 + $0x80] sm:$0xf]
        %v1919 = vld [vmem:[%s1896 + $0x84] sm:$0xff]
        %v1920 = vld [vmem:[%s1896 + $0x8c] sm:$0xf]
        %v1921 = vld [vmem:[%s1896 + $0x90] sm:$0xff]
        %v1922 = vld [vmem:[%s1896 + $0x98] sm:$0xf]
        %v1923 = vld [vmem:[%s1896 + $0x9c] sm:$0xff]
        %v1924 = vld [vmem:[%s1896 + $0xa4] sm:$0xf]
        %v1925 = vld [vmem:[%s1896 + $0xa8] sm:$0xff]
        %v1926 = vld [vmem:[%s1896 + $0xb0] sm:$0xf]
        %v1927 = vld [vmem:[%s1896 + $0xb4] sm:$0xff]
        %v1928 = vld [vmem:[%s1896 + $0xbc] sm:$0xf]
        %v1929 = vpack.c.bf16 %v1895, %v1894
        %v1962 = vunpack.c.l.b16 %v1897
        %v1963 = vunpack.c.h.b16 %v1897
        %v1964 = vunpack.c.l.b16 %v1898
        %v1965 = vunpack.c.l.b16 %v1899
        %v1966 = vunpack.c.h.b16 %v1899
        %v1967 = vunpack.c.l.b16 %v1900
        %v1968 = vunpack.c.l.b16 %v1901
        %v1969 = vunpack.c.h.b16 %v1901
        %v1970 = vunpack.c.l.b16 %v1902
        %v1971 = vunpack.c.l.b16 %v1903
        %v1972 = vunpack.c.h.b16 %v1903
        %v1973 = vunpack.c.l.b16 %v1904
        %v1974 = vunpack.c.l.b16 %v1905
        %v1975 = vunpack.c.h.b16 %v1905
        %v1976 = vunpack.c.l.b16 %v1906
        %v1977 = vunpack.c.l.b16 %v1907
        %v1978 = vunpack.c.h.b16 %v1907
        %v1979 = vunpack.c.l.b16 %v1908
        %v1980 = vunpack.c.l.b16 %v1909
        %v1981 = vunpack.c.h.b16 %v1909
        %v1982 = vunpack.c.l.b16 %v1910
        %v1983 = vunpack.c.l.b16 %v1911
        %v1984 = vunpack.c.h.b16 %v1911
        %v1985 = vunpack.c.l.b16 %v1912
        %v1986 = vunpack.c.l.b16 %v1913
        %v1987 = vunpack.c.h.b16 %v1913
        %v1988 = vunpack.c.l.b16 %v1914
        %v1989 = vunpack.c.l.b16 %v1915
        %v1990 = vunpack.c.h.b16 %v1915
        %v1991 = vunpack.c.l.b16 %v1916
        %v1992 = vunpack.c.l.b16 %v1917
        %v1993 = vunpack.c.h.b16 %v1917
        %v1994 = vunpack.c.l.b16 %v1918
        %v1995 = vunpack.c.l.b16 %v1919
        %v1996 = vunpack.c.h.b16 %v1919
        %v1997 = vunpack.c.l.b16 %v1920
        %v1998 = vunpack.c.l.b16 %v1921
        %v1999 = vunpack.c.h.b16 %v1921
        %v2000 = vunpack.c.l.b16 %v1922
        %v2001 = vunpack.c.l.b16 %v1923
        %v2002 = vunpack.c.h.b16 %v1923
        %v2003 = vunpack.c.l.b16 %v1924
        %v2004 = vunpack.c.l.b16 %v1925
        %v2005 = vunpack.c.h.b16 %v1925
        %v2006 = vunpack.c.l.b16 %v1926
        %v2007 = vunpack.c.l.b16 %v1927
        %v2008 = vunpack.c.h.b16 %v1927
        %v2009 = vunpack.c.l.b16 %v1928
        %v2010 = vpack.c.b16 %v1965, %v1962
        %v2011 = vpack.c.b16 %v1966, %v1963
        %v2012 = vpack.c.b16 %v1967, %v1964
        %v2013 = vpack.c.b16 %v1971, %v1968
        %v2014 = vpack.c.b16 %v1972, %v1969
        %v2015 = vpack.c.b16 %v1973, %v1970
        %v2016 = vpack.c.b16 %v1977, %v1974
        %v2017 = vpack.c.b16 %v1978, %v1975
        %v2018 = vpack.c.b16 %v1979, %v1976
        %v2019 = vpack.c.b16 %v1983, %v1980
        %v2020 = vpack.c.b16 %v1984, %v1981
        %v2021 = vpack.c.b16 %v1985, %v1982
        %v2022 = vpack.c.b16 %v1989, %v1986
        %v2023 = vpack.c.b16 %v1990, %v1987
        %v2024 = vpack.c.b16 %v1991, %v1988
        %v2025 = vpack.c.b16 %v1995, %v1992
        %v2026 = vpack.c.b16 %v1996, %v1993
        %v2027 = vpack.c.b16 %v1997, %v1994
        %v2028 = vpack.c.b16 %v2001, %v1998
        %v2029 = vpack.c.b16 %v2002, %v1999
        %v2030 = vpack.c.b16 %v2003, %v2000
        %v2031 = vpack.c.b16 %v2007, %v2004
        %v2032 = vpack.c.b16 %v2008, %v2005
        %v2033 = vpack.c.b16 %v2009, %v2006
        %2058 = vmatpush.bf16.msra.mxu0 %v2031
        %2059 = vmatpush.bf16.msra.mxu0 %v2028
        %2060 = vmatpush.bf16.msra.mxu0 %v2025
        %2061 = vmatpush.bf16.msra.mxu0 %v2022
        %2062 = vmatpush.bf16.msra.mxu0 %v2019
        %2063 = vmatpush.bf16.msra.mxu0 %v2016
        %2064 = vmatpush.bf16.msra.mxu0 %v2013
        %2065 = vmatpush.bf16.msra.mxu0 %v2010
        %2066 = vmatmul.bf16.gmra.mxu0 %v1929
        %v2067 = vpop.f32.mrf.mxu0
        %v2068 = vadd.f32 0.0, %v2067
        %v2069 = vpop.f32.mrf.mxu0
        %v2070 = vadd.f32 0.0, %v2069
        %2071 = vdwg.mxu0
        %2072 = vmatpush.bf16.msra.mxu0 %v2032
        %2073 = vmatpush.bf16.msra.mxu0 %v2029
        %2074 = vmatpush.bf16.msra.mxu0 %v2026
        %2075 = vmatpush.bf16.msra.mxu0 %v2023
        %2076 = vmatpush.bf16.msra.mxu0 %v2020
        %2077 = vmatpush.bf16.msra.mxu0 %v2017
        %2078 = vmatpush.bf16.msra.mxu0 %v2014
        %2079 = vmatpush.bf16.msra.mxu0 %v2011
        %2080 = vmatmul.bf16.gmra.mxu0 %v1929
        %v2081 = vpop.f32.mrf.mxu0
        %v2082 = vadd.f32 0.0, %v2081
        %v2083 = vpop.f32.mrf.mxu0
        %v2084 = vadd.f32 0.0, %v2083
        %2085 = vdwg.mxu0
        %2086 = vmatpush.bf16.msra.mxu0 %v2033
        %2087 = vmatpush.bf16.msra.mxu0 %v2030
        %2088 = vmatpush.bf16.msra.mxu0 %v2027
        %2089 = vmatpush.bf16.msra.mxu0 %v2024
        %2090 = vmatpush.bf16.msra.mxu0 %v2021
        %2091 = vmatpush.bf16.msra.mxu0 %v2018
        %2092 = vmatpush.bf16.msra.mxu0 %v2015
        %2093 = vmatpush.bf16.msra.mxu0 %v2012
        %2094 = vmatmul.bf16.gmra.mxu0 %v1929
        %v2095 = vpop.f32.mrf.mxu0
        %v2096 = vadd.f32 0.0, %v2095
        %v2097 = vpop.f32.mrf.mxu0
        %v2098 = vadd.f32 0.0, %v2097
        %2099 = vdwg.mxu0
        %v2100 = vrot.slane %v2068, 7
        %v2101 = vrot.slane %v2070, 7
        %v2102 = vsel %vm798, %v2100, %v2101
        %v2103 = vsel %vm798, %v2101, %v2100
        %v2104 = vsel %vm803, 0.0, %v2103
        %v2105 = vsel %vm804, 0.0, %v2102
        %v2106 = vrot.slane %v2096, 1
        %v2107 = vrot.slane %v2098, 1
        %v2108 = vsel %vm809, %v2106, %v2107
        %v2109 = vsel %vm809, %v2107, %v2106
        %v2110 = vsel %vm814, 0.0, %v2108
        %v2111 = vsel %vm815, 0.0, %v2109
        %v2112 = vadd.f32 %v2082, %v2104
        %v2113 = vadd.f32 %v2084, %v2105
        %v2114 = vadd.f32 %v2112, %v2110
        %v2115 = vadd.f32 %v2113, %v2111
        %v2116 = vadd.f32 %v2114, %v2115
        %v2117 = vrot.slane %v2116, 4
        %v2118 = vadd.f32 %v2116, %v2117
        %v2119 = vrot.slane %v2118, 2
        %v2120 = vadd.f32 %v2118, %v2119
        %v2121 = vrot.slane %v2120, 1
        %v2122 = vadd.f32 %v2120, %v2121
        %v2123 = vmul.f32 %v2114, %v2114
        %v2124 = vmul.f32 %v2115, %v2115
        %v2125 = vadd.f32 %v2123, %v2124
        %v2126 = vrot.slane %v2125, 4
        %v2127 = vadd.f32 %v2125, %v2126
        %v2128 = vrot.slane %v2127, 2
        %v2129 = vadd.f32 %v2127, %v2128
        %v2130 = vrot.slane %v2129, 1
        %v2131 = vadd.f32 %v2129, %v2130
        %v2132 = vmul.f32 %v2122, 0.0625
        %v2133 = vmul.f32 %v2131, 0.0625
        %v2134 = vmul.f32 %v2132, %v2132
        %v2135 = vsub.f32 %v2133, %v2134
        %v2136 = vmax.f32 %v2135, 0.0
        %v2137 = vsub.f32 %v2114, %v2132
        %v2138 = vsub.f32 %v2115, %v2132
        %v2139 = vadd.f32 %v2136, 1e-05
        %v2140 = vrsqrt.pop %v2139
        %v2141 = vmul.f32 %v2140, %v2139
        %v2142 = vmul.f32 %v2141, %v2140
        %v2143 = vmul.f32 0.5, %v2142
        %v2144 = vsub.f32 1.5, %v2143
        %v2145 = vmul.f32 %v2140, %v2144
        %vm2146 = vweird.f32 %v2139
        %vm2147 = vweird.f32 %v2140
        %vm2148 = vmor %vm2146, %vm2147
        %v2149 = vsel %vm2148, %v2140, %v2145
        %v2150 = vmul.f32 %v2137, %v2149
        %v2151 = vmul.f32 %v2138, %v2149
        %v2152 = vadd.f32 %v2150, %v1636
        %v2153 = vadd.f32 %v2151, %v1637
        %v2154 = vmax.f32 %v2152, 0.0
        %v2155 = vmax.f32 %v2153, 0.0
        %s2156 = scalar_lea.vmem [#allocation4], 1152
        %v2157 = vld [vmem:[%s2156] sm:$0xff]
        %v2158 = vld [vmem:[%s2156 + $0x8] sm:$0xf]
        %v2159 = vld [vmem:[%s2156 + $0xc] sm:$0xff]
        %v2160 = vld [vmem:[%s2156 + $0x14] sm:$0xf]
        %v2161 = vld [vmem:[%s2156 + $0x18] sm:$0xff]
        %v2162 = vld [vmem:[%s2156 + $0x20] sm:$0xf]
        %v2163 = vld [vmem:[%s2156 + $0x24] sm:$0xff]
        %v2164 = vld [vmem:[%s2156 + $0x2c] sm:$0xf]
        %v2165 = vld [vmem:[%s2156 + $0x30] sm:$0xff]
        %v2166 = vld [vmem:[%s2156 + $0x38] sm:$0xf]
        %v2167 = vld [vmem:[%s2156 + $0x3c] sm:$0xff]
        %v2168 = vld [vmem:[%s2156 + $0x44] sm:$0xf]
        %v2169 = vld [vmem:[%s2156 + $0x48] sm:$0xff]
        %v2170 = vld [vmem:[%s2156 + $0x50] sm:$0xf]
        %v2171 = vld [vmem:[%s2156 + $0x54] sm:$0xff]
        %v2172 = vld [vmem:[%s2156 + $0x5c] sm:$0xf]
        %v2173 = vld [vmem:[%s2156 + $0x60] sm:$0xff]
        %v2174 = vld [vmem:[%s2156 + $0x68] sm:$0xf]
        %v2175 = vld [vmem:[%s2156 + $0x6c] sm:$0xff]
        %v2176 = vld [vmem:[%s2156 + $0x74] sm:$0xf]
        %v2177 = vld [vmem:[%s2156 + $0x78] sm:$0xff]
        %v2178 = vld [vmem:[%s2156 + $0x80] sm:$0xf]
        %v2179 = vld [vmem:[%s2156 + $0x84] sm:$0xff]
        %v2180 = vld [vmem:[%s2156 + $0x8c] sm:$0xf]
        %v2181 = vld [vmem:[%s2156 + $0x90] sm:$0xff]
        %v2182 = vld [vmem:[%s2156 + $0x98] sm:$0xf]
        %v2183 = vld [vmem:[%s2156 + $0x9c] sm:$0xff]
        %v2184 = vld [vmem:[%s2156 + $0xa4] sm:$0xf]
        %v2185 = vld [vmem:[%s2156 + $0xa8] sm:$0xff]
        %v2186 = vld [vmem:[%s2156 + $0xb0] sm:$0xf]
        %v2187 = vld [vmem:[%s2156 + $0xb4] sm:$0xff]
        %v2188 = vld [vmem:[%s2156 + $0xbc] sm:$0xf]
        %v2189 = vpack.c.bf16 %v2155, %v2154
        %v2222 = vunpack.c.l.b16 %v2157
        %v2223 = vunpack.c.h.b16 %v2157
        %v2224 = vunpack.c.l.b16 %v2158
        %v2225 = vunpack.c.l.b16 %v2159
        %v2226 = vunpack.c.h.b16 %v2159
        %v2227 = vunpack.c.l.b16 %v2160
        %v2228 = vunpack.c.l.b16 %v2161
        %v2229 = vunpack.c.h.b16 %v2161
        %v2230 = vunpack.c.l.b16 %v2162
        %v2231 = vunpack.c.l.b16 %v2163
        %v2232 = vunpack.c.h.b16 %v2163
        %v2233 = vunpack.c.l.b16 %v2164
        %v2234 = vunpack.c.l.b16 %v2165
        %v2235 = vunpack.c.h.b16 %v2165
        %v2236 = vunpack.c.l.b16 %v2166
        %v2237 = vunpack.c.l.b16 %v2167
        %v2238 = vunpack.c.h.b16 %v2167
        %v2239 = vunpack.c.l.b16 %v2168
        %v2240 = vunpack.c.l.b16 %v2169
        %v2241 = vunpack.c.h.b16 %v2169
        %v2242 = vunpack.c.l.b16 %v2170
        %v2243 = vunpack.c.l.b16 %v2171
        %v2244 = vunpack.c.h.b16 %v2171
        %v2245 = vunpack.c.l.b16 %v2172
        %v2246 = vunpack.c.l.b16 %v2173
        %v2247 = vunpack.c.h.b16 %v2173
        %v2248 = vunpack.c.l.b16 %v2174
        %v2249 = vunpack.c.l.b16 %v2175
        %v2250 = vunpack.c.h.b16 %v2175
        %v2251 = vunpack.c.l.b16 %v2176
        %v2252 = vunpack.c.l.b16 %v2177
        %v2253 = vunpack.c.h.b16 %v2177
        %v2254 = vunpack.c.l.b16 %v2178
        %v2255 = vunpack.c.l.b16 %v2179
        %v2256 = vunpack.c.h.b16 %v2179
        %v2257 = vunpack.c.l.b16 %v2180
        %v2258 = vunpack.c.l.b16 %v2181
        %v2259 = vunpack.c.h.b16 %v2181
        %v2260 = vunpack.c.l.b16 %v2182
        %v2261 = vunpack.c.l.b16 %v2183
        %v2262 = vunpack.c.h.b16 %v2183
        %v2263 = vunpack.c.l.b16 %v2184
        %v2264 = vunpack.c.l.b16 %v2185
        %v2265 = vunpack.c.h.b16 %v2185
        %v2266 = vunpack.c.l.b16 %v2186
        %v2267 = vunpack.c.l.b16 %v2187
        %v2268 = vunpack.c.h.b16 %v2187
        %v2269 = vunpack.c.l.b16 %v2188
        %v2270 = vpack.c.b16 %v2225, %v2222
        %v2271 = vpack.c.b16 %v2226, %v2223
        %v2272 = vpack.c.b16 %v2227, %v2224
        %v2273 = vpack.c.b16 %v2231, %v2228
        %v2274 = vpack.c.b16 %v2232, %v2229
        %v2275 = vpack.c.b16 %v2233, %v2230
        %v2276 = vpack.c.b16 %v2237, %v2234
        %v2277 = vpack.c.b16 %v2238, %v2235
        %v2278 = vpack.c.b16 %v2239, %v2236
        %v2279 = vpack.c.b16 %v2243, %v2240
        %v2280 = vpack.c.b16 %v2244, %v2241
        %v2281 = vpack.c.b16 %v2245, %v2242
        %v2282 = vpack.c.b16 %v2249, %v2246
        %v2283 = vpack.c.b16 %v2250, %v2247
        %v2284 = vpack.c.b16 %v2251, %v2248
        %v2285 = vpack.c.b16 %v2255, %v2252
        %v2286 = vpack.c.b16 %v2256, %v2253
        %v2287 = vpack.c.b16 %v2257, %v2254
        %v2288 = vpack.c.b16 %v2261, %v2258
        %v2289 = vpack.c.b16 %v2262, %v2259
        %v2290 = vpack.c.b16 %v2263, %v2260
        %v2291 = vpack.c.b16 %v2267, %v2264
        %v2292 = vpack.c.b16 %v2268, %v2265
        %v2293 = vpack.c.b16 %v2269, %v2266
        %2318 = vmatpush.bf16.msra.mxu0 %v2291
        %2319 = vmatpush.bf16.msra.mxu0 %v2288
        %2320 = vmatpush.bf16.msra.mxu0 %v2285
        %2321 = vmatpush.bf16.msra.mxu0 %v2282
        %2322 = vmatpush.bf16.msra.mxu0 %v2279
        %2323 = vmatpush.bf16.msra.mxu0 %v2276
        %2324 = vmatpush.bf16.msra.mxu0 %v2273
        %2325 = vmatpush.bf16.msra.mxu0 %v2270
        %2326 = vmatmul.bf16.gmra.mxu0 %v2189
        %v2327 = vpop.f32.mrf.mxu0
        %v2328 = vadd.f32 0.0, %v2327
        %v2329 = vpop.f32.mrf.mxu0
        %v2330 = vadd.f32 0.0, %v2329
        %2331 = vdwg.mxu0
        %2332 = vmatpush.bf16.msra.mxu0 %v2292
        %2333 = vmatpush.bf16.msra.mxu0 %v2289
        %2334 = vmatpush.bf16.msra.mxu0 %v2286
        %2335 = vmatpush.bf16.msra.mxu0 %v2283
        %2336 = vmatpush.bf16.msra.mxu0 %v2280
        %2337 = vmatpush.bf16.msra.mxu0 %v2277
        %2338 = vmatpush.bf16.msra.mxu0 %v2274
        %2339 = vmatpush.bf16.msra.mxu0 %v2271
        %2340 = vmatmul.bf16.gmra.mxu0 %v2189
        %v2341 = vpop.f32.mrf.mxu0
        %v2342 = vadd.f32 0.0, %v2341
        %v2343 = vpop.f32.mrf.mxu0
        %v2344 = vadd.f32 0.0, %v2343
        %2345 = vdwg.mxu0
        %2346 = vmatpush.bf16.msra.mxu0 %v2293
        %2347 = vmatpush.bf16.msra.mxu0 %v2290
        %2348 = vmatpush.bf16.msra.mxu0 %v2287
        %2349 = vmatpush.bf16.msra.mxu0 %v2284
        %2350 = vmatpush.bf16.msra.mxu0 %v2281
        %2351 = vmatpush.bf16.msra.mxu0 %v2278
        %2352 = vmatpush.bf16.msra.mxu0 %v2275
        %2353 = vmatpush.bf16.msra.mxu0 %v2272
        %2354 = vmatmul.bf16.gmra.mxu0 %v2189
        %v2355 = vpop.f32.mrf.mxu0
        %v2356 = vadd.f32 0.0, %v2355
        %v2357 = vpop.f32.mrf.mxu0
        %v2358 = vadd.f32 0.0, %v2357
        %2359 = vdwg.mxu0
        %v2360 = vrot.slane %v2328, 7
        %v2361 = vrot.slane %v2330, 7
        %v2362 = vsel %vm798, %v2360, %v2361
        %v2363 = vsel %vm798, %v2361, %v2360
        %v2364 = vsel %vm803, 0.0, %v2363
        %v2365 = vsel %vm804, 0.0, %v2362
        %v2366 = vrot.slane %v2356, 1
        %v2367 = vrot.slane %v2358, 1
        %v2368 = vsel %vm809, %v2366, %v2367
        %v2369 = vsel %vm809, %v2367, %v2366
        %v2370 = vsel %vm814, 0.0, %v2368
        %v2371 = vsel %vm815, 0.0, %v2369
        %v2372 = vadd.f32 %v2342, %v2364
        %v2373 = vadd.f32 %v2344, %v2365
        %v2374 = vadd.f32 %v2372, %v2370
        %v2375 = vadd.f32 %v2373, %v2371
        %v2376 = vadd.f32 %v2374, %v2375
        %v2377 = vrot.slane %v2376, 4
        %v2378 = vadd.f32 %v2376, %v2377
        %v2379 = vrot.slane %v2378, 2
        %v2380 = vadd.f32 %v2378, %v2379
        %v2381 = vrot.slane %v2380, 1
        %v2382 = vadd.f32 %v2380, %v2381
        %v2383 = vmul.f32 %v2374, %v2374
        %v2384 = vmul.f32 %v2375, %v2375
        %v2385 = vadd.f32 %v2383, %v2384
        %v2386 = vrot.slane %v2385, 4
        %v2387 = vadd.f32 %v2385, %v2386
        %v2388 = vrot.slane %v2387, 2
        %v2389 = vadd.f32 %v2387, %v2388
        %v2390 = vrot.slane %v2389, 1
        %v2391 = vadd.f32 %v2389, %v2390
        %v2392 = vmul.f32 %v2382, 0.0625
        %v2393 = vmul.f32 %v2391, 0.0625
        %v2394 = vmul.f32 %v2392, %v2392
        %v2395 = vsub.f32 %v2393, %v2394
        %v2396 = vmax.f32 %v2395, 0.0
        %v2397 = vsub.f32 %v2374, %v2392
        %v2398 = vsub.f32 %v2375, %v2392
        %v2399 = vadd.f32 %v2396, 1e-05
        %v2400 = vrsqrt.pop %v2399
        %v2401 = vmul.f32 %v2400, %v2399
        %v2402 = vmul.f32 %v2401, %v2400
        %v2403 = vmul.f32 0.5, %v2402
        %v2404 = vsub.f32 1.5, %v2403
        %v2405 = vmul.f32 %v2400, %v2404
        %vm2406 = vweird.f32 %v2399
        %vm2407 = vweird.f32 %v2400
        %vm2408 = vmor %vm2406, %vm2407
        %v2409 = vsel %vm2408, %v2400, %v2405
        %v2410 = vmul.f32 %v2397, %v2409
        %v2411 = vmul.f32 %v2398, %v2409
        %v2412 = vmax.f32 %v2410, 0.0
        %v2413 = vmax.f32 %v2411, 0.0
        %s2414 = scalar_lea.vmem [#allocation4], 1344
        %v2415 = vld [vmem:[%s2414] sm:$0xff]
        %v2416 = vld [vmem:[%s2414 + $0x8] sm:$0xf]
        %v2417 = vld [vmem:[%s2414 + $0xc] sm:$0xff]
        %v2418 = vld [vmem:[%s2414 + $0x14] sm:$0xf]
        %v2419 = vld [vmem:[%s2414 + $0x18] sm:$0xff]
        %v2420 = vld [vmem:[%s2414 + $0x20] sm:$0xf]
        %v2421 = vld [vmem:[%s2414 + $0x24] sm:$0xff]
        %v2422 = vld [vmem:[%s2414 + $0x2c] sm:$0xf]
        %v2423 = vld [vmem:[%s2414 + $0x30] sm:$0xff]
        %v2424 = vld [vmem:[%s2414 + $0x38] sm:$0xf]
        %v2425 = vld [vmem:[%s2414 + $0x3c] sm:$0xff]
        %v2426 = vld [vmem:[%s2414 + $0x44] sm:$0xf]
        %v2427 = vld [vmem:[%s2414 + $0x48] sm:$0xff]
        %v2428 = vld [vmem:[%s2414 + $0x50] sm:$0xf]
        %v2429 = vld [vmem:[%s2414 + $0x54] sm:$0xff]
        %v2430 = vld [vmem:[%s2414 + $0x5c] sm:$0xf]
        %v2431 = vld [vmem:[%s2414 + $0x60] sm:$0xff]
        %v2432 = vld [vmem:[%s2414 + $0x68] sm:$0xf]
        %v2433 = vld [vmem:[%s2414 + $0x6c] sm:$0xff]
        %v2434 = vld [vmem:[%s2414 + $0x74] sm:$0xf]
        %v2435 = vld [vmem:[%s2414 + $0x78] sm:$0xff]
        %v2436 = vld [vmem:[%s2414 + $0x80] sm:$0xf]
        %v2437 = vld [vmem:[%s2414 + $0x84] sm:$0xff]
        %v2438 = vld [vmem:[%s2414 + $0x8c] sm:$0xf]
        %v2439 = vld [vmem:[%s2414 + $0x90] sm:$0xff]
        %v2440 = vld [vmem:[%s2414 + $0x98] sm:$0xf]
        %v2441 = vld [vmem:[%s2414 + $0x9c] sm:$0xff]
        %v2442 = vld [vmem:[%s2414 + $0xa4] sm:$0xf]
        %v2443 = vld [vmem:[%s2414 + $0xa8] sm:$0xff]
        %v2444 = vld [vmem:[%s2414 + $0xb0] sm:$0xf]
        %v2445 = vld [vmem:[%s2414 + $0xb4] sm:$0xff]
        %v2446 = vld [vmem:[%s2414 + $0xbc] sm:$0xf]
        %v2447 = vpack.c.bf16 %v2413, %v2412
        %v2480 = vunpack.c.l.b16 %v2415
        %v2481 = vunpack.c.h.b16 %v2415
        %v2482 = vunpack.c.l.b16 %v2416
        %v2483 = vunpack.c.l.b16 %v2417
        %v2484 = vunpack.c.h.b16 %v2417
        %v2485 = vunpack.c.l.b16 %v2418
        %v2486 = vunpack.c.l.b16 %v2419
        %v2487 = vunpack.c.h.b16 %v2419
        %v2488 = vunpack.c.l.b16 %v2420
        %v2489 = vunpack.c.l.b16 %v2421
        %v2490 = vunpack.c.h.b16 %v2421
        %v2491 = vunpack.c.l.b16 %v2422
        %v2492 = vunpack.c.l.b16 %v2423
        %v2493 = vunpack.c.h.b16 %v2423
        %v2494 = vunpack.c.l.b16 %v2424
        %v2495 = vunpack.c.l.b16 %v2425
        %v2496 = vunpack.c.h.b16 %v2425
        %v2497 = vunpack.c.l.b16 %v2426
        %v2498 = vunpack.c.l.b16 %v2427
        %v2499 = vunpack.c.h.b16 %v2427
        %v2500 = vunpack.c.l.b16 %v2428
        %v2501 = vunpack.c.l.b16 %v2429
        %v2502 = vunpack.c.h.b16 %v2429
        %v2503 = vunpack.c.l.b16 %v2430
        %v2504 = vunpack.c.l.b16 %v2431
        %v2505 = vunpack.c.h.b16 %v2431
        %v2506 = vunpack.c.l.b16 %v2432
        %v2507 = vunpack.c.l.b16 %v2433
        %v2508 = vunpack.c.h.b16 %v2433
        %v2509 = vunpack.c.l.b16 %v2434
        %v2510 = vunpack.c.l.b16 %v2435
        %v2511 = vunpack.c.h.b16 %v2435
        %v2512 = vunpack.c.l.b16 %v2436
        %v2513 = vunpack.c.l.b16 %v2437
        %v2514 = vunpack.c.h.b16 %v2437
        %v2515 = vunpack.c.l.b16 %v2438
        %v2516 = vunpack.c.l.b16 %v2439
        %v2517 = vunpack.c.h.b16 %v2439
        %v2518 = vunpack.c.l.b16 %v2440
        %v2519 = vunpack.c.l.b16 %v2441
        %v2520 = vunpack.c.h.b16 %v2441
        %v2521 = vunpack.c.l.b16 %v2442
        %v2522 = vunpack.c.l.b16 %v2443
        %v2523 = vunpack.c.h.b16 %v2443
        %v2524 = vunpack.c.l.b16 %v2444
        %v2525 = vunpack.c.l.b16 %v2445
        %v2526 = vunpack.c.h.b16 %v2445
        %v2527 = vunpack.c.l.b16 %v2446
        %v2528 = vpack.c.b16 %v2483, %v2480
        %v2529 = vpack.c.b16 %v2484, %v2481
        %v2530 = vpack.c.b16 %v2485, %v2482
        %v2531 = vpack.c.b16 %v2489, %v2486
        %v2532 = vpack.c.b16 %v2490, %v2487
        %v2533 = vpack.c.b16 %v2491, %v2488
        %v2534 = vpack.c.b16 %v2495, %v2492
        %v2535 = vpack.c.b16 %v2496, %v2493
        %v2536 = vpack.c.b16 %v2497, %v2494
        %v2537 = vpack.c.b16 %v2501, %v2498
        %v2538 = vpack.c.b16 %v2502, %v2499
        %v2539 = vpack.c.b16 %v2503, %v2500
        %v2540 = vpack.c.b16 %v2507, %v2504
        %v2541 = vpack.c.b16 %v2508, %v2505
        %v2542 = vpack.c.b16 %v2509, %v2506
        %v2543 = vpack.c.b16 %v2513, %v2510
        %v2544 = vpack.c.b16 %v2514, %v2511
        %v2545 = vpack.c.b16 %v2515, %v2512
        %v2546 = vpack.c.b16 %v2519, %v2516
        %v2547 = vpack.c.b16 %v2520, %v2517
        %v2548 = vpack.c.b16 %v2521, %v2518
        %v2549 = vpack.c.b16 %v2525, %v2522
        %v2550 = vpack.c.b16 %v2526, %v2523
        %v2551 = vpack.c.b16 %v2527, %v2524
        %2576 = vmatpush.bf16.msra.mxu0 %v2549
        %2577 = vmatpush.bf16.msra.mxu0 %v2546
        %2578 = vmatpush.bf16.msra.mxu0 %v2543
        %2579 = vmatpush.bf16.msra.mxu0 %v2540
        %2580 = vmatpush.bf16.msra.mxu0 %v2537
        %2581 = vmatpush.bf16.msra.mxu0 %v2534
        %2582 = vmatpush.bf16.msra.mxu0 %v2531
        %2583 = vmatpush.bf16.msra.mxu0 %v2528
        %2584 = vmatmul.bf16.gmra.mxu0 %v2447
        %v2585 = vpop.f32.mrf.mxu0
        %v2586 = vadd.f32 0.0, %v2585
        %v2587 = vpop.f32.mrf.mxu0
        %v2588 = vadd.f32 0.0, %v2587
        %2589 = vdwg.mxu0
        %2590 = vmatpush.bf16.msra.mxu0 %v2550
        %2591 = vmatpush.bf16.msra.mxu0 %v2547
        %2592 = vmatpush.bf16.msra.mxu0 %v2544
        %2593 = vmatpush.bf16.msra.mxu0 %v2541
        %2594 = vmatpush.bf16.msra.mxu0 %v2538
        %2595 = vmatpush.bf16.msra.mxu0 %v2535
        %2596 = vmatpush.bf16.msra.mxu0 %v2532
        %2597 = vmatpush.bf16.msra.mxu0 %v2529
        %2598 = vmatmul.bf16.gmra.mxu0 %v2447
        %v2599 = vpop.f32.mrf.mxu0
        %v2600 = vadd.f32 0.0, %v2599
        %v2601 = vpop.f32.mrf.mxu0
        %v2602 = vadd.f32 0.0, %v2601
        %2603 = vdwg.mxu0
        %2604 = vmatpush.bf16.msra.mxu0 %v2551
        %2605 = vmatpush.bf16.msra.mxu0 %v2548
        %2606 = vmatpush.bf16.msra.mxu0 %v2545
        %2607 = vmatpush.bf16.msra.mxu0 %v2542
        %2608 = vmatpush.bf16.msra.mxu0 %v2539
        %2609 = vmatpush.bf16.msra.mxu0 %v2536
        %2610 = vmatpush.bf16.msra.mxu0 %v2533
        %2611 = vmatpush.bf16.msra.mxu0 %v2530
        %2612 = vmatmul.bf16.gmra.mxu0 %v2447
        %v2613 = vpop.f32.mrf.mxu0
        %v2614 = vadd.f32 0.0, %v2613
        %v2615 = vpop.f32.mrf.mxu0
        %v2616 = vadd.f32 0.0, %v2615
        %2617 = vdwg.mxu0
        %v2618 = vrot.slane %v2586, 7
        %v2619 = vrot.slane %v2588, 7
        %v2620 = vsel %vm798, %v2618, %v2619
        %v2621 = vsel %vm798, %v2619, %v2618
        %v2622 = vsel %vm803, 0.0, %v2621
        %v2623 = vsel %vm804, 0.0, %v2620
        %v2624 = vrot.slane %v2614, 1
        %v2625 = vrot.slane %v2616, 1
        %v2626 = vsel %vm809, %v2624, %v2625
        %v2627 = vsel %vm809, %v2625, %v2624
        %v2628 = vsel %vm814, 0.0, %v2626
        %v2629 = vsel %vm815, 0.0, %v2627
        %v2630 = vadd.f32 %v2600, %v2622
        %v2631 = vadd.f32 %v2602, %v2623
        %v2632 = vadd.f32 %v2630, %v2628
        %v2633 = vadd.f32 %v2631, %v2629
        %v2634 = vadd.f32 %v2632, %v2633
        %v2635 = vrot.slane %v2634, 4
        %v2636 = vadd.f32 %v2634, %v2635
        %v2637 = vrot.slane %v2636, 2
        %v2638 = vadd.f32 %v2636, %v2637
        %v2639 = vrot.slane %v2638, 1
        %v2640 = vadd.f32 %v2638, %v2639
        %v2641 = vmul.f32 %v2632, %v2632
        %v2642 = vmul.f32 %v2633, %v2633
        %v2643 = vadd.f32 %v2641, %v2642
        %v2644 = vrot.slane %v2643, 4
        %v2645 = vadd.f32 %v2643, %v2644
        %v2646 = vrot.slane %v2645, 2
        %v2647 = vadd.f32 %v2645, %v2646
        %v2648 = vrot.slane %v2647, 1
        %v2649 = vadd.f32 %v2647, %v2648
        %v2650 = vmul.f32 %v2640, 0.0625
        %v2651 = vmul.f32 %v2649, 0.0625
        %v2652 = vmul.f32 %v2650, %v2650
        %v2653 = vsub.f32 %v2651, %v2652
        %v2654 = vmax.f32 %v2653, 0.0
        %v2655 = vsub.f32 %v2632, %v2650
        %v2656 = vsub.f32 %v2633, %v2650
        %v2657 = vadd.f32 %v2654, 1e-05
        %v2658 = vrsqrt.pop %v2657
        %v2659 = vmul.f32 %v2658, %v2657
        %v2660 = vmul.f32 %v2659, %v2658
        %v2661 = vmul.f32 0.5, %v2660
        %v2662 = vsub.f32 1.5, %v2661
        %v2663 = vmul.f32 %v2658, %v2662
        %vm2664 = vweird.f32 %v2657
        %vm2665 = vweird.f32 %v2658
        %vm2666 = vmor %vm2664, %vm2665
        %v2667 = vsel %vm2666, %v2658, %v2663
        %v2668 = vmul.f32 %v2655, %v2667
        %v2669 = vmul.f32 %v2656, %v2667
        %v2670 = vadd.f32 %v2668, %v2154
        %v2671 = vadd.f32 %v2669, %v2155
        %v2672 = vmax.f32 %v2670, 0.0
        %v2673 = vmax.f32 %v2671, 0.0
        %v2674 = vmax.f32 %v2672, 0.0
        %v2675 = vmax.f32 %v2673, 0.0
        %v2676 = vpack.c.bf16 %v2675, %v2674
        %v2677 = vld [vmem:[%s5] sm:$0xf]
        %v2678 = vld [vmem:[%s5 + $0x4] sm:$0xf]
        %v2679 = vld [vmem:[%s5 + $0x8] sm:$0xf]
        %v2680 = vld [vmem:[%s5 + $0xc] sm:$0xf]
        %v2681 = vld [vmem:[%s5 + $0x10] sm:$0xf]
        %v2682 = vld [vmem:[%s5 + $0x14] sm:$0xf]
        %v2683 = vld [vmem:[%s5 + $0x18] sm:$0xf]
        %v2684 = vld [vmem:[%s5 + $0x1c] sm:$0xf]
        %v2685 = vld [vmem:[%s5 + $0x20] sm:$0xf]
        %v2686 = vld [vmem:[%s5 + $0x24] sm:$0xf]
        %v2687 = vld [vmem:[%s5 + $0x28] sm:$0xf]
        %v2688 = vld [vmem:[%s5 + $0x2c] sm:$0xf]
        %v2689 = vld [vmem:[%s5 + $0x30] sm:$0xf]
        %v2690 = vld [vmem:[%s5 + $0x34] sm:$0xf]
        %v2691 = vld [vmem:[%s5 + $0x38] sm:$0xf]
        %v2692 = vld [vmem:[%s5 + $0x3c] sm:$0xf]
        %v2693 = vld [vmem:[%s6] sm:$0x1]
        %v2695 = vperm.slane %v2693, 0
        %v2713 = vunpack.c.l.b16 %v2677
        %v2714 = vunpack.c.l.b16 %v2678
        %v2715 = vunpack.c.l.b16 %v2679
        %v2716 = vunpack.c.l.b16 %v2680
        %v2717 = vunpack.c.l.b16 %v2681
        %v2718 = vunpack.c.l.b16 %v2682
        %v2719 = vunpack.c.l.b16 %v2683
        %v2720 = vunpack.c.l.b16 %v2684
        %v2721 = vunpack.c.l.b16 %v2685
        %v2722 = vunpack.c.l.b16 %v2686
        %v2723 = vunpack.c.l.b16 %v2687
        %v2724 = vunpack.c.l.b16 %v2688
        %v2725 = vunpack.c.l.b16 %v2689
        %v2726 = vunpack.c.l.b16 %v2690
        %v2727 = vunpack.c.l.b16 %v2691
        %v2728 = vunpack.c.l.b16 %v2692
        %v2729 = vpack.c.b16 %v2714, %v2713
        %v2730 = vpack.c.b16 %v2716, %v2715
        %v2731 = vpack.c.b16 %v2718, %v2717
        %v2732 = vpack.c.b16 %v2720, %v2719
        %v2733 = vpack.c.b16 %v2722, %v2721
        %v2734 = vpack.c.b16 %v2724, %v2723
        %v2735 = vpack.c.b16 %v2726, %v2725
        %v2736 = vpack.c.b16 %v2728, %v2727
        %2745 = vmatpush.bf16.msra.mxu0 %v2736
        %2746 = vmatpush.bf16.msra.mxu0 %v2735
        %2747 = vmatpush.bf16.msra.mxu0 %v2734
        %2748 = vmatpush.bf16.msra.mxu0 %v2733
        %2749 = vmatpush.bf16.msra.mxu0 %v2732
        %2750 = vmatpush.bf16.msra.mxu0 %v2731
        %2751 = vmatpush.bf16.msra.mxu0 %v2730
        %2752 = vmatpush.bf16.msra.mxu0 %v2729
        %2753 = vmatmul.bf16.gmra.mxu0 %v2676
        %v2754 = vpop.f32.mrf.mxu0
        %v2755 = vadd.f32 %v2695, %v2754
        %v2756 = vpop.f32.mrf.mxu0
        %v2757 = vadd.f32 %v2695, %v2756
        %2758 = vdwg.mxu0
        %v2759 = vmul.f32 %v2755, %v2755
        %v2760 = vmul.f32 %v2757, %v2757
        %v2761 = vld [vmem:[#allocation6] sm:$0xff]
        %v2762 = vld [vmem:[#allocation6 + $0x8] sm:$0x3f]
        %vm2763 = vcmask 113664
        %v2765 = vsel %vm2763, %v2759, 0
        %v2768 = vsel %vm2763, %v2760, 0
        %vm2770 = vcmask 1045504
        %v2772 = vsel %vm2770, %v2762, 0
        %2774 = vmatpush.msra.mxu0 0.0
        %2775 = vmatpush.msra.mxu0 0.0
        %2776 = vmatpush.msra.mxu0 0.0
        %2777 = vmatpush.msra.mxu0 0.0
        %2778 = vmatpush.msra.mxu0 0.0
        %2779 = vmatpush.msra.mxu0 0.0
        %2780 = vmatpush.msra.mxu0 0.0
        %2781 = vmatpush.msra.mxu0 0.0
        %2782 = vmatpush.msra.mxu0 0.0
        %2783 = vmatpush.msra.mxu0 0.0
        %2784 = vmatpush.msra.mxu0 0.0
        %2785 = vmatpush.msra.mxu0 0.0
        %2786 = vmatpush.msra.mxu0 0.0
        %2787 = vmatpush.msra.mxu0 0.0
        %2788 = vmatpush.msra.mxu0 %v2772
        %2789 = vmatpush.msra.mxu0 %v2761
        %2790 = vmatmul.f32.gmra.mxu0 %v2765
        %v2791 = vpop.f32.mrf.mxu0
        %v2792 = vadd.f32 0.0, %v2791
        %2793 = vmatmul.f32.gmra.mxu0 %v2768
        %v2794 = vpop.f32.mrf.mxu0
        %v2795 = vadd.f32 0.0, %v2794
        %2796 = vdwg.mxu0
        %v2797 = vrsqrt.pop %v2792
        %v2798 = vmul.f32 %v2797, %v2792
        %v2799 = vmul.f32 %v2798, %v2797
        %v2800 = vmul.f32 0.5, %v2799
        %v2801 = vsub.f32 1.5, %v2800
        %v2802 = vmul.f32 %v2797, %v2801
        %v2803 = vmul.f32 %v2792, %v2802
        %vm2804 = vcmp.eq.f32.partialorder %v2792, inf
        %v2805 = vsel %vm2804, %v2792, %v2803
        %vm2806 = vcmp.eq.f32.partialorder %v2792, 0.0
        %v2807 = vand.u32 %v2792, 2147483648
        %v2808 = vsel %vm2806, %v2807, %v2805
        %v2809 = vrsqrt.pop %v2795
        %v2810 = vmul.f32 %v2809, %v2795
        %v2811 = vmul.f32 %v2810, %v2809
        %v2812 = vmul.f32 0.5, %v2811
        %v2813 = vsub.f32 1.5, %v2812
        %v2814 = vmul.f32 %v2809, %v2813
        %v2815 = vmul.f32 %v2795, %v2814
        %vm2816 = vcmp.eq.f32.partialorder %v2795, inf
        %v2817 = vsel %vm2816, %v2795, %v2815
        %vm2818 = vcmp.eq.f32.partialorder %v2795, 0.0
        %v2819 = vand.u32 %v2795, 2147483648
        %v2820 = vsel %vm2818, %v2819, %v2817
        %v2821 = vmax.f32 %v2808, 1e-12
        %v2822 = vmax.f32 %v2820, 1e-12
        %v2823 = vrcp.pop %v2821
        %v2824 = vmul.f32 %v2821, %v2823
        %v2825 = vsub.f32 1.0, %v2824
        %v2826 = vmul.f32 %v2823, %v2825
        %v2827 = vadd.f32 %v2823, %v2826
        %vm2828 = vweird.f32 %v2821
        %vm2829 = vweird.f32 %v2823
        %vm2830 = vmor %vm2828, %vm2829
        %v2831 = vsel %vm2830, %v2823, %v2827
        %v2832 = vand.u32 2147483647, %v2821
        %vm2833 = vcmp.eq.f32.partialorder %v2832, 8.507059e+37
        %v2834 = vand.u32 %v2821, 2147483648
        %v2835 = vor.u32 1.1754944e-38, %v2834
        %v2836 = vsel %vm2833, %v2835, %v2831
        %v2837 = vmul.f32 %v2755, %v2836
        %v2838 = vrcp.pop %v2822
        %v2839 = vmul.f32 %v2822, %v2838
        %v2840 = vsub.f32 1.0, %v2839
        %v2841 = vmul.f32 %v2838, %v2840
        %v2842 = vadd.f32 %v2838, %v2841
        %vm2843 = vweird.f32 %v2822
        %vm2844 = vweird.f32 %v2838
        %vm2845 = vmor %vm2843, %vm2844
        %v2846 = vsel %vm2845, %v2838, %v2842
        %v2847 = vand.u32 2147483647, %v2822
        %vm2848 = vcmp.eq.f32.partialorder %v2847, 8.507059e+37
        %v2849 = vand.u32 %v2822, 2147483648
        %v2850 = vor.u32 1.1754944e-38, %v2849
        %v2851 = vsel %vm2848, %v2850, %v2846
        %v2852 = vmul.f32 %v2757, %v2851
        %2853 = vst.msk [vmem:[%s410] sm:$0xff] %vm2763, %v2755
        %2854 = vst.msk [vmem:[%s410 + $0x8] sm:$0xff] %vm2763, %v2757
        %2855 = vst.msk [vmem:[%s415] sm:$0xff] %vm2763, %v2837
        %2856 = vst.msk [vmem:[%s415 + $0x8] sm:$0xff] %vm2763, %v2852
        %p2857 = scmp.lt.s32.totalorder %s23, 1
        %s2858 = scalar_select %p2857, %s23, 1
        %s2859 = smul.addr %s2858, 2
        %s2860 = smul.addr %s2859, 8
        %s2861 = scalar_lea.vmem %s8, %s2860
        %p2862 = scmp.lt.s32.totalorder %s23, 1
        %s2863 = scalar_select %p2862, %s23, 1
        %s2864 = smul.addr %s2863, 2
        %s2865 = smul.addr %s2864, 8
        %s2866 = scalar_lea.vmem %s9, %s2865
        // Predicated region
        $region65: #{sidechain1d_forward.1} parent=51 // pred_check
          %p2867 = pneg %p219
        $region66: #{sidechain1d_forward.1} parent=51 // pred_check_branch
          %2869 = sbr.rel (%p2867) target = $region68
        $region67: #{sidechain1d_forward.1} parent=51 // pred_region
          _
        $region68: #{sidechain1d_forward.1} parent=51 // pred_fallthru
          _
        // Predicated region
        $region69: #{sidechain1d_forward.1} parent=51 // pred_check
          %p2870 = pneg %p245
        $region70: #{sidechain1d_forward.1} parent=51 // pred_check_branch
          %2872 = sbr.rel (%p2870) target = $region72
        $region71: #{sidechain1d_forward.1} parent=51 // pred_region
          _
        $region72: #{sidechain1d_forward.1} parent=51 // pred_fallthru
          _
      $region52: #{sidechain1d_forward.1} parent=5 // pred_fallthru
        _
      %p2873 = scmp.le.s32.totalorder 2, %s18
      // Predicated region
      $region73: #{sidechain1d_forward.1} parent=5 // pred_check
        %p2874 = pneg %p2873
      $region74: #{sidechain1d_forward.1} parent=5 // pred_check_branch
        %2876 = sbr.rel (%p2874) target = $region76
      $region75: #{sidechain1d_forward.1} parent=5 // pred_region
        %s2877 = ssub.s32 %s18, 2
        // Predicated region
        $region77: #{sidechain1d_forward.1} parent=75 // pred_check
          %p2878 = pneg %p225
        $region78: #{sidechain1d_forward.1} parent=75 // pred_check_branch
          %2880 = sbr.rel (%p2878) target = $region80
        $region79: #{sidechain1d_forward.1} parent=75 // pred_region
          %p2881 = scmp.lt.s32.totalorder %s24, 1
          %s2882 = scalar_select %p2881, %s24, 1
          %s2883 = smul.addr %s2882, 2
          %s2884 = smul.addr %s2883, 8
          %s2885 = scalar_lea.vmem %s8, %s2884
        $region80: #{sidechain1d_forward.1} parent=75 // pred_fallthru
          _
        // Predicated region
        $region81: #{sidechain1d_forward.1} parent=75 // pred_check
          %p2886 = pneg %p251
        $region82: #{sidechain1d_forward.1} parent=75 // pred_check_branch
          %2888 = sbr.rel (%p2886) target = $region84
        $region83: #{sidechain1d_forward.1} parent=75 // pred_region
          %p2889 = scmp.lt.s32.totalorder %s24, 1
          %s2890 = scalar_select %p2889, %s24, 1
          %s2891 = smul.addr %s2890, 2
          %s2892 = smul.addr %s2891, 8
          %s2893 = scalar_lea.vmem %s9, %s2892
        $region84: #{sidechain1d_forward.1} parent=75 // pred_fallthru
          _
      $region76: #{sidechain1d_forward.1} parent=5 // pred_fallthru
        _
    $region6: #{sidechain1d_forward.1} parent=1 // loop_footer
      %s22 = sadd.s32 1, %s18
    $region7: #{sidechain1d_forward.1} parent=1 // loop_footer_branch
      %17 = sbr.rel target = $region3
    $region8: #{sidechain1d_forward.1} parent=1 // loop_exit
      _
    %2894 = vsyncpa [#allocation3], 1
    %s2895 = scalar_lea.sflag [#allocation3], 1
    %2896 = vsyncpa %s2895, 1
    %2897 = vsyncpa [#allocation5], 1

// kernel: sidechain1d_forward.1
$region0: #{sidechain1d_forward.1}
  #allocation0 [shape = 'u32[]', space=smem, size = 0x4, offset = 0x4, fixed_abs, tag = 'smem constant byte address 0x4 - core index']
  #allocation1 [shape = 'u32[72,128]{1,0:T(1,128)}', space=vmem, size = 0x9000, scoped, tag = 'internal scratch']
  %s0 = inlined_call_operand.vmem [shape: f32[2,16,128], index: 0, kind: input, shape index: {}]
  %s1 = inlined_call_operand.vmem [shape: f32[2,16,128], index: 1, kind: input, shape index: {}]
  %s2 = inlined_call_operand.hbm [shape: bf16[256,128], index: 2, kind: input, shape index: {}]
  %s3 = inlined_call_operand.vmem [shape: f32[1,128], index: 3, kind: input, shape index: {}]
  %s4 = inlined_call_operand.hbm [shape: bf16[8,128,384], index: 4, kind: input, shape index: {}]
  %s5 = inlined_call_operand.vmem [shape: bf16[128,14], index: 5, kind: input, shape index: {}]
  %s6 = inlined_call_operand.vmem [shape: f32[1,14], index: 6, kind: input, shape index: {}]
  %s7 = inlined_call_operand.hbm [shape: f32[14,14], index: 7, kind: input, shape index: {}]
  %s8 = inlined_call_operand.vmem [shape: f32[2,16,14], index: 8, kind: output, shape index: {0}]
  %s9 = inlined_call_operand.vmem [shape: f32[2,16,14], index: 9, kind: output, shape index: {1}]
  %10 = xla_tuple %s8, %s9
  %s11 = sld [smem:[#allocation0]]
  $region85: #{sidechain1d_forward.1} parent=0
    _
  %s13 = ssub.s32 1, %s11
  %s14 = scalar_select 0, %s13, %s11
  $region1: #{sidechain1d_forward.1} parent=0
    #allocation2 [shape = 'u8[65536]{0}', space=vmem, size = 0x10000, scoped, tag = 'input window, operand 2, single buffered']
    #allocation3 [shape = 's32[2]{0}', space=sflag, size = 0x8, scoped, tag = 'scoped memory for sidechain1d_forward.1']
    #allocation4 [shape = 'u8[786432]{0}', space=vmem, size = 0xc0000, scoped, tag = 'input window, operand 4, single buffered']
    #allocation5 [shape = 's32[1]{0}', space=sflag, size = 0x4, scoped, tag = 'scoped memory for sidechain1d_forward.1']
    #allocation6 [shape = 'u8[8192]{0}', space=vmem, size = 0x2000, scoped, tag = 'input window, operand 7, single buffered']
    %15 = vsyncpa [#allocation3], 0
    %16 = vsyncpa [#allocation5], 0
    loop: start=0, step=1, limit=4
    $region2: #{sidechain1d_forward.1} parent=1 // loop_pre_header
      _
    $region3: #{sidechain1d_forward.1} parent=1 // loop_header
      %s18 = sphi 0, %s22
      %p19 = scmp.ge.s32.totalorder %s18, 4
      %s28 = sphi 0, %s30
      %s31 = sphi 0, %s28
      %s32 = sphi 0, %s31
      %s48 = sphi 0, %s32
      %s54 = sphi 0, %s56
      %s57 = sphi 0, %s54
      %s58 = sphi 0, %s57
      %s74 = sphi 0, %s58
      %s78 = sphi 0, %s78
      %s80 = sphi 0, %s78
      %s81 = sphi 0, %s80
      %s95 = sphi 0, %s81
      %s99 = sphi 0, %s99
      %s101 = sphi 0, %s99
      %s102 = sphi 0, %s101
      %s116 = sphi 0, %s102
      %s120 = sphi 0, %s120
      %s122 = sphi 0, %s120
      %s123 = sphi 0, %s122
      %s137 = sphi 0, %s123
      %s141 = sphi 0, %s141
      %s143 = sphi 0, %s141
      %s144 = sphi 0, %s143
      %s158 = sphi 0, %s144
      %s162 = sphi 0, %s162
      %s164 = sphi 0, %s162
      %s165 = sphi 0, %s164
      %s179 = sphi 0, %s165
      %s183 = sphi 0, %s183
      %s185 = sphi 0, %s183
      %s186 = sphi 0, %s185
      %s200 = sphi 0, %s186
      %s206 = sphi 0, %s208
      %s209 = sphi 0, %s206
      %s210 = sphi 0, %s209
      %s226 = sphi 0, %s210
      %s232 = sphi 0, %s234
      %s235 = sphi 0, %s232
      %s236 = sphi 0, %s235
      %s252 = sphi 0, %s236
    $region4: #{sidechain1d_forward.1} parent=1 // loop_header_branch
      %21 = sbr.rel (%p19) target = $region8
    $region5: #{sidechain1d_forward.1} parent=1 // loop_body
      %s23 = ssub.s32 %s18, 1
      %s24 = ssub.s32 %s18, 2
      %s25 = sadd.s32 %s18, 1
      %s26 = ssub.s32 %s18, %s25
      %p27 = scmp.eq.s32.totalorder %s26, 0
      %s29 = sadd.s32 %s28, 1
      %s30 = scalar_select %p27, %s28, %s29
      %p33 = pneg %p27
      %p34 = scmp.eq.s32.totalorder %s18, 1
      %p35 = por %p33, %p34
      %p36 = scmp.ne.s32.totalorder %s28, %s31
      %p37 = scmp.eq.s32.totalorder %s18, 0
      %p38 = por %p36, %p37
      %p39 = scmp.ne.s32.totalorder %s28, %s31
      %p40 = scmp.eq.s32.totalorder %s23, 1
      %p41 = por %p39, %p40
      %p42 = scmp.ne.s32.totalorder %s31, %s32
      %p43 = scmp.eq.s32.totalorder %s23, 0
      %p44 = por %p42, %p43
      %p45 = scmp.ne.s32.totalorder %s31, %s32
      %p46 = scmp.eq.s32.totalorder %s24, 1
      %p47 = por %p45, %p46
      %p49 = scmp.ne.s32.totalorder %s32, %s48
      %p50 = scmp.eq.s32.totalorder %s24, 0
      %p51 = por %p49, %p50
      %s52 = ssub.s32 %s18, %s25
      %p53 = scmp.eq.s32.totalorder %s52, 0
      %s55 = sadd.s32 %s54, 1
      %s56 = scalar_select %p53, %s54, %s55
      %p59 = pneg %p53
      %p60 = scmp.eq.s32.totalorder %s18, 1
      %p61 = por %p59, %p60
      %p62 = scmp.ne.s32.totalorder %s54, %s57
      %p63 = scmp.eq.s32.totalorder %s18, 0
      %p64 = por %p62, %p63
      %p65 = scmp.ne.s32.totalorder %s54, %s57
      %p66 = scmp.eq.s32.totalorder %s23, 1
      %p67 = por %p65, %p66
      %p68 = scmp.ne.s32.totalorder %s57, %s58
      %p69 = scmp.eq.s32.totalorder %s23, 0
      %p70 = por %p68, %p69
      %p71 = scmp.ne.s32.totalorder %s57, %s58
      %p72 = scmp.eq.s32.totalorder %s24, 1
      %p73 = por %p71, %p72
      %p75 = scmp.ne.s32.totalorder %s58, %s74
      %p76 = scmp.eq.s32.totalorder %s24, 0
      %p77 = por %p75, %p76
      %s79 = sadd.s32 %s78, 1
      %p82 = scmp.eq.s32.totalorder %s18, 1
      %p83 = scmp.ne.s32.totalorder %s78, %s80
      %p84 = scmp.eq.s32.totalorder %s18, 0
      %p85 = por %p83, %p84
      %p86 = scmp.ne.s32.totalorder %s78, %s80
      %p87 = scmp.eq.s32.totalorder %s23, 1
      %p88 = por %p86, %p87
      %p89 = scmp.ne.s32.totalorder %s80, %s81
      %p90 = scmp.eq.s32.totalorder %s23, 0
      %p91 = por %p89, %p90
      %p92 = scmp.ne.s32.totalorder %s80, %s81
      %p93 = scmp.eq.s32.totalorder %s24, 1
      %p94 = por %p92, %p93
      %p96 = scmp.ne.s32.totalorder %s81, %s95
      %p97 = scmp.eq.s32.totalorder %s24, 0
      %p98 = por %p96, %p97
      %s100 = sadd.s32 %s99, 1
      %p103 = scmp.eq.s32.totalorder %s18, 1
      %p104 = scmp.ne.s32.totalorder %s99, %s101
      %p105 = scmp.eq.s32.totalorder %s18, 0
      %p106 = por %p104, %p105
      %p107 = scmp.ne.s32.totalorder %s99, %s101
      %p108 = scmp.eq.s32.totalorder %s23, 1
      %p109 = por %p107, %p108
      %p110 = scmp.ne.s32.totalorder %s101, %s102
      %p111 = scmp.eq.s32.totalorder %s23, 0
      %p112 = por %p110, %p111
      %p113 = scmp.ne.s32.totalorder %s101, %s102
      %p114 = scmp.eq.s32.totalorder %s24, 1
      %p115 = por %p113, %p114
      %p117 = scmp.ne.s32.totalorder %s102, %s116
      %p118 = scmp.eq.s32.totalorder %s24, 0
      %p119 = por %p117, %p118
      %s121 = sadd.s32 %s120, 1
      %p124 = scmp.eq.s32.totalorder %s18, 1
      %p125 = scmp.ne.s32.totalorder %s120, %s122
      %p126 = scmp.eq.s32.totalorder %s18, 0
      %p127 = por %p125, %p126
      %p128 = scmp.ne.s32.totalorder %s120, %s122
      %p129 = scmp.eq.s32.totalorder %s23, 1
      %p130 = por %p128, %p129
      %p131 = scmp.ne.s32.totalorder %s122, %s123
      %p132 = scmp.eq.s32.totalorder %s23, 0
      %p133 = por %p131, %p132
      %p134 = scmp.ne.s32.totalorder %s122, %s123
      %p135 = scmp.eq.s32.totalorder %s24, 1
      %p136 = por %p134, %p135
      %p138 = scmp.ne.s32.totalorder %s123, %s137
      %p139 = scmp.eq.s32.totalorder %s24, 0
      %p140 = por %p138, %p139
      %s142 = sadd.s32 %s141, 1
      %p145 = scmp.eq.s32.totalorder %s18, 1
      %p146 = scmp.ne.s32.totalorder %s141, %s143
      %p147 = scmp.eq.s32.totalorder %s18, 0
      %p148 = por %p146, %p147
      %p149 = scmp.ne.s32.totalorder %s141, %s143
      %p150 = scmp.eq.s32.totalorder %s23, 1
      %p151 = por %p149, %p150
      %p152 = scmp.ne.s32.totalorder %s143, %s144
      %p153 = scmp.eq.s32.totalorder %s23, 0
      %p154 = por %p152, %p153
      %p155 = scmp.ne.s32.totalorder %s143, %s144
      %p156 = scmp.eq.s32.totalorder %s24, 1
      %p157 = por %p155, %p156
      %p159 = scmp.ne.s32.totalorder %s144, %s158
      %p160 = scmp.eq.s32.totalorder %s24, 0
      %p161 = por %p159, %p160
      %s163 = sadd.s32 %s162, 1
      %p166 = scmp.eq.s32.totalorder %s18, 1
      %p167 = scmp.ne.s32.totalorder %s162, %s164
      %p168 = scmp.eq.s32.totalorder %s18, 0
      %p169 = por %p167, %p168
      %p170 = scmp.ne.s32.totalorder %s162, %s164
      %p171 = scmp.eq.s32.totalorder %s23, 1
      %p172 = por %p170, %p171
      %p173 = scmp.ne.s32.totalorder %s164, %s165
      %p174 = scmp.eq.s32.totalorder %s23, 0
      %p175 = por %p173, %p174
      %p176 = scmp.ne.s32.totalorder %s164, %s165
      %p177 = scmp.eq.s32.totalorder %s24, 1
      %p178 = por %p176, %p177
      %p180 = scmp.ne.s32.totalorder %s165, %s179
      %p181 = scmp.eq.s32.totalorder %s24, 0
      %p182 = por %p180, %p181
      %s184 = sadd.s32 %s183, 1
      %p187 = scmp.eq.s32.totalorder %s18, 1
      %p188 = scmp.ne.s32.totalorder %s183, %s185
      %p189 = scmp.eq.s32.totalorder %s18, 0
      %p190 = por %p188, %p189
      %p191 = scmp.ne.s32.totalorder %s183, %s185
      %p192 = scmp.eq.s32.totalorder %s23, 1
      %p193 = por %p191, %p192
      %p194 = scmp.ne.s32.totalorder %s185, %s186
      %p195 = scmp.eq.s32.totalorder %s23, 0
      %p196 = por %p194, %p195
      %p197 = scmp.ne.s32.totalorder %s185, %s186
      %p198 = scmp.eq.s32.totalorder %s24, 1
      %p199 = por %p197, %p198
      %p201 = scmp.ne.s32.totalorder %s186, %s200
      %p202 = scmp.eq.s32.totalorder %s24, 0
      %p203 = por %p201, %p202
      %s204 = ssub.s32 %s18, %s25
      %p205 = scmp.eq.s32.totalorder %s204, 0
      %s207 = sadd.s32 %s206, 1
      %s208 = scalar_select %p205, %s206, %s207
      %p211 = pneg %p205
      %p212 = scmp.eq.s32.totalorder %s18, 1
      %p213 = por %p211, %p212
      %p214 = scmp.ne.s32.totalorder %s206, %s209
      %p215 = scmp.eq.s32.totalorder %s18, 0
      %p216 = por %p214, %p215
      %p217 = scmp.ne.s32.totalorder %s206, %s209
      %p218 = scmp.eq.s32.totalorder %s23, 1
      %p219 = por %p217, %p218
      %p220 = scmp.ne.s32.totalorder %s209, %s210
      %p221 = scmp.eq.s32.totalorder %s23, 0
      %p222 = por %p220, %p221
      %p223 = scmp.ne.s32.totalorder %s209, %s210
      %p224 = scmp.eq.s32.totalorder %s24, 1
      %p225 = por %p223, %p224
      %p227 = scmp.ne.s32.totalorder %s210, %s226
      %p228 = scmp.eq.s32.totalorder %s24, 0
      %p229 = por %p227, %p228
      %s230 = ssub.s32 %s18, %s25
      %p231 = scmp.eq.s32.totalorder %s230, 0
      %s233 = sadd.s32 %s232, 1
      %s234 = scalar_select %p231, %s232, %s233
      %p237 = pneg %p231
      %p238 = scmp.eq.s32.totalorder %s18, 1
      %p239 = por %p237, %p238
      %p240 = scmp.ne.s32.totalorder %s232, %s235
      %p241 = scmp.eq.s32.totalorder %s18, 0
      %p242 = por %p240, %p241
      %p243 = scmp.ne.s32.totalorder %s232, %s235
      %p244 = scmp.eq.s32.totalorder %s23, 1
      %p245 = por %p243, %p244
      %p246 = scmp.ne.s32.totalorder %s235, %s236
      %p247 = scmp.eq.s32.totalorder %s23, 0
      %p248 = por %p246, %p247
      %p249 = scmp.ne.s32.totalorder %s235, %s236
      %p250 = scmp.eq.s32.totalorder %s24, 1
      %p251 = por %p249, %p250
      %p253 = scmp.ne.s32.totalorder %s236, %s252
      %p254 = scmp.eq.s32.totalorder %s24, 0
      %p255 = por %p253, %p254
      %p256 = scmp.le.s32.totalorder 1, %s18
      %p257 = scmp.lt.s32.totalorder %s18, 3
      %p258 = pnand %p256, %p257
      %p259 = pneg %p258
      // Predicated region
      $region9: #{sidechain1d_forward.1} parent=5 // pred_check
        _
      $region10: #{sidechain1d_forward.1} parent=5 // pred_check_branch
        %261 = sbr.rel (%p258) target = $region12
      $region11: #{sidechain1d_forward.1} parent=5 // pred_region
        %s262 = ssub.s32 %s18, 1
        // Predicated region
        $region13: #{sidechain1d_forward.1} parent=11 // pred_check
          %p263 = pneg %p91
        $region14: #{sidechain1d_forward.1} parent=11 // pred_check_branch
          %265 = sbr.rel (%p263) target = $region16
        $region15: #{sidechain1d_forward.1} parent=11 // pred_region
          %267 = vsyncadd [#allocation3], 0
          %s268 = sshll.u32 %s2, 4
          %s269 = int_to_ptr.hbm [resolvable:$true] %s268
          %s270 = sshll.u32 [#allocation2], 4
          %s271 = int_to_ptr.vmem [resolvable:$true] %s270
          %276 = dma.hbm_to_vmem [thread:$0]  %s269, 2048, %s271, [#allocation3], 64, 64, 4
        $region16: #{sidechain1d_forward.1} parent=11 // pred_fallthru
          _
        // Predicated region
        $region17: #{sidechain1d_forward.1} parent=11 // pred_check
          %p277 = pneg %p112
        $region18: #{sidechain1d_forward.1} parent=11 // pred_check_branch
          %279 = sbr.rel (%p277) target = $region20
        $region19: #{sidechain1d_forward.1} parent=11 // pred_region
          _
        $region20: #{sidechain1d_forward.1} parent=11 // pred_fallthru
          _
        // Predicated region
        $region21: #{sidechain1d_forward.1} parent=11 // pred_check
          %p280 = pneg %p133
        $region22: #{sidechain1d_forward.1} parent=11 // pred_check_branch
          %282 = sbr.rel (%p280) target = $region24
        $region23: #{sidechain1d_forward.1} parent=11 // pred_region
          %284 = vsyncadd [#allocation5], 0
          %s285 = sshll.u32 %s4, 4
          %s286 = int_to_ptr.hbm [resolvable:$true] %s285
          %s287 = sshll.u32 [#allocation4], 4
          %s288 = int_to_ptr.vmem [resolvable:$true] %s287
          %293 = dma.hbm_to_vmem [thread:$0]  %s286, 24576, %s288, [#allocation5], 192, 192, 12
        $region24: #{sidechain1d_forward.1} parent=11 // pred_fallthru
          _
        // Predicated region
        $region25: #{sidechain1d_forward.1} parent=11 // pred_check
          %p294 = pneg %p154
        $region26: #{sidechain1d_forward.1} parent=11 // pred_check_branch
          %296 = sbr.rel (%p294) target = $region28
        $region27: #{sidechain1d_forward.1} parent=11 // pred_region
          _
        $region28: #{sidechain1d_forward.1} parent=11 // pred_fallthru
          _
        // Predicated region
        $region29: #{sidechain1d_forward.1} parent=11 // pred_check
          %p297 = pneg %p175
        $region30: #{sidechain1d_forward.1} parent=11 // pred_check_branch
          %299 = sbr.rel (%p297) target = $region32
        $region31: #{sidechain1d_forward.1} parent=11 // pred_region
          _
        $region32: #{sidechain1d_forward.1} parent=11 // pred_fallthru
          _
        // Predicated region
        $region33: #{sidechain1d_forward.1} parent=11 // pred_check
          %p300 = pneg %p196
        $region34: #{sidechain1d_forward.1} parent=11 // pred_check_branch
          %302 = sbr.rel (%p300) target = $region36
        $region35: #{sidechain1d_forward.1} parent=11 // pred_region
          %304 = vsyncadd [#allocation5], 0
          %s305 = sshll.u32 %s7, 4
          %s306 = int_to_ptr.hbm [resolvable:$true] %s305
          %s307 = sshll.u32 [#allocation6], 4
          %s308 = int_to_ptr.vmem [resolvable:$true] %s307
          %313 = dma.hbm_to_vmem [thread:$0]  %s306, 256, %s308, [#allocation5], 128, 128, 8
        $region36: #{sidechain1d_forward.1} parent=11 // pred_fallthru
          _
      $region12: #{sidechain1d_forward.1} parent=5 // pred_fallthru
        _
      %p314 = scmp.lt.s32.totalorder %s18, 2
      // Predicated region
      $region37: #{sidechain1d_forward.1} parent=5 // pred_check
        %p315 = pneg %p314
      $region38: #{sidechain1d_forward.1} parent=5 // pred_check_branch
        %317 = sbr.rel (%p315) target = $region40
      $region39: #{sidechain1d_forward.1} parent=5 // pred_region
        // Predicated region
        $region41: #{sidechain1d_forward.1} parent=39 // pred_check
          %p318 = pneg %p38
        $region42: #{sidechain1d_forward.1} parent=39 // pred_check_branch
          %320 = sbr.rel (%p318) target = $region44
        $region43: #{sidechain1d_forward.1} parent=39 // pred_region
          %p321 = scmp.lt.s32.totalorder %s18, 1
          %s322 = scalar_select %p321, %s18, 1
          %s323 = smul.addr %s322, 2
          %s324 = smul.addr %s323, 8
          %s325 = scalar_lea.vmem %s0, %s324
        $region44: #{sidechain1d_forward.1} parent=39 // pred_fallthru
          _
        // Predicated region
        $region45: #{sidechain1d_forward.1} parent=39 // pred_check
          %p326 = pneg %p64
        $region46: #{sidechain1d_forward.1} parent=39 // pred_check_branch
          %328 = sbr.rel (%p326) target = $region48
        $region47: #{sidechain1d_forward.1} parent=39 // pred_region
          %p329 = scmp.lt.s32.totalorder %s18, 1
          %s330 = scalar_select %p329, %s18, 1
          %s331 = smul.addr %s330, 2
          %s332 = smul.addr %s331, 8
          %s333 = scalar_lea.vmem %s1, %s332
        $region48: #{sidechain1d_forward.1} parent=39 // pred_fallthru
          _
      $region40: #{sidechain1d_forward.1} parent=5 // pred_fallthru
        _
      %p334 = scmp.le.s32.totalorder 1, %s18
      %p335 = scmp.lt.s32.totalorder %s18, 3
      %p336 = pnand %p334, %p335
      %p337 = pneg %p336
      // Predicated region
      $region49: #{sidechain1d_forward.1} parent=5 // pred_check
        _
      $region50: #{sidechain1d_forward.1} parent=5 // pred_check_branch
        %339 = sbr.rel (%p336) target = $region52
      $region51: #{sidechain1d_forward.1} parent=5 // pred_region
        %s340 = ssub.s32 %s18, 1
        // Predicated region
        $region53: #{sidechain1d_forward.1} parent=51 // pred_check
          %p341 = pneg %p91
        $region54: #{sidechain1d_forward.1} parent=51 // pred_check_branch
          %343 = sbr.rel (%p341) target = $region56
        $region55: #{sidechain1d_forward.1} parent=51 // pred_region
          %345 = dma.done [#allocation3], 2048
        $region56: #{sidechain1d_forward.1} parent=51 // pred_fallthru
          _
        // Predicated region
        $region57: #{sidechain1d_forward.1} parent=51 // pred_check
          %p346 = pneg %p133
        $region58: #{sidechain1d_forward.1} parent=51 // pred_check_branch
          %348 = sbr.rel (%p346) target = $region60
        $region59: #{sidechain1d_forward.1} parent=51 // pred_region
          %350 = dma.done [#allocation5], 24576
        $region60: #{sidechain1d_forward.1} parent=51 // pred_fallthru
          _
        // Predicated region
        $region61: #{sidechain1d_forward.1} parent=51 // pred_check
          %p351 = pneg %p196
        $region62: #{sidechain1d_forward.1} parent=51 // pred_check_branch
          %353 = sbr.rel (%p351) target = $region64
        $region63: #{sidechain1d_forward.1} parent=51 // pred_region
          %355 = dma.done [#allocation5], 256
        $region64: #{sidechain1d_forward.1} parent=51 // pred_fallthru
          _
        %p356 = scmp.lt.s32.totalorder %s23, 1
        %s357 = scalar_select %p356, %s23, 1
        %s358 = smul.addr %s357, 2
        %s359 = smul.addr %s358, 8
        %s360 = scalar_lea.vmem %s0, %s359
        %p361 = pneg %p44
        %p362 = pneg %p41
        %p363 = scmp.lt.s32.totalorder %s23, 1
        %s364 = scalar_select %p363, %s23, 1
        %s365 = smul.addr %s364, 2
        %s366 = smul.addr %s365, 8
        %s367 = scalar_lea.vmem %s1, %s366
        %p368 = pneg %p70
        %p369 = pneg %p67
        %p370 = pneg %p91
        %p371 = pneg %p88
        %p372 = pneg %p112
        %p373 = pneg %p109
        %p374 = pneg %p133
        %p375 = pneg %p130
        %p376 = pneg %p154
        %p377 = pneg %p151
        %p378 = pneg %p175
        %p379 = pneg %p172
        %p380 = pneg %p196
        %p381 = pneg %p193
        %p382 = pneg %p222
        %p383 = pneg %p219
        %p384 = scmp.lt.s32.totalorder %s23, 1
        %s385 = scalar_select %p384, %s23, 1
        %s386 = smul.addr %s385, 2
        %s387 = smul.addr %s386, 8
        %s388 = scalar_lea.vmem %s8, %s387
        %p389 = pneg %p248
        %p390 = pneg %p245
        %p391 = scmp.lt.s32.totalorder %s23, 1
        %s392 = scalar_select %p391, %s23, 1
        %s393 = smul.addr %s392, 2
        %s394 = smul.addr %s393, 8
        %s395 = scalar_lea.vmem %s9, %s394
        %p396 = scmp.lt.s32.totalorder %s23, 1
        %s397 = scalar_select %p396, %s23, 1
        %s398 = smul.addr %s397, 2
        %s399 = smul.addr %s398, 8
        %s400 = scalar_lea.vmem %s0, %s399
        %p401 = scmp.lt.s32.totalorder %s23, 1
        %s402 = scalar_select %p401, %s23, 1
        %s403 = smul.addr %s402, 2
        %s404 = smul.addr %s403, 8
        %s405 = scalar_lea.vmem %s1, %s404
        %p406 = scmp.lt.s32.totalorder %s23, 1
        %s407 = scalar_select %p406, %s23, 1
        %s408 = smul.addr %s407, 2
        %s409 = smul.addr %s408, 8
        %s410 = scalar_lea.vmem %s8, %s409
        %p411 = scmp.lt.s32.totalorder %s23, 1
        %s412 = scalar_select %p411, %s23, 1
        %s413 = smul.addr %s412, 2
        %s414 = smul.addr %s413, 8
        %s415 = scalar_lea.vmem %s9, %s414
        %v416 = vld [vmem:[%s400] sm:$0xff]
        %v417 = vld [vmem:[%s400 + $0x8] sm:$0xff]
        %v418 = vmax.f32 %v416, 0.0
        %v419 = vmax.f32 %v417, 0.0
        %v420 = vld [vmem:[%s405] sm:$0xff]
        %v421 = vld [vmem:[%s405 + $0x8] sm:$0xff]
        %v422 = vmax.f32 %v420, 0.0
        %v423 = vmax.f32 %v421, 0.0
        %v424 = vpack.c.bf16 %v419, %v418
        %v425 = vpack.c.bf16 %v423, %v422
        %v426 = vld [vmem:[#allocation2] sm:$0xf]
        %v427 = vld [vmem:[#allocation2 + $0x4] sm:$0xf]
        %v428 = vld [vmem:[#allocation2 + $0x8] sm:$0xf]
        %v429 = vld [vmem:[#allocation2 + $0xc] sm:$0xf]
        %v430 = vld [vmem:[#allocation2 + $0x10] sm:$0xf]
        %v431 = vld [vmem:[#allocation2 + $0x14] sm:$0xf]
        %v432 = vld [vmem:[#allocation2 + $0x18] sm:$0xf]
        %v433 = vld [vmem:[#allocation2 + $0x1c] sm:$0xf]
        %v434 = vld [vmem:[#allocation2 + $0x20] sm:$0xf]
        %v435 = vld [vmem:[#allocation2 + $0x24] sm:$0xf]
        %v436 = vld [vmem:[#allocation2 + $0x28] sm:$0xf]
        %v437 = vld [vmem:[#allocation2 + $0x2c] sm:$0xf]
        %v438 = vld [vmem:[#allocation2 + $0x30] sm:$0xf]
        %v439 = vld [vmem:[#allocation2 + $0x34] sm:$0xf]
        %v440 = vld [vmem:[#allocation2 + $0x38] sm:$0xf]
        %v441 = vld [vmem:[#allocation2 + $0x3c] sm:$0xf]
        %v442 = vld [vmem:[#allocation2 + $0x40] sm:$0xf]
        %v443 = vld [vmem:[#allocation2 + $0x44] sm:$0xf]
        %v444 = vld [vmem:[#allocation2 + $0x48] sm:$0xf]
        %v445 = vld [vmem:[#allocation2 + $0x4c] sm:$0xf]
        %v446 = vld [vmem:[#allocation2 + $0x50] sm:$0xf]
        %v447 = vld [vmem:[#allocation2 + $0x54] sm:$0xf]
        %v448 = vld [vmem:[#allocation2 + $0x58] sm:$0xf]
        %v449 = vld [vmem:[#allocation2 + $0x5c] sm:$0xf]
        %v450 = vld [vmem:[#allocation2 + $0x60] sm:$0xf]
        %v451 = vld [vmem:[#allocation2 + $0x64] sm:$0xf]
        %v452 = vld [vmem:[#allocation2 + $0x68] sm:$0xf]
        %v453 = vld [vmem:[#allocation2 + $0x6c] sm:$0xf]
        %v454 = vld [vmem:[#allocation2 + $0x70] sm:$0xf]
        %v455 = vld [vmem:[#allocation2 + $0x74] sm:$0xf]
        %v456 = vld [vmem:[#allocation2 + $0x78] sm:$0xf]
        %v457 = vld [vmem:[#allocation2 + $0x7c] sm:$0xf]
        %v458 = vld [vmem:[%s3] sm:$0x1]
        %v460 = vperm.slane %v458, 0
        %v494 = vunpack.c.l.b16 %v426
        %v495 = vunpack.c.l.b16 %v427
        %v496 = vunpack.c.l.b16 %v428
        %v497 = vunpack.c.l.b16 %v429
        %v498 = vunpack.c.l.b16 %v430
        %v499 = vunpack.c.l.b16 %v431
        %v500 = vunpack.c.l.b16 %v432
        %v501 = vunpack.c.l.b16 %v433
        %v502 = vunpack.c.l.b16 %v434
        %v503 = vunpack.c.l.b16 %v435
        %v504 = vunpack.c.l.b16 %v436
        %v505 = vunpack.c.l.b16 %v437
        %v506 = vunpack.c.l.b16 %v438
        %v507 = vunpack.c.l.b16 %v439
        %v508 = vunpack.c.l.b16 %v440
        %v509 = vunpack.c.l.b16 %v441
        %v510 = vunpack.c.l.b16 %v442
        %v511 = vunpack.c.l.b16 %v443
        %v512 = vunpack.c.l.b16 %v444
        %v513 = vunpack.c.l.b16 %v445
        %v514 = vunpack.c.l.b16 %v446
        %v515 = vunpack.c.l.b16 %v447
        %v516 = vunpack.c.l.b16 %v448
        %v517 = vunpack.c.l.b16 %v449
        %v518 = vunpack.c.l.b16 %v450
        %v519 = vunpack.c.l.b16 %v451
        %v520 = vunpack.c.l.b16 %v452
        %v521 = vunpack.c.l.b16 %v453
        %v522 = vunpack.c.l.b16 %v454
        %v523 = vunpack.c.l.b16 %v455
        %v524 = vunpack.c.l.b16 %v456
        %v525 = vunpack.c.l.b16 %v457
        %v526 = vpack.c.b16 %v495, %v494
        %v527 = vpack.c.b16 %v497, %v496
        %v528 = vpack.c.b16 %v499, %v498
        %v529 = vpack.c.b16 %v501, %v500
        %v530 = vpack.c.b16 %v503, %v502
        %v531 = vpack.c.b16 %v505, %v504
        %v532 = vpack.c.b16 %v507, %v506
        %v533 = vpack.c.b16 %v509, %v508
        %v534 = vpack.c.b16 %v511, %v510
        %v535 = vpack.c.b16 %v513, %v512
        %v536 = vpack.c.b16 %v515, %v514
        %v537 = vpack.c.b16 %v517, %v516
        %v538 = vpack.c.b16 %v519, %v518
        %v539 = vpack.c.b16 %v521, %v520
        %v540 = vpack.c.b16 %v523, %v522
        %v541 = vpack.c.b16 %v525, %v524
        %558 = vmatpush.bf16.msra.mxu0 %v533
        %559 = vmatpush.bf16.msra.mxu0 %v532
        %560 = vmatpush.bf16.msra.mxu0 %v531
        %561 = vmatpush.bf16.msra.mxu0 %v530
        %562 = vmatpush.bf16.msra.mxu0 %v529
        %563 = vmatpush.bf16.msra.mxu0 %v528
        %564 = vmatpush.bf16.msra.mxu0 %v527
        %565 = vmatpush.bf16.msra.mxu0 %v526
        %566 = vmatmul.bf16.gmra.mxu0 %v424
        %v567 = vpop.f32.mrf.mxu0
        %v568 = vadd.f32 %v460, %v567
        %v569 = vpop.f32.mrf.mxu0
        %v570 = vadd.f32 %v460, %v569
        %571 = vdwg.mxu0
        %572 = vmatpush.bf16.msra.mxu0 %v541
        %573 = vmatpush.bf16.msra.mxu0 %v540
        %574 = vmatpush.bf16.msra.mxu0 %v539
        %575 = vmatpush.bf16.msra.mxu0 %v538
        %576 = vmatpush.bf16.msra.mxu0 %v537
        %577 = vmatpush.bf16.msra.mxu0 %v536
        %578 = vmatpush.bf16.msra.mxu0 %v535
        %579 = vmatpush.bf16.msra.mxu0 %v534
        %580 = vmatmul.bf16.gmra.mxu0 %v425
        %v581 = vpop.f32.mrf.mxu0
        %v582 = vadd.f32 %v568, %v581
        %v583 = vpop.f32.mrf.mxu0
        %v584 = vadd.f32 %v570, %v583
        %585 = vdwg.mxu0
        %v586 = vlaneseq
        %v587 = vshrl.u32 %v586, 7
        %v588 = vadd.s32 %v587, 8
        %vm589 = vcmp.eq.s32.totalorder %v587, 0
        %vm590 = vcmp.eq.s32.totalorder %v588, 0
        %vm591 = vcmp.eq.s32.totalorder %v587, 15
        %vm592 = vcmp.eq.s32.totalorder %v588, 15
        %v593 = vld [vmem:[#allocation4] sm:$0xff]
        %v594 = vld [vmem:[#allocation4 + $0x8] sm:$0xf]
        %v595 = vld [vmem:[#allocation4 + $0xc] sm:$0xff]
        %v596 = vld [vmem:[#allocation4 + $0x14] sm:$0xf]
        %v597 = vld [vmem:[#allocation4 + $0x18] sm:$0xff]
        %v598 = vld [vmem:[#allocation4 + $0x20] sm:$0xf]
        %v599 = vld [vmem:[#allocation4 + $0x24] sm:$0xff]
        %v600 = vld [vmem:[#allocation4 + $0x2c] sm:$0xf]
        %v601 = vld [vmem:[#allocation4 + $0x30] sm:$0xff]
        %v602 = vld [vmem:[#allocation4 + $0x38] sm:$0xf]
        %v603 = vld [vmem:[#allocation4 + $0x3c] sm:$0xff]
        %v604 = vld [vmem:[#allocation4 + $0x44] sm:$0xf]
        %v605 = vld [vmem:[#allocation4 + $0x48] sm:$0xff]
        %v606 = vld [vmem:[#allocation4 + $0x50] sm:$0xf]
        %v607 = vld [vmem:[#allocation4 + $0x54] sm:$0xff]
        %v608 = vld [vmem:[#allocation4 + $0x5c] sm:$0xf]
        %v609 = vld [vmem:[#allocation4 + $0x60] sm:$0xff]
        %v610 = vld [vmem:[#allocation4 + $0x68] sm:$0xf]
        %v611 = vld [vmem:[#allocation4 + $0x6c] sm:$0xff]
        %v612 = vld [vmem:[#allocation4 + $0x74] sm:$0xf]
        %v613 = vld [vmem:[#allocation4 + $0x78] sm:$0xff]
        %v614 = vld [vmem:[#allocation4 + $0x80] sm:$0xf]
        %v615 = vld [vmem:[#allocation4 + $0x84] sm:$0xff]
        %v616 = vld [vmem:[#allocation4 + $0x8c] sm:$0xf]
        %v617 = vld [vmem:[#allocation4 + $0x90] sm:$0xff]
        %v618 = vld [vmem:[#allocation4 + $0x98] sm:$0xf]
        %v619 = vld [vmem:[#allocation4 + $0x9c] sm:$0xff]
        %v620 = vld [vmem:[#allocation4 + $0xa4] sm:$0xf]
        %v621 = vld [vmem:[#allocation4 + $0xa8] sm:$0xff]
        %v622 = vld [vmem:[#allocation4 + $0xb0] sm:$0xf]
        %v623 = vld [vmem:[#allocation4 + $0xb4] sm:$0xff]
        %v624 = vld [vmem:[#allocation4 + $0xbc] sm:$0xf]
        %v625 = vpack.c.bf16 %v584, %v582
        %v658 = vunpack.c.l.b16 %v593
        %v659 = vunpack.c.h.b16 %v593
        %v660 = vunpack.c.l.b16 %v594
        %v661 = vunpack.c.l.b16 %v595
        %v662 = vunpack.c.h.b16 %v595
        %v663 = vunpack.c.l.b16 %v596
        %v664 = vunpack.c.l.b16 %v597
        %v665 = vunpack.c.h.b16 %v597
        %v666 = vunpack.c.l.b16 %v598
        %v667 = vunpack.c.l.b16 %v599
        %v668 = vunpack.c.h.b16 %v599
        %v669 = vunpack.c.l.b16 %v600
        %v670 = vunpack.c.l.b16 %v601
        %v671 = vunpack.c.h.b16 %v601
        %v672 = vunpack.c.l.b16 %v602
        %v673 = vunpack.c.l.b16 %v603
        %v674 = vunpack.c.h.b16 %v603
        %v675 = vunpack.c.l.b16 %v604
        %v676 = vunpack.c.l.b16 %v605
        %v677 = vunpack.c.h.b16 %v605
        %v678 = vunpack.c.l.b16 %v606
        %v679 = vunpack.c.l.b16 %v607
        %v680 = vunpack.c.h.b16 %v607
        %v681 = vunpack.c.l.b16 %v608
        %v682 = vunpack.c.l.b16 %v609
        %v683 = vunpack.c.h.b16 %v609
        %v684 = vunpack.c.l.b16 %v610
        %v685 = vunpack.c.l.b16 %v611
        %v686 = vunpack.c.h.b16 %v611
        %v687 = vunpack.c.l.b16 %v612
        %v688 = vunpack.c.l.b16 %v613
        %v689 = vunpack.c.h.b16 %v613
        %v690 = vunpack.c.l.b16 %v614
        %v691 = vunpack.c.l.b16 %v615
        %v692 = vunpack.c.h.b16 %v615
        %v693 = vunpack.c.l.b16 %v616
        %v694 = vunpack.c.l.b16 %v617
        %v695 = vunpack.c.h.b16 %v617
        %v696 = vunpack.c.l.b16 %v618
        %v697 = vunpack.c.l.b16 %v619
        %v698 = vunpack.c.h.b16 %v619
        %v699 = vunpack.c.l.b16 %v620
        %v700 = vunpack.c.l.b16 %v621
        %v701 = vunpack.c.h.b16 %v621
        %v702 = vunpack.c.l.b16 %v622
        %v703 = vunpack.c.l.b16 %v623
        %v704 = vunpack.c.h.b16 %v623
        %v705 = vunpack.c.l.b16 %v624
        %v706 = vpack.c.b16 %v661, %v658
        %v707 = vpack.c.b16 %v662, %v659
        %v708 = vpack.c.b16 %v663, %v660
        %v709 = vpack.c.b16 %v667, %v664
        %v710 = vpack.c.b16 %v668, %v665
        %v711 = vpack.c.b16 %v669, %v666
        %v712 = vpack.c.b16 %v673, %v670
        %v713 = vpack.c.b16 %v674, %v671
        %v714 = vpack.c.b16 %v675, %v672
        %v715 = vpack.c.b16 %v679, %v676
        %v716 = vpack.c.b16 %v680, %v677
        %v717 = vpack.c.b16 %v681, %v678
        %v718 = vpack.c.b16 %v685, %v682
        %v719 = vpack.c.b16 %v686, %v683
        %v720 = vpack.c.b16 %v687, %v684
        %v721 = vpack.c.b16 %v691, %v688
        %v722 = vpack.c.b16 %v692, %v689
        %v723 = vpack.c.b16 %v693, %v690
        %v724 = vpack.c.b16 %v697, %v694
        %v725 = vpack.c.b16 %v698, %v695
        %v726 = vpack.c.b16 %v699, %v696
        %v727 = vpack.c.b16 %v703, %v700
        %v728 = vpack.c.b16 %v704, %v701
        %v729 = vpack.c.b16 %v705, %v702
        %754 = vmatpush.bf16.msra.mxu0 %v727
        %755 = vmatpush.bf16.msra.mxu0 %v724
        %756 = vmatpush.bf16.msra.mxu0 %v721
        %757 = vmatpush.bf16.msra.mxu0 %v718
        %758 = vmatpush.bf16.msra.mxu0 %v715
        %759 = vmatpush.bf16.msra.mxu0 %v712
        %760 = vmatpush.bf16.msra.mxu0 %v709
        %761 = vmatpush.bf16.msra.mxu0 %v706
        %762 = vmatmul.bf16.gmra.mxu0 %v625
        %v763 = vpop.f32.mrf.mxu0
        %v764 = vadd.f32 0.0, %v763
        %v765 = vpop.f32.mrf.mxu0
        %v766 = vadd.f32 0.0, %v765
        %767 = vdwg.mxu0
        %768 = vmatpush.bf16.msra.mxu0 %v728
        %769 = vmatpush.bf16.msra.mxu0 %v725
        %770 = vmatpush.bf16.msra.mxu0 %v722
        %771 = vmatpush.bf16.msra.mxu0 %v719
        %772 = vmatpush.bf16.msra.mxu0 %v716
        %773 = vmatpush.bf16.msra.mxu0 %v713
        %774 = vmatpush.bf16.msra.mxu0 %v710
        %775 = vmatpush.bf16.msra.mxu0 %v707
        %776 = vmatmul.bf16.gmra.mxu0 %v625
        %v777 = vpop.f32.mrf.mxu0
        %v778 = vadd.f32 0.0, %v777
        %v779 = vpop.f32.mrf.mxu0
        %v780 = vadd.f32 0.0, %v779
        %781 = vdwg.mxu0
        %782 = vmatpush.bf16.msra.mxu0 %v729
        %783 = vmatpush.bf16.msra.mxu0 %v726
        %784 = vmatpush.bf16.msra.mxu0 %v723
        %785 = vmatpush.bf16.msra.mxu0 %v720
        %786 = vmatpush.bf16.msra.mxu0 %v717
        %787 = vmatpush.bf16.msra.mxu0 %v714
        %788 = vmatpush.bf16.msra.mxu0 %v711
        %789 = vmatpush.bf16.msra.mxu0 %v708
        %790 = vmatmul.bf16.gmra.mxu0 %v625
        %v791 = vpop.f32.mrf.mxu0
        %v792 = vadd.f32 0.0, %v791
        %v793 = vpop.f32.mrf.mxu0
        %v794 = vadd.f32 0.0, %v793
        %795 = vdwg.mxu0
        %v796 = vrot.slane %v764, 7
        %v797 = vrot.slane %v766, 7
        %vm798 = vcmp.lt.s32.totalorder %v587, 1
        %v799 = vsel %vm798, %v796, %v797
        %v800 = vsel %vm798, %v797, %v796
        %v801 = vsel %vm589, 1, 0
        %v802 = vsel %vm590, 1, 0
        %vm803 = vcmp.eq.s32.totalorder %v801, 1
        %vm804 = vcmp.eq.s32.totalorder %v802, 1
        %v805 = vsel %vm803, 0.0, %v800
        %v806 = vsel %vm804, 0.0, %v799
        %v807 = vrot.slane %v792, 1
        %v808 = vrot.slane %v794, 1
        %vm809 = vcmp.lt.s32.totalorder %v587, 7
        %v810 = vsel %vm809, %v807, %v808
        %v811 = vsel %vm809, %v808, %v807
        %v812 = vsel %vm591, 1, 0
        %v813 = vsel %vm592, 1, 0
        %vm814 = vcmp.eq.s32.totalorder %v812, 1
        %vm815 = vcmp.eq.s32.totalorder %v813, 1
        %v816 = vsel %vm814, 0.0, %v810
        %v817 = vsel %vm815, 0.0, %v811
        %v818 = vadd.f32 %v778, %v805
        %v819 = vadd.f32 %v780, %v806
        %v820 = vadd.f32 %v818, %v816
        %v821 = vadd.f32 %v819, %v817
        %v822 = vadd.f32 %v820, %v821
        %v823 = vrot.slane %v822, 4
        %v824 = vadd.f32 %v822, %v823
        %v825 = vrot.slane %v824, 2
        %v826 = vadd.f32 %v824, %v825
        %v827 = vrot.slane %v826, 1
        %v828 = vadd.f32 %v826, %v827
        %v829 = vmul.f32 %v820, %v820
        %v830 = vmul.f32 %v821, %v821
        %v831 = vadd.f32 %v829, %v830
        %v832 = vrot.slane %v831, 4
        %v833 = vadd.f32 %v831, %v832
        %v834 = vrot.slane %v833, 2
        %v835 = vadd.f32 %v833, %v834
        %v836 = vrot.slane %v835, 1
        %v837 = vadd.f32 %v835, %v836
        %v838 = vmul.f32 %v828, 0.0625
        %v839 = vmul.f32 %v837, 0.0625
        %v840 = vmul.f32 %v838, %v838
        %v841 = vsub.f32 %v839, %v840
        %v842 = vmax.f32 %v841, 0.0
        %v843 = vsub.f32 %v820, %v838
        %v844 = vsub.f32 %v821, %v838
        %v845 = vadd.f32 %v842, 1e-05
        %v846 = vrsqrt.pop %v845
        %v847 = vmul.f32 %v846, %v845
        %v848 = vmul.f32 %v847, %v846
        %v849 = vmul.f32 0.5, %v848
        %v850 = vsub.f32 1.5, %v849
        %v851 = vmul.f32 %v846, %v850
        %vm852 = vweird.f32 %v845
        %vm853 = vweird.f32 %v846
        %vm854 = vmor %vm852, %vm853
        %v855 = vsel %vm854, %v846, %v851
        %v856 = vmul.f32 %v843, %v855
        %v857 = vmul.f32 %v844, %v855
        %v858 = vmax.f32 %v856, 0.0
        %v859 = vmax.f32 %v857, 0.0
        %s860 = scalar_lea.vmem [#allocation4], 192
        %v861 = vld [vmem:[%s860] sm:$0xff]
        %v862 = vld [vmem:[%s860 + $0x8] sm:$0xf]
        %v863 = vld [vmem:[%s860 + $0xc] sm:$0xff]
        %v864 = vld [vmem:[%s860 + $0x14] sm:$0xf]
        %v865 = vld [vmem:[%s860 + $0x18] sm:$0xff]
        %v866 = vld [vmem:[%s860 + $0x20] sm:$0xf]
        %v867 = vld [vmem:[%s860 + $0x24] sm:$0xff]
        %v868 = vld [vmem:[%s860 + $0x2c] sm:$0xf]
        %v869 = vld [vmem:[%s860 + $0x30] sm:$0xff]
        %v870 = vld [vmem:[%s860 + $0x38] sm:$0xf]
        %v871 = vld [vmem:[%s860 + $0x3c] sm:$0xff]
        %v872 = vld [vmem:[%s860 + $0x44] sm:$0xf]
        %v873 = vld [vmem:[%s860 + $0x48] sm:$0xff]
        %v874 = vld [vmem:[%s860 + $0x50] sm:$0xf]
        %v875 = vld [vmem:[%s860 + $0x54] sm:$0xff]
        %v876 = vld [vmem:[%s860 + $0x5c] sm:$0xf]
        %v877 = vld [vmem:[%s860 + $0x60] sm:$0xff]
        %v878 = vld [vmem:[%s860 + $0x68] sm:$0xf]
        %v879 = vld [vmem:[%s860 + $0x6c] sm:$0xff]
        %v880 = vld [vmem:[%s860 + $0x74] sm:$0xf]
        %v881 = vld [vmem:[%s860 + $0x78] sm:$0xff]
        %v882 = vld [vmem:[%s860 + $0x80] sm:$0xf]
        %v883 = vld [vmem:[%s860 + $0x84] sm:$0xff]
        %v884 = vld [vmem:[%s860 + $0x8c] sm:$0xf]
        %v885 = vld [vmem:[%s860 + $0x90] sm:$0xff]
        %v886 = vld [vmem:[%s860 + $0x98] sm:$0xf]
        %v887 = vld [vmem:[%s860 + $0x9c] sm:$0xff]
        %v888 = vld [vmem:[%s860 + $0xa4] sm:$0xf]
        %v889 = vld [vmem:[%s860 + $0xa8] sm:$0xff]
        %v890 = vld [vmem:[%s860 + $0xb0] sm:$0xf]
        %v891 = vld [vmem:[%s860 + $0xb4] sm:$0xff]
        %v892 = vld [vmem:[%s860 + $0xbc] sm:$0xf]
        %v893 = vpack.c.bf16 %v859, %v858
        %v926 = vunpack.c.l.b16 %v861
        %v927 = vunpack.c.h.b16 %v861
        %v928 = vunpack.c.l.b16 %v862
        %v929 = vunpack.c.l.b16 %v863
        %v930 = vunpack.c.h.b16 %v863
        %v931 = vunpack.c.l.b16 %v864
        %v932 = vunpack.c.l.b16 %v865
        %v933 = vunpack.c.h.b16 %v865
        %v934 = vunpack.c.l.b16 %v866
        %v935 = vunpack.c.l.b16 %v867
        %v936 = vunpack.c.h.b16 %v867
        %v937 = vunpack.c.l.b16 %v868
        %v938 = vunpack.c.l.b16 %v869
        %v939 = vunpack.c.h.b16 %v869
        %v940 = vunpack.c.l.b16 %v870
        %v941 = vunpack.c.l.b16 %v871
        %v942 = vunpack.c.h.b16 %v871
        %v943 = vunpack.c.l.b16 %v872
        %v944 = vunpack.c.l.b16 %v873
        %v945 = vunpack.c.h.b16 %v873
        %v946 = vunpack.c.l.b16 %v874
        %v947 = vunpack.c.l.b16 %v875
        %v948 = vunpack.c.h.b16 %v875
        %v949 = vunpack.c.l.b16 %v876
        %v950 = vunpack.c.l.b16 %v877
        %v951 = vunpack.c.h.b16 %v877
        %v952 = vunpack.c.l.b16 %v878
        %v953 = vunpack.c.l.b16 %v879
        %v954 = vunpack.c.h.b16 %v879
        %v955 = vunpack.c.l.b16 %v880
        %v956 = vunpack.c.l.b16 %v881
        %v957 = vunpack.c.h.b16 %v881
        %v958 = vunpack.c.l.b16 %v882
        %v959 = vunpack.c.l.b16 %v883
        %v960 = vunpack.c.h.b16 %v883
        %v961 = vunpack.c.l.b16 %v884
        %v962 = vunpack.c.l.b16 %v885
        %v963 = vunpack.c.h.b16 %v885
        %v964 = vunpack.c.l.b16 %v886
        %v965 = vunpack.c.l.b16 %v887
        %v966 = vunpack.c.h.b16 %v887
        %v967 = vunpack.c.l.b16 %v888
        %v968 = vunpack.c.l.b16 %v889
        %v969 = vunpack.c.h.b16 %v889
        %v970 = vunpack.c.l.b16 %v890
        %v971 = vunpack.c.l.b16 %v891
        %v972 = vunpack.c.h.b16 %v891
        %v973 = vunpack.c.l.b16 %v892
        %v974 = vpack.c.b16 %v929, %v926
        %v975 = vpack.c.b16 %v930, %v927
        %v976 = vpack.c.b16 %v931, %v928
        %v977 = vpack.c.b16 %v935, %v932
        %v978 = vpack.c.b16 %v936, %v933
        %v979 = vpack.c.b16 %v937, %v934
        %v980 = vpack.c.b16 %v941, %v938
        %v981 = vpack.c.b16 %v942, %v939
        %v982 = vpack.c.b16 %v943, %v940
        %v983 = vpack.c.b16 %v947, %v944
        %v984 = vpack.c.b16 %v948, %v945
        %v985 = vpack.c.b16 %v949, %v946
        %v986 = vpack.c.b16 %v953, %v950
        %v987 = vpack.c.b16 %v954, %v951
        %v988 = vpack.c.b16 %v955, %v952
        %v989 = vpack.c.b16 %v959, %v956
        %v990 = vpack.c.b16 %v960, %v957
        %v991 = vpack.c.b16 %v961, %v958
        %v992 = vpack.c.b16 %v965, %v962
        %v993 = vpack.c.b16 %v966, %v963
        %v994 = vpack.c.b16 %v967, %v964
        %v995 = vpack.c.b16 %v971, %v968
        %v996 = vpack.c.b16 %v972, %v969
        %v997 = vpack.c.b16 %v973, %v970
        %1022 = vmatpush.bf16.msra.mxu0 %v995
        %1023 = vmatpush.bf16.msra.mxu0 %v992
        %1024 = vmatpush.bf16.msra.mxu0 %v989
        %1025 = vmatpush.bf16.msra.mxu0 %v986
        %1026 = vmatpush.bf16.msra.mxu0 %v983
        %1027 = vmatpush.bf16.msra.mxu0 %v980
        %1028 = vmatpush.bf16.msra.mxu0 %v977
        %1029 = vmatpush.bf16.msra.mxu0 %v974
        %1030 = vmatmul.bf16.gmra.mxu0 %v893
        %v1031 = vpop.f32.mrf.mxu0
        %v1032 = vadd.f32 0.0, %v1031
        %v1033 = vpop.f32.mrf.mxu0
        %v1034 = vadd.f32 0.0, %v1033
        %1035 = vdwg.mxu0
        %1036 = vmatpush.bf16.msra.mxu0 %v996
        %1037 = vmatpush.bf16.msra.mxu0 %v993
        %1038 = vmatpush.bf16.msra.mxu0 %v990
        %1039 = vmatpush.bf16.msra.mxu0 %v987
        %1040 = vmatpush.bf16.msra.mxu0 %v984
        %1041 = vmatpush.bf16.msra.mxu0 %v981
        %1042 = vmatpush.bf16.msra.mxu0 %v978
        %1043 = vmatpush.bf16.msra.mxu0 %v975
        %1044 = vmatmul.bf16.gmra.mxu0 %v893
        %v1045 = vpop.f32.mrf.mxu0
        %v1046 = vadd.f32 0.0, %v1045
        %v1047 = vpop.f32.mrf.mxu0
        %v1048 = vadd.f32 0.0, %v1047
        %1049 = vdwg.mxu0
        %1050 = vmatpush.bf16.msra.mxu0 %v997
        %1051 = vmatpush.bf16.msra.mxu0 %v994
        %1052 = vmatpush.bf16.msra.mxu0 %v991
        %1053 = vmatpush.bf16.msra.mxu0 %v988
        %1054 = vmatpush.bf16.msra.mxu0 %v985
        %1055 = vmatpush.bf16.msra.mxu0 %v982
        %1056 = vmatpush.bf16.msra.mxu0 %v979
        %1057 = vmatpush.bf16.msra.mxu0 %v976
        %1058 = vmatmul.bf16.gmra.mxu0 %v893
        %v1059 = vpop.f32.mrf.mxu0
        %v1060 = vadd.f32 0.0, %v1059
        %v1061 = vpop.f32.mrf.mxu0
        %v1062 = vadd.f32 0.0, %v1061
        %1063 = vdwg.mxu0
        %v1064 = vrot.slane %v1032, 7
        %v1065 = vrot.slane %v1034, 7
        %v1066 = vsel %vm798, %v1064, %v1065
        %v1067 = vsel %vm798, %v1065, %v1064
        %v1068 = vsel %vm803, 0.0, %v1067
        %v1069 = vsel %vm804, 0.0, %v1066
        %v1070 = vrot.slane %v1060, 1
        %v1071 = vrot.slane %v1062, 1
        %v1072 = vsel %vm809, %v1070, %v1071
        %v1073 = vsel %vm809, %v1071, %v1070
        %v1074 = vsel %vm814, 0.0, %v1072
        %v1075 = vsel %vm815, 0.0, %v1073
        %v1076 = vadd.f32 %v1046, %v1068
        %v1077 = vadd.f32 %v1048, %v1069
        %v1078 = vadd.f32 %v1076, %v1074
        %v1079 = vadd.f32 %v1077, %v1075
        %v1080 = vadd.f32 %v1078, %v1079
        %v1081 = vrot.slane %v1080, 4
        %v1082 = vadd.f32 %v1080, %v1081
        %v1083 = vrot.slane %v1082, 2
        %v1084 = vadd.f32 %v1082, %v1083
        %v1085 = vrot.slane %v1084, 1
        %v1086 = vadd.f32 %v1084, %v1085
        %v1087 = vmul.f32 %v1078, %v1078
        %v1088 = vmul.f32 %v1079, %v1079
        %v1089 = vadd.f32 %v1087, %v1088
        %v1090 = vrot.slane %v1089, 4
        %v1091 = vadd.f32 %v1089, %v1090
        %v1092 = vrot.slane %v1091, 2
        %v1093 = vadd.f32 %v1091, %v1092
        %v1094 = vrot.slane %v1093, 1
        %v1095 = vadd.f32 %v1093, %v1094
        %v1096 = vmul.f32 %v1086, 0.0625
        %v1097 = vmul.f32 %v1095, 0.0625
        %v1098 = vmul.f32 %v1096, %v1096
        %v1099 = vsub.f32 %v1097, %v1098
        %v1100 = vmax.f32 %v1099, 0.0
        %v1101 = vsub.f32 %v1078, %v1096
        %v1102 = vsub.f32 %v1079, %v1096
        %v1103 = vadd.f32 %v1100, 1e-05
        %v1104 = vrsqrt.pop %v1103
        %v1105 = vmul.f32 %v1104, %v1103
        %v1106 = vmul.f32 %v1105, %v1104
        %v1107 = vmul.f32 0.5, %v1106
        %v1108 = vsub.f32 1.5, %v1107
        %v1109 = vmul.f32 %v1104, %v1108
        %vm1110 = vweird.f32 %v1103
        %vm1111 = vweird.f32 %v1104
        %vm1112 = vmor %vm1110, %vm1111
        %v1113 = vsel %vm1112, %v1104, %v1109
        %v1114 = vmul.f32 %v1101, %v1113
        %v1115 = vmul.f32 %v1102, %v1113
        %v1116 = vadd.f32 %v1114, %v582
        %v1117 = vadd.f32 %v1115, %v584
        %v1118 = vmax.f32 %v1116, 0.0
        %v1119 = vmax.f32 %v1117, 0.0
        %s1120 = scalar_lea.vmem [#allocation4], 384
        %v1121 = vld [vmem:[%s1120] sm:$0xff]
        %v1122 = vld [vmem:[%s1120 + $0x8] sm:$0xf]
        %v1123 = vld [vmem:[%s1120 + $0xc] sm:$0xff]
        %v1124 = vld [vmem:[%s1120 + $0x14] sm:$0xf]
        %v1125 = vld [vmem:[%s1120 + $0x18] sm:$0xff]
        %v1126 = vld [vmem:[%s1120 + $0x20] sm:$0xf]
        %v1127 = vld [vmem:[%s1120 + $0x24] sm:$0xff]
        %v1128 = vld [vmem:[%s1120 + $0x2c] sm:$0xf]
        %v1129 = vld [vmem:[%s1120 + $0x30] sm:$0xff]
        %v1130 = vld [vmem:[%s1120 + $0x38] sm:$0xf]
        %v1131 = vld [vmem:[%s1120 + $0x3c] sm:$0xff]
        %v1132 = vld [vmem:[%s1120 + $0x44] sm:$0xf]
        %v1133 = vld [vmem:[%s1120 + $0x48] sm:$0xff]
        %v1134 = vld [vmem:[%s1120 + $0x50] sm:$0xf]
        %v1135 = vld [vmem:[%s1120 + $0x54] sm:$0xff]
        %v1136 = vld [vmem:[%s1120 + $0x5c] sm:$0xf]
        %v1137 = vld [vmem:[%s1120 + $0x60] sm:$0xff]
        %v1138 = vld [vmem:[%s1120 + $0x68] sm:$0xf]
        %v1139 = vld [vmem:[%s1120 + $0x6c] sm:$0xff]
        %v1140 = vld [vmem:[%s1120 + $0x74] sm:$0xf]
        %v1141 = vld [vmem:[%s1120 + $0x78] sm:$0xff]
        %v1142 = vld [vmem:[%s1120 + $0x80] sm:$0xf]
        %v1143 = vld [vmem:[%s1120 + $0x84] sm:$0xff]
        %v1144 = vld [vmem:[%s1120 + $0x8c] sm:$0xf]
        %v1145 = vld [vmem:[%s1120 + $0x90] sm:$0xff]
        %v1146 = vld [vmem:[%s1120 + $0x98] sm:$0xf]
        %v1147 = vld [vmem:[%s1120 + $0x9c] sm:$0xff]
        %v1148 = vld [vmem:[%s1120 + $0xa4] sm:$0xf]
        %v1149 = vld [vmem:[%s1120 + $0xa8] sm:$0xff]
        %v1150 = vld [vmem:[%s1120 + $0xb0] sm:$0xf]
        %v1151 = vld [vmem:[%s1120 + $0xb4] sm:$0xff]
        %v1152 = vld [vmem:[%s1120 + $0xbc] sm:$0xf]
        %v1153 = vpack.c.bf16 %v1119, %v1118
        %v1186 = vunpack.c.l.b16 %v1121
        %v1187 = vunpack.c.h.b16 %v1121
        %v1188 = vunpack.c.l.b16 %v1122
        %v1189 = vunpack.c.l.b16 %v1123
        %v1190 = vunpack.c.h.b16 %v1123
        %v1191 = vunpack.c.l.b16 %v1124
        %v1192 = vunpack.c.l.b16 %v1125
        %v1193 = vunpack.c.h.b16 %v1125
        %v1194 = vunpack.c.l.b16 %v1126
        %v1195 = vunpack.c.l.b16 %v1127
        %v1196 = vunpack.c.h.b16 %v1127
        %v1197 = vunpack.c.l.b16 %v1128
        %v1198 = vunpack.c.l.b16 %v1129
        %v1199 = vunpack.c.h.b16 %v1129
        %v1200 = vunpack.c.l.b16 %v1130
        %v1201 = vunpack.c.l.b16 %v1131
        %v1202 = vunpack.c.h.b16 %v1131
        %v1203 = vunpack.c.l.b16 %v1132
        %v1204 = vunpack.c.l.b16 %v1133
        %v1205 = vunpack.c.h.b16 %v1133
        %v1206 = vunpack.c.l.b16 %v1134
        %v1207 = vunpack.c.l.b16 %v1135
        %v1208 = vunpack.c.h.b16 %v1135
        %v1209 = vunpack.c.l.b16 %v1136
        %v1210 = vunpack.c.l.b16 %v1137
        %v1211 = vunpack.c.h.b16 %v1137
        %v1212 = vunpack.c.l.b16 %v1138
        %v1213 = vunpack.c.l.b16 %v1139
        %v1214 = vunpack.c.h.b16 %v1139
        %v1215 = vunpack.c.l.b16 %v1140
        %v1216 = vunpack.c.l.b16 %v1141
        %v1217 = vunpack.c.h.b16 %v1141
        %v1218 = vunpack.c.l.b16 %v1142
        %v1219 = vunpack.c.l.b16 %v1143
        %v1220 = vunpack.c.h.b16 %v1143
        %v1221 = vunpack.c.l.b16 %v1144
        %v1222 = vunpack.c.l.b16 %v1145
        %v1223 = vunpack.c.h.b16 %v1145
        %v1224 = vunpack.c.l.b16 %v1146
        %v1225 = vunpack.c.l.b16 %v1147
        %v1226 = vunpack.c.h.b16 %v1147
        %v1227 = vunpack.c.l.b16 %v1148
        %v1228 = vunpack.c.l.b16 %v1149
        %v1229 = vunpack.c.h.b16 %v1149
        %v1230 = vunpack.c.l.b16 %v1150
        %v1231 = vunpack.c.l.b16 %v1151
        %v1232 = vunpack.c.h.b16 %v1151
        %v1233 = vunpack.c.l.b16 %v1152
        %v1234 = vpack.c.b16 %v1189, %v1186
        %v1235 = vpack.c.b16 %v1190, %v1187
        %v1236 = vpack.c.b16 %v1191, %v1188
        %v1237 = vpack.c.b16 %v1195, %v1192
        %v1238 = vpack.c.b16 %v1196, %v1193
        %v1239 = vpack.c.b16 %v1197, %v1194
        %v1240 = vpack.c.b16 %v1201, %v1198
        %v1241 = vpack.c.b16 %v1202, %v1199
        %v1242 = vpack.c.b16 %v1203, %v1200
        %v1243 = vpack.c.b16 %v1207, %v1204
        %v1244 = vpack.c.b16 %v1208, %v1205
        %v1245 = vpack.c.b16 %v1209, %v1206
        %v1246 = vpack.c.b16 %v1213, %v1210
        %v1247 = vpack.c.b16 %v1214, %v1211
        %v1248 = vpack.c.b16 %v1215, %v1212
        %v1249 = vpack.c.b16 %v1219, %v1216
        %v1250 = vpack.c.b16 %v1220, %v1217
        %v1251 = vpack.c.b16 %v1221, %v1218
        %v1252 = vpack.c.b16 %v1225, %v1222
        %v1253 = vpack.c.b16 %v1226, %v1223
        %v1254 = vpack.c.b16 %v1227, %v1224
        %v1255 = vpack.c.b16 %v1231, %v1228
        %v1256 = vpack.c.b16 %v1232, %v1229
        %v1257 = vpack.c.b16 %v1233, %v1230
        %1282 = vmatpush.bf16.msra.mxu0 %v1255
        %1283 = vmatpush.bf16.msra.mxu0 %v1252
        %1284 = vmatpush.bf16.msra.mxu0 %v1249
        %1285 = vmatpush.bf16.msra.mxu0 %v1246
        %1286 = vmatpush.bf16.msra.mxu0 %v1243
        %1287 = vmatpush.bf16.msra.mxu0 %v1240
        %1288 = vmatpush.bf16.msra.mxu0 %v1237
        %1289 = vmatpush.bf16.msra.mxu0 %v1234
        %1290 = vmatmul.bf16.gmra.mxu0 %v1153
        %v1291 = vpop.f32.mrf.mxu0
        %v1292 = vadd.f32 0.0, %v1291
        %v1293 = vpop.f32.mrf.mxu0
        %v1294 = vadd.f32 0.0, %v1293
        %1295 = vdwg.mxu0
        %1296 = vmatpush.bf16.msra.mxu0 %v1256
        %1297 = vmatpush.bf16.msra.mxu0 %v1253
        %1298 = vmatpush.bf16.msra.mxu0 %v1250
        %1299 = vmatpush.bf16.msra.mxu0 %v1247
        %1300 = vmatpush.bf16.msra.mxu0 %v1244
        %1301 = vmatpush.bf16.msra.mxu0 %v1241
        %1302 = vmatpush.bf16.msra.mxu0 %v1238
        %1303 = vmatpush.bf16.msra.mxu0 %v1235
        %1304 = vmatmul.bf16.gmra.mxu0 %v1153
        %v1305 = vpop.f32.mrf.mxu0
        %v1306 = vadd.f32 0.0, %v1305
        %v1307 = vpop.f32.mrf.mxu0
        %v1308 = vadd.f32 0.0, %v1307
        %1309 = vdwg.mxu0
        %1310 = vmatpush.bf16.msra.mxu0 %v1257
        %1311 = vmatpush.bf16.msra.mxu0 %v1254
        %1312 = vmatpush.bf16.msra.mxu0 %v1251
        %1313 = vmatpush.bf16.msra.mxu0 %v1248
        %1314 = vmatpush.bf16.msra.mxu0 %v1245
        %1315 = vmatpush.bf16.msra.mxu0 %v1242
        %1316 = vmatpush.bf16.msra.mxu0 %v1239
        %1317 = vmatpush.bf16.msra.mxu0 %v1236
        %1318 = vmatmul.bf16.gmra.mxu0 %v1153
        %v1319 = vpop.f32.mrf.mxu0
        %v1320 = vadd.f32 0.0, %v1319
        %v1321 = vpop.f32.mrf.mxu0
        %v1322 = vadd.f32 0.0, %v1321
        %1323 = vdwg.mxu0
        %v1324 = vrot.slane %v1292, 7
        %v1325 = vrot.slane %v1294, 7
        %v1326 = vsel %vm798, %v1324, %v1325
        %v1327 = vsel %vm798, %v1325, %v1324
        %v1328 = vsel %vm803, 0.0, %v1327
        %v1329 = vsel %vm804, 0.0, %v1326
        %v1330 = vrot.slane %v1320, 1
        %v1331 = vrot.slane %v1322, 1
        %v1332 = vsel %vm809, %v1330, %v1331
        %v1333 = vsel %vm809, %v1331, %v1330
        %v1334 = vsel %vm814, 0.0, %v1332
        %v1335 = vsel %vm815, 0.0, %v1333
        %v1336 = vadd.f32 %v1306, %v1328
        %v1337 = vadd.f32 %v1308, %v1329
        %v1338 = vadd.f32 %v1336, %v1334
        %v1339 = vadd.f32 %v1337, %v1335
        %v1340 = vadd.f32 %v1338, %v1339
        %v1341 = vrot.slane %v1340, 4
        %v1342 = vadd.f32 %v1340, %v1341
        %v1343 = vrot.slane %v1342, 2
        %v1344 = vadd.f32 %v1342, %v1343
        %v1345 = vrot.slane %v1344, 1
        %v1346 = vadd.f32 %v1344, %v1345
        %v1347 = vmul.f32 %v1338, %v1338
        %v1348 = vmul.f32 %v1339, %v1339
        %v1349 = vadd.f32 %v1347, %v1348
        %v1350 = vrot.slane %v1349, 4
        %v1351 = vadd.f32 %v1349, %v1350
        %v1352 = vrot.slane %v1351, 2
        %v1353 = vadd.f32 %v1351, %v1352
        %v1354 = vrot.slane %v1353, 1
        %v1355 = vadd.f32 %v1353, %v1354
        %v1356 = vmul.f32 %v1346, 0.0625
        %v1357 = vmul.f32 %v1355, 0.0625
        %v1358 = vmul.f32 %v1356, %v1356
        %v1359 = vsub.f32 %v1357, %v1358
        %v1360 = vmax.f32 %v1359, 0.0
        %v1361 = vsub.f32 %v1338, %v1356
        %v1362 = vsub.f32 %v1339, %v1356
        %v1363 = vadd.f32 %v1360, 1e-05
        %v1364 = vrsqrt.pop %v1363
        %v1365 = vmul.f32 %v1364, %v1363
        %v1366 = vmul.f32 %v1365, %v1364
        %v1367 = vmul.f32 0.5, %v1366
        %v1368 = vsub.f32 1.5, %v1367
        %v1369 = vmul.f32 %v1364, %v1368
        %vm1370 = vweird.f32 %v1363
        %vm1371 = vweird.f32 %v1364
        %vm1372 = vmor %vm1370, %vm1371
        %v1373 = vsel %vm1372, %v1364, %v1369
        %v1374 = vmul.f32 %v1361, %v1373
        %v1375 = vmul.f32 %v1362, %v1373
        %v1376 = vmax.f32 %v1374, 0.0
        %v1377 = vmax.f32 %v1375, 0.0
        %s1378 = scalar_lea.vmem [#allocation4], 576
        %v1379 = vld [vmem:[%s1378] sm:$0xff]
        %v1380 = vld [vmem:[%s1378 + $0x8] sm:$0xf]
        %v1381 = vld [vmem:[%s1378 + $0xc] sm:$0xff]
        %v1382 = vld [vmem:[%s1378 + $0x14] sm:$0xf]
        %v1383 = vld [vmem:[%s1378 + $0x18] sm:$0xff]
        %v1384 = vld [vmem:[%s1378 + $0x20] sm:$0xf]
        %v1385 = vld [vmem:[%s1378 + $0x24] sm:$0xff]
        %v1386 = vld [vmem:[%s1378 + $0x2c] sm:$0xf]
        %v1387 = vld [vmem:[%s1378 + $0x30] sm:$0xff]
        %v1388 = vld [vmem:[%s1378 + $0x38] sm:$0xf]
        %v1389 = vld [vmem:[%s1378 + $0x3c] sm:$0xff]
        %v1390 = vld [vmem:[%s1378 + $0x44] sm:$0xf]
        %v1391 = vld [vmem:[%s1378 + $0x48] sm:$0xff]
        %v1392 = vld [vmem:[%s1378 + $0x50] sm:$0xf]
        %v1393 = vld [vmem:[%s1378 + $0x54] sm:$0xff]
        %v1394 = vld [vmem:[%s1378 + $0x5c] sm:$0xf]
        %v1395 = vld [vmem:[%s1378 + $0x60] sm:$0xff]
        %v1396 = vld [vmem:[%s1378 + $0x68] sm:$0xf]
        %v1397 = vld [vmem:[%s1378 + $0x6c] sm:$0xff]
        %v1398 = vld [vmem:[%s1378 + $0x74] sm:$0xf]
        %v1399 = vld [vmem:[%s1378 + $0x78] sm:$0xff]
        %v1400 = vld [vmem:[%s1378 + $0x80] sm:$0xf]
        %v1401 = vld [vmem:[%s1378 + $0x84] sm:$0xff]
        %v1402 = vld [vmem:[%s1378 + $0x8c] sm:$0xf]
        %v1403 = vld [vmem:[%s1378 + $0x90] sm:$0xff]
        %v1404 = vld [vmem:[%s1378 + $0x98] sm:$0xf]
        %v1405 = vld [vmem:[%s1378 + $0x9c] sm:$0xff]
        %v1406 = vld [vmem:[%s1378 + $0xa4] sm:$0xf]
        %v1407 = vld [vmem:[%s1378 + $0xa8] sm:$0xff]
        %v1408 = vld [vmem:[%s1378 + $0xb0] sm:$0xf]
        %v1409 = vld [vmem:[%s1378 + $0xb4] sm:$0xff]
        %v1410 = vld [vmem:[%s1378 + $0xbc] sm:$0xf]
        %v1411 = vpack.c.bf16 %v1377, %v1376
        %v1444 = vunpack.c.l.b16 %v1379
        %v1445 = vunpack.c.h.b16 %v1379
        %v1446 = vunpack.c.l.b16 %v1380
        %v1447 = vunpack.c.l.b16 %v1381
        %v1448 = vunpack.c.h.b16 %v1381
        %v1449 = vunpack.c.l.b16 %v1382
        %v1450 = vunpack.c.l.b16 %v1383
        %v1451 = vunpack.c.h.b16 %v1383
        %v1452 = vunpack.c.l.b16 %v1384
        %v1453 = vunpack.c.l.b16 %v1385
        %v1454 = vunpack.c.h.b16 %v1385
        %v1455 = vunpack.c.l.b16 %v1386
        %v1456 = vunpack.c.l.b16 %v1387
        %v1457 = vunpack.c.h.b16 %v1387
        %v1458 = vunpack.c.l.b16 %v1388
        %v1459 = vunpack.c.l.b16 %v1389
        %v1460 = vunpack.c.h.b16 %v1389
        %v1461 = vunpack.c.l.b16 %v1390
        %v1462 = vunpack.c.l.b16 %v1391
        %v1463 = vunpack.c.h.b16 %v1391
        %v1464 = vunpack.c.l.b16 %v1392
        %v1465 = vunpack.c.l.b16 %v1393
        %v1466 = vunpack.c.h.b16 %v1393
        %v1467 = vunpack.c.l.b16 %v1394
        %v1468 = vunpack.c.l.b16 %v1395
        %v1469 = vunpack.c.h.b16 %v1395
        %v1470 = vunpack.c.l.b16 %v1396
        %v1471 = vunpack.c.l.b16 %v1397
        %v1472 = vunpack.c.h.b16 %v1397
        %v1473 = vunpack.c.l.b16 %v1398
        %v1474 = vunpack.c.l.b16 %v1399
        %v1475 = vunpack.c.h.b16 %v1399
        %v1476 = vunpack.c.l.b16 %v1400
        %v1477 = vunpack.c.l.b16 %v1401
        %v1478 = vunpack.c.h.b16 %v1401
        %v1479 = vunpack.c.l.b16 %v1402
        %v1480 = vunpack.c.l.b16 %v1403
        %v1481 = vunpack.c.h.b16 %v1403
        %v1482 = vunpack.c.l.b16 %v1404
        %v1483 = vunpack.c.l.b16 %v1405
        %v1484 = vunpack.c.h.b16 %v1405
        %v1485 = vunpack.c.l.b16 %v1406
        %v1486 = vunpack.c.l.b16 %v1407
        %v1487 = vunpack.c.h.b16 %v1407
        %v1488 = vunpack.c.l.b16 %v1408
        %v1489 = vunpack.c.l.b16 %v1409
        %v1490 = vunpack.c.h.b16 %v1409
        %v1491 = vunpack.c.l.b16 %v1410
        %v1492 = vpack.c.b16 %v1447, %v1444
        %v1493 = vpack.c.b16 %v1448, %v1445
        %v1494 = vpack.c.b16 %v1449, %v1446
        %v1495 = vpack.c.b16 %v1453, %v1450
        %v1496 = vpack.c.b16 %v1454, %v1451
        %v1497 = vpack.c.b16 %v1455, %v1452
        %v1498 = vpack.c.b16 %v1459, %v1456
        %v1499 = vpack.c.b16 %v1460, %v1457
        %v1500 = vpack.c.b16 %v1461, %v1458
        %v1501 = vpack.c.b16 %v1465, %v1462
        %v1502 = vpack.c.b16 %v1466, %v1463
        %v1503 = vpack.c.b16 %v1467, %v1464
        %v1504 = vpack.c.b16 %v1471, %v1468
        %v1505 = vpack.c.b16 %v1472, %v1469
        %v1506 = vpack.c.b16 %v1473, %v1470
        %v1507 = vpack.c.b16 %v1477, %v1474
        %v1508 = vpack.c.b16 %v1478, %v1475
        %v1509 = vpack.c.b16 %v1479, %v1476
        %v1510 = vpack.c.b16 %v1483, %v1480
        %v1511 = vpack.c.b16 %v1484, %v1481
        %v1512 = vpack.c.b16 %v1485, %v1482
        %v1513 = vpack.c.b16 %v1489, %v1486
        %v1514 = vpack.c.b16 %v1490, %v1487
        %v1515 = vpack.c.b16 %v1491, %v1488
        %1540 = vmatpush.bf16.msra.mxu0 %v1513
        %1541 = vmatpush.bf16.msra.mxu0 %v1510
        %1542 = vmatpush.bf16.msra.mxu0 %v1507
        %1543 = vmatpush.bf16.msra.mxu0 %v1504
        %1544 = vmatpush.bf16.msra.mxu0 %v1501
        %1545 = vmatpush.bf16.msra.mxu0 %v1498
        %1546 = vmatpush.bf16.msra.mxu0 %v1495
        %1547 = vmatpush.bf16.msra.mxu0 %v1492
        %1548 = vmatmul.bf16.gmra.mxu0 %v1411
        %v1549 = vpop.f32.mrf.mxu0
        %v1550 = vadd.f32 0.0, %v1549
        %v1551 = vpop.f32.mrf.mxu0
        %v1552 = vadd.f32 0.0, %v1551
        %1553 = vdwg.mxu0
        %1554 = vmatpush.bf16.msra.mxu0 %v1514
        %1555 = vmatpush.bf16.msra.mxu0 %v1511
        %1556 = vmatpush.bf16.msra.mxu0 %v1508
        %1557 = vmatpush.bf16.msra.mxu0 %v1505
        %1558 = vmatpush.bf16.msra.mxu0 %v1502
        %1559 = vmatpush.bf16.msra.mxu0 %v1499
        %1560 = vmatpush.bf16.msra.mxu0 %v1496
        %1561 = vmatpush.bf16.msra.mxu0 %v1493
        %1562 = vmatmul.bf16.gmra.mxu0 %v1411
        %v1563 = vpop.f32.mrf.mxu0
        %v1564 = vadd.f32 0.0, %v1563
        %v1565 = vpop.f32.mrf.mxu0
        %v1566 = vadd.f32 0.0, %v1565
        %1567 = vdwg.mxu0
        %1568 = vmatpush.bf16.msra.mxu0 %v1515
        %1569 = vmatpush.bf16.msra.mxu0 %v1512
        %1570 = vmatpush.bf16.msra.mxu0 %v1509
        %1571 = vmatpush.bf16.msra.mxu0 %v1506
        %1572 = vmatpush.bf16.msra.mxu0 %v1503
        %1573 = vmatpush.bf16.msra.mxu0 %v1500
        %1574 = vmatpush.bf16.msra.mxu0 %v1497
        %1575 = vmatpush.bf16.msra.mxu0 %v1494
        %1576 = vmatmul.bf16.gmra.mxu0 %v1411
        %v1577 = vpop.f32.mrf.mxu0
        %v1578 = vadd.f32 0.0, %v1577
        %v1579 = vpop.f32.mrf.mxu0
        %v1580 = vadd.f32 0.0, %v1579
        %1581 = vdwg.mxu0
        %v1582 = vrot.slane %v1550, 7
        %v1583 = vrot.slane %v1552, 7
        %v1584 = vsel %vm798, %v1582, %v1583
        %v1585 = vsel %vm798, %v1583, %v1582
        %v1586 = vsel %vm803, 0.0, %v1585
        %v1587 = vsel %vm804, 0.0, %v1584
        %v1588 = vrot.slane %v1578, 1
        %v1589 = vrot.slane %v1580, 1
        %v1590 = vsel %vm809, %v1588, %v1589
        %v1591 = vsel %vm809, %v1589, %v1588
        %v1592 = vsel %vm814, 0.0, %v1590
        %v1593 = vsel %vm815, 0.0, %v1591
        %v1594 = vadd.f32 %v1564, %v1586
        %v1595 = vadd.f32 %v1566, %v1587
        %v1596 = vadd.f32 %v1594, %v1592
        %v1597 = vadd.f32 %v1595, %v1593
        %v1598 = vadd.f32 %v1596, %v1597
        %v1599 = vrot.slane %v1598, 4
        %v1600 = vadd.f32 %v1598, %v1599
        %v1601 = vrot.slane %v1600, 2
        %v1602 = vadd.f32 %v1600, %v1601
        %v1603 = vrot.slane %v1602, 1
        %v1604 = vadd.f32 %v1602, %v1603
        %v1605 = vmul.f32 %v1596, %v1596
        %v1606 = vmul.f32 %v1597, %v1597
        %v1607 = vadd.f32 %v1605, %v1606
        %v1608 = vrot.slane %v1607, 4
        %v1609 = vadd.f32 %v1607, %v1608
        %v1610 = vrot.slane %v1609, 2
        %v1611 = vadd.f32 %v1609, %v1610
        %v1612 = vrot.slane %v1611, 1
        %v1613 = vadd.f32 %v1611, %v1612
        %v1614 = vmul.f32 %v1604, 0.0625
        %v1615 = vmul.f32 %v1613, 0.0625
        %v1616 = vmul.f32 %v1614, %v1614
        %v1617 = vsub.f32 %v1615, %v1616
        %v1618 = vmax.f32 %v1617, 0.0
        %v1619 = vsub.f32 %v1596, %v1614
        %v1620 = vsub.f32 %v1597, %v1614
        %v1621 = vadd.f32 %v1618, 1e-05
        %v1622 = vrsqrt.pop %v1621
        %v1623 = vmul.f32 %v1622, %v1621
        %v1624 = vmul.f32 %v1623, %v1622
        %v1625 = vmul.f32 0.5, %v1624
        %v1626 = vsub.f32 1.5, %v1625
        %v1627 = vmul.f32 %v1622, %v1626
        %vm1628 = vweird.f32 %v1621
        %vm1629 = vweird.f32 %v1622
        %vm1630 = vmor %vm1628, %vm1629
        %v1631 = vsel %vm1630, %v1622, %v1627
        %v1632 = vmul.f32 %v1619, %v1631
        %v1633 = vmul.f32 %v1620, %v1631
        %v1634 = vadd.f32 %v1632, %v1118
        %v1635 = vadd.f32 %v1633, %v1119
        %v1636 = vmax.f32 %v1634, 0.0
        %v1637 = vmax.f32 %v1635, 0.0
        %s1638 = scalar_lea.vmem [#allocation4], 768
        %v1639 = vld [vmem:[%s1638] sm:$0xff]
        %v1640 = vld [vmem:[%s1638 + $0x8] sm:$0xf]
        %v1641 = vld [vmem:[%s1638 + $0xc] sm:$0xff]
        %v1642 = vld [vmem:[%s1638 + $0x14] sm:$0xf]
        %v1643 = vld [vmem:[%s1638 + $0x18] sm:$0xff]
        %v1644 = vld [vmem:[%s1638 + $0x20] sm:$0xf]
        %v1645 = vld [vmem:[%s1638 + $0x24] sm:$0xff]
        %v1646 = vld [vmem:[%s1638 + $0x2c] sm:$0xf]
        %v1647 = vld [vmem:[%s1638 + $0x30] sm:$0xff]
        %v1648 = vld [vmem:[%s1638 + $0x38] sm:$0xf]
        %v1649 = vld [vmem:[%s1638 + $0x3c] sm:$0xff]
        %v1650 = vld [vmem:[%s1638 + $0x44] sm:$0xf]
        %v1651 = vld [vmem:[%s1638 + $0x48] sm:$0xff]
        %v1652 = vld [vmem:[%s1638 + $0x50] sm:$0xf]
        %v1653 = vld [vmem:[%s1638 + $0x54] sm:$0xff]
        %v1654 = vld [vmem:[%s1638 + $0x5c] sm:$0xf]
        %v1655 = vld [vmem:[%s1638 + $0x60] sm:$0xff]
        %v1656 = vld [vmem:[%s1638 + $0x68] sm:$0xf]
        %v1657 = vld [vmem:[%s1638 + $0x6c] sm:$0xff]
        %v1658 = vld [vmem:[%s1638 + $0x74] sm:$0xf]
        %v1659 = vld [vmem:[%s1638 + $0x78] sm:$0xff]
        %v1660 = vld [vmem:[%s1638 + $0x80] sm:$0xf]
        %v1661 = vld [vmem:[%s1638 + $0x84] sm:$0xff]
        %v1662 = vld [vmem:[%s1638 + $0x8c] sm:$0xf]
        %v1663 = vld [vmem:[%s1638 + $0x90] sm:$0xff]
        %v1664 = vld [vmem:[%s1638 + $0x98] sm:$0xf]
        %v1665 = vld [vmem:[%s1638 + $0x9c] sm:$0xff]
        %v1666 = vld [vmem:[%s1638 + $0xa4] sm:$0xf]
        %v1667 = vld [vmem:[%s1638 + $0xa8] sm:$0xff]
        %v1668 = vld [vmem:[%s1638 + $0xb0] sm:$0xf]
        %v1669 = vld [vmem:[%s1638 + $0xb4] sm:$0xff]
        %v1670 = vld [vmem:[%s1638 + $0xbc] sm:$0xf]
        %v1671 = vpack.c.bf16 %v1637, %v1636
        %v1704 = vunpack.c.l.b16 %v1639
        %v1705 = vunpack.c.h.b16 %v1639
        %v1706 = vunpack.c.l.b16 %v1640
        %v1707 = vunpack.c.l.b16 %v1641
        %v1708 = vunpack.c.h.b16 %v1641
        %v1709 = vunpack.c.l.b16 %v1642
        %v1710 = vunpack.c.l.b16 %v1643
        %v1711 = vunpack.c.h.b16 %v1643
        %v1712 = vunpack.c.l.b16 %v1644
        %v1713 = vunpack.c.l.b16 %v1645
        %v1714 = vunpack.c.h.b16 %v1645
        %v1715 = vunpack.c.l.b16 %v1646
        %v1716 = vunpack.c.l.b16 %v1647
        %v1717 = vunpack.c.h.b16 %v1647
        %v1718 = vunpack.c.l.b16 %v1648
        %v1719 = vunpack.c.l.b16 %v1649
        %v1720 = vunpack.c.h.b16 %v1649
        %v1721 = vunpack.c.l.b16 %v1650
        %v1722 = vunpack.c.l.b16 %v1651
        %v1723 = vunpack.c.h.b16 %v1651
        %v1724 = vunpack.c.l.b16 %v1652
        %v1725 = vunpack.c.l.b16 %v1653
        %v1726 = vunpack.c.h.b16 %v1653
        %v1727 = vunpack.c.l.b16 %v1654
        %v1728 = vunpack.c.l.b16 %v1655
        %v1729 = vunpack.c.h.b16 %v1655
        %v1730 = vunpack.c.l.b16 %v1656
        %v1731 = vunpack.c.l.b16 %v1657
        %v1732 = vunpack.c.h.b16 %v1657
        %v1733 = vunpack.c.l.b16 %v1658
        %v1734 = vunpack.c.l.b16 %v1659
        %v1735 = vunpack.c.h.b16 %v1659
        %v1736 = vunpack.c.l.b16 %v1660
        %v1737 = vunpack.c.l.b16 %v1661
        %v1738 = vunpack.c.h.b16 %v1661
        %v1739 = vunpack.c.l.b16 %v1662
        %v1740 = vunpack.c.l.b16 %v1663
        %v1741 = vunpack.c.h.b16 %v1663
        %v1742 = vunpack.c.l.b16 %v1664
        %v1743 = vunpack.c.l.b16 %v1665
        %v1744 = vunpack.c.h.b16 %v1665
        %v1745 = vunpack.c.l.b16 %v1666
        %v1746 = vunpack.c.l.b16 %v1667
        %v1747 = vunpack.c.h.b16 %v1667
        %v1748 = vunpack.c.l.b16 %v1668
        %v1749 = vunpack.c.l.b16 %v1669
        %v1750 = vunpack.c.h.b16 %v1669
        %v1751 = vunpack.c.l.b16 %v1670
        %v1752 = vpack.c.b16 %v1707, %v1704
        %v1753 = vpack.c.b16 %v1708, %v1705
        %v1754 = vpack.c.b16 %v1709, %v1706
        %v1755 = vpack.c.b16 %v1713, %v1710
        %v1756 = vpack.c.b16 %v1714, %v1711
        %v1757 = vpack.c.b16 %v1715, %v1712
        %v1758 = vpack.c.b16 %v1719, %v1716
        %v1759 = vpack.c.b16 %v1720, %v1717
        %v1760 = vpack.c.b16 %v1721, %v1718
        %v1761 = vpack.c.b16 %v1725, %v1722
        %v1762 = vpack.c.b16 %v1726, %v1723
        %v1763 = vpack.c.b16 %v1727, %v1724
        %v1764 = vpack.c.b16 %v1731, %v1728
        %v1765 = vpack.c.b16 %v1732, %v1729
        %v1766 = vpack.c.b16 %v1733, %v1730
        %v1767 = vpack.c.b16 %v1737, %v1734
        %v1768 = vpack.c.b16 %v1738, %v1735
        %v1769 = vpack.c.b16 %v1739, %v1736
        %v1770 = vpack.c.b16 %v1743, %v1740
        %v1771 = vpack.c.b16 %v1744, %v1741
        %v1772 = vpack.c.b16 %v1745, %v1742
        %v1773 = vpack.c.b16 %v1749, %v1746
        %v1774 = vpack.c.b16 %v1750, %v1747
        %v1775 = vpack.c.b16 %v1751, %v1748
        %1800 = vmatpush.bf16.msra.mxu0 %v1773
        %1801 = vmatpush.bf16.msra.mxu0 %v1770
        %1802 = vmatpush.bf16.msra.mxu0 %v1767
        %1803 = vmatpush.bf16.msra.mxu0 %v1764
        %1804 = vmatpush.bf16.msra.mxu0 %v1761
        %1805 = vmatpush.bf16.msra.mxu0 %v1758
        %1806 = vmatpush.bf16.msra.mxu0 %v1755
        %1807 = vmatpush.bf16.msra.mxu0 %v1752
        %1808 = vmatmul.bf16.gmra.mxu0 %v1671
        %v1809 = vpop.f32.mrf.mxu0
        %v1810 = vadd.f32 0.0, %v1809
        %v1811 = vpop.f32.mrf.mxu0
        %v1812 = vadd.f32 0.0, %v1811
        %1813 = vdwg.mxu0
        %1814 = vmatpush.bf16.msra.mxu0 %v1774
        %1815 = vmatpush.bf16.msra.mxu0 %v1771
        %1816 = vmatpush.bf16.msra.mxu0 %v1768
        %1817 = vmatpush.bf16.msra.mxu0 %v1765
        %1818 = vmatpush.bf16.msra.mxu0 %v1762
        %1819 = vmatpush.bf16.msra.mxu0 %v1759
        %1820 = vmatpush.bf16.msra.mxu0 %v1756
        %1821 = vmatpush.bf16.msra.mxu0 %v1753
        %1822 = vmatmul.bf16.gmra.mxu0 %v1671
        %v1823 = vpop.f32.mrf.mxu0
        %v1824 = vadd.f32 0.0, %v1823
        %v1825 = vpop.f32.mrf.mxu0
        %v1826 = vadd.f32 0.0, %v1825
        %1827 = vdwg.mxu0
        %1828 = vmatpush.bf16.msra.mxu0 %v1775
        %1829 = vmatpush.bf16.msra.mxu0 %v1772
        %1830 = vmatpush.bf16.msra.mxu0 %v1769
        %1831 = vmatpush.bf16.msra.mxu0 %v1766
        %1832 = vmatpush.bf16.msra.mxu0 %v1763
        %1833 = vmatpush.bf16.msra.mxu0 %v1760
        %1834 = vmatpush.bf16.msra.mxu0 %v1757
        %1835 = vmatpush.bf16.msra.mxu0 %v1754
        %1836 = vmatmul.bf16.gmra.mxu0 %v1671
        %v1837 = vpop.f32.mrf.mxu0
        %v1838 = vadd.f32 0.0, %v1837
        %v1839 = vpop.f32.mrf.mxu0
        %v1840 = vadd.f32 0.0, %v1839
        %1841 = vdwg.mxu0
        %v1842 = vrot.slane %v1810, 7
        %v1843 = vrot.slane %v1812, 7
        %v1844 = vsel %vm798, %v1842, %v1843
        %v1845 = vsel %vm798, %v1843, %v1842
        %v1846 = vsel %vm803, 0.0, %v1845
        %v1847 = vsel %vm804, 0.0, %v1844
        %v1848 = vrot.slane %v1838, 1
        %v1849 = vrot.slane %v1840, 1
        %v1850 = vsel %vm809, %v1848, %v1849
        %v1851 = vsel %vm809, %v1849, %v1848
        %v1852 = vsel %vm814, 0.0, %v1850
        %v1853 = vsel %vm815, 0.0, %v1851
        %v1854 = vadd.f32 %v1824, %v1846
        %v1855 = vadd.f32 %v1826, %v1847
        %v1856 = vadd.f32 %v1854, %v1852
        %v1857 = vadd.f32 %v1855, %v1853
        %v1858 = vadd.f32 %v1856, %v1857
        %v1859 = vrot.slane %v1858, 4
        %v1860 = vadd.f32 %v1858, %v1859
        %v1861 = vrot.slane %v1860, 2
        %v1862 = vadd.f32 %v1860, %v1861
        %v1863 = vrot.slane %v1862, 1
        %v1864 = vadd.f32 %v1862, %v1863
        %v1865 = vmul.f32 %v1856, %v1856
        %v1866 = vmul.f32 %v1857, %v1857
        %v1867 = vadd.f32 %v1865, %v1866
        %v1868 = vrot.slane %v1867, 4
        %v1869 = vadd.f32 %v1867, %v1868
        %v1870 = vrot.slane %v1869, 2
        %v1871 = vadd.f32 %v1869, %v1870
        %v1872 = vrot.slane %v1871, 1
        %v1873 = vadd.f32 %v1871, %v1872
        %v1874 = vmul.f32 %v1864, 0.0625
        %v1875 = vmul.f32 %v1873, 0.0625
        %v1876 = vmul.f32 %v1874, %v1874
        %v1877 = vsub.f32 %v1875, %v1876
        %v1878 = vmax.f32 %v1877, 0.0
        %v1879 = vsub.f32 %v1856, %v1874
        %v1880 = vsub.f32 %v1857, %v1874
        %v1881 = vadd.f32 %v1878, 1e-05
        %v1882 = vrsqrt.pop %v1881
        %v1883 = vmul.f32 %v1882, %v1881
        %v1884 = vmul.f32 %v1883, %v1882
        %v1885 = vmul.f32 0.5, %v1884
        %v1886 = vsub.f32 1.5, %v1885
        %v1887 = vmul.f32 %v1882, %v1886
        %vm1888 = vweird.f32 %v1881
        %vm1889 = vweird.f32 %v1882
        %vm1890 = vmor %vm1888, %vm1889
        %v1891 = vsel %vm1890, %v1882, %v1887
        %v1892 = vmul.f32 %v1879, %v1891
        %v1893 = vmul.f32 %v1880, %v1891
        %v1894 = vmax.f32 %v1892, 0.0
        %v1895 = vmax.f32 %v1893, 0.0
        %s1896 = scalar_lea.vmem [#allocation4], 960
        %v1897 = vld [vmem:[%s1896] sm:$0xff]
        %v1898 = vld [vmem:[%s1896 + $0x8] sm:$0xf]
        %v1899 = vld [vmem:[%s1896 + $0xc] sm:$0xff]
        %v1900 = vld [vmem:[%s1896 + $0x14] sm:$0xf]
        %v1901 = vld [vmem:[%s1896 + $0x18] sm:$0xff]
        %v1902 = vld [vmem:[%s1896 + $0x20] sm:$0xf]
        %v1903 = vld [vmem:[%s1896 + $0x24] sm:$0xff]
        %v1904 = vld [vmem:[%s1896 + $0x2c] sm:$0xf]
        %v1905 = vld [vmem:[%s1896 + $0x30] sm:$0xff]
        %v1906 = vld [vmem:[%s1896 + $0x38] sm:$0xf]
        %v1907 = vld [vmem:[%s1896 + $0x3c] sm:$0xff]
        %v1908 = vld [vmem:[%s1896 + $0x44] sm:$0xf]
        %v1909 = vld [vmem:[%s1896 + $0x48] sm:$0xff]
        %v1910 = vld [vmem:[%s1896 + $0x50] sm:$0xf]
        %v1911 = vld [vmem:[%s1896 + $0x54] sm:$0xff]
        %v1912 = vld [vmem:[%s1896 + $0x5c] sm:$0xf]
        %v1913 = vld [vmem:[%s1896 + $0x60] sm:$0xff]
        %v1914 = vld [vmem:[%s1896 + $0x68] sm:$0xf]
        %v1915 = vld [vmem:[%s1896 + $0x6c] sm:$0xff]
        %v1916 = vld [vmem:[%s1896 + $0x74] sm:$0xf]
        %v1917 = vld [vmem:[%s1896 + $0x78] sm:$0xff]
        %v1918 = vld [vmem:[%s1896 + $0x80] sm:$0xf]
        %v1919 = vld [vmem:[%s1896 + $0x84] sm:$0xff]
        %v1920 = vld [vmem:[%s1896 + $0x8c] sm:$0xf]
        %v1921 = vld [vmem:[%s1896 + $0x90] sm:$0xff]
        %v1922 = vld [vmem:[%s1896 + $0x98] sm:$0xf]
        %v1923 = vld [vmem:[%s1896 + $0x9c] sm:$0xff]
        %v1924 = vld [vmem:[%s1896 + $0xa4] sm:$0xf]
        %v1925 = vld [vmem:[%s1896 + $0xa8] sm:$0xff]
        %v1926 = vld [vmem:[%s1896 + $0xb0] sm:$0xf]
        %v1927 = vld [vmem:[%s1896 + $0xb4] sm:$0xff]
        %v1928 = vld [vmem:[%s1896 + $0xbc] sm:$0xf]
        %v1929 = vpack.c.bf16 %v1895, %v1894
        %v1962 = vunpack.c.l.b16 %v1897
        %v1963 = vunpack.c.h.b16 %v1897
        %v1964 = vunpack.c.l.b16 %v1898
        %v1965 = vunpack.c.l.b16 %v1899
        %v1966 = vunpack.c.h.b16 %v1899
        %v1967 = vunpack.c.l.b16 %v1900
        %v1968 = vunpack.c.l.b16 %v1901
        %v1969 = vunpack.c.h.b16 %v1901
        %v1970 = vunpack.c.l.b16 %v1902
        %v1971 = vunpack.c.l.b16 %v1903
        %v1972 = vunpack.c.h.b16 %v1903
        %v1973 = vunpack.c.l.b16 %v1904
        %v1974 = vunpack.c.l.b16 %v1905
        %v1975 = vunpack.c.h.b16 %v1905
        %v1976 = vunpack.c.l.b16 %v1906
        %v1977 = vunpack.c.l.b16 %v1907
        %v1978 = vunpack.c.h.b16 %v1907
        %v1979 = vunpack.c.l.b16 %v1908
        %v1980 = vunpack.c.l.b16 %v1909
        %v1981 = vunpack.c.h.b16 %v1909
        %v1982 = vunpack.c.l.b16 %v1910
        %v1983 = vunpack.c.l.b16 %v1911
        %v1984 = vunpack.c.h.b16 %v1911
        %v1985 = vunpack.c.l.b16 %v1912
        %v1986 = vunpack.c.l.b16 %v1913
        %v1987 = vunpack.c.h.b16 %v1913
        %v1988 = vunpack.c.l.b16 %v1914
        %v1989 = vunpack.c.l.b16 %v1915
        %v1990 = vunpack.c.h.b16 %v1915
        %v1991 = vunpack.c.l.b16 %v1916
        %v1992 = vunpack.c.l.b16 %v1917
        %v1993 = vunpack.c.h.b16 %v1917
        %v1994 = vunpack.c.l.b16 %v1918
        %v1995 = vunpack.c.l.b16 %v1919
        %v1996 = vunpack.c.h.b16 %v1919
        %v1997 = vunpack.c.l.b16 %v1920
        %v1998 = vunpack.c.l.b16 %v1921
        %v1999 = vunpack.c.h.b16 %v1921
        %v2000 = vunpack.c.l.b16 %v1922
        %v2001 = vunpack.c.l.b16 %v1923
        %v2002 = vunpack.c.h.b16 %v1923
        %v2003 = vunpack.c.l.b16 %v1924
        %v2004 = vunpack.c.l.b16 %v1925
        %v2005 = vunpack.c.h.b16 %v1925
        %v2006 = vunpack.c.l.b16 %v1926
        %v2007 = vunpack.c.l.b16 %v1927
        %v2008 = vunpack.c.h.b16 %v1927
        %v2009 = vunpack.c.l.b16 %v1928
        %v2010 = vpack.c.b16 %v1965, %v1962
        %v2011 = vpack.c.b16 %v1966, %v1963
        %v2012 = vpack.c.b16 %v1967, %v1964
        %v2013 = vpack.c.b16 %v1971, %v1968
        %v2014 = vpack.c.b16 %v1972, %v1969
        %v2015 = vpack.c.b16 %v1973, %v1970
        %v2016 = vpack.c.b16 %v1977, %v1974
        %v2017 = vpack.c.b16 %v1978, %v1975
        %v2018 = vpack.c.b16 %v1979, %v1976
        %v2019 = vpack.c.b16 %v1983, %v1980
        %v2020 = vpack.c.b16 %v1984, %v1981
        %v2021 = vpack.c.b16 %v1985, %v1982
        %v2022 = vpack.c.b16 %v1989, %v1986
        %v2023 = vpack.c.b16 %v1990, %v1987
        %v2024 = vpack.c.b16 %v1991, %v1988
        %v2025 = vpack.c.b16 %v1995, %v1992
        %v2026 = vpack.c.b16 %v1996, %v1993
        %v2027 = vpack.c.b16 %v1997, %v1994
        %v2028 = vpack.c.b16 %v2001, %v1998
        %v2029 = vpack.c.b16 %v2002, %v1999
        %v2030 = vpack.c.b16 %v2003, %v2000
        %v2031 = vpack.c.b16 %v2007, %v2004
        %v2032 = vpack.c.b16 %v2008, %v2005
        %v2033 = vpack.c.b16 %v2009, %v2006
        %2058 = vmatpush.bf16.msra.mxu0 %v2031
        %2059 = vmatpush.bf16.msra.mxu0 %v2028
        %2060 = vmatpush.bf16.msra.mxu0 %v2025
        %2061 = vmatpush.bf16.msra.mxu0 %v2022
        %2062 = vmatpush.bf16.msra.mxu0 %v2019
        %2063 = vmatpush.bf16.msra.mxu0 %v2016
        %2064 = vmatpush.bf16.msra.mxu0 %v2013
        %2065 = vmatpush.bf16.msra.mxu0 %v2010
        %2066 = vmatmul.bf16.gmra.mxu0 %v1929
        %v2067 = vpop.f32.mrf.mxu0
        %v2068 = vadd.f32 0.0, %v2067
        %v2069 = vpop.f32.mrf.mxu0
        %v2070 = vadd.f32 0.0, %v2069
        %2071 = vdwg.mxu0
        %2072 = vmatpush.bf16.msra.mxu0 %v2032
        %2073 = vmatpush.bf16.msra.mxu0 %v2029
        %2074 = vmatpush.bf16.msra.mxu0 %v2026
        %2075 = vmatpush.bf16.msra.mxu0 %v2023
        %2076 = vmatpush.bf16.msra.mxu0 %v2020
        %2077 = vmatpush.bf16.msra.mxu0 %v2017
        %2078 = vmatpush.bf16.msra.mxu0 %v2014
        %2079 = vmatpush.bf16.msra.mxu0 %v2011
        %2080 = vmatmul.bf16.gmra.mxu0 %v1929
        %v2081 = vpop.f32.mrf.mxu0
        %v2082 = vadd.f32 0.0, %v2081
        %v2083 = vpop.f32.mrf.mxu0
        %v2084 = vadd.f32 0.0, %v2083
        %2085 = vdwg.mxu0
        %2086 = vmatpush.bf16.msra.mxu0 %v2033
        %2087 = vmatpush.bf16.msra.mxu0 %v2030
        %2088 = vmatpush.bf16.msra.mxu0 %v2027
        %2089 = vmatpush.bf16.msra.mxu0 %v2024
        %2090 = vmatpush.bf16.msra.mxu0 %v2021
        %2091 = vmatpush.bf16.msra.mxu0 %v2018
        %2092 = vmatpush.bf16.msra.mxu0 %v2015
        %2093 = vmatpush.bf16.msra.mxu0 %v2012
        %2094 = vmatmul.bf16.gmra.mxu0 %v1929
        %v2095 = vpop.f32.mrf.mxu0
        %v2096 = vadd.f32 0.0, %v2095
        %v2097 = vpop.f32.mrf.mxu0
        %v2098 = vadd.f32 0.0, %v2097
        %2099 = vdwg.mxu0
        %v2100 = vrot.slane %v2068, 7
        %v2101 = vrot.slane %v2070, 7
        %v2102 = vsel %vm798, %v2100, %v2101
        %v2103 = vsel %vm798, %v2101, %v2100
        %v2104 = vsel %vm803, 0.0, %v2103
        %v2105 = vsel %vm804, 0.0, %v2102
        %v2106 = vrot.slane %v2096, 1
        %v2107 = vrot.slane %v2098, 1
        %v2108 = vsel %vm809, %v2106, %v2107
        %v2109 = vsel %vm809, %v2107, %v2106
        %v2110 = vsel %vm814, 0.0, %v2108
        %v2111 = vsel %vm815, 0.0, %v2109
        %v2112 = vadd.f32 %v2082, %v2104
        %v2113 = vadd.f32 %v2084, %v2105
        %v2114 = vadd.f32 %v2112, %v2110
        %v2115 = vadd.f32 %v2113, %v2111
        %v2116 = vadd.f32 %v2114, %v2115
        %v2117 = vrot.slane %v2116, 4
        %v2118 = vadd.f32 %v2116, %v2117
        %v2119 = vrot.slane %v2118, 2
        %v2120 = vadd.f32 %v2118, %v2119
        %v2121 = vrot.slane %v2120, 1
        %v2122 = vadd.f32 %v2120, %v2121
        %v2123 = vmul.f32 %v2114, %v2114
        %v2124 = vmul.f32 %v2115, %v2115
        %v2125 = vadd.f32 %v2123, %v2124
        %v2126 = vrot.slane %v2125, 4
        %v2127 = vadd.f32 %v2125, %v2126
        %v2128 = vrot.slane %v2127, 2
        %v2129 = vadd.f32 %v2127, %v2128
        %v2130 = vrot.slane %v2129, 1
        %v2131 = vadd.f32 %v2129, %v2130
        %v2132 = vmul.f32 %v2122, 0.0625
        %v2133 = vmul.f32 %v2131, 0.0625
        %v2134 = vmul.f32 %v2132, %v2132
        %v2135 = vsub.f32 %v2133, %v2134
        %v2136 = vmax.f32 %v2135, 0.0
        %v2137 = vsub.f32 %v2114, %v2132
        %v2138 = vsub.f32 %v2115, %v2132
        %v2139 = vadd.f32 %v2136, 1e-05
        %v2140 = vrsqrt.pop %v2139
        %v2141 = vmul.f32 %v2140, %v2139
        %v2142 = vmul.f32 %v2141, %v2140
        %v2143 = vmul.f32 0.5, %v2142
        %v2144 = vsub.f32 1.5, %v2143
        %v2145 = vmul.f32 %v2140, %v2144
        %vm2146 = vweird.f32 %v2139
        %vm2147 = vweird.f32 %v2140
        %vm2148 = vmor %vm2146, %vm2147
        %v2149 = vsel %vm2148, %v2140, %v2145
        %v2150 = vmul.f32 %v2137, %v2149
        %v2151 = vmul.f32 %v2138, %v2149
        %v2152 = vadd.f32 %v2150, %v1636
        %v2153 = vadd.f32 %v2151, %v1637
        %v2154 = vmax.f32 %v2152, 0.0
        %v2155 = vmax.f32 %v2153, 0.0
        %s2156 = scalar_lea.vmem [#allocation4], 1152
        %v2157 = vld [vmem:[%s2156] sm:$0xff]
        %v2158 = vld [vmem:[%s2156 + $0x8] sm:$0xf]
        %v2159 = vld [vmem:[%s2156 + $0xc] sm:$0xff]
        %v2160 = vld [vmem:[%s2156 + $0x14] sm:$0xf]
        %v2161 = vld [vmem:[%s2156 + $0x18] sm:$0xff]
        %v2162 = vld [vmem:[%s2156 + $0x20] sm:$0xf]
        %v2163 = vld [vmem:[%s2156 + $0x24] sm:$0xff]
        %v2164 = vld [vmem:[%s2156 + $0x2c] sm:$0xf]
        %v2165 = vld [vmem:[%s2156 + $0x30] sm:$0xff]
        %v2166 = vld [vmem:[%s2156 + $0x38] sm:$0xf]
        %v2167 = vld [vmem:[%s2156 + $0x3c] sm:$0xff]
        %v2168 = vld [vmem:[%s2156 + $0x44] sm:$0xf]
        %v2169 = vld [vmem:[%s2156 + $0x48] sm:$0xff]
        %v2170 = vld [vmem:[%s2156 + $0x50] sm:$0xf]
        %v2171 = vld [vmem:[%s2156 + $0x54] sm:$0xff]
        %v2172 = vld [vmem:[%s2156 + $0x5c] sm:$0xf]
        %v2173 = vld [vmem:[%s2156 + $0x60] sm:$0xff]
        %v2174 = vld [vmem:[%s2156 + $0x68] sm:$0xf]
        %v2175 = vld [vmem:[%s2156 + $0x6c] sm:$0xff]
        %v2176 = vld [vmem:[%s2156 + $0x74] sm:$0xf]
        %v2177 = vld [vmem:[%s2156 + $0x78] sm:$0xff]
        %v2178 = vld [vmem:[%s2156 + $0x80] sm:$0xf]
        %v2179 = vld [vmem:[%s2156 + $0x84] sm:$0xff]
        %v2180 = vld [vmem:[%s2156 + $0x8c] sm:$0xf]
        %v2181 = vld [vmem:[%s2156 + $0x90] sm:$0xff]
        %v2182 = vld [vmem:[%s2156 + $0x98] sm:$0xf]
        %v2183 = vld [vmem:[%s2156 + $0x9c] sm:$0xff]
        %v2184 = vld [vmem:[%s2156 + $0xa4] sm:$0xf]
        %v2185 = vld [vmem:[%s2156 + $0xa8] sm:$0xff]
        %v2186 = vld [vmem:[%s2156 + $0xb0] sm:$0xf]
        %v2187 = vld [vmem:[%s2156 + $0xb4] sm:$0xff]
        %v2188 = vld [vmem:[%s2156 + $0xbc] sm:$0xf]
        %v2189 = vpack.c.bf16 %v2155, %v2154
        %v2222 = vunpack.c.l.b16 %v2157
        %v2223 = vunpack.c.h.b16 %v2157
        %v2224 = vunpack.c.l.b16 %v2158
        %v2225 = vunpack.c.l.b16 %v2159
        %v2226 = vunpack.c.h.b16 %v2159
        %v2227 = vunpack.c.l.b16 %v2160
        %v2228 = vunpack.c.l.b16 %v2161
        %v2229 = vunpack.c.h.b16 %v2161
        %v2230 = vunpack.c.l.b16 %v2162
        %v2231 = vunpack.c.l.b16 %v2163
        %v2232 = vunpack.c.h.b16 %v2163
        %v2233 = vunpack.c.l.b16 %v2164
        %v2234 = vunpack.c.l.b16 %v2165
        %v2235 = vunpack.c.h.b16 %v2165
        %v2236 = vunpack.c.l.b16 %v2166
        %v2237 = vunpack.c.l.b16 %v2167
        %v2238 = vunpack.c.h.b16 %v2167
        %v2239 = vunpack.c.l.b16 %v2168
        %v2240 = vunpack.c.l.b16 %v2169
        %v2241 = vunpack.c.h.b16 %v2169
        %v2242 = vunpack.c.l.b16 %v2170
        %v2243 = vunpack.c.l.b16 %v2171
        %v2244 = vunpack.c.h.b16 %v2171
        %v2245 = vunpack.c.l.b16 %v2172
        %v2246 = vunpack.c.l.b16 %v2173
        %v2247 = vunpack.c.h.b16 %v2173
        %v2248 = vunpack.c.l.b16 %v2174
        %v2249 = vunpack.c.l.b16 %v2175
        %v2250 = vunpack.c.h.b16 %v2175
        %v2251 = vunpack.c.l.b16 %v2176
        %v2252 = vunpack.c.l.b16 %v2177
        %v2253 = vunpack.c.h.b16 %v2177
        %v2254 = vunpack.c.l.b16 %v2178
        %v2255 = vunpack.c.l.b16 %v2179
        %v2256 = vunpack.c.h.b16 %v2179
        %v2257 = vunpack.c.l.b16 %v2180
        %v2258 = vunpack.c.l.b16 %v2181
        %v2259 = vunpack.c.h.b16 %v2181
        %v2260 = vunpack.c.l.b16 %v2182
        %v2261 = vunpack.c.l.b16 %v2183
        %v2262 = vunpack.c.h.b16 %v2183
        %v2263 = vunpack.c.l.b16 %v2184
        %v2264 = vunpack.c.l.b16 %v2185
        %v2265 = vunpack.c.h.b16 %v2185
        %v2266 = vunpack.c.l.b16 %v2186
        %v2267 = vunpack.c.l.b16 %v2187
        %v2268 = vunpack.c.h.b16 %v2187
        %v2269 = vunpack.c.l.b16 %v2188
        %v2270 = vpack.c.b16 %v2225, %v2222
        %v2271 = vpack.c.b16 %v2226, %v2223
        %v2272 = vpack.c.b16 %v2227, %v2224
        %v2273 = vpack.c.b16 %v2231, %v2228
        %v2274 = vpack.c.b16 %v2232, %v2229
        %v2275 = vpack.c.b16 %v2233, %v2230
        %v2276 = vpack.c.b16 %v2237, %v2234
        %v2277 = vpack.c.b16 %v2238, %v2235
        %v2278 = vpack.c.b16 %v2239, %v2236
        %v2279 = vpack.c.b16 %v2243, %v2240
        %v2280 = vpack.c.b16 %v2244, %v2241
        %v2281 = vpack.c.b16 %v2245, %v2242
        %v2282 = vpack.c.b16 %v2249, %v2246
        %v2283 = vpack.c.b16 %v2250, %v2247
        %v2284 = vpack.c.b16 %v2251, %v2248
        %v2285 = vpack.c.b16 %v2255, %v2252
        %v2286 = vpack.c.b16 %v2256, %v2253
        %v2287 = vpack.c.b16 %v2257, %v2254
        %v2288 = vpack.c.b16 %v2261, %v2258
        %v2289 = vpack.c.b16 %v2262, %v2259
        %v2290 = vpack.c.b16 %v2263, %v2260
        %v2291 = vpack.c.b16 %v2267, %v2264
        %v2292 = vpack.c.b16 %v2268, %v2265
        %v2293 = vpack.c.b16 %v2269, %v2266
        %2318 = vmatpush.bf16.msra.mxu0 %v2291
        %2319 = vmatpush.bf16.msra.mxu0 %v2288
        %2320 = vmatpush.bf16.msra.mxu0 %v2285
        %2321 = vmatpush.bf16.msra.mxu0 %v2282
        %2322 = vmatpush.bf16.msra.mxu0 %v2279
        %2323 = vmatpush.bf16.msra.mxu0 %v2276
        %2324 = vmatpush.bf16.msra.mxu0 %v2273
        %2325 = vmatpush.bf16.msra.mxu0 %v2270
        %2326 = vmatmul.bf16.gmra.mxu0 %v2189
        %v2327 = vpop.f32.mrf.mxu0
        %v2328 = vadd.f32 0.0, %v2327
        %v2329 = vpop.f32.mrf.mxu0
        %v2330 = vadd.f32 0.0, %v2329
        %2331 = vdwg.mxu0
        %2332 = vmatpush.bf16.msra.mxu0 %v2292
        %2333 = vmatpush.bf16.msra.mxu0 %v2289
        %2334 = vmatpush.bf16.msra.mxu0 %v2286
        %2335 = vmatpush.bf16.msra.mxu0 %v2283
        %2336 = vmatpush.bf16.msra.mxu0 %v2280
        %2337 = vmatpush.bf16.msra.mxu0 %v2277
        %2338 = vmatpush.bf16.msra.mxu0 %v2274
        %2339 = vmatpush.bf16.msra.mxu0 %v2271
        %2340 = vmatmul.bf16.gmra.mxu0 %v2189
        %v2341 = vpop.f32.mrf.mxu0
        %v2342 = vadd.f32 0.0, %v2341
        %v2343 = vpop.f32.mrf.mxu0
        %v2344 = vadd.f32 0.0, %v2343
        %2345 = vdwg.mxu0
        %2346 = vmatpush.bf16.msra.mxu0 %v2293
        %2347 = vmatpush.bf16.msra.mxu0 %v2290
        %2348 = vmatpush.bf16.msra.mxu0 %v2287
        %2349 = vmatpush.bf16.msra.mxu0 %v2284
        %2350 = vmatpush.bf16.msra.mxu0 %v2281
        %2351 = vmatpush.bf16.msra.mxu0 %v2278
        %2352 = vmatpush.bf16.msra.mxu0 %v2275
        %2353 = vmatpush.bf16.msra.mxu0 %v2272
        %2354 = vmatmul.bf16.gmra.mxu0 %v2189
        %v2355 = vpop.f32.mrf.mxu0
        %v2356 = vadd.f32 0.0, %v2355
        %v2357 = vpop.f32.mrf.mxu0
        %v2358 = vadd.f32 0.0, %v2357
        %2359 = vdwg.mxu0
        %v2360 = vrot.slane %v2328, 7
        %v2361 = vrot.slane %v2330, 7
        %v2362 = vsel %vm798, %v2360, %v2361
        %v2363 = vsel %vm798, %v2361, %v2360
        %v2364 = vsel %vm803, 0.0, %v2363
        %v2365 = vsel %vm804, 0.0, %v2362
        %v2366 = vrot.slane %v2356, 1
        %v2367 = vrot.slane %v2358, 1
        %v2368 = vsel %vm809, %v2366, %v2367
        %v2369 = vsel %vm809, %v2367, %v2366
        %v2370 = vsel %vm814, 0.0, %v2368
        %v2371 = vsel %vm815, 0.0, %v2369
        %v2372 = vadd.f32 %v2342, %v2364
        %v2373 = vadd.f32 %v2344, %v2365
        %v2374 = vadd.f32 %v2372, %v2370
        %v2375 = vadd.f32 %v2373, %v2371
        %v2376 = vadd.f32 %v2374, %v2375
        %v2377 = vrot.slane %v2376, 4
        %v2378 = vadd.f32 %v2376, %v2377
        %v2379 = vrot.slane %v2378, 2
        %v2380 = vadd.f32 %v2378, %v2379
        %v2381 = vrot.slane %v2380, 1
        %v2382 = vadd.f32 %v2380, %v2381
        %v2383 = vmul.f32 %v2374, %v2374
        %v2384 = vmul.f32 %v2375, %v2375
        %v2385 = vadd.f32 %v2383, %v2384
        %v2386 = vrot.slane %v2385, 4
        %v2387 = vadd.f32 %v2385, %v2386
        %v2388 = vrot.slane %v2387, 2
        %v2389 = vadd.f32 %v2387, %v2388
        %v2390 = vrot.slane %v2389, 1
        %v2391 = vadd.f32 %v2389, %v2390
        %v2392 = vmul.f32 %v2382, 0.0625
        %v2393 = vmul.f32 %v2391, 0.0625
        %v2394 = vmul.f32 %v2392, %v2392
        %v2395 = vsub.f32 %v2393, %v2394
        %v2396 = vmax.f32 %v2395, 0.0
        %v2397 = vsub.f32 %v2374, %v2392
        %v2398 = vsub.f32 %v2375, %v2392
        %v2399 = vadd.f32 %v2396, 1e-05
        %v2400 = vrsqrt.pop %v2399
        %v2401 = vmul.f32 %v2400, %v2399
        %v2402 = vmul.f32 %v2401, %v2400
        %v2403 = vmul.f32 0.5, %v2402
        %v2404 = vsub.f32 1.5, %v2403
        %v2405 = vmul.f32 %v2400, %v2404
        %vm2406 = vweird.f32 %v2399
        %vm2407 = vweird.f32 %v2400
        %vm2408 = vmor %vm2406, %vm2407
        %v2409 = vsel %vm2408, %v2400, %v2405
        %v2410 = vmul.f32 %v2397, %v2409
        %v2411 = vmul.f32 %v2398, %v2409
        %v2412 = vmax.f32 %v2410, 0.0
        %v2413 = vmax.f32 %v2411, 0.0
        %s2414 = scalar_lea.vmem [#allocation4], 1344
        %v2415 = vld [vmem:[%s2414] sm:$0xff]
        %v2416 = vld [vmem:[%s2414 + $0x8] sm:$0xf]
        %v2417 = vld [vmem:[%s2414 + $0xc] sm:$0xff]
        %v2418 = vld [vmem:[%s2414 + $0x14] sm:$0xf]
        %v2419 = vld [vmem:[%s2414 + $0x18] sm:$0xff]
        %v2420 = vld [vmem:[%s2414 + $0x20] sm:$0xf]
        %v2421 = vld [vmem:[%s2414 + $0x24] sm:$0xff]
        %v2422 = vld [vmem:[%s2414 + $0x2c] sm:$0xf]
        %v2423 = vld [vmem:[%s2414 + $0x30] sm:$0xff]
        %v2424 = vld [vmem:[%s2414 + $0x38] sm:$0xf]
        %v2425 = vld [vmem:[%s2414 + $0x3c] sm:$0xff]
        %v2426 = vld [vmem:[%s2414 + $0x44] sm:$0xf]
        %v2427 = vld [vmem:[%s2414 + $0x48] sm:$0xff]
        %v2428 = vld [vmem:[%s2414 + $0x50] sm:$0xf]
        %v2429 = vld [vmem:[%s2414 + $0x54] sm:$0xff]
        %v2430 = vld [vmem:[%s2414 + $0x5c] sm:$0xf]
        %v2431 = vld [vmem:[%s2414 + $0x60] sm:$0xff]
        %v2432 = vld [vmem:[%s2414 + $0x68] sm:$0xf]
        %v2433 = vld [vmem:[%s2414 + $0x6c] sm:$0xff]
        %v2434 = vld [vmem:[%s2414 + $0x74] sm:$0xf]
        %v2435 = vld [vmem:[%s2414 + $0x78] sm:$0xff]
        %v2436 = vld [vmem:[%s2414 + $0x80] sm:$0xf]
        %v2437 = vld [vmem:[%s2414 + $0x84] sm:$0xff]
        %v2438 = vld [vmem:[%s2414 + $0x8c] sm:$0xf]
        %v2439 = vld [vmem:[%s2414 + $0x90] sm:$0xff]
        %v2440 = vld [vmem:[%s2414 + $0x98] sm:$0xf]
        %v2441 = vld [vmem:[%s2414 + $0x9c] sm:$0xff]
        %v2442 = vld [vmem:[%s2414 + $0xa4] sm:$0xf]
        %v2443 = vld [vmem:[%s2414 + $0xa8] sm:$0xff]
        %v2444 = vld [vmem:[%s2414 + $0xb0] sm:$0xf]
        %v2445 = vld [vmem:[%s2414 + $0xb4] sm:$0xff]
        %v2446 = vld [vmem:[%s2414 + $0xbc] sm:$0xf]
        %v2447 = vpack.c.bf16 %v2413, %v2412
        %v2480 = vunpack.c.l.b16 %v2415
        %v2481 = vunpack.c.h.b16 %v2415
        %v2482 = vunpack.c.l.b16 %v2416
        %v2483 = vunpack.c.l.b16 %v2417
        %v2484 = vunpack.c.h.b16 %v2417
        %v2485 = vunpack.c.l.b16 %v2418
        %v2486 = vunpack.c.l.b16 %v2419
        %v2487 = vunpack.c.h.b16 %v2419
        %v2488 = vunpack.c.l.b16 %v2420
        %v2489 = vunpack.c.l.b16 %v2421
        %v2490 = vunpack.c.h.b16 %v2421
        %v2491 = vunpack.c.l.b16 %v2422
        %v2492 = vunpack.c.l.b16 %v2423
        %v2493 = vunpack.c.h.b16 %v2423
        %v2494 = vunpack.c.l.b16 %v2424
        %v2495 = vunpack.c.l.b16 %v2425
        %v2496 = vunpack.c.h.b16 %v2425
        %v2497 = vunpack.c.l.b16 %v2426
        %v2498 = vunpack.c.l.b16 %v2427
        %v2499 = vunpack.c.h.b16 %v2427
        %v2500 = vunpack.c.l.b16 %v2428
        %v2501 = vunpack.c.l.b16 %v2429
        %v2502 = vunpack.c.h.b16 %v2429
        %v2503 = vunpack.c.l.b16 %v2430
        %v2504 = vunpack.c.l.b16 %v2431
        %v2505 = vunpack.c.h.b16 %v2431
        %v2506 = vunpack.c.l.b16 %v2432
        %v2507 = vunpack.c.l.b16 %v2433
        %v2508 = vunpack.c.h.b16 %v2433
        %v2509 = vunpack.c.l.b16 %v2434
        %v2510 = vunpack.c.l.b16 %v2435
        %v2511 = vunpack.c.h.b16 %v2435
        %v2512 = vunpack.c.l.b16 %v2436
        %v2513 = vunpack.c.l.b16 %v2437
        %v2514 = vunpack.c.h.b16 %v2437
        %v2515 = vunpack.c.l.b16 %v2438
        %v2516 = vunpack.c.l.b16 %v2439
        %v2517 = vunpack.c.h.b16 %v2439
        %v2518 = vunpack.c.l.b16 %v2440
        %v2519 = vunpack.c.l.b16 %v2441
        %v2520 = vunpack.c.h.b16 %v2441
        %v2521 = vunpack.c.l.b16 %v2442
        %v2522 = vunpack.c.l.b16 %v2443
        %v2523 = vunpack.c.h.b16 %v2443
        %v2524 = vunpack.c.l.b16 %v2444
        %v2525 = vunpack.c.l.b16 %v2445
        %v2526 = vunpack.c.h.b16 %v2445
        %v2527 = vunpack.c.l.b16 %v2446
        %v2528 = vpack.c.b16 %v2483, %v2480
        %v2529 = vpack.c.b16 %v2484, %v2481
        %v2530 = vpack.c.b16 %v2485, %v2482
        %v2531 = vpack.c.b16 %v2489, %v2486
        %v2532 = vpack.c.b16 %v2490, %v2487
        %v2533 = vpack.c.b16 %v2491, %v2488
        %v2534 = vpack.c.b16 %v2495, %v2492
        %v2535 = vpack.c.b16 %v2496, %v2493
        %v2536 = vpack.c.b16 %v2497, %v2494
        %v2537 = vpack.c.b16 %v2501, %v2498
        %v2538 = vpack.c.b16 %v2502, %v2499
        %v2539 = vpack.c.b16 %v2503, %v2500
        %v2540 = vpack.c.b16 %v2507, %v2504
        %v2541 = vpack.c.b16 %v2508, %v2505
        %v2542 = vpack.c.b16 %v2509, %v2506
        %v2543 = vpack.c.b16 %v2513, %v2510
        %v2544 = vpack.c.b16 %v2514, %v2511
        %v2545 = vpack.c.b16 %v2515, %v2512
        %v2546 = vpack.c.b16 %v2519, %v2516
        %v2547 = vpack.c.b16 %v2520, %v2517
        %v2548 = vpack.c.b16 %v2521, %v2518
        %v2549 = vpack.c.b16 %v2525, %v2522
        %v2550 = vpack.c.b16 %v2526, %v2523
        %v2551 = vpack.c.b16 %v2527, %v2524
        %2576 = vmatpush.bf16.msra.mxu0 %v2549
        %2577 = vmatpush.bf16.msra.mxu0 %v2546
        %2578 = vmatpush.bf16.msra.mxu0 %v2543
        %2579 = vmatpush.bf16.msra.mxu0 %v2540
        %2580 = vmatpush.bf16.msra.mxu0 %v2537
        %2581 = vmatpush.bf16.msra.mxu0 %v2534
        %2582 = vmatpush.bf16.msra.mxu0 %v2531
        %2583 = vmatpush.bf16.msra.mxu0 %v2528
        %2584 = vmatmul.bf16.gmra.mxu0 %v2447
        %v2585 = vpop.f32.mrf.mxu0
        %v2586 = vadd.f32 0.0, %v2585
        %v2587 = vpop.f32.mrf.mxu0
        %v2588 = vadd.f32 0.0, %v2587
        %2589 = vdwg.mxu0
        %2590 = vmatpush.bf16.msra.mxu0 %v2550
        %2591 = vmatpush.bf16.msra.mxu0 %v2547
        %2592 = vmatpush.bf16.msra.mxu0 %v2544
        %2593 = vmatpush.bf16.msra.mxu0 %v2541
        %2594 = vmatpush.bf16.msra.mxu0 %v2538
        %2595 = vmatpush.bf16.msra.mxu0 %v2535
        %2596 = vmatpush.bf16.msra.mxu0 %v2532
        %2597 = vmatpush.bf16.msra.mxu0 %v2529
        %2598 = vmatmul.bf16.gmra.mxu0 %v2447
        %v2599 = vpop.f32.mrf.mxu0
        %v2600 = vadd.f32 0.0, %v2599
        %v2601 = vpop.f32.mrf.mxu0
        %v2602 = vadd.f32 0.0, %v2601
        %2603 = vdwg.mxu0
        %2604 = vmatpush.bf16.msra.mxu0 %v2551
        %2605 = vmatpush.bf16.msra.mxu0 %v2548
        %2606 = vmatpush.bf16.msra.mxu0 %v2545
        %2607 = vmatpush.bf16.msra.mxu0 %v2542
        %2608 = vmatpush.bf16.msra.mxu0 %v2539
        %2609 = vmatpush.bf16.msra.mxu0 %v2536
        %2610 = vmatpush.bf16.msra.mxu0 %v2533
        %2611 = vmatpush.bf16.msra.mxu0 %v2530
        %2612 = vmatmul.bf16.gmra.mxu0 %v2447
        %v2613 = vpop.f32.mrf.mxu0
        %v2614 = vadd.f32 0.0, %v2613
        %v2615 = vpop.f32.mrf.mxu0
        %v2616 = vadd.f32 0.0, %v2615
        %2617 = vdwg.mxu0
        %v2618 = vrot.slane %v2586, 7
        %v2619 = vrot.slane %v2588, 7
        %v2620 = vsel %vm798, %v2618, %v2619
        %v2621 = vsel %vm798, %v2619, %v2618
        %v2622 = vsel %vm803, 0.0, %v2621
        %v2623 = vsel %vm804, 0.0, %v2620
        %v2624 = vrot.slane %v2614, 1
        %v2625 = vrot.slane %v2616, 1
        %v2626 = vsel %vm809, %v2624, %v2625
        %v2627 = vsel %vm809, %v2625, %v2624
        %v2628 = vsel %vm814, 0.0, %v2626
        %v2629 = vsel %vm815, 0.0, %v2627
        %v2630 = vadd.f32 %v2600, %v2622
        %v2631 = vadd.f32 %v2602, %v2623
        %v2632 = vadd.f32 %v2630, %v2628
        %v2633 = vadd.f32 %v2631, %v2629
        %v2634 = vadd.f32 %v2632, %v2633
        %v2635 = vrot.slane %v2634, 4
        %v2636 = vadd.f32 %v2634, %v2635
        %v2637 = vrot.slane %v2636, 2
        %v2638 = vadd.f32 %v2636, %v2637
        %v2639 = vrot.slane %v2638, 1
        %v2640 = vadd.f32 %v2638, %v2639
        %v2641 = vmul.f32 %v2632, %v2632
        %v2642 = vmul.f32 %v2633, %v2633
        %v2643 = vadd.f32 %v2641, %v2642
        %v2644 = vrot.slane %v2643, 4
        %v2645 = vadd.f32 %v2643, %v2644
        %v2646 = vrot.slane %v2645, 2
        %v2647 = vadd.f32 %v2645, %v2646
        %v2648 = vrot.slane %v2647, 1
        %v2649 = vadd.f32 %v2647, %v2648
        %v2650 = vmul.f32 %v2640, 0.0625
        %v2651 = vmul.f32 %v2649, 0.0625
        %v2652 = vmul.f32 %v2650, %v2650
        %v2653 = vsub.f32 %v2651, %v2652
        %v2654 = vmax.f32 %v2653, 0.0
        %v2655 = vsub.f32 %v2632, %v2650
        %v2656 = vsub.f32 %v2633, %v2650
        %v2657 = vadd.f32 %v2654, 1e-05
        %v2658 = vrsqrt.pop %v2657
        %v2659 = vmul.f32 %v2658, %v2657
        %v2660 = vmul.f32 %v2659, %v2658
        %v2661 = vmul.f32 0.5, %v2660
        %v2662 = vsub.f32 1.5, %v2661
        %v2663 = vmul.f32 %v2658, %v2662
        %vm2664 = vweird.f32 %v2657
        %vm2665 = vweird.f32 %v2658
        %vm2666 = vmor %vm2664, %vm2665
        %v2667 = vsel %vm2666, %v2658, %v2663
        %v2668 = vmul.f32 %v2655, %v2667
        %v2669 = vmul.f32 %v2656, %v2667
        %v2670 = vadd.f32 %v2668, %v2154
        %v2671 = vadd.f32 %v2669, %v2155
        %v2672 = vmax.f32 %v2670, 0.0
        %v2673 = vmax.f32 %v2671, 0.0
        %v2674 = vmax.f32 %v2672, 0.0
        %v2675 = vmax.f32 %v2673, 0.0
        %v2676 = vpack.c.bf16 %v2675, %v2674
        %v2677 = vld [vmem:[%s5] sm:$0xf]
        %v2678 = vld [vmem:[%s5 + $0x4] sm:$0xf]
        %v2679 = vld [vmem:[%s5 + $0x8] sm:$0xf]
        %v2680 = vld [vmem:[%s5 + $0xc] sm:$0xf]
        %v2681 = vld [vmem:[%s5 + $0x10] sm:$0xf]
        %v2682 = vld [vmem:[%s5 + $0x14] sm:$0xf]
        %v2683 = vld [vmem:[%s5 + $0x18] sm:$0xf]
        %v2684 = vld [vmem:[%s5 + $0x1c] sm:$0xf]
        %v2685 = vld [vmem:[%s5 + $0x20] sm:$0xf]
        %v2686 = vld [vmem:[%s5 + $0x24] sm:$0xf]
        %v2687 = vld [vmem:[%s5 + $0x28] sm:$0xf]
        %v2688 = vld [vmem:[%s5 + $0x2c] sm:$0xf]
        %v2689 = vld [vmem:[%s5 + $0x30] sm:$0xf]
        %v2690 = vld [vmem:[%s5 + $0x34] sm:$0xf]
        %v2691 = vld [vmem:[%s5 + $0x38] sm:$0xf]
        %v2692 = vld [vmem:[%s5 + $0x3c] sm:$0xf]
        %v2693 = vld [vmem:[%s6] sm:$0x1]
        %v2695 = vperm.slane %v2693, 0
        %v2713 = vunpack.c.l.b16 %v2677
        %v2714 = vunpack.c.l.b16 %v2678
        %v2715 = vunpack.c.l.b16 %v2679
        %v2716 = vunpack.c.l.b16 %v2680
        %v2717 = vunpack.c.l.b16 %v2681
        %v2718 = vunpack.c.l.b16 %v2682
        %v2719 = vunpack.c.l.b16 %v2683
        %v2720 = vunpack.c.l.b16 %v2684
        %v2721 = vunpack.c.l.b16 %v2685
        %v2722 = vunpack.c.l.b16 %v2686
        %v2723 = vunpack.c.l.b16 %v2687
        %v2724 = vunpack.c.l.b16 %v2688
        %v2725 = vunpack.c.l.b16 %v2689
        %v2726 = vunpack.c.l.b16 %v2690
        %v2727 = vunpack.c.l.b16 %v2691
        %v2728 = vunpack.c.l.b16 %v2692
        %v2729 = vpack.c.b16 %v2714, %v2713
        %v2730 = vpack.c.b16 %v2716, %v2715
        %v2731 = vpack.c.b16 %v2718, %v2717
        %v2732 = vpack.c.b16 %v2720, %v2719
        %v2733 = vpack.c.b16 %v2722, %v2721
        %v2734 = vpack.c.b16 %v2724, %v2723
        %v2735 = vpack.c.b16 %v2726, %v2725
        %v2736 = vpack.c.b16 %v2728, %v2727
        %2745 = vmatpush.bf16.msra.mxu0 %v2736
        %2746 = vmatpush.bf16.msra.mxu0 %v2735
        %2747 = vmatpush.bf16.msra.mxu0 %v2734
        %2748 = vmatpush.bf16.msra.mxu0 %v2733
        %2749 = vmatpush.bf16.msra.mxu0 %v2732
        %2750 = vmatpush.bf16.msra.mxu0 %v2731
        %2751 = vmatpush.bf16.msra.mxu0 %v2730
        %2752 = vmatpush.bf16.msra.mxu0 %v2729
        %2753 = vmatmul.bf16.gmra.mxu0 %v2676
        %v2754 = vpop.f32.mrf.mxu0
        %v2755 = vadd.f32 %v2695, %v2754
        %v2756 = vpop.f32.mrf.mxu0
        %v2757 = vadd.f32 %v2695, %v2756
        %2758 = vdwg.mxu0
        %v2759 = vmul.f32 %v2755, %v2755
        %v2760 = vmul.f32 %v2757, %v2757
        %v2761 = vld [vmem:[#allocation6] sm:$0xff]
        %v2762 = vld [vmem:[#allocation6 + $0x8] sm:$0x3f]
        %vm2763 = vcmask 113664
        %v2765 = vsel %vm2763, %v2759, 0
        %v2768 = vsel %vm2763, %v2760, 0
        %vm2770 = vcmask 1045504
        %v2772 = vsel %vm2770, %v2762, 0
        %2774 = vmatpush.msra.mxu0 0.0
        %2775 = vmatpush.msra.mxu0 0.0
        %2776 = vmatpush.msra.mxu0 0.0
        %2777 = vmatpush.msra.mxu0 0.0
        %2778 = vmatpush.msra.mxu0 0.0
        %2779 = vmatpush.msra.mxu0 0.0
        %2780 = vmatpush.msra.mxu0 0.0
        %2781 = vmatpush.msra.mxu0 0.0
        %2782 = vmatpush.msra.mxu0 0.0
        %2783 = vmatpush.msra.mxu0 0.0
        %2784 = vmatpush.msra.mxu0 0.0
        %2785 = vmatpush.msra.mxu0 0.0
        %2786 = vmatpush.msra.mxu0 0.0
        %2787 = vmatpush.msra.mxu0 0.0
        %2788 = vmatpush.msra.mxu0 %v2772
        %2789 = vmatpush.msra.mxu0 %v2761
        %2790 = vmatmul.f32.gmra.mxu0 %v2765
        %v2791 = vpop.f32.mrf.mxu0
        %v2792 = vadd.f32 0.0, %v2791
        %2793 = vmatmul.f32.gmra.mxu0 %v2768
        %v2794 = vpop.f32.mrf.mxu0
        %v2795 = vadd.f32 0.0, %v2794
        %2796 = vdwg.mxu0
        %v2797 = vrsqrt.pop %v2792
        %v2798 = vmul.f32 %v2797, %v2792
        %v2799 = vmul.f32 %v2798, %v2797
        %v2800 = vmul.f32 0.5, %v2799
        %v2801 = vsub.f32 1.5, %v2800
        %v2802 = vmul.f32 %v2797, %v2801
        %v2803 = vmul.f32 %v2792, %v2802
        %vm2804 = vcmp.eq.f32.partialorder %v2792, inf
        %v2805 = vsel %vm2804, %v2792, %v2803
        %vm2806 = vcmp.eq.f32.partialorder %v2792, 0.0
        %v2807 = vand.u32 %v2792, 2147483648
        %v2808 = vsel %vm2806, %v2807, %v2805
        %v2809 = vrsqrt.pop %v2795
        %v2810 = vmul.f32 %v2809, %v2795
        %v2811 = vmul.f32 %v2810, %v2809
        %v2812 = vmul.f32 0.5, %v2811
        %v2813 = vsub.f32 1.5, %v2812
        %v2814 = vmul.f32 %v2809, %v2813
        %v2815 = vmul.f32 %v2795, %v2814
        %vm2816 = vcmp.eq.f32.partialorder %v2795, inf
        %v2817 = vsel %vm2816, %v2795, %v2815
        %vm2818 = vcmp.eq.f32.partialorder %v2795, 0.0
        %v2819 = vand.u32 %v2795, 2147483648
        %v2820 = vsel %vm2818, %v2819, %v2817
        %v2821 = vmax.f32 %v2808, 1e-12
        %v2822 = vmax.f32 %v2820, 1e-12
        %v2823 = vrcp.pop %v2821
        %v2824 = vmul.f32 %v2821, %v2823
        %v2825 = vsub.f32 1.0, %v2824
        %v2826 = vmul.f32 %v2823, %v2825
        %v2827 = vadd.f32 %v2823, %v2826
        %vm2828 = vweird.f32 %v2821
        %vm2829 = vweird.f32 %v2823
        %vm2830 = vmor %vm2828, %vm2829
        %v2831 = vsel %vm2830, %v2823, %v2827
        %v2832 = vand.u32 2147483647, %v2821
        %vm2833 = vcmp.eq.f32.partialorder %v2832, 8.507059e+37
        %v2834 = vand.u32 %v2821, 2147483648
        %v2835 = vor.u32 1.1754944e-38, %v2834
        %v2836 = vsel %vm2833, %v2835, %v2831
        %v2837 = vmul.f32 %v2755, %v2836
        %v2838 = vrcp.pop %v2822
        %v2839 = vmul.f32 %v2822, %v2838
        %v2840 = vsub.f32 1.0, %v2839
        %v2841 = vmul.f32 %v2838, %v2840
        %v2842 = vadd.f32 %v2838, %v2841
        %vm2843 = vweird.f32 %v2822
        %vm2844 = vweird.f32 %v2838
        %vm2845 = vmor %vm2843, %vm2844
        %v2846 = vsel %vm2845, %v2838, %v2842
        %v2847 = vand.u32 2147483647, %v2822
        %vm2848 = vcmp.eq.f32.partialorder %v2847, 8.507059e+37
        %v2849 = vand.u32 %v2822, 2147483648
        %v2850 = vor.u32 1.1754944e-38, %v2849
        %v2851 = vsel %vm2848, %v2850, %v2846
        %v2852 = vmul.f32 %v2757, %v2851
        %2853 = vst.msk [vmem:[%s410] sm:$0xff] %vm2763, %v2755
        %2854 = vst.msk [vmem:[%s410 + $0x8] sm:$0xff] %vm2763, %v2757
        %2855 = vst.msk [vmem:[%s415] sm:$0xff] %vm2763, %v2837
        %2856 = vst.msk [vmem:[%s415 + $0x8] sm:$0xff] %vm2763, %v2852
        %p2857 = scmp.lt.s32.totalorder %s23, 1
        %s2858 = scalar_select %p2857, %s23, 1
        %s2859 = smul.addr %s2858, 2
        %s2860 = smul.addr %s2859, 8
        %s2861 = scalar_lea.vmem %s8, %s2860
        %p2862 = scmp.lt.s32.totalorder %s23, 1
        %s2863 = scalar_select %p2862, %s23, 1
        %s2864 = smul.addr %s2863, 2
        %s2865 = smul.addr %s2864, 8
        %s2866 = scalar_lea.vmem %s9, %s2865
        // Predicated region
        $region65: #{sidechain1d_forward.1} parent=51 // pred_check
          %p2867 = pneg %p219
        $region66: #{sidechain1d_forward.1} parent=51 // pred_check_branch
          %2869 = sbr.rel (%p2867) target = $region68
        $region67: #{sidechain1d_forward.1} parent=51 // pred_region
          _
        $region68: #{sidechain1d_forward.1} parent=51 // pred_fallthru
          _
        // Predicated region
        $region69: #{sidechain1d_forward.1} parent=51 // pred_check
          %p2870 = pneg %p245
        $region70: #{sidechain1d_forward.1} parent=51 // pred_check_branch
          %2872 = sbr.rel (%p2870) target = $region72
        $region71: #{sidechain1d_forward.1} parent=51 // pred_region
          _
        $region72: #{sidechain1d_forward.1} parent=51 // pred_fallthru
          _
      $region52: #{sidechain1d_forward.1} parent=5 // pred_fallthru
        _
      %p2873 = scmp.le.s32.totalorder 2, %s18
      // Predicated region
      $region73: #{sidechain1d_forward.1} parent=5 // pred_check
        %p2874 = pneg %p2873
      $region74: #{sidechain1d_forward.1} parent=5 // pred_check_branch
        %2876 = sbr.rel (%p2874) target = $region76
      $region75: #{sidechain1d_forward.1} parent=5 // pred_region
        %s2877 = ssub.s32 %s18, 2
        // Predicated region
        $region77: #{sidechain1d_forward.1} parent=75 // pred_check
          %p2878 = pneg %p225
        $region78: #{sidechain1d_forward.1} parent=75 // pred_check_branch
          %2880 = sbr.rel (%p2878) target = $region80
        $region79: #{sidechain1d_forward.1} parent=75 // pred_region
          %p2881 = scmp.lt.s32.totalorder %s24, 1
          %s2882 = scalar_select %p2881, %s24, 1
          %s2883 = smul.addr %s2882, 2
          %s2884 = smul.addr %s2883, 8
          %s2885 = scalar_lea.vmem %s8, %s2884
        $region80: #{sidechain1d_forward.1} parent=75 // pred_fallthru
          _
        // Predicated region
        $region81: #{sidechain1d_forward.1} parent=75 // pred_check
          %p2886 = pneg %p251
        $region82: #{sidechain1d_forward.1} parent=75 // pred_check_branch
          %2888 = sbr.rel (%p2886) target = $region84
        $region83: #{sidechain1d_forward.1} parent=75 // pred_region
          %p2889 = scmp.lt.s32.totalorder %s24, 1
          %s2890 = scalar_select %p2889, %s24, 1
          %s2891 = smul.addr %s2890, 2
          %s2892 = smul.addr %s2891, 8
          %s2893 = scalar_lea.vmem %s9, %s2892
        $region84: #{sidechain1d_forward.1} parent=75 // pred_fallthru
          _
      $region76: #{sidechain1d_forward.1} parent=5 // pred_fallthru
        _
    $region6: #{sidechain1d_forward.1} parent=1 // loop_footer
      %s22 = sadd.s32 1, %s18
    $region7: #{sidechain1d_forward.1} parent=1 // loop_footer_branch
      %17 = sbr.rel target = $region3
    $region8: #{sidechain1d_forward.1} parent=1 // loop_exit
      _
    %2894 = vsyncpa [#allocation3], 1
    %s2895 = scalar_lea.sflag [#allocation3], 1
    %2896 = vsyncpa %s2895, 1
    %2897 = vsyncpa [#allocation5], 1

</llo_original>
